<compile_context>
chip_gen: v6e
topology: v6e:2x2x1
jax: 0.10.0
libtpu: 0.0.40
codegen_flags: <defaults>
</compile_context>

<pallas_src>
import functools

import jax
import jax.numpy as jnp
import numpy as np
from jax.experimental import pallas as pl
from jax.experimental.pallas import tpu as pltpu

WORD_VECTOR_LENGTH = 300
HIDDEN = 50
NUM_LAYERS = 3
GATES = 3          # PyTorch gate order: r, z, n
HP = 128           # hidden padded to one full lane-width per gate slot


# ---------------------------------------------------------------------------
# Small dense (x @ w + b) kernel, tiled over the output (lane) dimension.
# Used for the hoisted layer-0 input matmul and the output (vocab) projection.
# ---------------------------------------------------------------------------
def _dense_kernel(x_ref, w_ref, b_ref, o_ref):
    o_ref[...] = (jnp.dot(x_ref[...], w_ref[...],
                          preferred_element_type=jnp.float32)
                  + b_ref[...]).astype(o_ref.dtype)


def _dense(x, w, b):
    """y = x @ w + b, vocab/N dimension tiled so large V never blows VMEM."""
    m, k = x.shape
    k2, n = w.shape
    assert k == k2
    tn = n
    for cand in (1024, 512, 256):
        if n > cand and n % cand == 0:
            tn = cand
            break
    return pl.pallas_call(
        _dense_kernel,
        out_shape=jax.ShapeDtypeStruct((m, n), jnp.float32),
        grid_spec=pltpu.PrefetchScalarGridSpec(
            num_scalar_prefetch=0,
            grid=(n // tn,),
            in_specs=[pl.BlockSpec((m, k), lambda j: (0, 0)),
                      pl.BlockSpec((k, tn), lambda j: (0, j)),
                      pl.BlockSpec((1, tn), lambda j: (0, j))],
            out_specs=pl.BlockSpec((m, tn), lambda j: (0, j))),
        compiler_params=pltpu.CompilerParams(
            dimension_semantics=("parallel",)),
    )(x, w, b)


# ---------------------------------------------------------------------------
# GRU recurrence kernel.  Single grid step; whole (short) sequence is looped
# inside (static Python unroll — T is small in this demo).
# ---------------------------------------------------------------------------
def _gru_kernel(xg0_ref, h0_ref, whh_ref, wih_ref, bx_ref, bhn_ref,
                top_ref, hfin_ref):
    # xg0_ref : (T, BP, 3*HP)  precomputed layer-0 input gate pre-activations
    # h0_ref  : (L, BP, HP)    initial hidden, padded
    # whh_ref : (L, HP, 3*HP)  packed hidden->gates weights
    # wih_ref : (L-1, HP, 3*HP) packed input->gates weights for layers 1..L-1
    # bx_ref  : (L-1, 1, 3*HP) combined input-path bias (b_ih + b_hh for r,z; b_ih for n)
    # bhn_ref : (L, 1, 3*HP)   b_hh for the n gate only (zeros elsewhere)
    T = xg0_ref.shape[0]
    BP = h0_ref.shape[1]

    # Hoist bias broadcasts out of the time loop (JAX does not CSE broadcast_in_dim).
    bx = [jnp.broadcast_to(bx_ref[l], (BP, GATES * HP))
          for l in range(NUM_LAYERS - 1)]
    bhn = [jnp.broadcast_to(bhn_ref[l], (BP, GATES * HP))
           for l in range(NUM_LAYERS)]

    h = [h0_ref[l] for l in range(NUM_LAYERS)]

    # TODO(synk): for long sequences, switch this static unroll to a chunked
    # grid / pl.loop over time blocks (T=8 here, so full unroll is cheapest).
    for t in range(T):
        below = None
        for l in range(NUM_LAYERS):
            if l == 0:
                xg = xg0_ref[t]                                   # (BP, 3*HP)
            else:
                xg = jnp.dot(below, wih_ref[l - 1],
                             preferred_element_type=jnp.float32) + bx[l - 1]
            gh = jnp.dot(h[l], whh_ref[l],
                         preferred_element_type=jnp.float32) + bhn[l]
            # Lane-aligned gate slices (each gate owns a full 128-lane slot).
            r = jax.nn.sigmoid(xg[:, 0:HP] + gh[:, 0:HP])
            z = jax.nn.sigmoid(xg[:, HP:2 * HP] + gh[:, HP:2 * HP])
            n = jnp.tanh(xg[:, 2 * HP:3 * HP] + r * gh[:, 2 * HP:3 * HP])
            h_l = (1.0 - z) * n + z * h[l]
            h[l] = h_l
            below = h_l
        top_ref[t] = below                                        # top-layer hidden

    # Final-hidden writeback exactly once (after the last timestep).
    for l in range(NUM_LAYERS):
        hfin_ref[l] = h[l]


# ---------------------------------------------------------------------------
# Parameter packing: one lane-padded (in, 3*128) weight per input per layer.
# ---------------------------------------------------------------------------
def _pack_gate_weights(w):
    """(3, in, H) -> (in, 3*HP): each gate in its own 128-lane slot, zero padded."""
    g, in_dim, h = w.shape
    out = jnp.zeros((in_dim, g * HP), w.dtype)
    for i in range(g):
        out = out.at[:, i * HP:i * HP + h].set(w[i])
    return out


def _pack_gate_bias(b):
    """(3, 1, H) -> (1, 3*HP)."""
    g, _, h = b.shape
    out = jnp.zeros((1, g * HP), b.dtype)
    for i in range(g):
        out = out.at[:, i * HP:i * HP + h].set(b[i, 0])
    return out


def _pad_rows(w, rows):
    return jnp.zeros((rows, w.shape[1]), w.dtype).at[:w.shape[0]].set(w)


def _pack_params(params):
    packed = {}
    whh, wih12, bx12, bhn = [], [], [], []
    for l in range(NUM_LAYERS):
        w_ih = params[f"w_ih_l{l}"]          # (3, in, H)
        w_hh = params[f"w_hh_l{l}"]          # (3, H, H)
        b_ih = params[f"b_ih_l{l}"]          # (3, 1, H)
        b_hh = params[f"b_hh_l{l}"]          # (3, 1, H)
        # Input-path bias: r,z get b_ih + b_hh; n gets only b_ih (PyTorch keeps
        # b_hh_n inside the r*(...) term).
        bx = jnp.concatenate([b_ih[:2] + b_hh[:2], b_ih[2:]], axis=0)
        bhn_l = jnp.concatenate([jnp.zeros_like(b_hh[:2]), b_hh[2:]], axis=0)
        whh.append(_pad_rows(_pack_gate_weights(w_hh), HP))
        bhn.append(_pack_gate_bias(bhn_l))
        if l == 0:
            packed["w_ih0"] = _pack_gate_weights(w_ih)            # (E, 3*HP)
            packed["bx0"] = _pack_gate_bias(bx)                   # (1, 3*HP)
        else:
            wih12.append(_pad_rows(_pack_gate_weights(w_ih), HP))
            bx12.append(_pack_gate_bias(bx))
    packed["whh"] = jnp.stack(whh)           # (L, HP, 3*HP)
    packed["wih12"] = jnp.stack(wih12)       # (L-1, HP, 3*HP)
    packed["bx12"] = jnp.stack(bx12)         # (L-1, 1, 3*HP)
    packed["bhn"] = jnp.stack(bhn)           # (L, 1, 3*HP)
    packed["w_out"] = _pad_rows(params["w_out"], HP)              # (HP, V)
    packed["b_out"] = params["b_out"]                             # (1, V)
    return packed


def _full_spec(shape):
    nd = len(shape)
    return pl.BlockSpec(shape, lambda *args, _nd=nd: (0,) * _nd)


# ---------------------------------------------------------------------------
# Forward pass (matches DECODER.forward: embedding -> GRU(3) -> Linear).
# ---------------------------------------------------------------------------
@jax.jit
def decoder_forward(x_ids, hidden, params):
    """x_ids: (B, T) int32; hidden: (NUM_LAYERS, B, HIDDEN) f32."""
    emb_table = params["embedding"]                               # (V, E)
    B, T = x_ids.shape
    V, E = emb_table.shape
    H = HIDDEN
    BP = max(8, ((B + 7) // 8) * 8)                               # sublane-pad batch

    packed = _pack_params(params)

    # Embedding gather, directly time-major (plain-JAX glue feeding the kernels).
    emb_tm = emb_table[x_ids.T]                                   # (T, B, E)
    emb_tm = jnp.pad(emb_tm, ((0, 0), (0, BP - B), (0, 0)))       # (T, BP, E)

    # Hoisted layer-0 input matmul: one MXU-friendly (T*BP, E) x (E, 3*HP) matmul.
    xg0 = _dense(emb_tm.reshape(T * BP, E), packed["w_ih0"], packed["bx0"])
    xg0 = xg0.reshape(T, BP, GATES * HP)

    h0 = jnp.zeros((NUM_LAYERS, BP, HP), jnp.float32)
    h0 = h0.at[:, :B, :H].set(hidden.astype(jnp.float32))

    top_h, h_fin = pl.pallas_call(
        _gru_kernel,
        out_shape=(jax.ShapeDtypeStruct((T, BP, HP), jnp.float32),
                   jax.ShapeDtypeStruct((NUM_LAYERS, BP, HP), jnp.float32)),
        grid_spec=pltpu.PrefetchScalarGridSpec(
            num_scalar_prefetch=0,
            grid=(1,),
            in_specs=[_full_spec((T, BP, GATES * HP)),
                      _full_spec((NUM_LAYERS, BP, HP)),
                      _full_spec((NUM_LAYERS, HP, GATES * HP)),
                      _full_spec((NUM_LAYERS - 1, HP, GATES * HP)),
                      _full_spec((NUM_LAYERS - 1, 1, GATES * HP)),
                      _full_spec((NUM_LAYERS, 1, GATES * HP))],
            out_specs=(_full_spec((T, BP, HP)),
                       _full_spec((NUM_LAYERS, BP, HP)))),
        compiler_params=pltpu.CompilerParams(
            dimension_semantics=("arbitrary",)),                  # serial recurrence
    )(xg0, h0, packed["whh"], packed["wih12"], packed["bx12"], packed["bhn"])

    # Hoisted output projection: one batched (B*T, HP) x (HP, V) matmul, vocab-tiled.
    top_bt = jnp.transpose(top_h[:, :B, :], (1, 0, 2)).reshape(B * T, HP)
    logits = _dense(top_bt, packed["w_out"], packed["b_out"]).reshape(B, T, V)

    h_final = h_fin[:, :B, :H]
    return logits, h_final


# ---------------------------------------------------------------------------
# Pure-JAX reference mirroring torch.nn.GRU(num_layers=3, batch_first) + Linear.
# ---------------------------------------------------------------------------
_dot_hp = functools.partial(jnp.dot, preferred_element_type=jnp.float32,
                            precision=jax.lax.Precision.HIGHEST)


def decoder_reference(x_ids, hidden, params):
    emb = params["embedding"][x_ids]                              # (B, T, E)
    B, T, _ = emb.shape
    inp_tm = jnp.transpose(emb, (1, 0, 2))                        # (T, B, E)
    h_layers = [hidden[l] for l in range(NUM_LAYERS)]
    outs = []
    for t in range(T):
        x = inp_tm[t]
        for l in range(NUM_LAYERS):
            wih, whh = params[f"w_ih_l{l}"], params[f"w_hh_l{l}"]
            bih, bhh = params[f"b_ih_l{l}"], params[f"b_hh_l{l}"]
            h_prev = h_layers[l]
            r = jax.nn.sigmoid(_dot_hp(x, wih[0]) + bih[0] + _dot_hp(h_prev, whh[0]) + bhh[0])
            z = jax.nn.sigmoid(_dot_hp(x, wih[1]) + bih[1] + _dot_hp(h_prev, whh[1]) + bhh[1])
            n = jnp.tanh(_dot_hp(x, wih[2]) + bih[2] + r * (_dot_hp(h_prev, whh[2]) + bhh[2]))
            h_new = (1.0 - z) * n + z * h_prev
            h_layers[l] = h_new
            x = h_new
        outs.append(x)
    top = jnp.stack(outs, axis=1)                                 # (B, T, H)
    logits = _dot_hp(top, params["w_out"]) + params["b_out"]
    return logits, jnp.stack(h_layers, axis=0)


def init_params(key, vocab_size):
    keys = jax.random.split(key, 16)
    k = float(1.0 / (HIDDEN ** 0.5))
    params = {}
    # nn.Embedding.from_pretrained(embed.vectors) -> synthetic pretrained table.
    params["embedding"] = jax.random.normal(
        keys[0], (vocab_size, WORD_VECTOR_LENGTH), jnp.float32)
    idx = 1
    for l in range(NUM_LAYERS):
        in_size = WORD_VECTOR_LENGTH if l == 0 else HIDDEN
        params[f"w_ih_l{l}"] = jax.random.uniform(
            keys[idx], (3, in_size, HIDDEN), jnp.float32, -k, k); idx += 1
        params[f"w_hh_l{l}"] = jax.random.uniform(
            keys[idx], (3, HIDDEN, HIDDEN), jnp.float32, -k, k); idx += 1
        params[f"b_ih_l{l}"] = jax.random.uniform(
            keys[idx], (3, 1, HIDDEN), jnp.float32, -k, k); idx += 1
        params[f"b_hh_l{l}"] = jax.random.uniform(
            keys[idx], (3, 1, HIDDEN), jnp.float32, -k, k); idx += 1
    params["w_out"] = jax.random.uniform(
        keys[idx], (HIDDEN, vocab_size), jnp.float32, -k, k); idx += 1
    params["b_out"] = jax.random.uniform(
        keys[idx], (1, vocab_size), jnp.float32, -k, k)
    return params


if __name__ == "__main__":
    B, T, V = 2, 8, 256
    key = jax.random.PRNGKey(0)
    kp, kx, kh = jax.random.split(key, 3)

    params = init_params(kp, V)
    x_ids = jax.random.randint(kx, (B, T), 0, V, dtype=jnp.int32)
    hidden = 0.1 * jax.random.normal(kh, (NUM_LAYERS, B, HIDDEN), jnp.float32)

    logits, h_final = decoder_forward(x_ids, hidden, params)
    jax.block_until_ready((logits, h_final))

    assert logits.shape == (B, T, V)
    assert h_final.shape == (NUM_LAYERS, B, HIDDEN)

    # Tolerance accounts for default-precision (bf16-pass) MXU matmuls in the
    # kernels vs. the HIGHEST-precision f32 reference (per the perf review).
    ref_logits, ref_h = decoder_reference(x_ids, hidden, params)
    np.testing.assert_allclose(np.asarray(logits), np.asarray(ref_logits),
                               rtol=1e-2, atol=1e-2)
    np.testing.assert_allclose(np.asarray(h_final), np.asarray(ref_h),
                               rtol=1e-2, atol=1e-2)
    print("KERNEL_OK")
</pallas_src>

<mosaic_0001>
module attributes {stable_mosaic.version = 11 : i64} {
  func.func @_dense_kernel(%arg0: i32, %arg1: memref<64x300xf32, #tpu.memory_space<vmem>>, %arg2: memref<300x384xf32, #tpu.memory_space<vmem>>, %arg3: memref<1x384xf32, #tpu.memory_space<vmem>>, %arg4: memref<64x384xf32, #tpu.memory_space<vmem>>) attributes {dimension_semantics = [#tpu.dimension_semantics<parallel>], iteration_bounds = array<i64: 1>, scalar_prefetch = 0 : i64, scratch_operands = 0 : i64, tpu.core_type = #tpu.core_type<tc>, window_params = [{pipeline_mode = #tpu.pipeline_mode<synchronous>, transform_indices = @transform_0, window_bounds = array<i64: 64, 300>}, {transform_indices = @transform_1, window_bounds = array<i64: 300, 384>}, {transform_indices = @transform_2, window_bounds = array<i64: 1, 384>}, {transform_indices = @transform_3, window_bounds = array<i64: 64, 384>}]} {
    %c0 = arith.constant 0 : index
    %c0_0 = arith.constant 0 : index
    %0 = vector.load %arg1[%c0, %c0_0] : memref<64x300xf32, #tpu.memory_space<vmem>>, vector<64x300xf32>
    %c0_1 = arith.constant 0 : index
    %c0_2 = arith.constant 0 : index
    %1 = vector.load %arg2[%c0_1, %c0_2] : memref<300x384xf32, #tpu.memory_space<vmem>>, vector<300x384xf32>
    %cst = arith.constant dense<0.000000e+00> : vector<64x384xf32>
    %2 = tpu.matmul %0, %1, %cst {dimension_numbers = #tpu.dot_dimension_numbers<[1], [0], [0], [1], [0, 0, 1, 1], [], []>} : vector<64x300xf32>, vector<300x384xf32>, vector<64x384xf32> -> vector<64x384xf32>
    %c0_3 = arith.constant 0 : index
    %c0_4 = arith.constant 0 : index
    %3 = vector.load %arg3[%c0_3, %c0_4] : memref<1x384xf32, #tpu.memory_space<vmem>>, vector<1x384xf32>
    %4 = vector.broadcast %3 : vector<1x384xf32> to vector<64x384xf32>
    %5 = arith.addf %2, %4 : vector<64x384xf32>
    %c0_5 = arith.constant 0 : index
    %c0_6 = arith.constant 0 : index
    %6 = vector.load %arg4[%c0_5, %c0_6] : memref<64x384xf32, #tpu.memory_space<vmem>>, vector<64x384xf32>
    tpu.vector_store %arg4[%c0_5, %c0_6], %5 {strides = array<i32>} : memref<64x384xf32, #tpu.memory_space<vmem>>, vector<64x384xf32>,
    return
  }
  func.func @transform_0(%arg0: i32) -> (i32, i32) {
    %c0_i32 = arith.constant 0 : i32
    %c0_i32_0 = arith.constant 0 : i32
    %c0_i32_1 = arith.constant 0 : i32
    return %c0_i32, %c0_i32_0 : i32, i32
  }
  func.func @transform_1(%arg0: i32) -> (i32, i32) {
    %c0_i32 = arith.constant 0 : i32
    %c0_i32_0 = arith.constant 0 : i32
    return %c0_i32, %arg0 : i32, i32
  }
  func.func @transform_2(%arg0: i32) -> (i32, i32) {
    %c0_i32 = arith.constant 0 : i32
    %c0_i32_0 = arith.constant 0 : i32
    return %c0_i32, %arg0 : i32, i32
  }
  func.func @transform_3(%arg0: i32) -> (i32, i32) {
    %c0_i32 = arith.constant 0 : i32
    %c0_i32_0 = arith.constant 0 : i32
    return %c0_i32, %arg0 : i32, i32
  }
}

module attributes {stable_mosaic.version = 11 : i64} {
  func.func @_dense_kernel(%arg0: i32, %arg1: memref<16x128xf32, #tpu.memory_space<vmem>>, %arg2: memref<128x256xf32, #tpu.memory_space<vmem>>, %arg3: memref<1x256xf32, #tpu.memory_space<vmem>>, %arg4: memref<16x256xf32, #tpu.memory_space<vmem>>) attributes {dimension_semantics = [#tpu.dimension_semantics<parallel>], iteration_bounds = array<i64: 1>, scalar_prefetch = 0 : i64, scratch_operands = 0 : i64, tpu.core_type = #tpu.core_type<tc>, window_params = [{pipeline_mode = #tpu.pipeline_mode<synchronous>, transform_indices = @transform_0, window_bounds = array<i64: 16, 128>}, {transform_indices = @transform_1, window_bounds = array<i64: 128, 256>}, {transform_indices = @transform_2, window_bounds = array<i64: 1, 256>}, {transform_indices = @transform_3, window_bounds = array<i64: 16, 256>}]} {
    %c0 = arith.constant 0 : index
    %c0_0 = arith.constant 0 : index
    %0 = vector.load %arg1[%c0, %c0_0] : memref<16x128xf32, #tpu.memory_space<vmem>>, vector<16x128xf32>
    %c0_1 = arith.constant 0 : index
    %c0_2 = arith.constant 0 : index
    %1 = vector.load %arg2[%c0_1, %c0_2] : memref<128x256xf32, #tpu.memory_space<vmem>>, vector<128x256xf32>
    %cst = arith.constant dense<0.000000e+00> : vector<16x256xf32>
    %2 = tpu.matmul %0, %1, %cst {dimension_numbers = #tpu.dot_dimension_numbers<[1], [0], [0], [1], [0, 0, 1, 1], [], []>} : vector<16x128xf32>, vector<128x256xf32>, vector<16x256xf32> -> vector<16x256xf32>
    %c0_3 = arith.constant 0 : index
    %c0_4 = arith.constant 0 : index
    %3 = vector.load %arg3[%c0_3, %c0_4] : memref<1x256xf32, #tpu.memory_space<vmem>>, vector<1x256xf32>
    %4 = vector.broadcast %3 : vector<1x256xf32> to vector<16x256xf32>
    %5 = arith.addf %2, %4 : vector<16x256xf32>
    %c0_5 = arith.constant 0 : index
    %c0_6 = arith.constant 0 : index
    %6 = vector.load %arg4[%c0_5, %c0_6] : memref<16x256xf32, #tpu.memory_space<vmem>>, vector<16x256xf32>
    tpu.vector_store %arg4[%c0_5, %c0_6], %5 {strides = array<i32>} : memref<16x256xf32, #tpu.memory_space<vmem>>, vector<16x256xf32>,
    return
  }
  func.func @transform_0(%arg0: i32) -> (i32, i32) {
    %c0_i32 = arith.constant 0 : i32
    %c0_i32_0 = arith.constant 0 : i32
    %c0_i32_1 = arith.constant 0 : i32
    return %c0_i32, %c0_i32_0 : i32, i32
  }
  func.func @transform_1(%arg0: i32) -> (i32, i32) {
    %c0_i32 = arith.constant 0 : i32
    %c0_i32_0 = arith.constant 0 : i32
    return %c0_i32, %arg0 : i32, i32
  }
  func.func @transform_2(%arg0: i32) -> (i32, i32) {
    %c0_i32 = arith.constant 0 : i32
    %c0_i32_0 = arith.constant 0 : i32
    return %c0_i32, %arg0 : i32, i32
  }
  func.func @transform_3(%arg0: i32) -> (i32, i32) {
    %c0_i32 = arith.constant 0 : i32
    %c0_i32_0 = arith.constant 0 : i32
    return %c0_i32, %arg0 : i32, i32
  }
}

module attributes {stable_mosaic.version = 11 : i64} {
  func.func @_gru_kernel(%arg0: i32, %arg1: memref<8x8x384xf32, #tpu.memory_space<vmem>>, %arg2: memref<3x8x128xf32, #tpu.memory_space<vmem>>, %arg3: memref<3x128x384xf32, #tpu.memory_space<vmem>>, %arg4: memref<2x128x384xf32, #tpu.memory_space<vmem>>, %arg5: memref<2x1x384xf32, #tpu.memory_space<vmem>>, %arg6: memref<3x1x384xf32, #tpu.memory_space<vmem>>, %arg7: memref<8x8x128xf32, #tpu.memory_space<vmem>>, %arg8: memref<3x8x128xf32, #tpu.memory_space<vmem>>) attributes {dimension_semantics = [#tpu.dimension_semantics<arbitrary>], iteration_bounds = array<i64: 1>, scalar_prefetch = 0 : i64, scratch_operands = 0 : i64, tpu.core_type = #tpu.core_type<tc>, window_params = [{pipeline_mode = #tpu.pipeline_mode<synchronous>, transform_indices = @transform_0, window_bounds = array<i64: 8, 8, 384>}, {pipeline_mode = #tpu.pipeline_mode<synchronous>, transform_indices = @transform_1, window_bounds = array<i64: 3, 8, 128>}, {pipeline_mode = #tpu.pipeline_mode<synchronous>, transform_indices = @transform_2, window_bounds = array<i64: 3, 128, 384>}, {pipeline_mode = #tpu.pipeline_mode<synchronous>, transform_indices = @transform_3, window_bounds = array<i64: 2, 128, 384>}, {pipeline_mode = #tpu.pipeline_mode<synchronous>, transform_indices = @transform_4, window_bounds = array<i64: 2, 1, 384>}, {pipeline_mode = #tpu.pipeline_mode<synchronous>, transform_indices = @transform_5, window_bounds = array<i64: 3, 1, 384>}, {pipeline_mode = #tpu.pipeline_mode<synchronous>, transform_indices = @transform_6, window_bounds = array<i64: 8, 8, 128>}, {pipeline_mode = #tpu.pipeline_mode<synchronous>, transform_indices = @transform_7, window_bounds = array<i64: 3, 8, 128>}]} {
    %c0 = arith.constant 0 : index
    %c0_0 = arith.constant 0 : index
    %c0_1 = arith.constant 0 : index
    %0 = vector.load %arg5[%c0, %c0_0, %c0_1] : memref<2x1x384xf32, #tpu.memory_space<vmem>>, vector<1x1x384xf32>
    %1 = vector.shape_cast %0 : vector<1x1x384xf32> to vector<1x384xf32>
    %2 = vector.shape_cast %1 : vector<1x384xf32> to vector<1x384xf32>
    %3 = vector.broadcast %2 : vector<1x384xf32> to vector<8x384xf32>
    %c1 = arith.constant 1 : index
    %c0_2 = arith.constant 0 : index
    %c0_3 = arith.constant 0 : index
    %4 = vector.load %arg5[%c1, %c0_2, %c0_3] : memref<2x1x384xf32, #tpu.memory_space<vmem>>, vector<1x1x384xf32>
    %5 = vector.shape_cast %4 : vector<1x1x384xf32> to vector<1x384xf32>
    %6 = vector.shape_cast %5 : vector<1x384xf32> to vector<1x384xf32>
    %7 = vector.broadcast %6 : vector<1x384xf32> to vector<8x384xf32>
    %c0_4 = arith.constant 0 : index
    %c0_5 = arith.constant 0 : index
    %c0_6 = arith.constant 0 : index
    %8 = vector.load %arg6[%c0_4, %c0_5, %c0_6] : memref<3x1x384xf32, #tpu.memory_space<vmem>>, vector<1x1x384xf32>
    %9 = vector.shape_cast %8 : vector<1x1x384xf32> to vector<1x384xf32>
    %10 = vector.shape_cast %9 : vector<1x384xf32> to vector<1x384xf32>
    %11 = vector.broadcast %10 : vector<1x384xf32> to vector<8x384xf32>
    %c1_7 = arith.constant 1 : index
    %c0_8 = arith.constant 0 : index
    %c0_9 = arith.constant 0 : index
    %12 = vector.load %arg6[%c1_7, %c0_8, %c0_9] : memref<3x1x384xf32, #tpu.memory_space<vmem>>, vector<1x1x384xf32>
    %13 = vector.shape_cast %12 : vector<1x1x384xf32> to vector<1x384xf32>
    %14 = vector.shape_cast %13 : vector<1x384xf32> to vector<1x384xf32>
    %15 = vector.broadcast %14 : vector<1x384xf32> to vector<8x384xf32>
    %c2 = arith.constant 2 : index
    %c0_10 = arith.constant 0 : index
    %c0_11 = arith.constant 0 : index
    %16 = vector.load %arg6[%c2, %c0_10, %c0_11] : memref<3x1x384xf32, #tpu.memory_space<vmem>>, vector<1x1x384xf32>
    %17 = vector.shape_cast %16 : vector<1x1x384xf32> to vector<1x384xf32>
    %18 = vector.shape_cast %17 : vector<1x384xf32> to vector<1x384xf32>
    %19 = vector.broadcast %18 : vector<1x384xf32> to vector<8x384xf32>
    %c0_12 = arith.constant 0 : index
    %c0_13 = arith.constant 0 : index
    %c0_14 = arith.constant 0 : index
    %20 = vector.load %arg2[%c0_12, %c0_13, %c0_14] : memref<3x8x128xf32, #tpu.memory_space<vmem>>, vector<1x8x128xf32>
    %21 = vector.shape_cast %20 : vector<1x8x128xf32> to vector<8x128xf32>
    %c1_15 = arith.constant 1 : index
    %c0_16 = arith.constant 0 : index
    %c0_17 = arith.constant 0 : index
    %22 = vector.load %arg2[%c1_15, %c0_16, %c0_17] : memref<3x8x128xf32, #tpu.memory_space<vmem>>, vector<1x8x128xf32>
    %23 = vector.shape_cast %22 : vector<1x8x128xf32> to vector<8x128xf32>
    %c2_18 = arith.constant 2 : index
    %c0_19 = arith.constant 0 : index
    %c0_20 = arith.constant 0 : index
    %24 = vector.load %arg2[%c2_18, %c0_19, %c0_20] : memref<3x8x128xf32, #tpu.memory_space<vmem>>, vector<1x8x128xf32>
    %25 = vector.shape_cast %24 : vector<1x8x128xf32> to vector<8x128xf32>
    %c0_21 = arith.constant 0 : index
    %c0_22 = arith.constant 0 : index
    %c0_23 = arith.constant 0 : index
    %26 = vector.load %arg1[%c0_21, %c0_22, %c0_23] : memref<8x8x384xf32, #tpu.memory_space<vmem>>, vector<1x8x384xf32>
    %27 = vector.shape_cast %26 : vector<1x8x384xf32> to vector<8x384xf32>
    %c0_24 = arith.constant 0 : index
    %c0_25 = arith.constant 0 : index
    %c0_26 = arith.constant 0 : index
    %28 = vector.load %arg3[%c0_24, %c0_25, %c0_26] : memref<3x128x384xf32, #tpu.memory_space<vmem>>, vector<1x128x384xf32>
    %29 = vector.shape_cast %28 : vector<1x128x384xf32> to vector<128x384xf32>
    %cst = arith.constant dense<0.000000e+00> : vector<8x384xf32>
    %30 = tpu.matmul %21, %29, %cst {dimension_numbers = #tpu.dot_dimension_numbers<[1], [0], [0], [1], [0, 0, 1, 1], [], []>} : vector<8x128xf32>, vector<128x384xf32>, vector<8x384xf32> -> vector<8x384xf32>
    %31 = arith.addf %30, %11 : vector<8x384xf32>
    %32 = vector.extract_strided_slice %27 {offsets = [0, 0], sizes = [8, 128], strides = [1, 1]} : vector<8x384xf32> to vector<8x128xf32>
    %33 = vector.extract_strided_slice %31 {offsets = [0, 0], sizes = [8, 128], strides = [1, 1]} : vector<8x384xf32> to vector<8x128xf32>
    %34 = arith.addf %32, %33 : vector<8x128xf32>
    %35 = arith.negf %34 : vector<8x128xf32>
    %36 = math.exp %35 : vector<8x128xf32>
    %cst_27 = arith.constant 1.000000e+00 : f32
    %37 = vector.broadcast %cst_27 : f32 to vector<8x128xf32>
    %38 = arith.addf %37, %36 : vector<8x128xf32>
    %39 = arith.divf %37, %38 : vector<8x128xf32>
    %40 = vector.extract_strided_slice %27 {offsets = [0, 128], sizes = [8, 128], strides = [1, 1]} : vector<8x384xf32> to vector<8x128xf32>
    %41 = vector.extract_strided_slice %31 {offsets = [0, 128], sizes = [8, 128], strides = [1, 1]} : vector<8x384xf32> to vector<8x128xf32>
    %42 = arith.addf %40, %41 : vector<8x128xf32>
    %43 = arith.negf %42 : vector<8x128xf32>
    %44 = math.exp %43 : vector<8x128xf32>
    %cst_28 = arith.constant 1.000000e+00 : f32
    %45 = vector.broadcast %cst_28 : f32 to vector<8x128xf32>
    %46 = arith.addf %45, %44 : vector<8x128xf32>
    %47 = arith.divf %45, %46 : vector<8x128xf32>
    %48 = vector.extract_strided_slice %27 {offsets = [0, 256], sizes = [8, 128], strides = [1, 1]} : vector<8x384xf32> to vector<8x128xf32>
    %49 = vector.extract_strided_slice %31 {offsets = [0, 256], sizes = [8, 128], strides = [1, 1]} : vector<8x384xf32> to vector<8x128xf32>
    %50 = arith.mulf %39, %49 : vector<8x128xf32>
    %51 = arith.addf %48, %50 : vector<8x128xf32>
    %52 = math.tanh %51 : vector<8x128xf32>
    %cst_29 = arith.constant 1.000000e+00 : f32
    %53 = vector.broadcast %cst_29 : f32 to vector<8x128xf32>
    %54 = arith.subf %53, %47 : vector<8x128xf32>
    %55 = arith.mulf %54, %52 : vector<8x128xf32>
    %56 = arith.mulf %47, %21 : vector<8x128xf32>
    %57 = arith.addf %55, %56 : vector<8x128xf32>
    %c0_30 = arith.constant 0 : index
    %c0_31 = arith.constant 0 : index
    %c0_32 = arith.constant 0 : index
    %58 = vector.load %arg4[%c0_30, %c0_31, %c0_32] : memref<2x128x384xf32, #tpu.memory_space<vmem>>, vector<1x128x384xf32>
    %59 = vector.shape_cast %58 : vector<1x128x384xf32> to vector<128x384xf32>
    %cst_33 = arith.constant dense<0.000000e+00> : vector<8x384xf32>
    %60 = tpu.matmul %57, %59, %cst_33 {dimension_numbers = #tpu.dot_dimension_numbers<[1], [0], [0], [1], [0, 0, 1, 1], [], []>} : vector<8x128xf32>, vector<128x384xf32>, vector<8x384xf32> -> vector<8x384xf32>
    %61 = arith.addf %60, %3 : vector<8x384xf32>
    %c1_34 = arith.constant 1 : index
    %c0_35 = arith.constant 0 : index
    %c0_36 = arith.constant 0 : index
    %62 = vector.load %arg3[%c1_34, %c0_35, %c0_36] : memref<3x128x384xf32, #tpu.memory_space<vmem>>, vector<1x128x384xf32>
    %63 = vector.shape_cast %62 : vector<1x128x384xf32> to vector<128x384xf32>
    %cst_37 = arith.constant dense<0.000000e+00> : vector<8x384xf32>
    %64 = tpu.matmul %23, %63, %cst_37 {dimension_numbers = #tpu.dot_dimension_numbers<[1], [0], [0], [1], [0, 0, 1, 1], [], []>} : vector<8x128xf32>, vector<128x384xf32>, vector<8x384xf32> -> vector<8x384xf32>
    %65 = arith.addf %64, %15 : vector<8x384xf32>
    %66 = vector.extract_strided_slice %61 {offsets = [0, 0], sizes = [8, 128], strides = [1, 1]} : vector<8x384xf32> to vector<8x128xf32>
    %67 = vector.extract_strided_slice %65 {offsets = [0, 0], sizes = [8, 128], strides = [1, 1]} : vector<8x384xf32> to vector<8x128xf32>
    %68 = arith.addf %66, %67 : vector<8x128xf32>
    %69 = arith.negf %68 : vector<8x128xf32>
    %70 = math.exp %69 : vector<8x128xf32>
    %cst_38 = arith.constant 1.000000e+00 : f32
    %71 = vector.broadcast %cst_38 : f32 to vector<8x128xf32>
    %72 = arith.addf %71, %70 : vector<8x128xf32>
    %73 = arith.divf %71, %72 : vector<8x128xf32>
    %74 = vector.extract_strided_slice %61 {offsets = [0, 128], sizes = [8, 128], strides = [1, 1]} : vector<8x384xf32> to vector<8x128xf32>
    %75 = vector.extract_strided_slice %65 {offsets = [0, 128], sizes = [8, 128], strides = [1, 1]} : vector<8x384xf32> to vector<8x128xf32>
    %76 = arith.addf %74, %75 : vector<8x128xf32>
    %77 = arith.negf %76 : vector<8x128xf32>
    %78 = math.exp %77 : vector<8x128xf32>
    %cst_39 = arith.constant 1.000000e+00 : f32
    %79 = vector.broadcast %cst_39 : f32 to vector<8x128xf32>
    %80 = arith.addf %79, %78 : vector<8x128xf32>
    %81 = arith.divf %79, %80 : vector<8x128xf32>
    %82 = vector.extract_strided_slice %61 {offsets = [0, 256], sizes = [8, 128], strides = [1, 1]} : vector<8x384xf32> to vector<8x128xf32>
    %83 = vector.extract_strided_slice %65 {offsets = [0, 256], sizes = [8, 128], strides = [1, 1]} : vector<8x384xf32> to vector<8x128xf32>
    %84 = arith.mulf %73, %83 : vector<8x128xf32>
    %85 = arith.addf %82, %84 : vector<8x128xf32>
    %86 = math.tanh %85 : vector<8x128xf32>
    %cst_40 = arith.constant 1.000000e+00 : f32
    %87 = vector.broadcast %cst_40 : f32 to vector<8x128xf32>
    %88 = arith.subf %87, %81 : vector<8x128xf32>
    %89 = arith.mulf %88, %86 : vector<8x128xf32>
    %90 = arith.mulf %81, %23 : vector<8x128xf32>
    %91 = arith.addf %89, %90 : vector<8x128xf32>
    %c1_41 = arith.constant 1 : index
    %c0_42 = arith.constant 0 : index
    %c0_43 = arith.constant 0 : index
    %92 = vector.load %arg4[%c1_41, %c0_42, %c0_43] : memref<2x128x384xf32, #tpu.memory_space<vmem>>, vector<1x128x384xf32>
    %93 = vector.shape_cast %92 : vector<1x128x384xf32> to vector<128x384xf32>
    %cst_44 = arith.constant dense<0.000000e+00> : vector<8x384xf32>
    %94 = tpu.matmul %91, %93, %cst_44 {dimension_numbers = #tpu.dot_dimension_numbers<[1], [0], [0], [1], [0, 0, 1, 1], [], []>} : vector<8x128xf32>, vector<128x384xf32>, vector<8x384xf32> -> vector<8x384xf32>
    %95 = arith.addf %94, %7 : vector<8x384xf32>
    %c2_45 = arith.constant 2 : index
    %c0_46 = arith.constant 0 : index
    %c0_47 = arith.constant 0 : index
    %96 = vector.load %arg3[%c2_45, %c0_46, %c0_47] : memref<3x128x384xf32, #tpu.memory_space<vmem>>, vector<1x128x384xf32>
    %97 = vector.shape_cast %96 : vector<1x128x384xf32> to vector<128x384xf32>
    %cst_48 = arith.constant dense<0.000000e+00> : vector<8x384xf32>
    %98 = tpu.matmul %25, %97, %cst_48 {dimension_numbers = #tpu.dot_dimension_numbers<[1], [0], [0], [1], [0, 0, 1, 1], [], []>} : vector<8x128xf32>, vector<128x384xf32>, vector<8x384xf32> -> vector<8x384xf32>
    %99 = arith.addf %98, %19 : vector<8x384xf32>
    %100 = vector.extract_strided_slice %95 {offsets = [0, 0], sizes = [8, 128], strides = [1, 1]} : vector<8x384xf32> to vector<8x128xf32>
    %101 = vector.extract_strided_slice %99 {offsets = [0, 0], sizes = [8, 128], strides = [1, 1]} : vector<8x384xf32> to vector<8x128xf32>
    %102 = arith.addf %100, %101 : vector<8x128xf32>
    %103 = arith.negf %102 : vector<8x128xf32>
    %104 = math.exp %103 : vector<8x128xf32>
    %cst_49 = arith.constant 1.000000e+00 : f32
    %105 = vector.broadcast %cst_49 : f32 to vector<8x128xf32>
    %106 = arith.addf %105, %104 : vector<8x128xf32>
    %107 = arith.divf %105, %106 : vector<8x128xf32>
    %108 = vector.extract_strided_slice %95 {offsets = [0, 128], sizes = [8, 128], strides = [1, 1]} : vector<8x384xf32> to vector<8x128xf32>
    %109 = vector.extract_strided_slice %99 {offsets = [0, 128], sizes = [8, 128], strides = [1, 1]} : vector<8x384xf32> to vector<8x128xf32>
    %110 = arith.addf %108, %109 : vector<8x128xf32>
    %111 = arith.negf %110 : vector<8x128xf32>
    %112 = math.exp %111 : vector<8x128xf32>
    %cst_50 = arith.constant 1.000000e+00 : f32
    %113 = vector.broadcast %cst_50 : f32 to vector<8x128xf32>
    %114 = arith.addf %113, %112 : vector<8x128xf32>
    %115 = arith.divf %113, %114 : vector<8x128xf32>
    %116 = vector.extract_strided_slice %95 {offsets = [0, 256], sizes = [8, 128], strides = [1, 1]} : vector<8x384xf32> to vector<8x128xf32>
    %117 = vector.extract_strided_slice %99 {offsets = [0, 256], sizes = [8, 128], strides = [1, 1]} : vector<8x384xf32> to vector<8x128xf32>
    %118 = arith.mulf %107, %117 : vector<8x128xf32>
    %119 = arith.addf %116, %118 : vector<8x128xf32>
    %120 = math.tanh %119 : vector<8x128xf32>
    %cst_51 = arith.constant 1.000000e+00 : f32
    %121 = vector.broadcast %cst_51 : f32 to vector<8x128xf32>
    %122 = arith.subf %121, %115 : vector<8x128xf32>
    %123 = arith.mulf %122, %120 : vector<8x128xf32>
    %124 = arith.mulf %115, %25 : vector<8x128xf32>
    %125 = arith.addf %123, %124 : vector<8x128xf32>
    %c0_52 = arith.constant 0 : index
    %c0_53 = arith.constant 0 : index
    %c0_54 = arith.constant 0 : index
    %126 = vector.load %arg7[%c0_52, %c0_53, %c0_54] : memref<8x8x128xf32, #tpu.memory_space<vmem>>, vector<1x8x128xf32>
    %127 = vector.shape_cast %126 : vector<1x8x128xf32> to vector<8x128xf32>
    %128 = vector.shape_cast %125 : vector<8x128xf32> to vector<1x8x128xf32>
    tpu.vector_store %arg7[%c0_52, %c0_53, %c0_54], %128 {strides = array<i32>} : memref<8x8x128xf32, #tpu.memory_space<vmem>>, vector<1x8x128xf32>,
    %c1_55 = arith.constant 1 : index
    %c0_56 = arith.constant 0 : index
    %c0_57 = arith.constant 0 : index
    %129 = vector.load %arg1[%c1_55, %c0_56, %c0_57] : memref<8x8x384xf32, #tpu.memory_space<vmem>>, vector<1x8x384xf32>
    %130 = vector.shape_cast %129 : vector<1x8x384xf32> to vector<8x384xf32>
    %c0_58 = arith.constant 0 : index
    %c0_59 = arith.constant 0 : index
    %c0_60 = arith.constant 0 : index
    %131 = vector.load %arg3[%c0_58, %c0_59, %c0_60] : memref<3x128x384xf32, #tpu.memory_space<vmem>>, vector<1x128x384xf32>
    %132 = vector.shape_cast %131 : vector<1x128x384xf32> to vector<128x384xf32>
    %cst_61 = arith.constant dense<0.000000e+00> : vector<8x384xf32>
    %133 = tpu.matmul %57, %132, %cst_61 {dimension_numbers = #tpu.dot_dimension_numbers<[1], [0], [0], [1], [0, 0, 1, 1], [], []>} : vector<8x128xf32>, vector<128x384xf32>, vector<8x384xf32> -> vector<8x384xf32>
    %134 = arith.addf %133, %11 : vector<8x384xf32>
    %135 = vector.extract_strided_slice %130 {offsets = [0, 0], sizes = [8, 128], strides = [1, 1]} : vector<8x384xf32> to vector<8x128xf32>
    %136 = vector.extract_strided_slice %134 {offsets = [0, 0], sizes = [8, 128], strides = [1, 1]} : vector<8x384xf32> to vector<8x128xf32>
    %137 = arith.addf %135, %136 : vector<8x128xf32>
    %138 = arith.negf %137 : vector<8x128xf32>
    %139 = math.exp %138 : vector<8x128xf32>
    %cst_62 = arith.constant 1.000000e+00 : f32
    %140 = vector.broadcast %cst_62 : f32 to vector<8x128xf32>
    %141 = arith.addf %140, %139 : vector<8x128xf32>
    %142 = arith.divf %140, %141 : vector<8x128xf32>
    %143 = vector.extract_strided_slice %130 {offsets = [0, 128], sizes = [8, 128], strides = [1, 1]} : vector<8x384xf32> to vector<8x128xf32>
    %144 = vector.extract_strided_slice %134 {offsets = [0, 128], sizes = [8, 128], strides = [1, 1]} : vector<8x384xf32> to vector<8x128xf32>
    %145 = arith.addf %143, %144 : vector<8x128xf32>
    %146 = arith.negf %145 : vector<8x128xf32>
    %147 = math.exp %146 : vector<8x128xf32>
    %cst_63 = arith.constant 1.000000e+00 : f32
    %148 = vector.broadcast %cst_63 : f32 to vector<8x128xf32>
    %149 = arith.addf %148, %147 : vector<8x128xf32>
    %150 = arith.divf %148, %149 : vector<8x128xf32>
    %151 = vector.extract_strided_slice %130 {offsets = [0, 256], sizes = [8, 128], strides = [1, 1]} : vector<8x384xf32> to vector<8x128xf32>
    %152 = vector.extract_strided_slice %134 {offsets = [0, 256], sizes = [8, 128], strides = [1, 1]} : vector<8x384xf32> to vector<8x128xf32>
    %153 = arith.mulf %142, %152 : vector<8x128xf32>
    %154 = arith.addf %151, %153 : vector<8x128xf32>
    %155 = math.tanh %154 : vector<8x128xf32>
    %cst_64 = arith.constant 1.000000e+00 : f32
    %156 = vector.broadcast %cst_64 : f32 to vector<8x128xf32>
    %157 = arith.subf %156, %150 : vector<8x128xf32>
    %158 = arith.mulf %157, %155 : vector<8x128xf32>
    %159 = arith.mulf %150, %57 : vector<8x128xf32>
    %160 = arith.addf %158, %159 : vector<8x128xf32>
    %c0_65 = arith.constant 0 : index
    %c0_66 = arith.constant 0 : index
    %c0_67 = arith.constant 0 : index
    %161 = vector.load %arg4[%c0_65, %c0_66, %c0_67] : memref<2x128x384xf32, #tpu.memory_space<vmem>>, vector<1x128x384xf32>
    %162 = vector.shape_cast %161 : vector<1x128x384xf32> to vector<128x384xf32>
    %cst_68 = arith.constant dense<0.000000e+00> : vector<8x384xf32>
    %163 = tpu.matmul %160, %162, %cst_68 {dimension_numbers = #tpu.dot_dimension_numbers<[1], [0], [0], [1], [0, 0, 1, 1], [], []>} : vector<8x128xf32>, vector<128x384xf32>, vector<8x384xf32> -> vector<8x384xf32>
    %164 = arith.addf %163, %3 : vector<8x384xf32>
    %c1_69 = arith.constant 1 : index
    %c0_70 = arith.constant 0 : index
    %c0_71 = arith.constant 0 : index
    %165 = vector.load %arg3[%c1_69, %c0_70, %c0_71] : memref<3x128x384xf32, #tpu.memory_space<vmem>>, vector<1x128x384xf32>
    %166 = vector.shape_cast %165 : vector<1x128x384xf32> to vector<128x384xf32>
    %cst_72 = arith.constant dense<0.000000e+00> : vector<8x384xf32>
    %167 = tpu.matmul %91, %166, %cst_72 {dimension_numbers = #tpu.dot_dimension_numbers<[1], [0], [0], [1], [0, 0, 1, 1], [], []>} : vector<8x128xf32>, vector<128x384xf32>, vector<8x384xf32> -> vector<8x384xf32>
    %168 = arith.addf %167, %15 : vector<8x384xf32>
    %169 = vector.extract_strided_slice %164 {offsets = [0, 0], sizes = [8, 128], strides = [1, 1]} : vector<8x384xf32> to vector<8x128xf32>
    %170 = vector.extract_strided_slice %168 {offsets = [0, 0], sizes = [8, 128], strides = [1, 1]} : vector<8x384xf32> to vector<8x128xf32>
    %171 = arith.addf %169, %170 : vector<8x128xf32>
    %172 = arith.negf %171 : vector<8x128xf32>
    %173 = math.exp %172 : vector<8x128xf32>
    %cst_73 = arith.constant 1.000000e+00 : f32
    %174 = vector.broadcast %cst_73 : f32 to vector<8x128xf32>
    %175 = arith.addf %174, %173 : vector<8x128xf32>
    %176 = arith.divf %174, %175 : vector<8x128xf32>
    %177 = vector.extract_strided_slice %164 {offsets = [0, 128], sizes = [8, 128], strides = [1, 1]} : vector<8x384xf32> to vector<8x128xf32>
    %178 = vector.extract_strided_slice %168 {offsets = [0, 128], sizes = [8, 128], strides = [1, 1]} : vector<8x384xf32> to vector<8x128xf32>
    %179 = arith.addf %177, %178 : vector<8x128xf32>
    %180 = arith.negf %179 : vector<8x128xf32>
    %181 = math.exp %180 : vector<8x128xf32>
    %cst_74 = arith.constant 1.000000e+00 : f32
    %182 = vector.broadcast %cst_74 : f32 to vector<8x128xf32>
    %183 = arith.addf %182, %181 : vector<8x128xf32>
    %184 = arith.divf %182, %183 : vector<8x128xf32>
    %185 = vector.extract_strided_slice %164 {offsets = [0, 256], sizes = [8, 128], strides = [1, 1]} : vector<8x384xf32> to vector<8x128xf32>
    %186 = vector.extract_strided_slice %168 {offsets = [0, 256], sizes = [8, 128], strides = [1, 1]} : vector<8x384xf32> to vector<8x128xf32>
    %187 = arith.mulf %176, %186 : vector<8x128xf32>
    %188 = arith.addf %185, %187 : vector<8x128xf32>
    %189 = math.tanh %188 : vector<8x128xf32>
    %cst_75 = arith.constant 1.000000e+00 : f32
    %190 = vector.broadcast %cst_75 : f32 to vector<8x128xf32>
    %191 = arith.subf %190, %184 : vector<8x128xf32>
    %192 = arith.mulf %191, %189 : vector<8x128xf32>
    %193 = arith.mulf %184, %91 : vector<8x128xf32>
    %194 = arith.addf %192, %193 : vector<8x128xf32>
    %c1_76 = arith.constant 1 : index
    %c0_77 = arith.constant 0 : index
    %c0_78 = arith.constant 0 : index
    %195 = vector.load %arg4[%c1_76, %c0_77, %c0_78] : memref<2x128x384xf32, #tpu.memory_space<vmem>>, vector<1x128x384xf32>
    %196 = vector.shape_cast %195 : vector<1x128x384xf32> to vector<128x384xf32>
    %cst_79 = arith.constant dense<0.000000e+00> : vector<8x384xf32>
    %197 = tpu.matmul %194, %196, %cst_79 {dimension_numbers = #tpu.dot_dimension_numbers<[1], [0], [0], [1], [0, 0, 1, 1], [], []>} : vector<8x128xf32>, vector<128x384xf32>, vector<8x384xf32> -> vector<8x384xf32>
    %198 = arith.addf %197, %7 : vector<8x384xf32>
    %c2_80 = arith.constant 2 : index
    %c0_81 = arith.constant 0 : index
    %c0_82 = arith.constant 0 : index
    %199 = vector.load %arg3[%c2_80, %c0_81, %c0_82] : memref<3x128x384xf32, #tpu.memory_space<vmem>>, vector<1x128x384xf32>
    %200 = vector.shape_cast %199 : vector<1x128x384xf32> to vector<128x384xf32>
    %cst_83 = arith.constant dense<0.000000e+00> : vector<8x384xf32>
    %201 = tpu.matmul %125, %200, %cst_83 {dimension_numbers = #tpu.dot_dimension_numbers<[1], [0], [0], [1], [0, 0, 1, 1], [], []>} : vector<8x128xf32>, vector<128x384xf32>, vector<8x384xf32> -> vector<8x384xf32>
    %202 = arith.addf %201, %19 : vector<8x384xf32>
    %203 = vector.extract_strided_slice %198 {offsets = [0, 0], sizes = [8, 128], strides = [1, 1]} : vector<8x384xf32> to vector<8x128xf32>
    %204 = vector.extract_strided_slice %202 {offsets = [0, 0], sizes = [8, 128], strides = [1, 1]} : vector<8x384xf32> to vector<8x128xf32>
    %205 = arith.addf %203, %204 : vector<8x128xf32>
    %206 = arith.negf %205 : vector<8x128xf32>
    %207 = math.exp %206 : vector<8x128xf32>
    %cst_84 = arith.constant 1.000000e+00 : f32
    %208 = vector.broadcast %cst_84 : f32 to vector<8x128xf32>
    %209 = arith.addf %208, %207 : vector<8x128xf32>
    %210 = arith.divf %208, %209 : vector<8x128xf32>
    %211 = vector.extract_strided_slice %198 {offsets = [0, 128], sizes = [8, 128], strides = [1, 1]} : vector<8x384xf32> to vector<8x128xf32>
    %212 = vector.extract_strided_slice %202 {offsets = [0, 128], sizes = [8, 128], strides = [1, 1]} : vector<8x384xf32> to vector<8x128xf32>
    %213 = arith.addf %211, %212 : vector<8x128xf32>
    %214 = arith.negf %213 : vector<8x128xf32>
    %215 = math.exp %214 : vector<8x128xf32>
    %cst_85 = arith.constant 1.000000e+00 : f32
    %216 = vector.broadcast %cst_85 : f32 to vector<8x128xf32>
    %217 = arith.addf %216, %215 : vector<8x128xf32>
    %218 = arith.divf %216, %217 : vector<8x128xf32>
    %219 = vector.extract_strided_slice %198 {offsets = [0, 256], sizes = [8, 128], strides = [1, 1]} : vector<8x384xf32> to vector<8x128xf32>
    %220 = vector.extract_strided_slice %202 {offsets = [0, 256], sizes = [8, 128], strides = [1, 1]} : vector<8x384xf32> to vector<8x128xf32>
    %221 = arith.mulf %210, %220 : vector<8x128xf32>
    %222 = arith.addf %219, %221 : vector<8x128xf32>
    %223 = math.tanh %222 : vector<8x128xf32>
    %cst_86 = arith.constant 1.000000e+00 : f32
    %224 = vector.broadcast %cst_86 : f32 to vector<8x128xf32>
    %225 = arith.subf %224, %218 : vector<8x128xf32>
    %226 = arith.mulf %225, %223 : vector<8x128xf32>
    %227 = arith.mulf %218, %125 : vector<8x128xf32>
    %228 = arith.addf %226, %227 : vector<8x128xf32>
    %c1_87 = arith.constant 1 : index
    %c0_88 = arith.constant 0 : index
    %c0_89 = arith.constant 0 : index
    %229 = vector.load %arg7[%c1_87, %c0_88, %c0_89] : memref<8x8x128xf32, #tpu.memory_space<vmem>>, vector<1x8x128xf32>
    %230 = vector.shape_cast %229 : vector<1x8x128xf32> to vector<8x128xf32>
    %231 = vector.shape_cast %228 : vector<8x128xf32> to vector<1x8x128xf32>
    tpu.vector_store %arg7[%c1_87, %c0_88, %c0_89], %231 {strides = array<i32>} : memref<8x8x128xf32, #tpu.memory_space<vmem>>, vector<1x8x128xf32>,
    %c2_90 = arith.constant 2 : index
    %c0_91 = arith.constant 0 : index
    %c0_92 = arith.constant 0 : index
    %232 = vector.load %arg1[%c2_90, %c0_91, %c0_92] : memref<8x8x384xf32, #tpu.memory_space<vmem>>, vector<1x8x384xf32>
    %233 = vector.shape_cast %232 : vector<1x8x384xf32> to vector<8x384xf32>
    %c0_93 = arith.constant 0 : index
    %c0_94 = arith.constant 0 : index
    %c0_95 = arith.constant 0 : index
    %234 = vector.load %arg3[%c0_93, %c0_94, %c0_95] : memref<3x128x384xf32, #tpu.memory_space<vmem>>, vector<1x128x384xf32>
    %235 = vector.shape_cast %234 : vector<1x128x384xf32> to vector<128x384xf32>
    %cst_96 = arith.constant dense<0.000000e+00> : vector<8x384xf32>
    %236 = tpu.matmul %160, %235, %cst_96 {dimension_numbers = #tpu.dot_dimension_numbers<[1], [0], [0], [1], [0, 0, 1, 1], [], []>} : vector<8x128xf32>, vector<128x384xf32>, vector<8x384xf32> -> vector<8x384xf32>
    %237 = arith.addf %236, %11 : vector<8x384xf32>
    %238 = vector.extract_strided_slice %233 {offsets = [0, 0], sizes = [8, 128], strides = [1, 1]} : vector<8x384xf32> to vector<8x128xf32>
    %239 = vector.extract_strided_slice %237 {offsets = [0, 0], sizes = [8, 128], strides = [1, 1]} : vector<8x384xf32> to vector<8x128xf32>
    %240 = arith.addf %238, %239 : vector<8x128xf32>
    %241 = arith.negf %240 : vector<8x128xf32>
    %242 = math.exp %241 : vector<8x128xf32>
    %cst_97 = arith.constant 1.000000e+00 : f32
    %243 = vector.broadcast %cst_97 : f32 to vector<8x128xf32>
    %244 = arith.addf %243, %242 : vector<8x128xf32>
    %245 = arith.divf %243, %244 : vector<8x128xf32>
    %246 = vector.extract_strided_slice %233 {offsets = [0, 128], sizes = [8, 128], strides = [1, 1]} : vector<8x384xf32> to vector<8x128xf32>
    %247 = vector.extract_strided_slice %237 {offsets = [0, 128], sizes = [8, 128], strides = [1, 1]} : vector<8x384xf32> to vector<8x128xf32>
    %248 = arith.addf %246, %247 : vector<8x128xf32>
    %249 = arith.negf %248 : vector<8x128xf32>
    %250 = math.exp %249 : vector<8x128xf32>
    %cst_98 = arith.constant 1.000000e+00 : f32
    %251 = vector.broadcast %cst_98 : f32 to vector<8x128xf32>
    %252 = arith.addf %251, %250 : vector<8x128xf32>
    %253 = arith.divf %251, %252 : vector<8x128xf32>
    %254 = vector.extract_strided_slice %233 {offsets = [0, 256], sizes = [8, 128], strides = [1, 1]} : vector<8x384xf32> to vector<8x128xf32>
    %255 = vector.extract_strided_slice %237 {offsets = [0, 256], sizes = [8, 128], strides = [1, 1]} : vector<8x384xf32> to vector<8x128xf32>
    %256 = arith.mulf %245, %255 : vector<8x128xf32>
    %257 = arith.addf %254, %256 : vector<8x128xf32>
    %258 = math.tanh %257 : vector<8x128xf32>
    %cst_99 = arith.constant 1.000000e+00 : f32
    %259 = vector.broadcast %cst_99 : f32 to vector<8x128xf32>
    %260 = arith.subf %259, %253 : vector<8x128xf32>
    %261 = arith.mulf %260, %258 : vector<8x128xf32>
    %262 = arith.mulf %253, %160 : vector<8x128xf32>
    %263 = arith.addf %261, %262 : vector<8x128xf32>
    %c0_100 = arith.constant 0 : index
    %c0_101 = arith.constant 0 : index
    %c0_102 = arith.constant 0 : index
    %264 = vector.load %arg4[%c0_100, %c0_101, %c0_102] : memref<2x128x384xf32, #tpu.memory_space<vmem>>, vector<1x128x384xf32>
    %265 = vector.shape_cast %264 : vector<1x128x384xf32> to vector<128x384xf32>
    %cst_103 = arith.constant dense<0.000000e+00> : vector<8x384xf32>
    %266 = tpu.matmul %263, %265, %cst_103 {dimension_numbers = #tpu.dot_dimension_numbers<[1], [0], [0], [1], [0, 0, 1, 1], [], []>} : vector<8x128xf32>, vector<128x384xf32>, vector<8x384xf32> -> vector<8x384xf32>
    %267 = arith.addf %266, %3 : vector<8x384xf32>
    %c1_104 = arith.constant 1 : index
    %c0_105 = arith.constant 0 : index
    %c0_106 = arith.constant 0 : index
    %268 = vector.load %arg3[%c1_104, %c0_105, %c0_106] : memref<3x128x384xf32, #tpu.memory_space<vmem>>, vector<1x128x384xf32>
    %269 = vector.shape_cast %268 : vector<1x128x384xf32> to vector<128x384xf32>
    %cst_107 = arith.constant dense<0.000000e+00> : vector<8x384xf32>
    %270 = tpu.matmul %194, %269, %cst_107 {dimension_numbers = #tpu.dot_dimension_numbers<[1], [0], [0], [1], [0, 0, 1, 1], [], []>} : vector<8x128xf32>, vector<128x384xf32>, vector<8x384xf32> -> vector<8x384xf32>
    %271 = arith.addf %270, %15 : vector<8x384xf32>
    %272 = vector.extract_strided_slice %267 {offsets = [0, 0], sizes = [8, 128], strides = [1, 1]} : vector<8x384xf32> to vector<8x128xf32>
    %273 = vector.extract_strided_slice %271 {offsets = [0, 0], sizes = [8, 128], strides = [1, 1]} : vector<8x384xf32> to vector<8x128xf32>
    %274 = arith.addf %272, %273 : vector<8x128xf32>
    %275 = arith.negf %274 : vector<8x128xf32>
    %276 = math.exp %275 : vector<8x128xf32>
    %cst_108 = arith.constant 1.000000e+00 : f32
    %277 = vector.broadcast %cst_108 : f32 to vector<8x128xf32>
    %278 = arith.addf %277, %276 : vector<8x128xf32>
    %279 = arith.divf %277, %278 : vector<8x128xf32>
    %280 = vector.extract_strided_slice %267 {offsets = [0, 128], sizes = [8, 128], strides = [1, 1]} : vector<8x384xf32> to vector<8x128xf32>
    %281 = vector.extract_strided_slice %271 {offsets = [0, 128], sizes = [8, 128], strides = [1, 1]} : vector<8x384xf32> to vector<8x128xf32>
    %282 = arith.addf %280, %281 : vector<8x128xf32>
    %283 = arith.negf %282 : vector<8x128xf32>
    %284 = math.exp %283 : vector<8x128xf32>
    %cst_109 = arith.constant 1.000000e+00 : f32
    %285 = vector.broadcast %cst_109 : f32 to vector<8x128xf32>
    %286 = arith.addf %285, %284 : vector<8x128xf32>
    %287 = arith.divf %285, %286 : vector<8x128xf32>
    %288 = vector.extract_strided_slice %267 {offsets = [0, 256], sizes = [8, 128], strides = [1, 1]} : vector<8x384xf32> to vector<8x128xf32>
    %289 = vector.extract_strided_slice %271 {offsets = [0, 256], sizes = [8, 128], strides = [1, 1]} : vector<8x384xf32> to vector<8x128xf32>
    %290 = arith.mulf %279, %289 : vector<8x128xf32>
    %291 = arith.addf %288, %290 : vector<8x128xf32>
    %292 = math.tanh %291 : vector<8x128xf32>
    %cst_110 = arith.constant 1.000000e+00 : f32
    %293 = vector.broadcast %cst_110 : f32 to vector<8x128xf32>
    %294 = arith.subf %293, %287 : vector<8x128xf32>
    %295 = arith.mulf %294, %292 : vector<8x128xf32>
    %296 = arith.mulf %287, %194 : vector<8x128xf32>
    %297 = arith.addf %295, %296 : vector<8x128xf32>
    %c1_111 = arith.constant 1 : index
    %c0_112 = arith.constant 0 : index
    %c0_113 = arith.constant 0 : index
    %298 = vector.load %arg4[%c1_111, %c0_112, %c0_113] : memref<2x128x384xf32, #tpu.memory_space<vmem>>, vector<1x128x384xf32>
    %299 = vector.shape_cast %298 : vector<1x128x384xf32> to vector<128x384xf32>
    %cst_114 = arith.constant dense<0.000000e+00> : vector<8x384xf32>
    %300 = tpu.matmul %297, %299, %cst_114 {dimension_numbers = #tpu.dot_dimension_numbers<[1], [0], [0], [1], [0, 0, 1, 1], [], []>} : vector<8x128xf32>, vector<128x384xf32>, vector<8x384xf32> -> vector<8x384xf32>
    %301 = arith.addf %300, %7 : vector<8x384xf32>
    %c2_115 = arith.constant 2 : index
    %c0_116 = arith.constant 0 : index
    %c0_117 = arith.constant 0 : index
    %302 = vector.load %arg3[%c2_115, %c0_116, %c0_117] : memref<3x128x384xf32, #tpu.memory_space<vmem>>, vector<1x128x384xf32>
    %303 = vector.shape_cast %302 : vector<1x128x384xf32> to vector<128x384xf32>
    %cst_118 = arith.constant dense<0.000000e+00> : vector<8x384xf32>
    %304 = tpu.matmul %228, %303, %cst_118 {dimension_numbers = #tpu.dot_dimension_numbers<[1], [0], [0], [1], [0, 0, 1, 1], [], []>} : vector<8x128xf32>, vector<128x384xf32>, vector<8x384xf32> -> vector<8x384xf32>
    %305 = arith.addf %304, %19 : vector<8x384xf32>
    %306 = vector.extract_strided_slice %301 {offsets = [0, 0], sizes = [8, 128], strides = [1, 1]} : vector<8x384xf32> to vector<8x128xf32>
    %307 = vector.extract_strided_slice %305 {offsets = [0, 0], sizes = [8, 128], strides = [1, 1]} : vector<8x384xf32> to vector<8x128xf32>
    %308 = arith.addf %306, %307 : vector<8x128xf32>
    %309 = arith.negf %308 : vector<8x128xf32>
    %310 = math.exp %309 : vector<8x128xf32>
    %cst_119 = arith.constant 1.000000e+00 : f32
    %311 = vector.broadcast %cst_119 : f32 to vector<8x128xf32>
    %312 = arith.addf %311, %310 : vector<8x128xf32>
    %313 = arith.divf %311, %312 : vector<8x128xf32>
    %314 = vector.extract_strided_slice %301 {offsets = [0, 128], sizes = [8, 128], strides = [1, 1]} : vector<8x384xf32> to vector<8x128xf32>
    %315 = vector.extract_strided_slice %305 {offsets = [0, 128], sizes = [8, 128], strides = [1, 1]} : vector<8x384xf32> to vector<8x128xf32>
    %316 = arith.addf %314, %315 : vector<8x128xf32>
    %317 = arith.negf %316 : vector<8x128xf32>
    %318 = math.exp %317 : vector<8x128xf32>
    %cst_120 = arith.constant 1.000000e+00 : f32
    %319 = vector.broadcast %cst_120 : f32 to vector<8x128xf32>
    %320 = arith.addf %319, %318 : vector<8x128xf32>
    %321 = arith.divf %319, %320 : vector<8x128xf32>
    %322 = vector.extract_strided_slice %301 {offsets = [0, 256], sizes = [8, 128], strides = [1, 1]} : vector<8x384xf32> to vector<8x128xf32>
    %323 = vector.extract_strided_slice %305 {offsets = [0, 256], sizes = [8, 128], strides = [1, 1]} : vector<8x384xf32> to vector<8x128xf32>
    %324 = arith.mulf %313, %323 : vector<8x128xf32>
    %325 = arith.addf %322, %324 : vector<8x128xf32>
    %326 = math.tanh %325 : vector<8x128xf32>
    %cst_121 = arith.constant 1.000000e+00 : f32
    %327 = vector.broadcast %cst_121 : f32 to vector<8x128xf32>
    %328 = arith.subf %327, %321 : vector<8x128xf32>
    %329 = arith.mulf %328, %326 : vector<8x128xf32>
    %330 = arith.mulf %321, %228 : vector<8x128xf32>
    %331 = arith.addf %329, %330 : vector<8x128xf32>
    %c2_122 = arith.constant 2 : index
    %c0_123 = arith.constant 0 : index
    %c0_124 = arith.constant 0 : index
    %332 = vector.load %arg7[%c2_122, %c0_123, %c0_124] : memref<8x8x128xf32, #tpu.memory_space<vmem>>, vector<1x8x128xf32>
    %333 = vector.shape_cast %332 : vector<1x8x128xf32> to vector<8x128xf32>
    %334 = vector.shape_cast %331 : vector<8x128xf32> to vector<1x8x128xf32>
    tpu.vector_store %arg7[%c2_122, %c0_123, %c0_124], %334 {strides = array<i32>} : memref<8x8x128xf32, #tpu.memory_space<vmem>>, vector<1x8x128xf32>,
    %c3 = arith.constant 3 : index
    %c0_125 = arith.constant 0 : index
    %c0_126 = arith.constant 0 : index
    %335 = vector.load %arg1[%c3, %c0_125, %c0_126] : memref<8x8x384xf32, #tpu.memory_space<vmem>>, vector<1x8x384xf32>
    %336 = vector.shape_cast %335 : vector<1x8x384xf32> to vector<8x384xf32>
    %c0_127 = arith.constant 0 : index
    %c0_128 = arith.constant 0 : index
    %c0_129 = arith.constant 0 : index
    %337 = vector.load %arg3[%c0_127, %c0_128, %c0_129] : memref<3x128x384xf32, #tpu.memory_space<vmem>>, vector<1x128x384xf32>
    %338 = vector.shape_cast %337 : vector<1x128x384xf32> to vector<128x384xf32>
    %cst_130 = arith.constant dense<0.000000e+00> : vector<8x384xf32>
    %339 = tpu.matmul %263, %338, %cst_130 {dimension_numbers = #tpu.dot_dimension_numbers<[1], [0], [0], [1], [0, 0, 1, 1], [], []>} : vector<8x128xf32>, vector<128x384xf32>, vector<8x384xf32> -> vector<8x384xf32>
    %340 = arith.addf %339, %11 : vector<8x384xf32>
    %341 = vector.extract_strided_slice %336 {offsets = [0, 0], sizes = [8, 128], strides = [1, 1]} : vector<8x384xf32> to vector<8x128xf32>
    %342 = vector.extract_strided_slice %340 {offsets = [0, 0], sizes = [8, 128], strides = [1, 1]} : vector<8x384xf32> to vector<8x128xf32>
    %343 = arith.addf %341, %342 : vector<8x128xf32>
    %344 = arith.negf %343 : vector<8x128xf32>
    %345 = math.exp %344 : vector<8x128xf32>
    %cst_131 = arith.constant 1.000000e+00 : f32
    %346 = vector.broadcast %cst_131 : f32 to vector<8x128xf32>
    %347 = arith.addf %346, %345 : vector<8x128xf32>
    %348 = arith.divf %346, %347 : vector<8x128xf32>
    %349 = vector.extract_strided_slice %336 {offsets = [0, 128], sizes = [8, 128], strides = [1, 1]} : vector<8x384xf32> to vector<8x128xf32>
    %350 = vector.extract_strided_slice %340 {offsets = [0, 128], sizes = [8, 128], strides = [1, 1]} : vector<8x384xf32> to vector<8x128xf32>
    %351 = arith.addf %349, %350 : vector<8x128xf32>
    %352 = arith.negf %351 : vector<8x128xf32>
    %353 = math.exp %352 : vector<8x128xf32>
    %cst_132 = arith.constant 1.000000e+00 : f32
    %354 = vector.broadcast %cst_132 : f32 to vector<8x128xf32>
    %355 = arith.addf %354, %353 : vector<8x128xf32>
    %356 = arith.divf %354, %355 : vector<8x128xf32>
    %357 = vector.extract_strided_slice %336 {offsets = [0, 256], sizes = [8, 128], strides = [1, 1]} : vector<8x384xf32> to vector<8x128xf32>
    %358 = vector.extract_strided_slice %340 {offsets = [0, 256], sizes = [8, 128], strides = [1, 1]} : vector<8x384xf32> to vector<8x128xf32>
    %359 = arith.mulf %348, %358 : vector<8x128xf32>
    %360 = arith.addf %357, %359 : vector<8x128xf32>
    %361 = math.tanh %360 : vector<8x128xf32>
    %cst_133 = arith.constant 1.000000e+00 : f32
    %362 = vector.broadcast %cst_133 : f32 to vector<8x128xf32>
    %363 = arith.subf %362, %356 : vector<8x128xf32>
    %364 = arith.mulf %363, %361 : vector<8x128xf32>
    %365 = arith.mulf %356, %263 : vector<8x128xf32>
    %366 = arith.addf %364, %365 : vector<8x128xf32>
    %c0_134 = arith.constant 0 : index
    %c0_135 = arith.constant 0 : index
    %c0_136 = arith.constant 0 : index
    %367 = vector.load %arg4[%c0_134, %c0_135, %c0_136] : memref<2x128x384xf32, #tpu.memory_space<vmem>>, vector<1x128x384xf32>
    %368 = vector.shape_cast %367 : vector<1x128x384xf32> to vector<128x384xf32>
    %cst_137 = arith.constant dense<0.000000e+00> : vector<8x384xf32>
    %369 = tpu.matmul %366, %368, %cst_137 {dimension_numbers = #tpu.dot_dimension_numbers<[1], [0], [0], [1], [0, 0, 1, 1], [], []>} : vector<8x128xf32>, vector<128x384xf32>, vector<8x384xf32> -> vector<8x384xf32>
    %370 = arith.addf %369, %3 : vector<8x384xf32>
    %c1_138 = arith.constant 1 : index
    %c0_139 = arith.constant 0 : index
    %c0_140 = arith.constant 0 : index
    %371 = vector.load %arg3[%c1_138, %c0_139, %c0_140] : memref<3x128x384xf32, #tpu.memory_space<vmem>>, vector<1x128x384xf32>
    %372 = vector.shape_cast %371 : vector<1x128x384xf32> to vector<128x384xf32>
    %cst_141 = arith.constant dense<0.000000e+00> : vector<8x384xf32>
    %373 = tpu.matmul %297, %372, %cst_141 {dimension_numbers = #tpu.dot_dimension_numbers<[1], [0], [0], [1], [0, 0, 1, 1], [], []>} : vector<8x128xf32>, vector<128x384xf32>, vector<8x384xf32> -> vector<8x384xf32>
    %374 = arith.addf %373, %15 : vector<8x384xf32>
    %375 = vector.extract_strided_slice %370 {offsets = [0, 0], sizes = [8, 128], strides = [1, 1]} : vector<8x384xf32> to vector<8x128xf32>
    %376 = vector.extract_strided_slice %374 {offsets = [0, 0], sizes = [8, 128], strides = [1, 1]} : vector<8x384xf32> to vector<8x128xf32>
    %377 = arith.addf %375, %376 : vector<8x128xf32>
    %378 = arith.negf %377 : vector<8x128xf32>
    %379 = math.exp %378 : vector<8x128xf32>
    %cst_142 = arith.constant 1.000000e+00 : f32
    %380 = vector.broadcast %cst_142 : f32 to vector<8x128xf32>
    %381 = arith.addf %380, %379 : vector<8x128xf32>
    %382 = arith.divf %380, %381 : vector<8x128xf32>
    %383 = vector.extract_strided_slice %370 {offsets = [0, 128], sizes = [8, 128], strides = [1, 1]} : vector<8x384xf32> to vector<8x128xf32>
    %384 = vector.extract_strided_slice %374 {offsets = [0, 128], sizes = [8, 128], strides = [1, 1]} : vector<8x384xf32> to vector<8x128xf32>
    %385 = arith.addf %383, %384 : vector<8x128xf32>
    %386 = arith.negf %385 : vector<8x128xf32>
    %387 = math.exp %386 : vector<8x128xf32>
    %cst_143 = arith.constant 1.000000e+00 : f32
    %388 = vector.broadcast %cst_143 : f32 to vector<8x128xf32>
    %389 = arith.addf %388, %387 : vector<8x128xf32>
    %390 = arith.divf %388, %389 : vector<8x128xf32>
    %391 = vector.extract_strided_slice %370 {offsets = [0, 256], sizes = [8, 128], strides = [1, 1]} : vector<8x384xf32> to vector<8x128xf32>
    %392 = vector.extract_strided_slice %374 {offsets = [0, 256], sizes = [8, 128], strides = [1, 1]} : vector<8x384xf32> to vector<8x128xf32>
    %393 = arith.mulf %382, %392 : vector<8x128xf32>
    %394 = arith.addf %391, %393 : vector<8x128xf32>
    %395 = math.tanh %394 : vector<8x128xf32>
    %cst_144 = arith.constant 1.000000e+00 : f32
    %396 = vector.broadcast %cst_144 : f32 to vector<8x128xf32>
    %397 = arith.subf %396, %390 : vector<8x128xf32>
    %398 = arith.mulf %397, %395 : vector<8x128xf32>
    %399 = arith.mulf %390, %297 : vector<8x128xf32>
    %400 = arith.addf %398, %399 : vector<8x128xf32>
    %c1_145 = arith.constant 1 : index
    %c0_146 = arith.constant 0 : index
    %c0_147 = arith.constant 0 : index
    %401 = vector.load %arg4[%c1_145, %c0_146, %c0_147] : memref<2x128x384xf32, #tpu.memory_space<vmem>>, vector<1x128x384xf32>
    %402 = vector.shape_cast %401 : vector<1x128x384xf32> to vector<128x384xf32>
    %cst_148 = arith.constant dense<0.000000e+00> : vector<8x384xf32>
    %403 = tpu.matmul %400, %402, %cst_148 {dimension_numbers = #tpu.dot_dimension_numbers<[1], [0], [0], [1], [0, 0, 1, 1], [], []>} : vector<8x128xf32>, vector<128x384xf32>, vector<8x384xf32> -> vector<8x384xf32>
    %404 = arith.addf %403, %7 : vector<8x384xf32>
    %c2_149 = arith.constant 2 : index
    %c0_150 = arith.constant 0 : index
    %c0_151 = arith.constant 0 : index
    %405 = vector.load %arg3[%c2_149, %c0_150, %c0_151] : memref<3x128x384xf32, #tpu.memory_space<vmem>>, vector<1x128x384xf32>
    %406 = vector.shape_cast %405 : vector<1x128x384xf32> to vector<128x384xf32>
    %cst_152 = arith.constant dense<0.000000e+00> : vector<8x384xf32>
    %407 = tpu.matmul %331, %406, %cst_152 {dimension_numbers = #tpu.dot_dimension_numbers<[1], [0], [0], [1], [0, 0, 1, 1], [], []>} : vector<8x128xf32>, vector<128x384xf32>, vector<8x384xf32> -> vector<8x384xf32>
    %408 = arith.addf %407, %19 : vector<8x384xf32>
    %409 = vector.extract_strided_slice %404 {offsets = [0, 0], sizes = [8, 128], strides = [1, 1]} : vector<8x384xf32> to vector<8x128xf32>
    %410 = vector.extract_strided_slice %408 {offsets = [0, 0], sizes = [8, 128], strides = [1, 1]} : vector<8x384xf32> to vector<8x128xf32>
    %411 = arith.addf %409, %410 : vector<8x128xf32>
    %412 = arith.negf %411 : vector<8x128xf32>
    %413 = math.exp %412 : vector<8x128xf32>
    %cst_153 = arith.constant 1.000000e+00 : f32
    %414 = vector.broadcast %cst_153 : f32 to vector<8x128xf32>
    %415 = arith.addf %414, %413 : vector<8x128xf32>
    %416 = arith.divf %414, %415 : vector<8x128xf32>
    %417 = vector.extract_strided_slice %404 {offsets = [0, 128], sizes = [8, 128], strides = [1, 1]} : vector<8x384xf32> to vector<8x128xf32>
    %418 = vector.extract_strided_slice %408 {offsets = [0, 128], sizes = [8, 128], strides = [1, 1]} : vector<8x384xf32> to vector<8x128xf32>
    %419 = arith.addf %417, %418 : vector<8x128xf32>
    %420 = arith.negf %419 : vector<8x128xf32>
    %421 = math.exp %420 : vector<8x128xf32>
    %cst_154 = arith.constant 1.000000e+00 : f32
    %422 = vector.broadcast %cst_154 : f32 to vector<8x128xf32>
    %423 = arith.addf %422, %421 : vector<8x128xf32>
    %424 = arith.divf %422, %423 : vector<8x128xf32>
    %425 = vector.extract_strided_slice %404 {offsets = [0, 256], sizes = [8, 128], strides = [1, 1]} : vector<8x384xf32> to vector<8x128xf32>
    %426 = vector.extract_strided_slice %408 {offsets = [0, 256], sizes = [8, 128], strides = [1, 1]} : vector<8x384xf32> to vector<8x128xf32>
    %427 = arith.mulf %416, %426 : vector<8x128xf32>
    %428 = arith.addf %425, %427 : vector<8x128xf32>
    %429 = math.tanh %428 : vector<8x128xf32>
    %cst_155 = arith.constant 1.000000e+00 : f32
    %430 = vector.broadcast %cst_155 : f32 to vector<8x128xf32>
    %431 = arith.subf %430, %424 : vector<8x128xf32>
    %432 = arith.mulf %431, %429 : vector<8x128xf32>
    %433 = arith.mulf %424, %331 : vector<8x128xf32>
    %434 = arith.addf %432, %433 : vector<8x128xf32>
    %c3_156 = arith.constant 3 : index
    %c0_157 = arith.constant 0 : index
    %c0_158 = arith.constant 0 : index
    %435 = vector.load %arg7[%c3_156, %c0_157, %c0_158] : memref<8x8x128xf32, #tpu.memory_space<vmem>>, vector<1x8x128xf32>
    %436 = vector.shape_cast %435 : vector<1x8x128xf32> to vector<8x128xf32>
    %437 = vector.shape_cast %434 : vector<8x128xf32> to vector<1x8x128xf32>
    tpu.vector_store %arg7[%c3_156, %c0_157, %c0_158], %437 {strides = array<i32>} : memref<8x8x128xf32, #tpu.memory_space<vmem>>, vector<1x8x128xf32>,
    %c4 = arith.constant 4 : index
    %c0_159 = arith.constant 0 : index
    %c0_160 = arith.constant 0 : index
    %438 = vector.load %arg1[%c4, %c0_159, %c0_160] : memref<8x8x384xf32, #tpu.memory_space<vmem>>, vector<1x8x384xf32>
    %439 = vector.shape_cast %438 : vector<1x8x384xf32> to vector<8x384xf32>
    %c0_161 = arith.constant 0 : index
    %c0_162 = arith.constant 0 : index
    %c0_163 = arith.constant 0 : index
    %440 = vector.load %arg3[%c0_161, %c0_162, %c0_163] : memref<3x128x384xf32, #tpu.memory_space<vmem>>, vector<1x128x384xf32>
    %441 = vector.shape_cast %440 : vector<1x128x384xf32> to vector<128x384xf32>
    %cst_164 = arith.constant dense<0.000000e+00> : vector<8x384xf32>
    %442 = tpu.matmul %366, %441, %cst_164 {dimension_numbers = #tpu.dot_dimension_numbers<[1], [0], [0], [1], [0, 0, 1, 1], [], []>} : vector<8x128xf32>, vector<128x384xf32>, vector<8x384xf32> -> vector<8x384xf32>
    %443 = arith.addf %442, %11 : vector<8x384xf32>
    %444 = vector.extract_strided_slice %439 {offsets = [0, 0], sizes = [8, 128], strides = [1, 1]} : vector<8x384xf32> to vector<8x128xf32>
    %445 = vector.extract_strided_slice %443 {offsets = [0, 0], sizes = [8, 128], strides = [1, 1]} : vector<8x384xf32> to vector<8x128xf32>
    %446 = arith.addf %444, %445 : vector<8x128xf32>
    %447 = arith.negf %446 : vector<8x128xf32>
    %448 = math.exp %447 : vector<8x128xf32>
    %cst_165 = arith.constant 1.000000e+00 : f32
    %449 = vector.broadcast %cst_165 : f32 to vector<8x128xf32>
    %450 = arith.addf %449, %448 : vector<8x128xf32>
    %451 = arith.divf %449, %450 : vector<8x128xf32>
    %452 = vector.extract_strided_slice %439 {offsets = [0, 128], sizes = [8, 128], strides = [1, 1]} : vector<8x384xf32> to vector<8x128xf32>
    %453 = vector.extract_strided_slice %443 {offsets = [0, 128], sizes = [8, 128], strides = [1, 1]} : vector<8x384xf32> to vector<8x128xf32>
    %454 = arith.addf %452, %453 : vector<8x128xf32>
    %455 = arith.negf %454 : vector<8x128xf32>
    %456 = math.exp %455 : vector<8x128xf32>
    %cst_166 = arith.constant 1.000000e+00 : f32
    %457 = vector.broadcast %cst_166 : f32 to vector<8x128xf32>
    %458 = arith.addf %457, %456 : vector<8x128xf32>
    %459 = arith.divf %457, %458 : vector<8x128xf32>
    %460 = vector.extract_strided_slice %439 {offsets = [0, 256], sizes = [8, 128], strides = [1, 1]} : vector<8x384xf32> to vector<8x128xf32>
    %461 = vector.extract_strided_slice %443 {offsets = [0, 256], sizes = [8, 128], strides = [1, 1]} : vector<8x384xf32> to vector<8x128xf32>
    %462 = arith.mulf %451, %461 : vector<8x128xf32>
    %463 = arith.addf %460, %462 : vector<8x128xf32>
    %464 = math.tanh %463 : vector<8x128xf32>
    %cst_167 = arith.constant 1.000000e+00 : f32
    %465 = vector.broadcast %cst_167 : f32 to vector<8x128xf32>
    %466 = arith.subf %465, %459 : vector<8x128xf32>
    %467 = arith.mulf %466, %464 : vector<8x128xf32>
    %468 = arith.mulf %459, %366 : vector<8x128xf32>
    %469 = arith.addf %467, %468 : vector<8x128xf32>
    %c0_168 = arith.constant 0 : index
    %c0_169 = arith.constant 0 : index
    %c0_170 = arith.constant 0 : index
    %470 = vector.load %arg4[%c0_168, %c0_169, %c0_170] : memref<2x128x384xf32, #tpu.memory_space<vmem>>, vector<1x128x384xf32>
    %471 = vector.shape_cast %470 : vector<1x128x384xf32> to vector<128x384xf32>
    %cst_171 = arith.constant dense<0.000000e+00> : vector<8x384xf32>
    %472 = tpu.matmul %469, %471, %cst_171 {dimension_numbers = #tpu.dot_dimension_numbers<[1], [0], [0], [1], [0, 0, 1, 1], [], []>} : vector<8x128xf32>, vector<128x384xf32>, vector<8x384xf32> -> vector<8x384xf32>
    %473 = arith.addf %472, %3 : vector<8x384xf32>
    %c1_172 = arith.constant 1 : index
    %c0_173 = arith.constant 0 : index
    %c0_174 = arith.constant 0 : index
    %474 = vector.load %arg3[%c1_172, %c0_173, %c0_174] : memref<3x128x384xf32, #tpu.memory_space<vmem>>, vector<1x128x384xf32>
    %475 = vector.shape_cast %474 : vector<1x128x384xf32> to vector<128x384xf32>
    %cst_175 = arith.constant dense<0.000000e+00> : vector<8x384xf32>
    %476 = tpu.matmul %400, %475, %cst_175 {dimension_numbers = #tpu.dot_dimension_numbers<[1], [0], [0], [1], [0, 0, 1, 1], [], []>} : vector<8x128xf32>, vector<128x384xf32>, vector<8x384xf32> -> vector<8x384xf32>
    %477 = arith.addf %476, %15 : vector<8x384xf32>
    %478 = vector.extract_strided_slice %473 {offsets = [0, 0], sizes = [8, 128], strides = [1, 1]} : vector<8x384xf32> to vector<8x128xf32>
    %479 = vector.extract_strided_slice %477 {offsets = [0, 0], sizes = [8, 128], strides = [1, 1]} : vector<8x384xf32> to vector<8x128xf32>
    %480 = arith.addf %478, %479 : vector<8x128xf32>
    %481 = arith.negf %480 : vector<8x128xf32>
    %482 = math.exp %481 : vector<8x128xf32>
    %cst_176 = arith.constant 1.000000e+00 : f32
    %483 = vector.broadcast %cst_176 : f32 to vector<8x128xf32>
    %484 = arith.addf %483, %482 : vector<8x128xf32>
    %485 = arith.divf %483, %484 : vector<8x128xf32>
    %486 = vector.extract_strided_slice %473 {offsets = [0, 128], sizes = [8, 128], strides = [1, 1]} : vector<8x384xf32> to vector<8x128xf32>
    %487 = vector.extract_strided_slice %477 {offsets = [0, 128], sizes = [8, 128], strides = [1, 1]} : vector<8x384xf32> to vector<8x128xf32>
    %488 = arith.addf %486, %487 : vector<8x128xf32>
    %489 = arith.negf %488 : vector<8x128xf32>
    %490 = math.exp %489 : vector<8x128xf32>
    %cst_177 = arith.constant 1.000000e+00 : f32
    %491 = vector.broadcast %cst_177 : f32 to vector<8x128xf32>
    %492 = arith.addf %491, %490 : vector<8x128xf32>
    %493 = arith.divf %491, %492 : vector<8x128xf32>
    %494 = vector.extract_strided_slice %473 {offsets = [0, 256], sizes = [8, 128], strides = [1, 1]} : vector<8x384xf32> to vector<8x128xf32>
    %495 = vector.extract_strided_slice %477 {offsets = [0, 256], sizes = [8, 128], strides = [1, 1]} : vector<8x384xf32> to vector<8x128xf32>
    %496 = arith.mulf %485, %495 : vector<8x128xf32>
    %497 = arith.addf %494, %496 : vector<8x128xf32>
    %498 = math.tanh %497 : vector<8x128xf32>
    %cst_178 = arith.constant 1.000000e+00 : f32
    %499 = vector.broadcast %cst_178 : f32 to vector<8x128xf32>
    %500 = arith.subf %499, %493 : vector<8x128xf32>
    %501 = arith.mulf %500, %498 : vector<8x128xf32>
    %502 = arith.mulf %493, %400 : vector<8x128xf32>
    %503 = arith.addf %501, %502 : vector<8x128xf32>
    %c1_179 = arith.constant 1 : index
    %c0_180 = arith.constant 0 : index
    %c0_181 = arith.constant 0 : index
    %504 = vector.load %arg4[%c1_179, %c0_180, %c0_181] : memref<2x128x384xf32, #tpu.memory_space<vmem>>, vector<1x128x384xf32>
    %505 = vector.shape_cast %504 : vector<1x128x384xf32> to vector<128x384xf32>
    %cst_182 = arith.constant dense<0.000000e+00> : vector<8x384xf32>
    %506 = tpu.matmul %503, %505, %cst_182 {dimension_numbers = #tpu.dot_dimension_numbers<[1], [0], [0], [1], [0, 0, 1, 1], [], []>} : vector<8x128xf32>, vector<128x384xf32>, vector<8x384xf32> -> vector<8x384xf32>
    %507 = arith.addf %506, %7 : vector<8x384xf32>
    %c2_183 = arith.constant 2 : index
    %c0_184 = arith.constant 0 : index
    %c0_185 = arith.constant 0 : index
    %508 = vector.load %arg3[%c2_183, %c0_184, %c0_185] : memref<3x128x384xf32, #tpu.memory_space<vmem>>, vector<1x128x384xf32>
    %509 = vector.shape_cast %508 : vector<1x128x384xf32> to vector<128x384xf32>
    %cst_186 = arith.constant dense<0.000000e+00> : vector<8x384xf32>
    %510 = tpu.matmul %434, %509, %cst_186 {dimension_numbers = #tpu.dot_dimension_numbers<[1], [0], [0], [1], [0, 0, 1, 1], [], []>} : vector<8x128xf32>, vector<128x384xf32>, vector<8x384xf32> -> vector<8x384xf32>
    %511 = arith.addf %510, %19 : vector<8x384xf32>
    %512 = vector.extract_strided_slice %507 {offsets = [0, 0], sizes = [8, 128], strides = [1, 1]} : vector<8x384xf32> to vector<8x128xf32>
    %513 = vector.extract_strided_slice %511 {offsets = [0, 0], sizes = [8, 128], strides = [1, 1]} : vector<8x384xf32> to vector<8x128xf32>
    %514 = arith.addf %512, %513 : vector<8x128xf32>
    %515 = arith.negf %514 : vector<8x128xf32>
    %516 = math.exp %515 : vector<8x128xf32>
    %cst_187 = arith.constant 1.000000e+00 : f32
    %517 = vector.broadcast %cst_187 : f32 to vector<8x128xf32>
    %518 = arith.addf %517, %516 : vector<8x128xf32>
    %519 = arith.divf %517, %518 : vector<8x128xf32>
    %520 = vector.extract_strided_slice %507 {offsets = [0, 128], sizes = [8, 128], strides = [1, 1]} : vector<8x384xf32> to vector<8x128xf32>
    %521 = vector.extract_strided_slice %511 {offsets = [0, 128], sizes = [8, 128], strides = [1, 1]} : vector<8x384xf32> to vector<8x128xf32>
    %522 = arith.addf %520, %521 : vector<8x128xf32>
    %523 = arith.negf %522 : vector<8x128xf32>
    %524 = math.exp %523 : vector<8x128xf32>
    %cst_188 = arith.constant 1.000000e+00 : f32
    %525 = vector.broadcast %cst_188 : f32 to vector<8x128xf32>
    %526 = arith.addf %525, %524 : vector<8x128xf32>
    %527 = arith.divf %525, %526 : vector<8x128xf32>
    %528 = vector.extract_strided_slice %507 {offsets = [0, 256], sizes = [8, 128], strides = [1, 1]} : vector<8x384xf32> to vector<8x128xf32>
    %529 = vector.extract_strided_slice %511 {offsets = [0, 256], sizes = [8, 128], strides = [1, 1]} : vector<8x384xf32> to vector<8x128xf32>
    %530 = arith.mulf %519, %529 : vector<8x128xf32>
    %531 = arith.addf %528, %530 : vector<8x128xf32>
    %532 = math.tanh %531 : vector<8x128xf32>
    %cst_189 = arith.constant 1.000000e+00 : f32
    %533 = vector.broadcast %cst_189 : f32 to vector<8x128xf32>
    %534 = arith.subf %533, %527 : vector<8x128xf32>
    %535 = arith.mulf %534, %532 : vector<8x128xf32>
    %536 = arith.mulf %527, %434 : vector<8x128xf32>
    %537 = arith.addf %535, %536 : vector<8x128xf32>
    %c4_190 = arith.constant 4 : index
    %c0_191 = arith.constant 0 : index
    %c0_192 = arith.constant 0 : index
    %538 = vector.load %arg7[%c4_190, %c0_191, %c0_192] : memref<8x8x128xf32, #tpu.memory_space<vmem>>, vector<1x8x128xf32>
    %539 = vector.shape_cast %538 : vector<1x8x128xf32> to vector<8x128xf32>
    %540 = vector.shape_cast %537 : vector<8x128xf32> to vector<1x8x128xf32>
    tpu.vector_store %arg7[%c4_190, %c0_191, %c0_192], %540 {strides = array<i32>} : memref<8x8x128xf32, #tpu.memory_space<vmem>>, vector<1x8x128xf32>,
    %c5 = arith.constant 5 : index
    %c0_193 = arith.constant 0 : index
    %c0_194 = arith.constant 0 : index
    %541 = vector.load %arg1[%c5, %c0_193, %c0_194] : memref<8x8x384xf32, #tpu.memory_space<vmem>>, vector<1x8x384xf32>
    %542 = vector.shape_cast %541 : vector<1x8x384xf32> to vector<8x384xf32>
    %c0_195 = arith.constant 0 : index
    %c0_196 = arith.constant 0 : index
    %c0_197 = arith.constant 0 : index
    %543 = vector.load %arg3[%c0_195, %c0_196, %c0_197] : memref<3x128x384xf32, #tpu.memory_space<vmem>>, vector<1x128x384xf32>
    %544 = vector.shape_cast %543 : vector<1x128x384xf32> to vector<128x384xf32>
    %cst_198 = arith.constant dense<0.000000e+00> : vector<8x384xf32>
    %545 = tpu.matmul %469, %544, %cst_198 {dimension_numbers = #tpu.dot_dimension_numbers<[1], [0], [0], [1], [0, 0, 1, 1], [], []>} : vector<8x128xf32>, vector<128x384xf32>, vector<8x384xf32> -> vector<8x384xf32>
    %546 = arith.addf %545, %11 : vector<8x384xf32>
    %547 = vector.extract_strided_slice %542 {offsets = [0, 0], sizes = [8, 128], strides = [1, 1]} : vector<8x384xf32> to vector<8x128xf32>
    %548 = vector.extract_strided_slice %546 {offsets = [0, 0], sizes = [8, 128], strides = [1, 1]} : vector<8x384xf32> to vector<8x128xf32>
    %549 = arith.addf %547, %548 : vector<8x128xf32>
    %550 = arith.negf %549 : vector<8x128xf32>
    %551 = math.exp %550 : vector<8x128xf32>
    %cst_199 = arith.constant 1.000000e+00 : f32
    %552 = vector.broadcast %cst_199 : f32 to vector<8x128xf32>
    %553 = arith.addf %552, %551 : vector<8x128xf32>
    %554 = arith.divf %552, %553 : vector<8x128xf32>
    %555 = vector.extract_strided_slice %542 {offsets = [0, 128], sizes = [8, 128], strides = [1, 1]} : vector<8x384xf32> to vector<8x128xf32>
    %556 = vector.extract_strided_slice %546 {offsets = [0, 128], sizes = [8, 128], strides = [1, 1]} : vector<8x384xf32> to vector<8x128xf32>
    %557 = arith.addf %555, %556 : vector<8x128xf32>
    %558 = arith.negf %557 : vector<8x128xf32>
    %559 = math.exp %558 : vector<8x128xf32>
    %cst_200 = arith.constant 1.000000e+00 : f32
    %560 = vector.broadcast %cst_200 : f32 to vector<8x128xf32>
    %561 = arith.addf %560, %559 : vector<8x128xf32>
    %562 = arith.divf %560, %561 : vector<8x128xf32>
    %563 = vector.extract_strided_slice %542 {offsets = [0, 256], sizes = [8, 128], strides = [1, 1]} : vector<8x384xf32> to vector<8x128xf32>
    %564 = vector.extract_strided_slice %546 {offsets = [0, 256], sizes = [8, 128], strides = [1, 1]} : vector<8x384xf32> to vector<8x128xf32>
    %565 = arith.mulf %554, %564 : vector<8x128xf32>
    %566 = arith.addf %563, %565 : vector<8x128xf32>
    %567 = math.tanh %566 : vector<8x128xf32>
    %cst_201 = arith.constant 1.000000e+00 : f32
    %568 = vector.broadcast %cst_201 : f32 to vector<8x128xf32>
    %569 = arith.subf %568, %562 : vector<8x128xf32>
    %570 = arith.mulf %569, %567 : vector<8x128xf32>
    %571 = arith.mulf %562, %469 : vector<8x128xf32>
    %572 = arith.addf %570, %571 : vector<8x128xf32>
    %c0_202 = arith.constant 0 : index
    %c0_203 = arith.constant 0 : index
    %c0_204 = arith.constant 0 : index
    %573 = vector.load %arg4[%c0_202, %c0_203, %c0_204] : memref<2x128x384xf32, #tpu.memory_space<vmem>>, vector<1x128x384xf32>
    %574 = vector.shape_cast %573 : vector<1x128x384xf32> to vector<128x384xf32>
    %cst_205 = arith.constant dense<0.000000e+00> : vector<8x384xf32>
    %575 = tpu.matmul %572, %574, %cst_205 {dimension_numbers = #tpu.dot_dimension_numbers<[1], [0], [0], [1], [0, 0, 1, 1], [], []>} : vector<8x128xf32>, vector<128x384xf32>, vector<8x384xf32> -> vector<8x384xf32>
    %576 = arith.addf %575, %3 : vector<8x384xf32>
    %c1_206 = arith.constant 1 : index
    %c0_207 = arith.constant 0 : index
    %c0_208 = arith.constant 0 : index
    %577 = vector.load %arg3[%c1_206, %c0_207, %c0_208] : memref<3x128x384xf32, #tpu.memory_space<vmem>>, vector<1x128x384xf32>
    %578 = vector.shape_cast %577 : vector<1x128x384xf32> to vector<128x384xf32>
    %cst_209 = arith.constant dense<0.000000e+00> : vector<8x384xf32>
    %579 = tpu.matmul %503, %578, %cst_209 {dimension_numbers = #tpu.dot_dimension_numbers<[1], [0], [0], [1], [0, 0, 1, 1], [], []>} : vector<8x128xf32>, vector<128x384xf32>, vector<8x384xf32> -> vector<8x384xf32>
    %580 = arith.addf %579, %15 : vector<8x384xf32>
    %581 = vector.extract_strided_slice %576 {offsets = [0, 0], sizes = [8, 128], strides = [1, 1]} : vector<8x384xf32> to vector<8x128xf32>
    %582 = vector.extract_strided_slice %580 {offsets = [0, 0], sizes = [8, 128], strides = [1, 1]} : vector<8x384xf32> to vector<8x128xf32>
    %583 = arith.addf %581, %582 : vector<8x128xf32>
    %584 = arith.negf %583 : vector<8x128xf32>
    %585 = math.exp %584 : vector<8x128xf32>
    %cst_210 = arith.constant 1.000000e+00 : f32
    %586 = vector.broadcast %cst_210 : f32 to vector<8x128xf32>
    %587 = arith.addf %586, %585 : vector<8x128xf32>
    %588 = arith.divf %586, %587 : vector<8x128xf32>
    %589 = vector.extract_strided_slice %576 {offsets = [0, 128], sizes = [8, 128], strides = [1, 1]} : vector<8x384xf32> to vector<8x128xf32>
    %590 = vector.extract_strided_slice %580 {offsets = [0, 128], sizes = [8, 128], strides = [1, 1]} : vector<8x384xf32> to vector<8x128xf32>
    %591 = arith.addf %589, %590 : vector<8x128xf32>
    %592 = arith.negf %591 : vector<8x128xf32>
    %593 = math.exp %592 : vector<8x128xf32>
    %cst_211 = arith.constant 1.000000e+00 : f32
    %594 = vector.broadcast %cst_211 : f32 to vector<8x128xf32>
    %595 = arith.addf %594, %593 : vector<8x128xf32>
    %596 = arith.divf %594, %595 : vector<8x128xf32>
    %597 = vector.extract_strided_slice %576 {offsets = [0, 256], sizes = [8, 128], strides = [1, 1]} : vector<8x384xf32> to vector<8x128xf32>
    %598 = vector.extract_strided_slice %580 {offsets = [0, 256], sizes = [8, 128], strides = [1, 1]} : vector<8x384xf32> to vector<8x128xf32>
    %599 = arith.mulf %588, %598 : vector<8x128xf32>
    %600 = arith.addf %597, %599 : vector<8x128xf32>
    %601 = math.tanh %600 : vector<8x128xf32>
    %cst_212 = arith.constant 1.000000e+00 : f32
    %602 = vector.broadcast %cst_212 : f32 to vector<8x128xf32>
    %603 = arith.subf %602, %596 : vector<8x128xf32>
    %604 = arith.mulf %603, %601 : vector<8x128xf32>
    %605 = arith.mulf %596, %503 : vector<8x128xf32>
    %606 = arith.addf %604, %605 : vector<8x128xf32>
    %c1_213 = arith.constant 1 : index
    %c0_214 = arith.constant 0 : index
    %c0_215 = arith.constant 0 : index
    %607 = vector.load %arg4[%c1_213, %c0_214, %c0_215] : memref<2x128x384xf32, #tpu.memory_space<vmem>>, vector<1x128x384xf32>
    %608 = vector.shape_cast %607 : vector<1x128x384xf32> to vector<128x384xf32>
    %cst_216 = arith.constant dense<0.000000e+00> : vector<8x384xf32>
    %609 = tpu.matmul %606, %608, %cst_216 {dimension_numbers = #tpu.dot_dimension_numbers<[1], [0], [0], [1], [0, 0, 1, 1], [], []>} : vector<8x128xf32>, vector<128x384xf32>, vector<8x384xf32> -> vector<8x384xf32>
    %610 = arith.addf %609, %7 : vector<8x384xf32>
    %c2_217 = arith.constant 2 : index
    %c0_218 = arith.constant 0 : index
    %c0_219 = arith.constant 0 : index
    %611 = vector.load %arg3[%c2_217, %c0_218, %c0_219] : memref<3x128x384xf32, #tpu.memory_space<vmem>>, vector<1x128x384xf32>
    %612 = vector.shape_cast %611 : vector<1x128x384xf32> to vector<128x384xf32>
    %cst_220 = arith.constant dense<0.000000e+00> : vector<8x384xf32>
    %613 = tpu.matmul %537, %612, %cst_220 {dimension_numbers = #tpu.dot_dimension_numbers<[1], [0], [0], [1], [0, 0, 1, 1], [], []>} : vector<8x128xf32>, vector<128x384xf32>, vector<8x384xf32> -> vector<8x384xf32>
    %614 = arith.addf %613, %19 : vector<8x384xf32>
    %615 = vector.extract_strided_slice %610 {offsets = [0, 0], sizes = [8, 128], strides = [1, 1]} : vector<8x384xf32> to vector<8x128xf32>
    %616 = vector.extract_strided_slice %614 {offsets = [0, 0], sizes = [8, 128], strides = [1, 1]} : vector<8x384xf32> to vector<8x128xf32>
    %617 = arith.addf %615, %616 : vector<8x128xf32>
    %618 = arith.negf %617 : vector<8x128xf32>
    %619 = math.exp %618 : vector<8x128xf32>
    %cst_221 = arith.constant 1.000000e+00 : f32
    %620 = vector.broadcast %cst_221 : f32 to vector<8x128xf32>
    %621 = arith.addf %620, %619 : vector<8x128xf32>
    %622 = arith.divf %620, %621 : vector<8x128xf32>
    %623 = vector.extract_strided_slice %610 {offsets = [0, 128], sizes = [8, 128], strides = [1, 1]} : vector<8x384xf32> to vector<8x128xf32>
    %624 = vector.extract_strided_slice %614 {offsets = [0, 128], sizes = [8, 128], strides = [1, 1]} : vector<8x384xf32> to vector<8x128xf32>
    %625 = arith.addf %623, %624 : vector<8x128xf32>
    %626 = arith.negf %625 : vector<8x128xf32>
    %627 = math.exp %626 : vector<8x128xf32>
    %cst_222 = arith.constant 1.000000e+00 : f32
    %628 = vector.broadcast %cst_222 : f32 to vector<8x128xf32>
    %629 = arith.addf %628, %627 : vector<8x128xf32>
    %630 = arith.divf %628, %629 : vector<8x128xf32>
    %631 = vector.extract_strided_slice %610 {offsets = [0, 256], sizes = [8, 128], strides = [1, 1]} : vector<8x384xf32> to vector<8x128xf32>
    %632 = vector.extract_strided_slice %614 {offsets = [0, 256], sizes = [8, 128], strides = [1, 1]} : vector<8x384xf32> to vector<8x128xf32>
    %633 = arith.mulf %622, %632 : vector<8x128xf32>
    %634 = arith.addf %631, %633 : vector<8x128xf32>
    %635 = math.tanh %634 : vector<8x128xf32>
    %cst_223 = arith.constant 1.000000e+00 : f32
    %636 = vector.broadcast %cst_223 : f32 to vector<8x128xf32>
    %637 = arith.subf %636, %630 : vector<8x128xf32>
    %638 = arith.mulf %637, %635 : vector<8x128xf32>
    %639 = arith.mulf %630, %537 : vector<8x128xf32>
    %640 = arith.addf %638, %639 : vector<8x128xf32>
    %c5_224 = arith.constant 5 : index
    %c0_225 = arith.constant 0 : index
    %c0_226 = arith.constant 0 : index
    %641 = vector.load %arg7[%c5_224, %c0_225, %c0_226] : memref<8x8x128xf32, #tpu.memory_space<vmem>>, vector<1x8x128xf32>
    %642 = vector.shape_cast %641 : vector<1x8x128xf32> to vector<8x128xf32>
    %643 = vector.shape_cast %640 : vector<8x128xf32> to vector<1x8x128xf32>
    tpu.vector_store %arg7[%c5_224, %c0_225, %c0_226], %643 {strides = array<i32>} : memref<8x8x128xf32, #tpu.memory_space<vmem>>, vector<1x8x128xf32>,
    %c6 = arith.constant 6 : index
    %c0_227 = arith.constant 0 : index
    %c0_228 = arith.constant 0 : index
    %644 = vector.load %arg1[%c6, %c0_227, %c0_228] : memref<8x8x384xf32, #tpu.memory_space<vmem>>, vector<1x8x384xf32>
    %645 = vector.shape_cast %644 : vector<1x8x384xf32> to vector<8x384xf32>
    %c0_229 = arith.constant 0 : index
    %c0_230 = arith.constant 0 : index
    %c0_231 = arith.constant 0 : index
    %646 = vector.load %arg3[%c0_229, %c0_230, %c0_231] : memref<3x128x384xf32, #tpu.memory_space<vmem>>, vector<1x128x384xf32>
    %647 = vector.shape_cast %646 : vector<1x128x384xf32> to vector<128x384xf32>
    %cst_232 = arith.constant dense<0.000000e+00> : vector<8x384xf32>
    %648 = tpu.matmul %572, %647, %cst_232 {dimension_numbers = #tpu.dot_dimension_numbers<[1], [0], [0], [1], [0, 0, 1, 1], [], []>} : vector<8x128xf32>, vector<128x384xf32>, vector<8x384xf32> -> vector<8x384xf32>
    %649 = arith.addf %648, %11 : vector<8x384xf32>
    %650 = vector.extract_strided_slice %645 {offsets = [0, 0], sizes = [8, 128], strides = [1, 1]} : vector<8x384xf32> to vector<8x128xf32>
    %651 = vector.extract_strided_slice %649 {offsets = [0, 0], sizes = [8, 128], strides = [1, 1]} : vector<8x384xf32> to vector<8x128xf32>
    %652 = arith.addf %650, %651 : vector<8x128xf32>
    %653 = arith.negf %652 : vector<8x128xf32>
    %654 = math.exp %653 : vector<8x128xf32>
    %cst_233 = arith.constant 1.000000e+00 : f32
    %655 = vector.broadcast %cst_233 : f32 to vector<8x128xf32>
    %656 = arith.addf %655, %654 : vector<8x128xf32>
    %657 = arith.divf %655, %656 : vector<8x128xf32>
    %658 = vector.extract_strided_slice %645 {offsets = [0, 128], sizes = [8, 128], strides = [1, 1]} : vector<8x384xf32> to vector<8x128xf32>
    %659 = vector.extract_strided_slice %649 {offsets = [0, 128], sizes = [8, 128], strides = [1, 1]} : vector<8x384xf32> to vector<8x128xf32>
    %660 = arith.addf %658, %659 : vector<8x128xf32>
    %661 = arith.negf %660 : vector<8x128xf32>
    %662 = math.exp %661 : vector<8x128xf32>
    %cst_234 = arith.constant 1.000000e+00 : f32
    %663 = vector.broadcast %cst_234 : f32 to vector<8x128xf32>
    %664 = arith.addf %663, %662 : vector<8x128xf32>
    %665 = arith.divf %663, %664 : vector<8x128xf32>
    %666 = vector.extract_strided_slice %645 {offsets = [0, 256], sizes = [8, 128], strides = [1, 1]} : vector<8x384xf32> to vector<8x128xf32>
    %667 = vector.extract_strided_slice %649 {offsets = [0, 256], sizes = [8, 128], strides = [1, 1]} : vector<8x384xf32> to vector<8x128xf32>
    %668 = arith.mulf %657, %667 : vector<8x128xf32>
    %669 = arith.addf %666, %668 : vector<8x128xf32>
    %670 = math.tanh %669 : vector<8x128xf32>
    %cst_235 = arith.constant 1.000000e+00 : f32
    %671 = vector.broadcast %cst_235 : f32 to vector<8x128xf32>
    %672 = arith.subf %671, %665 : vector<8x128xf32>
    %673 = arith.mulf %672, %670 : vector<8x128xf32>
    %674 = arith.mulf %665, %572 : vector<8x128xf32>
    %675 = arith.addf %673, %674 : vector<8x128xf32>
    %c0_236 = arith.constant 0 : index
    %c0_237 = arith.constant 0 : index
    %c0_238 = arith.constant 0 : index
    %676 = vector.load %arg4[%c0_236, %c0_237, %c0_238] : memref<2x128x384xf32, #tpu.memory_space<vmem>>, vector<1x128x384xf32>
    %677 = vector.shape_cast %676 : vector<1x128x384xf32> to vector<128x384xf32>
    %cst_239 = arith.constant dense<0.000000e+00> : vector<8x384xf32>
    %678 = tpu.matmul %675, %677, %cst_239 {dimension_numbers = #tpu.dot_dimension_numbers<[1], [0], [0], [1], [0, 0, 1, 1], [], []>} : vector<8x128xf32>, vector<128x384xf32>, vector<8x384xf32> -> vector<8x384xf32>
    %679 = arith.addf %678, %3 : vector<8x384xf32>
    %c1_240 = arith.constant 1 : index
    %c0_241 = arith.constant 0 : index
    %c0_242 = arith.constant 0 : index
    %680 = vector.load %arg3[%c1_240, %c0_241, %c0_242] : memref<3x128x384xf32, #tpu.memory_space<vmem>>, vector<1x128x384xf32>
    %681 = vector.shape_cast %680 : vector<1x128x384xf32> to vector<128x384xf32>
    %cst_243 = arith.constant dense<0.000000e+00> : vector<8x384xf32>
    %682 = tpu.matmul %606, %681, %cst_243 {dimension_numbers = #tpu.dot_dimension_numbers<[1], [0], [0], [1], [0, 0, 1, 1], [], []>} : vector<8x128xf32>, vector<128x384xf32>, vector<8x384xf32> -> vector<8x384xf32>
    %683 = arith.addf %682, %15 : vector<8x384xf32>
    %684 = vector.extract_strided_slice %679 {offsets = [0, 0], sizes = [8, 128], strides = [1, 1]} : vector<8x384xf32> to vector<8x128xf32>
    %685 = vector.extract_strided_slice %683 {offsets = [0, 0], sizes = [8, 128], strides = [1, 1]} : vector<8x384xf32> to vector<8x128xf32>
    %686 = arith.addf %684, %685 : vector<8x128xf32>
    %687 = arith.negf %686 : vector<8x128xf32>
    %688 = math.exp %687 : vector<8x128xf32>
    %cst_244 = arith.constant 1.000000e+00 : f32
    %689 = vector.broadcast %cst_244 : f32 to vector<8x128xf32>
    %690 = arith.addf %689, %688 : vector<8x128xf32>
    %691 = arith.divf %689, %690 : vector<8x128xf32>
    %692 = vector.extract_strided_slice %679 {offsets = [0, 128], sizes = [8, 128], strides = [1, 1]} : vector<8x384xf32> to vector<8x128xf32>
    %693 = vector.extract_strided_slice %683 {offsets = [0, 128], sizes = [8, 128], strides = [1, 1]} : vector<8x384xf32> to vector<8x128xf32>
    %694 = arith.addf %692, %693 : vector<8x128xf32>
    %695 = arith.negf %694 : vector<8x128xf32>
    %696 = math.exp %695 : vector<8x128xf32>
    %cst_245 = arith.constant 1.000000e+00 : f32
    %697 = vector.broadcast %cst_245 : f32 to vector<8x128xf32>
    %698 = arith.addf %697, %696 : vector<8x128xf32>
    %699 = arith.divf %697, %698 : vector<8x128xf32>
    %700 = vector.extract_strided_slice %679 {offsets = [0, 256], sizes = [8, 128], strides = [1, 1]} : vector<8x384xf32> to vector<8x128xf32>
    %701 = vector.extract_strided_slice %683 {offsets = [0, 256], sizes = [8, 128], strides = [1, 1]} : vector<8x384xf32> to vector<8x128xf32>
    %702 = arith.mulf %691, %701 : vector<8x128xf32>
    %703 = arith.addf %700, %702 : vector<8x128xf32>
    %704 = math.tanh %703 : vector<8x128xf32>
    %cst_246 = arith.constant 1.000000e+00 : f32
    %705 = vector.broadcast %cst_246 : f32 to vector<8x128xf32>
    %706 = arith.subf %705, %699 : vector<8x128xf32>
    %707 = arith.mulf %706, %704 : vector<8x128xf32>
    %708 = arith.mulf %699, %606 : vector<8x128xf32>
    %709 = arith.addf %707, %708 : vector<8x128xf32>
    %c1_247 = arith.constant 1 : index
    %c0_248 = arith.constant 0 : index
    %c0_249 = arith.constant 0 : index
    %710 = vector.load %arg4[%c1_247, %c0_248, %c0_249] : memref<2x128x384xf32, #tpu.memory_space<vmem>>, vector<1x128x384xf32>
    %711 = vector.shape_cast %710 : vector<1x128x384xf32> to vector<128x384xf32>
    %cst_250 = arith.constant dense<0.000000e+00> : vector<8x384xf32>
    %712 = tpu.matmul %709, %711, %cst_250 {dimension_numbers = #tpu.dot_dimension_numbers<[1], [0], [0], [1], [0, 0, 1, 1], [], []>} : vector<8x128xf32>, vector<128x384xf32>, vector<8x384xf32> -> vector<8x384xf32>
    %713 = arith.addf %712, %7 : vector<8x384xf32>
    %c2_251 = arith.constant 2 : index
    %c0_252 = arith.constant 0 : index
    %c0_253 = arith.constant 0 : index
    %714 = vector.load %arg3[%c2_251, %c0_252, %c0_253] : memref<3x128x384xf32, #tpu.memory_space<vmem>>, vector<1x128x384xf32>
    %715 = vector.shape_cast %714 : vector<1x128x384xf32> to vector<128x384xf32>
    %cst_254 = arith.constant dense<0.000000e+00> : vector<8x384xf32>
    %716 = tpu.matmul %640, %715, %cst_254 {dimension_numbers = #tpu.dot_dimension_numbers<[1], [0], [0], [1], [0, 0, 1, 1], [], []>} : vector<8x128xf32>, vector<128x384xf32>, vector<8x384xf32> -> vector<8x384xf32>
    %717 = arith.addf %716, %19 : vector<8x384xf32>
    %718 = vector.extract_strided_slice %713 {offsets = [0, 0], sizes = [8, 128], strides = [1, 1]} : vector<8x384xf32> to vector<8x128xf32>
    %719 = vector.extract_strided_slice %717 {offsets = [0, 0], sizes = [8, 128], strides = [1, 1]} : vector<8x384xf32> to vector<8x128xf32>
    %720 = arith.addf %718, %719 : vector<8x128xf32>
    %721 = arith.negf %720 : vector<8x128xf32>
    %722 = math.exp %721 : vector<8x128xf32>
    %cst_255 = arith.constant 1.000000e+00 : f32
    %723 = vector.broadcast %cst_255 : f32 to vector<8x128xf32>
    %724 = arith.addf %723, %722 : vector<8x128xf32>
    %725 = arith.divf %723, %724 : vector<8x128xf32>
    %726 = vector.extract_strided_slice %713 {offsets = [0, 128], sizes = [8, 128], strides = [1, 1]} : vector<8x384xf32> to vector<8x128xf32>
    %727 = vector.extract_strided_slice %717 {offsets = [0, 128], sizes = [8, 128], strides = [1, 1]} : vector<8x384xf32> to vector<8x128xf32>
    %728 = arith.addf %726, %727 : vector<8x128xf32>
    %729 = arith.negf %728 : vector<8x128xf32>
    %730 = math.exp %729 : vector<8x128xf32>
    %cst_256 = arith.constant 1.000000e+00 : f32
    %731 = vector.broadcast %cst_256 : f32 to vector<8x128xf32>
    %732 = arith.addf %731, %730 : vector<8x128xf32>
    %733 = arith.divf %731, %732 : vector<8x128xf32>
    %734 = vector.extract_strided_slice %713 {offsets = [0, 256], sizes = [8, 128], strides = [1, 1]} : vector<8x384xf32> to vector<8x128xf32>
    %735 = vector.extract_strided_slice %717 {offsets = [0, 256], sizes = [8, 128], strides = [1, 1]} : vector<8x384xf32> to vector<8x128xf32>
    %736 = arith.mulf %725, %735 : vector<8x128xf32>
    %737 = arith.addf %734, %736 : vector<8x128xf32>
    %738 = math.tanh %737 : vector<8x128xf32>
    %cst_257 = arith.constant 1.000000e+00 : f32
    %739 = vector.broadcast %cst_257 : f32 to vector<8x128xf32>
    %740 = arith.subf %739, %733 : vector<8x128xf32>
    %741 = arith.mulf %740, %738 : vector<8x128xf32>
    %742 = arith.mulf %733, %640 : vector<8x128xf32>
    %743 = arith.addf %741, %742 : vector<8x128xf32>
    %c6_258 = arith.constant 6 : index
    %c0_259 = arith.constant 0 : index
    %c0_260 = arith.constant 0 : index
    %744 = vector.load %arg7[%c6_258, %c0_259, %c0_260] : memref<8x8x128xf32, #tpu.memory_space<vmem>>, vector<1x8x128xf32>
    %745 = vector.shape_cast %744 : vector<1x8x128xf32> to vector<8x128xf32>
    %746 = vector.shape_cast %743 : vector<8x128xf32> to vector<1x8x128xf32>
    tpu.vector_store %arg7[%c6_258, %c0_259, %c0_260], %746 {strides = array<i32>} : memref<8x8x128xf32, #tpu.memory_space<vmem>>, vector<1x8x128xf32>,
    %c7 = arith.constant 7 : index
    %c0_261 = arith.constant 0 : index
    %c0_262 = arith.constant 0 : index
    %747 = vector.load %arg1[%c7, %c0_261, %c0_262] : memref<8x8x384xf32, #tpu.memory_space<vmem>>, vector<1x8x384xf32>
    %748 = vector.shape_cast %747 : vector<1x8x384xf32> to vector<8x384xf32>
    %c0_263 = arith.constant 0 : index
    %c0_264 = arith.constant 0 : index
    %c0_265 = arith.constant 0 : index
    %749 = vector.load %arg3[%c0_263, %c0_264, %c0_265] : memref<3x128x384xf32, #tpu.memory_space<vmem>>, vector<1x128x384xf32>
    %750 = vector.shape_cast %749 : vector<1x128x384xf32> to vector<128x384xf32>
    %cst_266 = arith.constant dense<0.000000e+00> : vector<8x384xf32>
    %751 = tpu.matmul %675, %750, %cst_266 {dimension_numbers = #tpu.dot_dimension_numbers<[1], [0], [0], [1], [0, 0, 1, 1], [], []>} : vector<8x128xf32>, vector<128x384xf32>, vector<8x384xf32> -> vector<8x384xf32>
    %752 = arith.addf %751, %11 : vector<8x384xf32>
    %753 = vector.extract_strided_slice %748 {offsets = [0, 0], sizes = [8, 128], strides = [1, 1]} : vector<8x384xf32> to vector<8x128xf32>
    %754 = vector.extract_strided_slice %752 {offsets = [0, 0], sizes = [8, 128], strides = [1, 1]} : vector<8x384xf32> to vector<8x128xf32>
    %755 = arith.addf %753, %754 : vector<8x128xf32>
    %756 = arith.negf %755 : vector<8x128xf32>
    %757 = math.exp %756 : vector<8x128xf32>
    %cst_267 = arith.constant 1.000000e+00 : f32
    %758 = vector.broadcast %cst_267 : f32 to vector<8x128xf32>
    %759 = arith.addf %758, %757 : vector<8x128xf32>
    %760 = arith.divf %758, %759 : vector<8x128xf32>
    %761 = vector.extract_strided_slice %748 {offsets = [0, 128], sizes = [8, 128], strides = [1, 1]} : vector<8x384xf32> to vector<8x128xf32>
    %762 = vector.extract_strided_slice %752 {offsets = [0, 128], sizes = [8, 128], strides = [1, 1]} : vector<8x384xf32> to vector<8x128xf32>
    %763 = arith.addf %761, %762 : vector<8x128xf32>
    %764 = arith.negf %763 : vector<8x128xf32>
    %765 = math.exp %764 : vector<8x128xf32>
    %cst_268 = arith.constant 1.000000e+00 : f32
    %766 = vector.broadcast %cst_268 : f32 to vector<8x128xf32>
    %767 = arith.addf %766, %765 : vector<8x128xf32>
    %768 = arith.divf %766, %767 : vector<8x128xf32>
    %769 = vector.extract_strided_slice %748 {offsets = [0, 256], sizes = [8, 128], strides = [1, 1]} : vector<8x384xf32> to vector<8x128xf32>
    %770 = vector.extract_strided_slice %752 {offsets = [0, 256], sizes = [8, 128], strides = [1, 1]} : vector<8x384xf32> to vector<8x128xf32>
    %771 = arith.mulf %760, %770 : vector<8x128xf32>
    %772 = arith.addf %769, %771 : vector<8x128xf32>
    %773 = math.tanh %772 : vector<8x128xf32>
    %cst_269 = arith.constant 1.000000e+00 : f32
    %774 = vector.broadcast %cst_269 : f32 to vector<8x128xf32>
    %775 = arith.subf %774, %768 : vector<8x128xf32>
    %776 = arith.mulf %775, %773 : vector<8x128xf32>
    %777 = arith.mulf %768, %675 : vector<8x128xf32>
    %778 = arith.addf %776, %777 : vector<8x128xf32>
    %c0_270 = arith.constant 0 : index
    %c0_271 = arith.constant 0 : index
    %c0_272 = arith.constant 0 : index
    %779 = vector.load %arg4[%c0_270, %c0_271, %c0_272] : memref<2x128x384xf32, #tpu.memory_space<vmem>>, vector<1x128x384xf32>
    %780 = vector.shape_cast %779 : vector<1x128x384xf32> to vector<128x384xf32>
    %cst_273 = arith.constant dense<0.000000e+00> : vector<8x384xf32>
    %781 = tpu.matmul %778, %780, %cst_273 {dimension_numbers = #tpu.dot_dimension_numbers<[1], [0], [0], [1], [0, 0, 1, 1], [], []>} : vector<8x128xf32>, vector<128x384xf32>, vector<8x384xf32> -> vector<8x384xf32>
    %782 = arith.addf %781, %3 : vector<8x384xf32>
    %c1_274 = arith.constant 1 : index
    %c0_275 = arith.constant 0 : index
    %c0_276 = arith.constant 0 : index
    %783 = vector.load %arg3[%c1_274, %c0_275, %c0_276] : memref<3x128x384xf32, #tpu.memory_space<vmem>>, vector<1x128x384xf32>
    %784 = vector.shape_cast %783 : vector<1x128x384xf32> to vector<128x384xf32>
    %cst_277 = arith.constant dense<0.000000e+00> : vector<8x384xf32>
    %785 = tpu.matmul %709, %784, %cst_277 {dimension_numbers = #tpu.dot_dimension_numbers<[1], [0], [0], [1], [0, 0, 1, 1], [], []>} : vector<8x128xf32>, vector<128x384xf32>, vector<8x384xf32> -> vector<8x384xf32>
    %786 = arith.addf %785, %15 : vector<8x384xf32>
    %787 = vector.extract_strided_slice %782 {offsets = [0, 0], sizes = [8, 128], strides = [1, 1]} : vector<8x384xf32> to vector<8x128xf32>
    %788 = vector.extract_strided_slice %786 {offsets = [0, 0], sizes = [8, 128], strides = [1, 1]} : vector<8x384xf32> to vector<8x128xf32>
    %789 = arith.addf %787, %788 : vector<8x128xf32>
    %790 = arith.negf %789 : vector<8x128xf32>
    %791 = math.exp %790 : vector<8x128xf32>
    %cst_278 = arith.constant 1.000000e+00 : f32
    %792 = vector.broadcast %cst_278 : f32 to vector<8x128xf32>
    %793 = arith.addf %792, %791 : vector<8x128xf32>
    %794 = arith.divf %792, %793 : vector<8x128xf32>
    %795 = vector.extract_strided_slice %782 {offsets = [0, 128], sizes = [8, 128], strides = [1, 1]} : vector<8x384xf32> to vector<8x128xf32>
    %796 = vector.extract_strided_slice %786 {offsets = [0, 128], sizes = [8, 128], strides = [1, 1]} : vector<8x384xf32> to vector<8x128xf32>
    %797 = arith.addf %795, %796 : vector<8x128xf32>
    %798 = arith.negf %797 : vector<8x128xf32>
    %799 = math.exp %798 : vector<8x128xf32>
    %cst_279 = arith.constant 1.000000e+00 : f32
    %800 = vector.broadcast %cst_279 : f32 to vector<8x128xf32>
    %801 = arith.addf %800, %799 : vector<8x128xf32>
    %802 = arith.divf %800, %801 : vector<8x128xf32>
    %803 = vector.extract_strided_slice %782 {offsets = [0, 256], sizes = [8, 128], strides = [1, 1]} : vector<8x384xf32> to vector<8x128xf32>
    %804 = vector.extract_strided_slice %786 {offsets = [0, 256], sizes = [8, 128], strides = [1, 1]} : vector<8x384xf32> to vector<8x128xf32>
    %805 = arith.mulf %794, %804 : vector<8x128xf32>
    %806 = arith.addf %803, %805 : vector<8x128xf32>
    %807 = math.tanh %806 : vector<8x128xf32>
    %cst_280 = arith.constant 1.000000e+00 : f32
    %808 = vector.broadcast %cst_280 : f32 to vector<8x128xf32>
    %809 = arith.subf %808, %802 : vector<8x128xf32>
    %810 = arith.mulf %809, %807 : vector<8x128xf32>
    %811 = arith.mulf %802, %709 : vector<8x128xf32>
    %812 = arith.addf %810, %811 : vector<8x128xf32>
    %c1_281 = arith.constant 1 : index
    %c0_282 = arith.constant 0 : index
    %c0_283 = arith.constant 0 : index
    %813 = vector.load %arg4[%c1_281, %c0_282, %c0_283] : memref<2x128x384xf32, #tpu.memory_space<vmem>>, vector<1x128x384xf32>
    %814 = vector.shape_cast %813 : vector<1x128x384xf32> to vector<128x384xf32>
    %cst_284 = arith.constant dense<0.000000e+00> : vector<8x384xf32>
    %815 = tpu.matmul %812, %814, %cst_284 {dimension_numbers = #tpu.dot_dimension_numbers<[1], [0], [0], [1], [0, 0, 1, 1], [], []>} : vector<8x128xf32>, vector<128x384xf32>, vector<8x384xf32> -> vector<8x384xf32>
    %816 = arith.addf %815, %7 : vector<8x384xf32>
    %c2_285 = arith.constant 2 : index
    %c0_286 = arith.constant 0 : index
    %c0_287 = arith.constant 0 : index
    %817 = vector.load %arg3[%c2_285, %c0_286, %c0_287] : memref<3x128x384xf32, #tpu.memory_space<vmem>>, vector<1x128x384xf32>
    %818 = vector.shape_cast %817 : vector<1x128x384xf32> to vector<128x384xf32>
    %cst_288 = arith.constant dense<0.000000e+00> : vector<8x384xf32>
    %819 = tpu.matmul %743, %818, %cst_288 {dimension_numbers = #tpu.dot_dimension_numbers<[1], [0], [0], [1], [0, 0, 1, 1], [], []>} : vector<8x128xf32>, vector<128x384xf32>, vector<8x384xf32> -> vector<8x384xf32>
    %820 = arith.addf %819, %19 : vector<8x384xf32>
    %821 = vector.extract_strided_slice %816 {offsets = [0, 0], sizes = [8, 128], strides = [1, 1]} : vector<8x384xf32> to vector<8x128xf32>
    %822 = vector.extract_strided_slice %820 {offsets = [0, 0], sizes = [8, 128], strides = [1, 1]} : vector<8x384xf32> to vector<8x128xf32>
    %823 = arith.addf %821, %822 : vector<8x128xf32>
    %824 = arith.negf %823 : vector<8x128xf32>
    %825 = math.exp %824 : vector<8x128xf32>
    %cst_289 = arith.constant 1.000000e+00 : f32
    %826 = vector.broadcast %cst_289 : f32 to vector<8x128xf32>
    %827 = arith.addf %826, %825 : vector<8x128xf32>
    %828 = arith.divf %826, %827 : vector<8x128xf32>
    %829 = vector.extract_strided_slice %816 {offsets = [0, 128], sizes = [8, 128], strides = [1, 1]} : vector<8x384xf32> to vector<8x128xf32>
    %830 = vector.extract_strided_slice %820 {offsets = [0, 128], sizes = [8, 128], strides = [1, 1]} : vector<8x384xf32> to vector<8x128xf32>
    %831 = arith.addf %829, %830 : vector<8x128xf32>
    %832 = arith.negf %831 : vector<8x128xf32>
    %833 = math.exp %832 : vector<8x128xf32>
    %cst_290 = arith.constant 1.000000e+00 : f32
    %834 = vector.broadcast %cst_290 : f32 to vector<8x128xf32>
    %835 = arith.addf %834, %833 : vector<8x128xf32>
    %836 = arith.divf %834, %835 : vector<8x128xf32>
    %837 = vector.extract_strided_slice %816 {offsets = [0, 256], sizes = [8, 128], strides = [1, 1]} : vector<8x384xf32> to vector<8x128xf32>
    %838 = vector.extract_strided_slice %820 {offsets = [0, 256], sizes = [8, 128], strides = [1, 1]} : vector<8x384xf32> to vector<8x128xf32>
    %839 = arith.mulf %828, %838 : vector<8x128xf32>
    %840 = arith.addf %837, %839 : vector<8x128xf32>
    %841 = math.tanh %840 : vector<8x128xf32>
    %cst_291 = arith.constant 1.000000e+00 : f32
    %842 = vector.broadcast %cst_291 : f32 to vector<8x128xf32>
    %843 = arith.subf %842, %836 : vector<8x128xf32>
    %844 = arith.mulf %843, %841 : vector<8x128xf32>
    %845 = arith.mulf %836, %743 : vector<8x128xf32>
    %846 = arith.addf %844, %845 : vector<8x128xf32>
    %c7_292 = arith.constant 7 : index
    %c0_293 = arith.constant 0 : index
    %c0_294 = arith.constant 0 : index
    %847 = vector.load %arg7[%c7_292, %c0_293, %c0_294] : memref<8x8x128xf32, #tpu.memory_space<vmem>>, vector<1x8x128xf32>
    %848 = vector.shape_cast %847 : vector<1x8x128xf32> to vector<8x128xf32>
    %849 = vector.shape_cast %846 : vector<8x128xf32> to vector<1x8x128xf32>
    tpu.vector_store %arg7[%c7_292, %c0_293, %c0_294], %849 {strides = array<i32>} : memref<8x8x128xf32, #tpu.memory_space<vmem>>, vector<1x8x128xf32>,
    %c0_295 = arith.constant 0 : index
    %c0_296 = arith.constant 0 : index
    %c0_297 = arith.constant 0 : index
    %850 = vector.load %arg8[%c0_295, %c0_296, %c0_297] : memref<3x8x128xf32, #tpu.memory_space<vmem>>, vector<1x8x128xf32>
    %851 = vector.shape_cast %850 : vector<1x8x128xf32> to vector<8x128xf32>
    %852 = vector.shape_cast %778 : vector<8x128xf32> to vector<1x8x128xf32>
    tpu.vector_store %arg8[%c0_295, %c0_296, %c0_297], %852 {strides = array<i32>} : memref<3x8x128xf32, #tpu.memory_space<vmem>>, vector<1x8x128xf32>,
    %c1_298 = arith.constant 1 : index
    %c0_299 = arith.constant 0 : index
    %c0_300 = arith.constant 0 : index
    %853 = vector.load %arg8[%c1_298, %c0_299, %c0_300] : memref<3x8x128xf32, #tpu.memory_space<vmem>>, vector<1x8x128xf32>
    %854 = vector.shape_cast %853 : vector<1x8x128xf32> to vector<8x128xf32>
    %855 = vector.shape_cast %812 : vector<8x128xf32> to vector<1x8x128xf32>
    tpu.vector_store %arg8[%c1_298, %c0_299, %c0_300], %855 {strides = array<i32>} : memref<3x8x128xf32, #tpu.memory_space<vmem>>, vector<1x8x128xf32>,
    %c2_301 = arith.constant 2 : index
    %c0_302 = arith.constant 0 : index
    %c0_303 = arith.constant 0 : index
    %856 = vector.load %arg8[%c2_301, %c0_302, %c0_303] : memref<3x8x128xf32, #tpu.memory_space<vmem>>, vector<1x8x128xf32>
    %857 = vector.shape_cast %856 : vector<1x8x128xf32> to vector<8x128xf32>
    %858 = vector.shape_cast %846 : vector<8x128xf32> to vector<1x8x128xf32>
    tpu.vector_store %arg8[%c2_301, %c0_302, %c0_303], %858 {strides = array<i32>} : memref<3x8x128xf32, #tpu.memory_space<vmem>>, vector<1x8x128xf32>,
    return
  }
  func.func @transform_0(%arg0: i32) -> (i32, i32, i32) {
    %c0_i32 = arith.constant 0 : i32
    %c0_i32_0 = arith.constant 0 : i32
    %c0_i32_1 = arith.constant 0 : i32
    %c0_i32_2 = arith.constant 0 : i32
    return %c0_i32, %c0_i32_0, %c0_i32_1 : i32, i32, i32
  }
  func.func @transform_1(%arg0: i32) -> (i32, i32, i32) {
    %c0_i32 = arith.constant 0 : i32
    %c0_i32_0 = arith.constant 0 : i32
    %c0_i32_1 = arith.constant 0 : i32
    %c0_i32_2 = arith.constant 0 : i32
    return %c0_i32, %c0_i32_0, %c0_i32_1 : i32, i32, i32
  }
  func.func @transform_2(%arg0: i32) -> (i32, i32, i32) {
    %c0_i32 = arith.constant 0 : i32
    %c0_i32_0 = arith.constant 0 : i32
    %c0_i32_1 = arith.constant 0 : i32
    %c0_i32_2 = arith.constant 0 : i32
    return %c0_i32, %c0_i32_0, %c0_i32_1 : i32, i32, i32
  }
  func.func @transform_3(%arg0: i32) -> (i32, i32, i32) {
    %c0_i32 = arith.constant 0 : i32
    %c0_i32_0 = arith.constant 0 : i32
    %c0_i32_1 = arith.constant 0 : i32
    %c0_i32_2 = arith.constant 0 : i32
    return %c0_i32, %c0_i32_0, %c0_i32_1 : i32, i32, i32
  }
  func.func @transform_4(%arg0: i32) -> (i32, i32, i32) {
    %c0_i32 = arith.constant 0 : i32
    %c0_i32_0 = arith.constant 0 : i32
    %c0_i32_1 = arith.constant 0 : i32
    %c0_i32_2 = arith.constant 0 : i32
    return %c0_i32, %c0_i32_0, %c0_i32_1 : i32, i32, i32
  }
  func.func @transform_5(%arg0: i32) -> (i32, i32, i32) {
    %c0_i32 = arith.constant 0 : i32
    %c0_i32_0 = arith.constant 0 : i32
    %c0_i32_1 = arith.constant 0 : i32
    %c0_i32_2 = arith.constant 0 : i32
    return %c0_i32, %c0_i32_0, %c0_i32_1 : i32, i32, i32
  }
  func.func @transform_6(%arg0: i32) -> (i32, i32, i32) {
    %c0_i32 = arith.constant 0 : i32
    %c0_i32_0 = arith.constant 0 : i32
    %c0_i32_1 = arith.constant 0 : i32
    %c0_i32_2 = arith.constant 0 : i32
    return %c0_i32, %c0_i32_0, %c0_i32_1 : i32, i32, i32
  }
  func.func @transform_7(%arg0: i32) -> (i32, i32, i32) {
    %c0_i32 = arith.constant 0 : i32
    %c0_i32_0 = arith.constant 0 : i32
    %c0_i32_1 = arith.constant 0 : i32
    %c0_i32_2 = arith.constant 0 : i32
    return %c0_i32, %c0_i32_0, %c0_i32_1 : i32, i32, i32
  }
}

</mosaic_0001>

<llo_original>
// kernel: decoder_forward.3
$region0: #{decoder_forward.3}
  #allocation0 [shape = 'u32[]', space=smem, size = 0x4, offset = 0x4, fixed_abs, tag = 'smem constant byte address 0x4 - core index']
  #allocation1 [shape = 'u32[144,128]{1,0:T(1,128)}', space=vmem, size = 0x12000, scoped, tag = 'internal scratch']
  %s0 = inlined_call_operand.vmem [shape: f32[64,300], index: 0, kind: input, shape index: {}]
  %s1 = inlined_call_operand.vmem [shape: f32[300,384], index: 1, kind: input, shape index: {}]
  %s2 = inlined_call_operand.vmem [shape: f32[1,384], index: 2, kind: input, shape index: {}]
  %s3 = inlined_call_operand.vmem [shape: f32[64,384], index: 3, kind: output, shape index: {}]
  %s4 = sld [smem:[#allocation0]]
  $region22: #{decoder_forward.3} parent=0
    _
  %s6 = ssub.s32 1, %s4
  %s7 = scalar_select 0, %s6, %s4
  // Predicated region
  $region2: #{decoder_forward.3} parent=0 // pred_check
    _
  $region3: #{decoder_forward.3} parent=0 // pred_check_branch
    %9 = sbr.rel (0) target = $region5
  $region4: #{decoder_forward.3} parent=0 // pred_region
    _
  $region5: #{decoder_forward.3} parent=0 // pred_fallthru
    _
  // Predicated region
  $region6: #{decoder_forward.3} parent=0 // pred_check
    _
  $region7: #{decoder_forward.3} parent=0 // pred_check_branch
    %11 = sbr.rel (0) target = $region9
  $region8: #{decoder_forward.3} parent=0 // pred_region
    _
  $region9: #{decoder_forward.3} parent=0 // pred_fallthru
    _
  // Predicated region
  $region10: #{decoder_forward.3} parent=0 // pred_check
    _
  $region11: #{decoder_forward.3} parent=0 // pred_check_branch
    %13 = sbr.rel (0) target = $region13
  $region12: #{decoder_forward.3} parent=0 // pred_region
    _
  $region13: #{decoder_forward.3} parent=0 // pred_fallthru
    _
  %v14 = vld [vmem:[%s0] sm:$0xff]
  %v15 = vld [vmem:[%s0 + $0x8] sm:$0xff]
  %v16 = vld [vmem:[%s0 + $0x10] sm:$0xff]
  %v17 = vld [vmem:[%s0 + $0x18] sm:$0xff]
  %v18 = vld [vmem:[%s0 + $0x20] sm:$0xff]
  %v19 = vld [vmem:[%s0 + $0x28] sm:$0xff]
  %v20 = vld [vmem:[%s0 + $0x30] sm:$0xff]
  %v21 = vld [vmem:[%s0 + $0x38] sm:$0xff]
  %v22 = vld [vmem:[%s0 + $0x40] sm:$0xff]
  %v23 = vld [vmem:[%s0 + $0x48] sm:$0xff]
  %v24 = vld [vmem:[%s0 + $0x50] sm:$0xff]
  %v25 = vld [vmem:[%s0 + $0x58] sm:$0xff]
  %v26 = vld [vmem:[%s0 + $0x60] sm:$0xff]
  %v27 = vld [vmem:[%s0 + $0x68] sm:$0xff]
  %v28 = vld [vmem:[%s0 + $0x70] sm:$0xff]
  %v29 = vld [vmem:[%s0 + $0x78] sm:$0xff]
  %v30 = vld [vmem:[%s0 + $0x80] sm:$0xff]
  %v31 = vld [vmem:[%s0 + $0x88] sm:$0xff]
  %v32 = vld [vmem:[%s0 + $0x90] sm:$0xff]
  %v33 = vld [vmem:[%s0 + $0x98] sm:$0xff]
  %v34 = vld [vmem:[%s0 + $0xa0] sm:$0xff]
  %v35 = vld [vmem:[%s0 + $0xa8] sm:$0xff]
  %v36 = vld [vmem:[%s0 + $0xb0] sm:$0xff]
  %v37 = vld [vmem:[%s0 + $0xb8] sm:$0xff]
  %v38 = vld [vmem:[%s1] sm:$0xff]
  %v39 = vld [vmem:[%s1 + $0x8] sm:$0xff]
  %v40 = vld [vmem:[%s1 + $0x10] sm:$0xff]
  %v41 = vld [vmem:[%s1 + $0x18] sm:$0xff]
  %v42 = vld [vmem:[%s1 + $0x20] sm:$0xff]
  %v43 = vld [vmem:[%s1 + $0x28] sm:$0xff]
  %v44 = vld [vmem:[%s1 + $0x30] sm:$0xff]
  %v45 = vld [vmem:[%s1 + $0x38] sm:$0xff]
  %v46 = vld [vmem:[%s1 + $0x40] sm:$0xff]
  %v47 = vld [vmem:[%s1 + $0x48] sm:$0xff]
  %v48 = vld [vmem:[%s1 + $0x50] sm:$0xff]
  %v49 = vld [vmem:[%s1 + $0x58] sm:$0xff]
  %v50 = vld [vmem:[%s1 + $0x60] sm:$0xff]
  %v51 = vld [vmem:[%s1 + $0x68] sm:$0xff]
  %v52 = vld [vmem:[%s1 + $0x70] sm:$0xff]
  %v53 = vld [vmem:[%s1 + $0x78] sm:$0xff]
  %v54 = vld [vmem:[%s1 + $0x80] sm:$0xff]
  %v55 = vld [vmem:[%s1 + $0x88] sm:$0xff]
  %v56 = vld [vmem:[%s1 + $0x90] sm:$0xff]
  %v57 = vld [vmem:[%s1 + $0x98] sm:$0xff]
  %v58 = vld [vmem:[%s1 + $0xa0] sm:$0xff]
  %v59 = vld [vmem:[%s1 + $0xa8] sm:$0xff]
  %v60 = vld [vmem:[%s1 + $0xb0] sm:$0xff]
  %v61 = vld [vmem:[%s1 + $0xb8] sm:$0xff]
  %v62 = vld [vmem:[%s1 + $0xc0] sm:$0xff]
  %v63 = vld [vmem:[%s1 + $0xc8] sm:$0xff]
  %v64 = vld [vmem:[%s1 + $0xd0] sm:$0xff]
  %v65 = vld [vmem:[%s1 + $0xd8] sm:$0xff]
  %v66 = vld [vmem:[%s1 + $0xe0] sm:$0xff]
  %v67 = vld [vmem:[%s1 + $0xe8] sm:$0xff]
  %v68 = vld [vmem:[%s1 + $0xf0] sm:$0xff]
  %v69 = vld [vmem:[%s1 + $0xf8] sm:$0xff]
  %v70 = vld [vmem:[%s1 + $0x100] sm:$0xff]
  %v71 = vld [vmem:[%s1 + $0x108] sm:$0xff]
  %v72 = vld [vmem:[%s1 + $0x110] sm:$0xff]
  %v73 = vld [vmem:[%s1 + $0x118] sm:$0xff]
  %v74 = vld [vmem:[%s1 + $0x120] sm:$0xff]
  %v75 = vld [vmem:[%s1 + $0x128] sm:$0xff]
  %v76 = vld [vmem:[%s1 + $0x130] sm:$0xff]
  %v77 = vld [vmem:[%s1 + $0x138] sm:$0xff]
  %v78 = vld [vmem:[%s1 + $0x140] sm:$0xff]
  %v79 = vld [vmem:[%s1 + $0x148] sm:$0xff]
  %v80 = vld [vmem:[%s1 + $0x150] sm:$0xff]
  %v81 = vld [vmem:[%s1 + $0x158] sm:$0xff]
  %v82 = vld [vmem:[%s1 + $0x160] sm:$0xff]
  %v83 = vld [vmem:[%s1 + $0x168] sm:$0xff]
  %v84 = vld [vmem:[%s1 + $0x170] sm:$0xff]
  %v85 = vld [vmem:[%s1 + $0x178] sm:$0xff]
  %v86 = vld [vmem:[%s1 + $0x180] sm:$0xff]
  %v87 = vld [vmem:[%s1 + $0x188] sm:$0xff]
  %v88 = vld [vmem:[%s1 + $0x190] sm:$0xff]
  %v89 = vld [vmem:[%s1 + $0x198] sm:$0xff]
  %v90 = vld [vmem:[%s1 + $0x1a0] sm:$0xff]
  %v91 = vld [vmem:[%s1 + $0x1a8] sm:$0xff]
  %v92 = vld [vmem:[%s1 + $0x1b0] sm:$0xff]
  %v93 = vld [vmem:[%s1 + $0x1b8] sm:$0xff]
  %v94 = vld [vmem:[%s1 + $0x1c0] sm:$0xff]
  %v95 = vld [vmem:[%s1 + $0x1c8] sm:$0xff]
  %v96 = vld [vmem:[%s1 + $0x1d0] sm:$0xff]
  %v97 = vld [vmem:[%s1 + $0x1d8] sm:$0xff]
  %v98 = vld [vmem:[%s1 + $0x1e0] sm:$0xff]
  %v99 = vld [vmem:[%s1 + $0x1e8] sm:$0xff]
  %v100 = vld [vmem:[%s1 + $0x1f0] sm:$0xff]
  %v101 = vld [vmem:[%s1 + $0x1f8] sm:$0xff]
  %v102 = vld [vmem:[%s1 + $0x200] sm:$0xff]
  %v103 = vld [vmem:[%s1 + $0x208] sm:$0xff]
  %v104 = vld [vmem:[%s1 + $0x210] sm:$0xff]
  %v105 = vld [vmem:[%s1 + $0x218] sm:$0xff]
  %v106 = vld [vmem:[%s1 + $0x220] sm:$0xff]
  %v107 = vld [vmem:[%s1 + $0x228] sm:$0xff]
  %v108 = vld [vmem:[%s1 + $0x230] sm:$0xff]
  %v109 = vld [vmem:[%s1 + $0x238] sm:$0xff]
  %v110 = vld [vmem:[%s1 + $0x240] sm:$0xff]
  %v111 = vld [vmem:[%s1 + $0x248] sm:$0xff]
  %v112 = vld [vmem:[%s1 + $0x250] sm:$0xff]
  %v113 = vld [vmem:[%s1 + $0x258] sm:$0xff]
  %v114 = vld [vmem:[%s1 + $0x260] sm:$0xff]
  %v115 = vld [vmem:[%s1 + $0x268] sm:$0xff]
  %v116 = vld [vmem:[%s1 + $0x270] sm:$0xff]
  %v117 = vld [vmem:[%s1 + $0x278] sm:$0xff]
  %v118 = vld [vmem:[%s1 + $0x280] sm:$0xff]
  %v119 = vld [vmem:[%s1 + $0x288] sm:$0xff]
  %v120 = vld [vmem:[%s1 + $0x290] sm:$0xff]
  %v121 = vld [vmem:[%s1 + $0x298] sm:$0xff]
  %v122 = vld [vmem:[%s1 + $0x2a0] sm:$0xff]
  %v123 = vld [vmem:[%s1 + $0x2a8] sm:$0xff]
  %v124 = vld [vmem:[%s1 + $0x2b0] sm:$0xff]
  %v125 = vld [vmem:[%s1 + $0x2b8] sm:$0xff]
  %v126 = vld [vmem:[%s1 + $0x2c0] sm:$0xff]
  %v127 = vld [vmem:[%s1 + $0x2c8] sm:$0xff]
  %v128 = vld [vmem:[%s1 + $0x2d0] sm:$0xff]
  %v129 = vld [vmem:[%s1 + $0x2d8] sm:$0xff]
  %v130 = vld [vmem:[%s1 + $0x2e0] sm:$0xff]
  %v131 = vld [vmem:[%s1 + $0x2e8] sm:$0xff]
  %v132 = vld [vmem:[%s1 + $0x2f0] sm:$0xff]
  %v133 = vld [vmem:[%s1 + $0x2f8] sm:$0xff]
  %v134 = vld [vmem:[%s1 + $0x300] sm:$0xff]
  %v135 = vld [vmem:[%s1 + $0x308] sm:$0xff]
  %v136 = vld [vmem:[%s1 + $0x310] sm:$0xff]
  %v137 = vld [vmem:[%s1 + $0x318] sm:$0xff]
  %v138 = vld [vmem:[%s1 + $0x320] sm:$0xff]
  %v139 = vld [vmem:[%s1 + $0x328] sm:$0xff]
  %v140 = vld [vmem:[%s1 + $0x330] sm:$0xff]
  %v141 = vld [vmem:[%s1 + $0x338] sm:$0xff]
  %v142 = vld [vmem:[%s1 + $0x340] sm:$0xff]
  %v143 = vld [vmem:[%s1 + $0x348] sm:$0xff]
  %v144 = vld [vmem:[%s1 + $0x350] sm:$0xff]
  %v145 = vld [vmem:[%s1 + $0x358] sm:$0xff]
  %v146 = vld [vmem:[%s1 + $0x360] sm:$0xff]
  %v147 = vld [vmem:[%s1 + $0x368] sm:$0xff]
  %v148 = vld [vmem:[%s1 + $0x370] sm:$0xff]
  %v149 = vld [vmem:[%s1 + $0x378] sm:$0xf]
  %v150 = vld [vmem:[%s1 + $0x380] sm:$0xf]
  %v151 = vld [vmem:[%s1 + $0x388] sm:$0xf]
  %v152 = vld [vmem:[%s2] sm:$0x7]
  %v154 = vlaneseq
  %v155 = vshrl.u32 %v154, 7
  %v156 = vsub.s32 0, %v155
  %v157 = vrot.slane %v152, %v156
  %v158 = vlaneseq
  %v159 = vshrl.u32 %v158, 7
  %v160 = vsub.s32 1, %v159
  %v161 = vrot.slane %v152, %v160
  %v162 = vlaneseq
  %v163 = vshrl.u32 %v162, 7
  %v164 = vsub.s32 2, %v163
  %v165 = vrot.slane %v152, %v164
  %vm169 = vcmask 359424
  %v171 = vsel %vm169, %v16, 0
  %v174 = vsel %vm169, %v19, 0
  %v177 = vsel %vm169, %v22, 0
  %v180 = vsel %vm169, %v25, 0
  %v183 = vsel %vm169, %v28, 0
  %v186 = vsel %vm169, %v31, 0
  %v189 = vsel %vm169, %v34, 0
  %v192 = vsel %vm169, %v37, 0
  %vm194 = vcmask 1043456
  %v196 = vsel %vm194, %v149, 0
  %v199 = vsel %vm194, %v150, 0
  %v202 = vsel %vm194, %v151, 0
  %204 = vmatprep.subr.mxu0 %v84
  %205 = vmatpush1.msra.mxu0 %v83
  %206 = vmatprep.subr.mxu0 %v81
  %207 = vmatpush1.msra.mxu0 %v80
  %208 = vmatprep.subr.mxu0 %v78
  %209 = vmatpush1.msra.mxu0 %v77
  %210 = vmatprep.subr.mxu0 %v75
  %211 = vmatpush1.msra.mxu0 %v74
  %212 = vmatprep.subr.mxu0 %v72
  %213 = vmatpush1.msra.mxu0 %v71
  %214 = vmatprep.subr.mxu0 %v69
  %215 = vmatpush1.msra.mxu0 %v68
  %216 = vmatprep.subr.mxu0 %v66
  %217 = vmatpush1.msra.mxu0 %v65
  %218 = vmatprep.subr.mxu0 %v63
  %219 = vmatpush1.msra.mxu0 %v62
  %220 = vmatprep.subr.mxu0 %v60
  %221 = vmatpush1.msra.mxu0 %v59
  %222 = vmatprep.subr.mxu0 %v57
  %223 = vmatpush1.msra.mxu0 %v56
  %224 = vmatprep.subr.mxu0 %v54
  %225 = vmatpush1.msra.mxu0 %v53
  %226 = vmatprep.subr.mxu0 %v51
  %227 = vmatpush1.msra.mxu0 %v50
  %228 = vmatprep.subr.mxu0 %v48
  %229 = vmatpush1.msra.mxu0 %v47
  %230 = vmatprep.subr.mxu0 %v45
  %231 = vmatpush1.msra.mxu0 %v44
  %232 = vmatprep.subr.mxu0 %v42
  %233 = vmatpush1.msra.mxu0 %v41
  %234 = vmatprep.subr.mxu0 %v39
  %235 = vmatpush1.msra.mxu0 %v38
  %236 = vmatprep.subr.mxu0 %v132
  %237 = vmatpush2.msra.mxu0 %v131
  %238 = vmatprep.subr.mxu0 %v129
  %239 = vmatpush2.msra.mxu0 %v128
  %240 = vmatprep.subr.mxu0 %v126
  %241 = vmatpush2.msra.mxu0 %v125
  %242 = vmatprep.subr.mxu0 %v123
  %243 = vmatpush2.msra.mxu0 %v122
  %244 = vmatprep.subr.mxu0 %v120
  %245 = vmatpush2.msra.mxu0 %v119
  %246 = vmatprep.subr.mxu0 %v117
  %247 = vmatpush2.msra.mxu0 %v116
  %248 = vmatprep.subr.mxu0 %v114
  %249 = vmatpush2.msra.mxu0 %v113
  %250 = vmatprep.subr.mxu0 %v111
  %251 = vmatpush2.msra.mxu0 %v110
  %252 = vmatprep.subr.mxu0 %v108
  %253 = vmatpush2.msra.mxu0 %v107
  %254 = vmatprep.subr.mxu0 %v105
  %255 = vmatpush2.msra.mxu0 %v104
  %256 = vmatprep.subr.mxu0 %v102
  %257 = vmatpush2.msra.mxu0 %v101
  %258 = vmatprep.subr.mxu0 %v99
  %259 = vmatpush2.msra.mxu0 %v98
  %260 = vmatprep.subr.mxu0 %v96
  %261 = vmatpush2.msra.mxu0 %v95
  %262 = vmatprep.subr.mxu0 %v93
  %263 = vmatpush2.msra.mxu0 %v92
  %264 = vmatprep.subr.mxu0 %v90
  %265 = vmatpush2.msra.mxu0 %v89
  %266 = vmatprep.subr.mxu0 %v87
  %267 = vmatpush2.msra.mxu0 %v86
  %268 = vmatprep.mubr.f32.mxu0 %v15
  %269 = vmatmul.mubr.f32.gmra.mxu0 %v14
  %v270 = vpop.f32.mrf.mxu0
  %v271 = vadd.f32 %v157, %v270
  %v272 = vpop.f32.mrf.mxu0
  %v273 = vadd.f32 %v161, %v272
  %274 = vmatprep.mubr.f32.mxu0 %v18
  %275 = vmatmul.mubr.f32.gmra.mxu0 %v17
  %v276 = vpop.f32.mrf.mxu0
  %v277 = vadd.f32 %v157, %v276
  %v278 = vpop.f32.mrf.mxu0
  %v279 = vadd.f32 %v161, %v278
  %280 = vmatprep.mubr.f32.mxu0 %v21
  %281 = vmatmul.mubr.f32.gmra.mxu0 %v20
  %v282 = vpop.f32.mrf.mxu0
  %v283 = vadd.f32 %v157, %v282
  %v284 = vpop.f32.mrf.mxu0
  %v285 = vadd.f32 %v161, %v284
  %286 = vmatprep.mubr.f32.mxu0 %v24
  %287 = vmatmul.mubr.f32.gmra.mxu0 %v23
  %v288 = vpop.f32.mrf.mxu0
  %v289 = vadd.f32 %v157, %v288
  %v290 = vpop.f32.mrf.mxu0
  %v291 = vadd.f32 %v161, %v290
  %292 = vmatprep.mubr.f32.mxu0 %v27
  %293 = vmatmul.mubr.f32.gmra.mxu0 %v26
  %v294 = vpop.f32.mrf.mxu0
  %v295 = vadd.f32 %v157, %v294
  %v296 = vpop.f32.mrf.mxu0
  %v297 = vadd.f32 %v161, %v296
  %298 = vmatprep.mubr.f32.mxu0 %v30
  %299 = vmatmul.mubr.f32.gmra.mxu0 %v29
  %v300 = vpop.f32.mrf.mxu0
  %v301 = vadd.f32 %v157, %v300
  %v302 = vpop.f32.mrf.mxu0
  %v303 = vadd.f32 %v161, %v302
  %304 = vmatprep.mubr.f32.mxu0 %v33
  %305 = vmatmul.mubr.f32.gmra.mxu0 %v32
  %v306 = vpop.f32.mrf.mxu0
  %v307 = vadd.f32 %v157, %v306
  %v308 = vpop.f32.mrf.mxu0
  %v309 = vadd.f32 %v161, %v308
  %310 = vmatprep.mubr.f32.mxu0 %v36
  %311 = vmatmul.mubr.f32.gmra.mxu0 %v35
  %v312 = vpop.f32.mrf.mxu0
  %v313 = vadd.f32 %v157, %v312
  %v314 = vpop.f32.mrf.mxu0
  %v315 = vadd.f32 %v161, %v314
  %316 = vdwg.mxu0
  %317 = vmatprep.subr.mxu0 0.0
  %318 = vmatpush1.msra.mxu0 0.0
  %319 = vmatprep.subr.mxu0 0.0
  %320 = vmatpush1.msra.mxu0 0.0
  %321 = vmatprep.subr.mxu0 0.0
  %322 = vmatpush1.msra.mxu0 0.0
  %323 = vmatprep.subr.mxu0 0.0
  %324 = vmatpush1.msra.mxu0 0.0
  %325 = vmatprep.subr.mxu0 0.0
  %326 = vmatpush1.msra.mxu0 0.0
  %327 = vmatprep.subr.mxu0 0.0
  %328 = vmatpush1.msra.mxu0 0.0
  %329 = vmatprep.subr.mxu0 0.0
  %330 = vmatpush1.msra.mxu0 0.0
  %331 = vmatprep.subr.mxu0 0.0
  %332 = vmatpush1.msra.mxu0 0.0
  %333 = vmatprep.subr.mxu0 0.0
  %334 = vmatpush1.msra.mxu0 0.0
  %335 = vmatprep.subr.mxu0 0.0
  %336 = vmatpush1.msra.mxu0 0.0
  %337 = vmatprep.subr.mxu0 %v199
  %338 = vmatpush1.msra.mxu0 %v196
  %339 = vmatprep.subr.mxu0 %v147
  %340 = vmatpush1.msra.mxu0 %v146
  %341 = vmatprep.subr.mxu0 %v144
  %342 = vmatpush1.msra.mxu0 %v143
  %343 = vmatprep.subr.mxu0 %v141
  %344 = vmatpush1.msra.mxu0 %v140
  %345 = vmatprep.subr.mxu0 %v138
  %346 = vmatpush1.msra.mxu0 %v137
  %347 = vmatprep.subr.mxu0 %v135
  %348 = vmatpush1.msra.mxu0 %v134
  %349 = vmatprep.subr.mxu0 0.0
  %350 = vmatpush2.msra.mxu0 0.0
  %351 = vmatprep.subr.mxu0 0.0
  %352 = vmatpush2.msra.mxu0 0.0
  %353 = vmatprep.subr.mxu0 0.0
  %354 = vmatpush2.msra.mxu0 0.0
  %355 = vmatprep.subr.mxu0 0.0
  %356 = vmatpush2.msra.mxu0 0.0
  %357 = vmatprep.subr.mxu0 0.0
  %358 = vmatpush2.msra.mxu0 0.0
  %359 = vmatprep.subr.mxu0 0.0
  %360 = vmatpush2.msra.mxu0 0.0
  %361 = vmatprep.subr.mxu0 0.0
  %362 = vmatpush2.msra.mxu0 0.0
  %363 = vmatprep.subr.mxu0 0.0
  %364 = vmatpush2.msra.mxu0 0.0
  %365 = vmatprep.subr.mxu0 0.0
  %366 = vmatpush2.msra.mxu0 0.0
  %367 = vmatprep.subr.mxu0 0.0
  %368 = vmatpush2.msra.mxu0 0.0
  %369 = vmatprep.subr.mxu0 0.0
  %370 = vmatpush2.msra.mxu0 0.0
  %371 = vmatprep.subr.mxu0 0.0
  %372 = vmatpush2.msra.mxu0 0.0
  %373 = vmatprep.subr.mxu0 0.0
  %374 = vmatpush2.msra.mxu0 0.0
  %375 = vmatprep.subr.mxu0 0.0
  %376 = vmatpush2.msra.mxu0 0.0
  %377 = vmatprep.subr.mxu0 0.0
  %378 = vmatpush2.msra.mxu0 0.0
  %379 = vmatprep.subr.mxu0 0.0
  %380 = vmatpush2.msra.mxu0 0.0
  %381 = vmatprep.mubr.f32.mxu0 0.0
  %382 = vmatmul.mubr.f32.gmra.mxu0 %v171
  %v383 = vpop.f32.mrf.mxu0
  %v384 = vadd.f32 %v271, %v383
  %v385 = vpop.f32.mrf.mxu0
  %v386 = vadd.f32 %v273, %v385
  %387 = vmatprep.mubr.f32.mxu0 0.0
  %388 = vmatmul.mubr.f32.gmra.mxu0 %v174
  %v389 = vpop.f32.mrf.mxu0
  %v390 = vadd.f32 %v277, %v389
  %v391 = vpop.f32.mrf.mxu0
  %v392 = vadd.f32 %v279, %v391
  %393 = vmatprep.mubr.f32.mxu0 0.0
  %394 = vmatmul.mubr.f32.gmra.mxu0 %v177
  %v395 = vpop.f32.mrf.mxu0
  %v396 = vadd.f32 %v283, %v395
  %v397 = vpop.f32.mrf.mxu0
  %v398 = vadd.f32 %v285, %v397
  %399 = vmatprep.mubr.f32.mxu0 0.0
  %400 = vmatmul.mubr.f32.gmra.mxu0 %v180
  %v401 = vpop.f32.mrf.mxu0
  %v402 = vadd.f32 %v289, %v401
  %v403 = vpop.f32.mrf.mxu0
  %v404 = vadd.f32 %v291, %v403
  %405 = vmatprep.mubr.f32.mxu0 0.0
  %406 = vmatmul.mubr.f32.gmra.mxu0 %v183
  %v407 = vpop.f32.mrf.mxu0
  %v408 = vadd.f32 %v295, %v407
  %v409 = vpop.f32.mrf.mxu0
  %v410 = vadd.f32 %v297, %v409
  %411 = vmatprep.mubr.f32.mxu0 0.0
  %412 = vmatmul.mubr.f32.gmra.mxu0 %v186
  %v413 = vpop.f32.mrf.mxu0
  %v414 = vadd.f32 %v301, %v413
  %v415 = vpop.f32.mrf.mxu0
  %v416 = vadd.f32 %v303, %v415
  %417 = vmatprep.mubr.f32.mxu0 0.0
  %418 = vmatmul.mubr.f32.gmra.mxu0 %v189
  %v419 = vpop.f32.mrf.mxu0
  %v420 = vadd.f32 %v307, %v419
  %v421 = vpop.f32.mrf.mxu0
  %v422 = vadd.f32 %v309, %v421
  %423 = vmatprep.mubr.f32.mxu0 0.0
  %424 = vmatmul.mubr.f32.gmra.mxu0 %v192
  %v425 = vpop.f32.mrf.mxu0
  %v426 = vadd.f32 %v313, %v425
  %v427 = vpop.f32.mrf.mxu0
  %v428 = vadd.f32 %v315, %v427
  %429 = vdwg.mxu0
  %430 = vmatprep.subr.mxu0 0.0
  %431 = vmatpush1.msra.mxu0 %v85
  %432 = vmatprep.subr.mxu0 0.0
  %433 = vmatpush1.msra.mxu0 %v82
  %434 = vmatprep.subr.mxu0 0.0
  %435 = vmatpush1.msra.mxu0 %v79
  %436 = vmatprep.subr.mxu0 0.0
  %437 = vmatpush1.msra.mxu0 %v76
  %438 = vmatprep.subr.mxu0 0.0
  %439 = vmatpush1.msra.mxu0 %v73
  %440 = vmatprep.subr.mxu0 0.0
  %441 = vmatpush1.msra.mxu0 %v70
  %442 = vmatprep.subr.mxu0 0.0
  %443 = vmatpush1.msra.mxu0 %v67
  %444 = vmatprep.subr.mxu0 0.0
  %445 = vmatpush1.msra.mxu0 %v64
  %446 = vmatprep.subr.mxu0 0.0
  %447 = vmatpush1.msra.mxu0 %v61
  %448 = vmatprep.subr.mxu0 0.0
  %449 = vmatpush1.msra.mxu0 %v58
  %450 = vmatprep.subr.mxu0 0.0
  %451 = vmatpush1.msra.mxu0 %v55
  %452 = vmatprep.subr.mxu0 0.0
  %453 = vmatpush1.msra.mxu0 %v52
  %454 = vmatprep.subr.mxu0 0.0
  %455 = vmatpush1.msra.mxu0 %v49
  %456 = vmatprep.subr.mxu0 0.0
  %457 = vmatpush1.msra.mxu0 %v46
  %458 = vmatprep.subr.mxu0 0.0
  %459 = vmatpush1.msra.mxu0 %v43
  %460 = vmatprep.subr.mxu0 0.0
  %461 = vmatpush1.msra.mxu0 %v40
  %462 = vmatprep.subr.mxu0 0.0
  %463 = vmatpush2.msra.mxu0 %v133
  %464 = vmatprep.subr.mxu0 0.0
  %465 = vmatpush2.msra.mxu0 %v130
  %466 = vmatprep.subr.mxu0 0.0
  %467 = vmatpush2.msra.mxu0 %v127
  %468 = vmatprep.subr.mxu0 0.0
  %469 = vmatpush2.msra.mxu0 %v124
  %470 = vmatprep.subr.mxu0 0.0
  %471 = vmatpush2.msra.mxu0 %v121
  %472 = vmatprep.subr.mxu0 0.0
  %473 = vmatpush2.msra.mxu0 %v118
  %474 = vmatprep.subr.mxu0 0.0
  %475 = vmatpush2.msra.mxu0 %v115
  %476 = vmatprep.subr.mxu0 0.0
  %477 = vmatpush2.msra.mxu0 %v112
  %478 = vmatprep.subr.mxu0 0.0
  %479 = vmatpush2.msra.mxu0 %v109
  %480 = vmatprep.subr.mxu0 0.0
  %481 = vmatpush2.msra.mxu0 %v106
  %482 = vmatprep.subr.mxu0 0.0
  %483 = vmatpush2.msra.mxu0 %v103
  %484 = vmatprep.subr.mxu0 0.0
  %485 = vmatpush2.msra.mxu0 %v100
  %486 = vmatprep.subr.mxu0 0.0
  %487 = vmatpush2.msra.mxu0 %v97
  %488 = vmatprep.subr.mxu0 0.0
  %489 = vmatpush2.msra.mxu0 %v94
  %490 = vmatprep.subr.mxu0 0.0
  %491 = vmatpush2.msra.mxu0 %v91
  %492 = vmatprep.subr.mxu0 0.0
  %493 = vmatpush2.msra.mxu0 %v88
  %494 = vmatprep.mubr.f32.mxu0 %v15
  %495 = vmatmul.mubr.f32.gmra.mxu0 %v14
  %v496 = vpop.f32.mrf.mxu0
  %v497 = vadd.f32 %v165, %v496
  %v498 = vpop.f32.mrf.mxu0
  %499 = vmatprep.mubr.f32.mxu0 %v18
  %500 = vmatmul.mubr.f32.gmra.mxu0 %v17
  %v501 = vpop.f32.mrf.mxu0
  %v502 = vadd.f32 %v165, %v501
  %v503 = vpop.f32.mrf.mxu0
  %504 = vmatprep.mubr.f32.mxu0 %v21
  %505 = vmatmul.mubr.f32.gmra.mxu0 %v20
  %v506 = vpop.f32.mrf.mxu0
  %v507 = vadd.f32 %v165, %v506
  %v508 = vpop.f32.mrf.mxu0
  %509 = vmatprep.mubr.f32.mxu0 %v24
  %510 = vmatmul.mubr.f32.gmra.mxu0 %v23
  %v511 = vpop.f32.mrf.mxu0
  %v512 = vadd.f32 %v165, %v511
  %v513 = vpop.f32.mrf.mxu0
  %514 = vmatprep.mubr.f32.mxu0 %v27
  %515 = vmatmul.mubr.f32.gmra.mxu0 %v26
  %v516 = vpop.f32.mrf.mxu0
  %v517 = vadd.f32 %v165, %v516
  %v518 = vpop.f32.mrf.mxu0
  %519 = vmatprep.mubr.f32.mxu0 %v30
  %520 = vmatmul.mubr.f32.gmra.mxu0 %v29
  %v521 = vpop.f32.mrf.mxu0
  %v522 = vadd.f32 %v165, %v521
  %v523 = vpop.f32.mrf.mxu0
  %524 = vmatprep.mubr.f32.mxu0 %v33
  %525 = vmatmul.mubr.f32.gmra.mxu0 %v32
  %v526 = vpop.f32.mrf.mxu0
  %v527 = vadd.f32 %v165, %v526
  %v528 = vpop.f32.mrf.mxu0
  %529 = vmatprep.mubr.f32.mxu0 %v36
  %530 = vmatmul.mubr.f32.gmra.mxu0 %v35
  %v531 = vpop.f32.mrf.mxu0
  %v532 = vadd.f32 %v165, %v531
  %v533 = vpop.f32.mrf.mxu0
  %534 = vdwg.mxu0
  %535 = vmatprep.subr.mxu0 0.0
  %536 = vmatpush1.msra.mxu0 0.0
  %537 = vmatprep.subr.mxu0 0.0
  %538 = vmatpush1.msra.mxu0 0.0
  %539 = vmatprep.subr.mxu0 0.0
  %540 = vmatpush1.msra.mxu0 0.0
  %541 = vmatprep.subr.mxu0 0.0
  %542 = vmatpush1.msra.mxu0 0.0
  %543 = vmatprep.subr.mxu0 0.0
  %544 = vmatpush1.msra.mxu0 0.0
  %545 = vmatprep.subr.mxu0 0.0
  %546 = vmatpush1.msra.mxu0 0.0
  %547 = vmatprep.subr.mxu0 0.0
  %548 = vmatpush1.msra.mxu0 0.0
  %549 = vmatprep.subr.mxu0 0.0
  %550 = vmatpush1.msra.mxu0 0.0
  %551 = vmatprep.subr.mxu0 0.0
  %552 = vmatpush1.msra.mxu0 0.0
  %553 = vmatprep.subr.mxu0 0.0
  %554 = vmatpush1.msra.mxu0 0.0
  %555 = vmatprep.subr.mxu0 0.0
  %556 = vmatpush1.msra.mxu0 %v202
  %557 = vmatprep.subr.mxu0 0.0
  %558 = vmatpush1.msra.mxu0 %v148
  %559 = vmatprep.subr.mxu0 0.0
  %560 = vmatpush1.msra.mxu0 %v145
  %561 = vmatprep.subr.mxu0 0.0
  %562 = vmatpush1.msra.mxu0 %v142
  %563 = vmatprep.subr.mxu0 0.0
  %564 = vmatpush1.msra.mxu0 %v139
  %565 = vmatprep.subr.mxu0 0.0
  %566 = vmatpush1.msra.mxu0 %v136
  %567 = vmatprep.subr.mxu0 0.0
  %568 = vmatpush2.msra.mxu0 0.0
  %569 = vmatprep.subr.mxu0 0.0
  %570 = vmatpush2.msra.mxu0 0.0
  %571 = vmatprep.subr.mxu0 0.0
  %572 = vmatpush2.msra.mxu0 0.0
  %573 = vmatprep.subr.mxu0 0.0
  %574 = vmatpush2.msra.mxu0 0.0
  %575 = vmatprep.subr.mxu0 0.0
  %576 = vmatpush2.msra.mxu0 0.0
  %577 = vmatprep.subr.mxu0 0.0
  %578 = vmatpush2.msra.mxu0 0.0
  %579 = vmatprep.subr.mxu0 0.0
  %580 = vmatpush2.msra.mxu0 0.0
  %581 = vmatprep.subr.mxu0 0.0
  %582 = vmatpush2.msra.mxu0 0.0
  %583 = vmatprep.subr.mxu0 0.0
  %584 = vmatpush2.msra.mxu0 0.0
  %585 = vmatprep.subr.mxu0 0.0
  %586 = vmatpush2.msra.mxu0 0.0
  %587 = vmatprep.subr.mxu0 0.0
  %588 = vmatpush2.msra.mxu0 0.0
  %589 = vmatprep.subr.mxu0 0.0
  %590 = vmatpush2.msra.mxu0 0.0
  %591 = vmatprep.subr.mxu0 0.0
  %592 = vmatpush2.msra.mxu0 0.0
  %593 = vmatprep.subr.mxu0 0.0
  %594 = vmatpush2.msra.mxu0 0.0
  %595 = vmatprep.subr.mxu0 0.0
  %596 = vmatpush2.msra.mxu0 0.0
  %597 = vmatprep.subr.mxu0 0.0
  %598 = vmatpush2.msra.mxu0 0.0
  %599 = vmatprep.mubr.f32.mxu0 0.0
  %600 = vmatmul.mubr.f32.gmra.mxu0 %v171
  %v601 = vpop.f32.mrf.mxu0
  %v602 = vadd.f32 %v497, %v601
  %v603 = vpop.f32.mrf.mxu0
  %604 = vmatprep.mubr.f32.mxu0 0.0
  %605 = vmatmul.mubr.f32.gmra.mxu0 %v174
  %v606 = vpop.f32.mrf.mxu0
  %v607 = vadd.f32 %v502, %v606
  %v608 = vpop.f32.mrf.mxu0
  %609 = vmatprep.mubr.f32.mxu0 0.0
  %610 = vmatmul.mubr.f32.gmra.mxu0 %v177
  %v611 = vpop.f32.mrf.mxu0
  %v612 = vadd.f32 %v507, %v611
  %v613 = vpop.f32.mrf.mxu0
  %614 = vmatprep.mubr.f32.mxu0 0.0
  %615 = vmatmul.mubr.f32.gmra.mxu0 %v180
  %v616 = vpop.f32.mrf.mxu0
  %v617 = vadd.f32 %v512, %v616
  %v618 = vpop.f32.mrf.mxu0
  %619 = vmatprep.mubr.f32.mxu0 0.0
  %620 = vmatmul.mubr.f32.gmra.mxu0 %v183
  %v621 = vpop.f32.mrf.mxu0
  %v622 = vadd.f32 %v517, %v621
  %v623 = vpop.f32.mrf.mxu0
  %624 = vmatprep.mubr.f32.mxu0 0.0
  %625 = vmatmul.mubr.f32.gmra.mxu0 %v186
  %v626 = vpop.f32.mrf.mxu0
  %v627 = vadd.f32 %v522, %v626
  %v628 = vpop.f32.mrf.mxu0
  %629 = vmatprep.mubr.f32.mxu0 0.0
  %630 = vmatmul.mubr.f32.gmra.mxu0 %v189
  %v631 = vpop.f32.mrf.mxu0
  %v632 = vadd.f32 %v527, %v631
  %v633 = vpop.f32.mrf.mxu0
  %634 = vmatprep.mubr.f32.mxu0 0.0
  %635 = vmatmul.mubr.f32.gmra.mxu0 %v192
  %v636 = vpop.f32.mrf.mxu0
  %v637 = vadd.f32 %v532, %v636
  %v638 = vpop.f32.mrf.mxu0
  %639 = vdwg.mxu0
  %640 = vst [vmem:[%s3] sm:$0xff] %v384
  %641 = vst [vmem:[%s3 + $0x8] sm:$0xff] %v386
  %642 = vst [vmem:[%s3 + $0x10] sm:$0xff] %v602
  %643 = vst [vmem:[%s3 + $0x18] sm:$0xff] %v390
  %644 = vst [vmem:[%s3 + $0x20] sm:$0xff] %v392
  %645 = vst [vmem:[%s3 + $0x28] sm:$0xff] %v607
  %646 = vst [vmem:[%s3 + $0x30] sm:$0xff] %v396
  %647 = vst [vmem:[%s3 + $0x38] sm:$0xff] %v398
  %648 = vst [vmem:[%s3 + $0x40] sm:$0xff] %v612
  %649 = vst [vmem:[%s3 + $0x48] sm:$0xff] %v402
  %650 = vst [vmem:[%s3 + $0x50] sm:$0xff] %v404
  %651 = vst [vmem:[%s3 + $0x58] sm:$0xff] %v617
  %652 = vst [vmem:[%s3 + $0x60] sm:$0xff] %v408
  %653 = vst [vmem:[%s3 + $0x68] sm:$0xff] %v410
  %654 = vst [vmem:[%s3 + $0x70] sm:$0xff] %v622
  %655 = vst [vmem:[%s3 + $0x78] sm:$0xff] %v414
  %656 = vst [vmem:[%s3 + $0x80] sm:$0xff] %v416
  %657 = vst [vmem:[%s3 + $0x88] sm:$0xff] %v627
  %658 = vst [vmem:[%s3 + $0x90] sm:$0xff] %v420
  %659 = vst [vmem:[%s3 + $0x98] sm:$0xff] %v422
  %660 = vst [vmem:[%s3 + $0xa0] sm:$0xff] %v632
  %661 = vst [vmem:[%s3 + $0xa8] sm:$0xff] %v426
  %662 = vst [vmem:[%s3 + $0xb0] sm:$0xff] %v428
  %663 = vst [vmem:[%s3 + $0xb8] sm:$0xff] %v637
  // Predicated region
  $region14: #{decoder_forward.3} parent=0 // pred_check
    _
  $region15: #{decoder_forward.3} parent=0 // pred_check_branch
    %665 = sbr.rel (0) target = $region17
  $region16: #{decoder_forward.3} parent=0 // pred_region
    _
  $region17: #{decoder_forward.3} parent=0 // pred_fallthru
    _
  // Predicated region
  $region18: #{decoder_forward.3} parent=0 // pred_check
    _
  $region19: #{decoder_forward.3} parent=0 // pred_check_branch
    %667 = sbr.rel (0) target = $region21
  $region20: #{decoder_forward.3} parent=0 // pred_region
    _
  $region21: #{decoder_forward.3} parent=0 // pred_fallthru
    _

// kernel: decoder_forward.5
$region0: #{decoder_forward.5}
  #allocation0 [shape = 'u32[]', space=smem, size = 0x4, offset = 0x4, fixed_abs, tag = 'smem constant byte address 0x4 - core index']
  #allocation1 [shape = 'u32[144,128]{1,0:T(1,128)}', space=vmem, size = 0x12000, scoped, tag = 'internal scratch']
  %s0 = inlined_call_operand.vmem [shape: f32[16,128], index: 0, kind: input, shape index: {}]
  %s1 = inlined_call_operand.vmem [shape: f32[128,256], index: 1, kind: input, shape index: {}]
  %s2 = inlined_call_operand.vmem [shape: f32[1,256], index: 2, kind: input, shape index: {}]
  %s3 = inlined_call_operand.hbm [shape: f32[16,256], index: 3, kind: output, shape index: {}]
  %s4 = sld [smem:[#allocation0]]
  $region22: #{decoder_forward.5} parent=0
    _
  %s6 = ssub.s32 1, %s4
  %s7 = scalar_select 0, %s6, %s4
  $region1: #{decoder_forward.5} parent=0
    #allocation2 [shape = 'u8[16384]{0}', space=vmem, size = 0x4000, scoped, tag = 'output window, operand 0, single buffered']
    #allocation3 [shape = 's32[1]{0}', space=sflag, size = 0x4, scoped, tag = 'scoped memory for decoder_forward.5']
    %8 = vsyncpa [#allocation3], 0
    // Predicated region
    $region2: #{decoder_forward.5} parent=1 // pred_check
      _
    $region3: #{decoder_forward.5} parent=1 // pred_check_branch
      %10 = sbr.rel (0) target = $region5
    $region4: #{decoder_forward.5} parent=1 // pred_region
      _
    $region5: #{decoder_forward.5} parent=1 // pred_fallthru
      _
    // Predicated region
    $region6: #{decoder_forward.5} parent=1 // pred_check
      _
    $region7: #{decoder_forward.5} parent=1 // pred_check_branch
      %12 = sbr.rel (0) target = $region9
    $region8: #{decoder_forward.5} parent=1 // pred_region
      _
    $region9: #{decoder_forward.5} parent=1 // pred_fallthru
      _
    // Predicated region
    $region10: #{decoder_forward.5} parent=1 // pred_check
      _
    $region11: #{decoder_forward.5} parent=1 // pred_check_branch
      %14 = sbr.rel (0) target = $region13
    $region12: #{decoder_forward.5} parent=1 // pred_region
      _
    $region13: #{decoder_forward.5} parent=1 // pred_fallthru
      _
    %v15 = vld [vmem:[%s0] sm:$0xff]
    %v16 = vld [vmem:[%s0 + $0x8] sm:$0xff]
    %v17 = vld [vmem:[%s1] sm:$0xff]
    %v18 = vld [vmem:[%s1 + $0x8] sm:$0xff]
    %v19 = vld [vmem:[%s1 + $0x10] sm:$0xff]
    %v20 = vld [vmem:[%s1 + $0x18] sm:$0xff]
    %v21 = vld [vmem:[%s1 + $0x20] sm:$0xff]
    %v22 = vld [vmem:[%s1 + $0x28] sm:$0xff]
    %v23 = vld [vmem:[%s1 + $0x30] sm:$0xff]
    %v24 = vld [vmem:[%s1 + $0x38] sm:$0xff]
    %v25 = vld [vmem:[%s1 + $0x40] sm:$0xff]
    %v26 = vld [vmem:[%s1 + $0x48] sm:$0xff]
    %v27 = vld [vmem:[%s1 + $0x50] sm:$0xff]
    %v28 = vld [vmem:[%s1 + $0x58] sm:$0xff]
    %v29 = vld [vmem:[%s1 + $0x60] sm:$0xff]
    %v30 = vld [vmem:[%s1 + $0x68] sm:$0xff]
    %v31 = vld [vmem:[%s1 + $0x70] sm:$0xff]
    %v32 = vld [vmem:[%s1 + $0x78] sm:$0xff]
    %v33 = vld [vmem:[%s1 + $0x80] sm:$0xff]
    %v34 = vld [vmem:[%s1 + $0x88] sm:$0xff]
    %v35 = vld [vmem:[%s1 + $0x90] sm:$0xff]
    %v36 = vld [vmem:[%s1 + $0x98] sm:$0xff]
    %v37 = vld [vmem:[%s1 + $0xa0] sm:$0xff]
    %v38 = vld [vmem:[%s1 + $0xa8] sm:$0xff]
    %v39 = vld [vmem:[%s1 + $0xb0] sm:$0xff]
    %v40 = vld [vmem:[%s1 + $0xb8] sm:$0xff]
    %v41 = vld [vmem:[%s1 + $0xc0] sm:$0xff]
    %v42 = vld [vmem:[%s1 + $0xc8] sm:$0xff]
    %v43 = vld [vmem:[%s1 + $0xd0] sm:$0xff]
    %v44 = vld [vmem:[%s1 + $0xd8] sm:$0xff]
    %v45 = vld [vmem:[%s1 + $0xe0] sm:$0xff]
    %v46 = vld [vmem:[%s1 + $0xe8] sm:$0xff]
    %v47 = vld [vmem:[%s1 + $0xf0] sm:$0xff]
    %v48 = vld [vmem:[%s1 + $0xf8] sm:$0xff]
    %v49 = vld [vmem:[%s2] sm:$0x3]
    %v51 = vlaneseq
    %v52 = vshrl.u32 %v51, 7
    %v53 = vsub.s32 0, %v52
    %v54 = vrot.slane %v49, %v53
    %v55 = vlaneseq
    %v56 = vshrl.u32 %v55, 7
    %v57 = vsub.s32 1, %v56
    %v58 = vrot.slane %v49, %v57
    %61 = vmatprep.subr.mxu0 %v48
    %62 = vmatpush1.msra.mxu0 %v47
    %63 = vmatprep.subr.mxu0 %v46
    %64 = vmatpush1.msra.mxu0 %v45
    %65 = vmatprep.subr.mxu0 %v44
    %66 = vmatpush1.msra.mxu0 %v43
    %67 = vmatprep.subr.mxu0 %v42
    %68 = vmatpush1.msra.mxu0 %v41
    %69 = vmatprep.subr.mxu0 %v40
    %70 = vmatpush1.msra.mxu0 %v39
    %71 = vmatprep.subr.mxu0 %v38
    %72 = vmatpush1.msra.mxu0 %v37
    %73 = vmatprep.subr.mxu0 %v36
    %74 = vmatpush1.msra.mxu0 %v35
    %75 = vmatprep.subr.mxu0 %v34
    %76 = vmatpush1.msra.mxu0 %v33
    %77 = vmatprep.subr.mxu0 %v32
    %78 = vmatpush1.msra.mxu0 %v31
    %79 = vmatprep.subr.mxu0 %v30
    %80 = vmatpush1.msra.mxu0 %v29
    %81 = vmatprep.subr.mxu0 %v28
    %82 = vmatpush1.msra.mxu0 %v27
    %83 = vmatprep.subr.mxu0 %v26
    %84 = vmatpush1.msra.mxu0 %v25
    %85 = vmatprep.subr.mxu0 %v24
    %86 = vmatpush1.msra.mxu0 %v23
    %87 = vmatprep.subr.mxu0 %v22
    %88 = vmatpush1.msra.mxu0 %v21
    %89 = vmatprep.subr.mxu0 %v20
    %90 = vmatpush1.msra.mxu0 %v19
    %91 = vmatprep.subr.mxu0 %v18
    %92 = vmatpush1.msra.mxu0 %v17
    %93 = vmatprep.subr.mxu0 0.0
    %94 = vmatpush2.msra.mxu0 0.0
    %95 = vmatprep.subr.mxu0 0.0
    %96 = vmatpush2.msra.mxu0 0.0
    %97 = vmatprep.subr.mxu0 0.0
    %98 = vmatpush2.msra.mxu0 0.0
    %99 = vmatprep.subr.mxu0 0.0
    %100 = vmatpush2.msra.mxu0 0.0
    %101 = vmatprep.subr.mxu0 0.0
    %102 = vmatpush2.msra.mxu0 0.0
    %103 = vmatprep.subr.mxu0 0.0
    %104 = vmatpush2.msra.mxu0 0.0
    %105 = vmatprep.subr.mxu0 0.0
    %106 = vmatpush2.msra.mxu0 0.0
    %107 = vmatprep.subr.mxu0 0.0
    %108 = vmatpush2.msra.mxu0 0.0
    %109 = vmatprep.subr.mxu0 0.0
    %110 = vmatpush2.msra.mxu0 0.0
    %111 = vmatprep.subr.mxu0 0.0
    %112 = vmatpush2.msra.mxu0 0.0
    %113 = vmatprep.subr.mxu0 0.0
    %114 = vmatpush2.msra.mxu0 0.0
    %115 = vmatprep.subr.mxu0 0.0
    %116 = vmatpush2.msra.mxu0 0.0
    %117 = vmatprep.subr.mxu0 0.0
    %118 = vmatpush2.msra.mxu0 0.0
    %119 = vmatprep.subr.mxu0 0.0
    %120 = vmatpush2.msra.mxu0 0.0
    %121 = vmatprep.subr.mxu0 0.0
    %122 = vmatpush2.msra.mxu0 0.0
    %123 = vmatprep.subr.mxu0 0.0
    %124 = vmatpush2.msra.mxu0 0.0
    %125 = vmatprep.mubr.f32.mxu0 0.0
    %126 = vmatmul.mubr.f32.gmra.mxu0 %v15
    %v127 = vpop.f32.mrf.mxu0
    %v128 = vadd.f32 %v54, %v127
    %v129 = vpop.f32.mrf.mxu0
    %v130 = vadd.f32 %v58, %v129
    %131 = vmatprep.mubr.f32.mxu0 0.0
    %132 = vmatmul.mubr.f32.gmra.mxu0 %v16
    %v133 = vpop.f32.mrf.mxu0
    %v134 = vadd.f32 %v54, %v133
    %v135 = vpop.f32.mrf.mxu0
    %v136 = vadd.f32 %v58, %v135
    %137 = vdwg.mxu0
    %138 = vst [vmem:[#allocation2] sm:$0xff] %v128
    %139 = vst [vmem:[#allocation2 + $0x8] sm:$0xff] %v130
    %140 = vst [vmem:[#allocation2 + $0x10] sm:$0xff] %v134
    %141 = vst [vmem:[#allocation2 + $0x18] sm:$0xff] %v136
    // Predicated region
    $region14: #{decoder_forward.5} parent=1 // pred_check
      _
    $region15: #{decoder_forward.5} parent=1 // pred_check_branch
      %143 = sbr.rel (0) target = $region17
    $region16: #{decoder_forward.5} parent=1 // pred_region
      %s145 = ssub.s32 512, 512
      %146 = vsyncadd [#allocation3], %s145
      %s147 = sshll.u32 [#allocation2], 4
      %s148 = int_to_ptr.vmem [resolvable:$true] %s147
      %153 = dma.vmem_to_hbm [thread:$0]  %s148, 512, %s3, [#allocation3], 256, 256, 16
    $region17: #{decoder_forward.5} parent=1 // pred_fallthru
      _
    // Predicated region
    $region18: #{decoder_forward.5} parent=1 // pred_check
      _
    $region19: #{decoder_forward.5} parent=1 // pred_check_branch
      %155 = sbr.rel (0) target = $region21
    $region20: #{decoder_forward.5} parent=1 // pred_region
      %156 = dma.done [#allocation3], 512
    $region21: #{decoder_forward.5} parent=1 // pred_fallthru
      _
    %157 = vsyncpa [#allocation3], 1

// kernel: decoder_forward.4
$region0: #{decoder_forward.4}
  #allocation0 [shape = 'u32[]', space=smem, size = 0x4, offset = 0x4, fixed_abs, tag = 'smem constant byte address 0x4 - core index']
  #allocation1 [shape = 'u32[144,128]{1,0:T(1,128)}', space=vmem, size = 0x12000, scoped, tag = 'internal scratch']
  %s0 = inlined_call_operand.vmem [shape: f32[8,8,384], index: 0, kind: input, shape index: {}]
  %s1 = inlined_call_operand.vmem [shape: f32[3,8,128], index: 1, kind: input, shape index: {}]
  %s2 = inlined_call_operand.vmem [shape: f32[3,128,384], index: 2, kind: input, shape index: {}]
  %s3 = inlined_call_operand.vmem [shape: f32[2,128,384], index: 3, kind: input, shape index: {}]
  %s4 = inlined_call_operand.vmem [shape: f32[2,1,384], index: 4, kind: input, shape index: {}]
  %s5 = inlined_call_operand.vmem [shape: f32[3,1,384], index: 5, kind: input, shape index: {}]
  %s6 = inlined_call_operand.vmem [shape: f32[8,8,128], index: 6, kind: output, shape index: {0}]
  %s7 = inlined_call_operand.vmem [shape: f32[3,8,128], index: 7, kind: output, shape index: {1}]
  %8 = xla_tuple %s6, %s7
  %s9 = sld [smem:[#allocation0]]
  $region42: #{decoder_forward.4} parent=0
    _
  %s11 = ssub.s32 1, %s9
  %s12 = scalar_select 0, %s11, %s9
  // Predicated region
  $region2: #{decoder_forward.4} parent=0 // pred_check
    _
  $region3: #{decoder_forward.4} parent=0 // pred_check_branch
    %14 = sbr.rel (0) target = $region5
  $region4: #{decoder_forward.4} parent=0 // pred_region
    _
  $region5: #{decoder_forward.4} parent=0 // pred_fallthru
    _
  // Predicated region
  $region6: #{decoder_forward.4} parent=0 // pred_check
    _
  $region7: #{decoder_forward.4} parent=0 // pred_check_branch
    %16 = sbr.rel (0) target = $region9
  $region8: #{decoder_forward.4} parent=0 // pred_region
    _
  $region9: #{decoder_forward.4} parent=0 // pred_fallthru
    _
  // Predicated region
  $region10: #{decoder_forward.4} parent=0 // pred_check
    _
  $region11: #{decoder_forward.4} parent=0 // pred_check_branch
    %18 = sbr.rel (0) target = $region13
  $region12: #{decoder_forward.4} parent=0 // pred_region
    _
  $region13: #{decoder_forward.4} parent=0 // pred_fallthru
    _
  // Predicated region
  $region14: #{decoder_forward.4} parent=0 // pred_check
    _
  $region15: #{decoder_forward.4} parent=0 // pred_check_branch
    %20 = sbr.rel (0) target = $region17
  $region16: #{decoder_forward.4} parent=0 // pred_region
    _
  $region17: #{decoder_forward.4} parent=0 // pred_fallthru
    _
  // Predicated region
  $region18: #{decoder_forward.4} parent=0 // pred_check
    _
  $region19: #{decoder_forward.4} parent=0 // pred_check_branch
    %22 = sbr.rel (0) target = $region21
  $region20: #{decoder_forward.4} parent=0 // pred_region
    _
  $region21: #{decoder_forward.4} parent=0 // pred_fallthru
    _
  // Predicated region
  $region22: #{decoder_forward.4} parent=0 // pred_check
    _
  $region23: #{decoder_forward.4} parent=0 // pred_check_branch
    %24 = sbr.rel (0) target = $region25
  $region24: #{decoder_forward.4} parent=0 // pred_region
    _
  $region25: #{decoder_forward.4} parent=0 // pred_fallthru
    _
  %v25 = vld [vmem:[%s4] sm:$0x7]
  %v27 = vlaneseq
  %v28 = vshrl.u32 %v27, 7
  %v29 = vsub.s32 0, %v28
  %v30 = vrot.slane %v25, %v29
  %v31 = vlaneseq
  %v32 = vshrl.u32 %v31, 7
  %v33 = vsub.s32 1, %v32
  %v34 = vrot.slane %v25, %v33
  %v35 = vlaneseq
  %v36 = vshrl.u32 %v35, 7
  %v37 = vsub.s32 2, %v36
  %v38 = vrot.slane %v25, %v37
  %s42 = scalar_lea.vmem %s4, 3
  %v43 = vld [vmem:[%s42] sm:$0x7]
  %v45 = vlaneseq
  %v46 = vshrl.u32 %v45, 7
  %v47 = vsub.s32 0, %v46
  %v48 = vrot.slane %v43, %v47
  %v49 = vlaneseq
  %v50 = vshrl.u32 %v49, 7
  %v51 = vsub.s32 1, %v50
  %v52 = vrot.slane %v43, %v51
  %v53 = vlaneseq
  %v54 = vshrl.u32 %v53, 7
  %v55 = vsub.s32 2, %v54
  %v56 = vrot.slane %v43, %v55
  %v60 = vld [vmem:[%s5] sm:$0x7]
  %v62 = vlaneseq
  %v63 = vshrl.u32 %v62, 7
  %v64 = vsub.s32 0, %v63
  %v65 = vrot.slane %v60, %v64
  %v66 = vlaneseq
  %v67 = vshrl.u32 %v66, 7
  %v68 = vsub.s32 1, %v67
  %v69 = vrot.slane %v60, %v68
  %v70 = vlaneseq
  %v71 = vshrl.u32 %v70, 7
  %v72 = vsub.s32 2, %v71
  %v73 = vrot.slane %v60, %v72
  %s77 = scalar_lea.vmem %s5, 3
  %v78 = vld [vmem:[%s77] sm:$0x7]
  %v80 = vlaneseq
  %v81 = vshrl.u32 %v80, 7
  %v82 = vsub.s32 0, %v81
  %v83 = vrot.slane %v78, %v82
  %v84 = vlaneseq
  %v85 = vshrl.u32 %v84, 7
  %v86 = vsub.s32 1, %v85
  %v87 = vrot.slane %v78, %v86
  %v88 = vlaneseq
  %v89 = vshrl.u32 %v88, 7
  %v90 = vsub.s32 2, %v89
  %v91 = vrot.slane %v78, %v90
  %s95 = scalar_lea.vmem %s5, 6
  %v96 = vld [vmem:[%s95] sm:$0x7]
  %v98 = vlaneseq
  %v99 = vshrl.u32 %v98, 7
  %v100 = vsub.s32 0, %v99
  %v101 = vrot.slane %v96, %v100
  %v102 = vlaneseq
  %v103 = vshrl.u32 %v102, 7
  %v104 = vsub.s32 1, %v103
  %v105 = vrot.slane %v96, %v104
  %v106 = vlaneseq
  %v107 = vshrl.u32 %v106, 7
  %v108 = vsub.s32 2, %v107
  %v109 = vrot.slane %v96, %v108
  %v113 = vld [vmem:[%s1] sm:$0xff]
  %s114 = scalar_lea.vmem %s1, 8
  %v115 = vld [vmem:[%s114] sm:$0xff]
  %s116 = scalar_lea.vmem %s1, 16
  %v117 = vld [vmem:[%s116] sm:$0xff]
  %v118 = vld [vmem:[%s0] sm:$0xff]
  %v119 = vld [vmem:[%s0 + $0x8] sm:$0xff]
  %v120 = vld [vmem:[%s0 + $0x10] sm:$0xff]
  %v121 = vld [vmem:[%s2] sm:$0xff]
  %v122 = vld [vmem:[%s2 + $0x8] sm:$0xff]
  %v123 = vld [vmem:[%s2 + $0x10] sm:$0xff]
  %v124 = vld [vmem:[%s2 + $0x18] sm:$0xff]
  %v125 = vld [vmem:[%s2 + $0x20] sm:$0xff]
  %v126 = vld [vmem:[%s2 + $0x28] sm:$0xff]
  %v127 = vld [vmem:[%s2 + $0x30] sm:$0xff]
  %v128 = vld [vmem:[%s2 + $0x38] sm:$0xff]
  %v129 = vld [vmem:[%s2 + $0x40] sm:$0xff]
  %v130 = vld [vmem:[%s2 + $0x48] sm:$0xff]
  %v131 = vld [vmem:[%s2 + $0x50] sm:$0xff]
  %v132 = vld [vmem:[%s2 + $0x58] sm:$0xff]
  %v133 = vld [vmem:[%s2 + $0x60] sm:$0xff]
  %v134 = vld [vmem:[%s2 + $0x68] sm:$0xff]
  %v135 = vld [vmem:[%s2 + $0x70] sm:$0xff]
  %v136 = vld [vmem:[%s2 + $0x78] sm:$0xff]
  %v137 = vld [vmem:[%s2 + $0x80] sm:$0xff]
  %v138 = vld [vmem:[%s2 + $0x88] sm:$0xff]
  %v139 = vld [vmem:[%s2 + $0x90] sm:$0xff]
  %v140 = vld [vmem:[%s2 + $0x98] sm:$0xff]
  %v141 = vld [vmem:[%s2 + $0xa0] sm:$0xff]
  %v142 = vld [vmem:[%s2 + $0xa8] sm:$0xff]
  %v143 = vld [vmem:[%s2 + $0xb0] sm:$0xff]
  %v144 = vld [vmem:[%s2 + $0xb8] sm:$0xff]
  %v145 = vld [vmem:[%s2 + $0xc0] sm:$0xff]
  %v146 = vld [vmem:[%s2 + $0xc8] sm:$0xff]
  %v147 = vld [vmem:[%s2 + $0xd0] sm:$0xff]
  %v148 = vld [vmem:[%s2 + $0xd8] sm:$0xff]
  %v149 = vld [vmem:[%s2 + $0xe0] sm:$0xff]
  %v150 = vld [vmem:[%s2 + $0xe8] sm:$0xff]
  %v151 = vld [vmem:[%s2 + $0xf0] sm:$0xff]
  %v152 = vld [vmem:[%s2 + $0xf8] sm:$0xff]
  %v153 = vld [vmem:[%s2 + $0x100] sm:$0xff]
  %v154 = vld [vmem:[%s2 + $0x108] sm:$0xff]
  %v155 = vld [vmem:[%s2 + $0x110] sm:$0xff]
  %v156 = vld [vmem:[%s2 + $0x118] sm:$0xff]
  %v157 = vld [vmem:[%s2 + $0x120] sm:$0xff]
  %v158 = vld [vmem:[%s2 + $0x128] sm:$0xff]
  %v159 = vld [vmem:[%s2 + $0x130] sm:$0xff]
  %v160 = vld [vmem:[%s2 + $0x138] sm:$0xff]
  %v161 = vld [vmem:[%s2 + $0x140] sm:$0xff]
  %v162 = vld [vmem:[%s2 + $0x148] sm:$0xff]
  %v163 = vld [vmem:[%s2 + $0x150] sm:$0xff]
  %v164 = vld [vmem:[%s2 + $0x158] sm:$0xff]
  %v165 = vld [vmem:[%s2 + $0x160] sm:$0xff]
  %v166 = vld [vmem:[%s2 + $0x168] sm:$0xff]
  %v167 = vld [vmem:[%s2 + $0x170] sm:$0xff]
  %v168 = vld [vmem:[%s2 + $0x178] sm:$0xff]
  %169 = vmatprep.subr.mxu0 %v167
  %170 = vmatpush1.msra.mxu0 %v166
  %171 = vmatprep.subr.mxu0 %v164
  %172 = vmatpush1.msra.mxu0 %v163
  %173 = vmatprep.subr.mxu0 %v161
  %174 = vmatpush1.msra.mxu0 %v160
  %175 = vmatprep.subr.mxu0 %v158
  %176 = vmatpush1.msra.mxu0 %v157
  %177 = vmatprep.subr.mxu0 %v155
  %178 = vmatpush1.msra.mxu0 %v154
  %179 = vmatprep.subr.mxu0 %v152
  %180 = vmatpush1.msra.mxu0 %v151
  %181 = vmatprep.subr.mxu0 %v149
  %182 = vmatpush1.msra.mxu0 %v148
  %183 = vmatprep.subr.mxu0 %v146
  %184 = vmatpush1.msra.mxu0 %v145
  %185 = vmatprep.subr.mxu0 %v143
  %186 = vmatpush1.msra.mxu0 %v142
  %187 = vmatprep.subr.mxu0 %v140
  %188 = vmatpush1.msra.mxu0 %v139
  %189 = vmatprep.subr.mxu0 %v137
  %190 = vmatpush1.msra.mxu0 %v136
  %191 = vmatprep.subr.mxu0 %v134
  %192 = vmatpush1.msra.mxu0 %v133
  %193 = vmatprep.subr.mxu0 %v131
  %194 = vmatpush1.msra.mxu0 %v130
  %195 = vmatprep.subr.mxu0 %v128
  %196 = vmatpush1.msra.mxu0 %v127
  %197 = vmatprep.subr.mxu0 %v125
  %198 = vmatpush1.msra.mxu0 %v124
  %199 = vmatprep.subr.mxu0 %v122
  %200 = vmatpush1.msra.mxu0 %v121
  %201 = vmatprep.subr.mxu0 0.0
  %202 = vmatpush2.msra.mxu0 0.0
  %203 = vmatprep.subr.mxu0 0.0
  %204 = vmatpush2.msra.mxu0 0.0
  %205 = vmatprep.subr.mxu0 0.0
  %206 = vmatpush2.msra.mxu0 0.0
  %207 = vmatprep.subr.mxu0 0.0
  %208 = vmatpush2.msra.mxu0 0.0
  %209 = vmatprep.subr.mxu0 0.0
  %210 = vmatpush2.msra.mxu0 0.0
  %211 = vmatprep.subr.mxu0 0.0
  %212 = vmatpush2.msra.mxu0 0.0
  %213 = vmatprep.subr.mxu0 0.0
  %214 = vmatpush2.msra.mxu0 0.0
  %215 = vmatprep.subr.mxu0 0.0
  %216 = vmatpush2.msra.mxu0 0.0
  %217 = vmatprep.subr.mxu0 0.0
  %218 = vmatpush2.msra.mxu0 0.0
  %219 = vmatprep.subr.mxu0 0.0
  %220 = vmatpush2.msra.mxu0 0.0
  %221 = vmatprep.subr.mxu0 0.0
  %222 = vmatpush2.msra.mxu0 0.0
  %223 = vmatprep.subr.mxu0 0.0
  %224 = vmatpush2.msra.mxu0 0.0
  %225 = vmatprep.subr.mxu0 0.0
  %226 = vmatpush2.msra.mxu0 0.0
  %227 = vmatprep.subr.mxu0 0.0
  %228 = vmatpush2.msra.mxu0 0.0
  %229 = vmatprep.subr.mxu0 0.0
  %230 = vmatpush2.msra.mxu0 0.0
  %231 = vmatprep.subr.mxu0 0.0
  %232 = vmatpush2.msra.mxu0 0.0
  %233 = vmatprep.mubr.f32.mxu0 0.0
  %234 = vmatmul.mubr.f32.gmra.mxu0 %v113
  %v235 = vpop.f32.mrf.mxu0
  %v236 = vadd.f32 %v65, %v235
  %v237 = vpop.f32.mrf.mxu0
  %v238 = vadd.f32 %v69, %v237
  %239 = vdwg.mxu0
  %240 = vmatprep.subr.mxu0 0.0
  %241 = vmatpush1.msra.mxu0 %v168
  %242 = vmatprep.subr.mxu0 0.0
  %243 = vmatpush1.msra.mxu0 %v165
  %244 = vmatprep.subr.mxu0 0.0
  %245 = vmatpush1.msra.mxu0 %v162
  %246 = vmatprep.subr.mxu0 0.0
  %247 = vmatpush1.msra.mxu0 %v159
  %248 = vmatprep.subr.mxu0 0.0
  %249 = vmatpush1.msra.mxu0 %v156
  %250 = vmatprep.subr.mxu0 0.0
  %251 = vmatpush1.msra.mxu0 %v153
  %252 = vmatprep.subr.mxu0 0.0
  %253 = vmatpush1.msra.mxu0 %v150
  %254 = vmatprep.subr.mxu0 0.0
  %255 = vmatpush1.msra.mxu0 %v147
  %256 = vmatprep.subr.mxu0 0.0
  %257 = vmatpush1.msra.mxu0 %v144
  %258 = vmatprep.subr.mxu0 0.0
  %259 = vmatpush1.msra.mxu0 %v141
  %260 = vmatprep.subr.mxu0 0.0
  %261 = vmatpush1.msra.mxu0 %v138
  %262 = vmatprep.subr.mxu0 0.0
  %263 = vmatpush1.msra.mxu0 %v135
  %264 = vmatprep.subr.mxu0 0.0
  %265 = vmatpush1.msra.mxu0 %v132
  %266 = vmatprep.subr.mxu0 0.0
  %267 = vmatpush1.msra.mxu0 %v129
  %268 = vmatprep.subr.mxu0 0.0
  %269 = vmatpush1.msra.mxu0 %v126
  %270 = vmatprep.subr.mxu0 0.0
  %271 = vmatpush1.msra.mxu0 %v123
  %272 = vmatprep.subr.mxu0 0.0
  %273 = vmatpush2.msra.mxu0 0.0
  %274 = vmatprep.subr.mxu0 0.0
  %275 = vmatpush2.msra.mxu0 0.0
  %276 = vmatprep.subr.mxu0 0.0
  %277 = vmatpush2.msra.mxu0 0.0
  %278 = vmatprep.subr.mxu0 0.0
  %279 = vmatpush2.msra.mxu0 0.0
  %280 = vmatprep.subr.mxu0 0.0
  %281 = vmatpush2.msra.mxu0 0.0
  %282 = vmatprep.subr.mxu0 0.0
  %283 = vmatpush2.msra.mxu0 0.0
  %284 = vmatprep.subr.mxu0 0.0
  %285 = vmatpush2.msra.mxu0 0.0
  %286 = vmatprep.subr.mxu0 0.0
  %287 = vmatpush2.msra.mxu0 0.0
  %288 = vmatprep.subr.mxu0 0.0
  %289 = vmatpush2.msra.mxu0 0.0
  %290 = vmatprep.subr.mxu0 0.0
  %291 = vmatpush2.msra.mxu0 0.0
  %292 = vmatprep.subr.mxu0 0.0
  %293 = vmatpush2.msra.mxu0 0.0
  %294 = vmatprep.subr.mxu0 0.0
  %295 = vmatpush2.msra.mxu0 0.0
  %296 = vmatprep.subr.mxu0 0.0
  %297 = vmatpush2.msra.mxu0 0.0
  %298 = vmatprep.subr.mxu0 0.0
  %299 = vmatpush2.msra.mxu0 0.0
  %300 = vmatprep.subr.mxu0 0.0
  %301 = vmatpush2.msra.mxu0 0.0
  %302 = vmatprep.subr.mxu0 0.0
  %303 = vmatpush2.msra.mxu0 0.0
  %304 = vmatprep.mubr.f32.mxu0 0.0
  %305 = vmatmul.mubr.f32.gmra.mxu0 %v113
  %v306 = vpop.f32.mrf.mxu0
  %v307 = vadd.f32 %v73, %v306
  %v308 = vpop.f32.mrf.mxu0
  %309 = vdwg.mxu0
  %v310 = vadd.f32 %v118, %v236
  %v311 = vxor.u32 %v310, 2147483648
  %v312 = vmul.f32 %v311, 1.442695
  %v313 = vpow.pop %v312
  %v314 = vadd.f32 %v313, 1.0
  %v315 = vrcp.pop %v314
  %v316 = vmul.f32 1.0, %v315
  %v317 = vadd.f32 %v119, %v238
  %v318 = vxor.u32 %v317, 2147483648
  %v319 = vmul.f32 %v318, 1.442695
  %v320 = vpow.pop %v319
  %v321 = vadd.f32 %v320, 1.0
  %v322 = vrcp.pop %v321
  %v323 = vmul.f32 1.0, %v322
  %v324 = vmul.f32 %v316, %v307
  %v325 = vadd.f32 %v120, %v324
  %v326 = vtanh.pop %v325
  %v327 = vsub.f32 1.0, %v323
  %v328 = vmul.f32 %v327, %v326
  %v329 = vmul.f32 %v323, %v113
  %v330 = vadd.f32 %v328, %v329
  %v331 = vld [vmem:[%s3] sm:$0xff]
  %v332 = vld [vmem:[%s3 + $0x8] sm:$0xff]
  %v333 = vld [vmem:[%s3 + $0x10] sm:$0xff]
  %v334 = vld [vmem:[%s3 + $0x18] sm:$0xff]
  %v335 = vld [vmem:[%s3 + $0x20] sm:$0xff]
  %v336 = vld [vmem:[%s3 + $0x28] sm:$0xff]
  %v337 = vld [vmem:[%s3 + $0x30] sm:$0xff]
  %v338 = vld [vmem:[%s3 + $0x38] sm:$0xff]
  %v339 = vld [vmem:[%s3 + $0x40] sm:$0xff]
  %v340 = vld [vmem:[%s3 + $0x48] sm:$0xff]
  %v341 = vld [vmem:[%s3 + $0x50] sm:$0xff]
  %v342 = vld [vmem:[%s3 + $0x58] sm:$0xff]
  %v343 = vld [vmem:[%s3 + $0x60] sm:$0xff]
  %v344 = vld [vmem:[%s3 + $0x68] sm:$0xff]
  %v345 = vld [vmem:[%s3 + $0x70] sm:$0xff]
  %v346 = vld [vmem:[%s3 + $0x78] sm:$0xff]
  %v347 = vld [vmem:[%s3 + $0x80] sm:$0xff]
  %v348 = vld [vmem:[%s3 + $0x88] sm:$0xff]
  %v349 = vld [vmem:[%s3 + $0x90] sm:$0xff]
  %v350 = vld [vmem:[%s3 + $0x98] sm:$0xff]
  %v351 = vld [vmem:[%s3 + $0xa0] sm:$0xff]
  %v352 = vld [vmem:[%s3 + $0xa8] sm:$0xff]
  %v353 = vld [vmem:[%s3 + $0xb0] sm:$0xff]
  %v354 = vld [vmem:[%s3 + $0xb8] sm:$0xff]
  %v355 = vld [vmem:[%s3 + $0xc0] sm:$0xff]
  %v356 = vld [vmem:[%s3 + $0xc8] sm:$0xff]
  %v357 = vld [vmem:[%s3 + $0xd0] sm:$0xff]
  %v358 = vld [vmem:[%s3 + $0xd8] sm:$0xff]
  %v359 = vld [vmem:[%s3 + $0xe0] sm:$0xff]
  %v360 = vld [vmem:[%s3 + $0xe8] sm:$0xff]
  %v361 = vld [vmem:[%s3 + $0xf0] sm:$0xff]
  %v362 = vld [vmem:[%s3 + $0xf8] sm:$0xff]
  %v363 = vld [vmem:[%s3 + $0x100] sm:$0xff]
  %v364 = vld [vmem:[%s3 + $0x108] sm:$0xff]
  %v365 = vld [vmem:[%s3 + $0x110] sm:$0xff]
  %v366 = vld [vmem:[%s3 + $0x118] sm:$0xff]
  %v367 = vld [vmem:[%s3 + $0x120] sm:$0xff]
  %v368 = vld [vmem:[%s3 + $0x128] sm:$0xff]
  %v369 = vld [vmem:[%s3 + $0x130] sm:$0xff]
  %v370 = vld [vmem:[%s3 + $0x138] sm:$0xff]
  %v371 = vld [vmem:[%s3 + $0x140] sm:$0xff]
  %v372 = vld [vmem:[%s3 + $0x148] sm:$0xff]
  %v373 = vld [vmem:[%s3 + $0x150] sm:$0xff]
  %v374 = vld [vmem:[%s3 + $0x158] sm:$0xff]
  %v375 = vld [vmem:[%s3 + $0x160] sm:$0xff]
  %v376 = vld [vmem:[%s3 + $0x168] sm:$0xff]
  %v377 = vld [vmem:[%s3 + $0x170] sm:$0xff]
  %v378 = vld [vmem:[%s3 + $0x178] sm:$0xff]
  %379 = vmatprep.subr.mxu0 %v377
  %380 = vmatpush1.msra.mxu0 %v376
  %381 = vmatprep.subr.mxu0 %v374
  %382 = vmatpush1.msra.mxu0 %v373
  %383 = vmatprep.subr.mxu0 %v371
  %384 = vmatpush1.msra.mxu0 %v370
  %385 = vmatprep.subr.mxu0 %v368
  %386 = vmatpush1.msra.mxu0 %v367
  %387 = vmatprep.subr.mxu0 %v365
  %388 = vmatpush1.msra.mxu0 %v364
  %389 = vmatprep.subr.mxu0 %v362
  %390 = vmatpush1.msra.mxu0 %v361
  %391 = vmatprep.subr.mxu0 %v359
  %392 = vmatpush1.msra.mxu0 %v358
  %393 = vmatprep.subr.mxu0 %v356
  %394 = vmatpush1.msra.mxu0 %v355
  %395 = vmatprep.subr.mxu0 %v353
  %396 = vmatpush1.msra.mxu0 %v352
  %397 = vmatprep.subr.mxu0 %v350
  %398 = vmatpush1.msra.mxu0 %v349
  %399 = vmatprep.subr.mxu0 %v347
  %400 = vmatpush1.msra.mxu0 %v346
  %401 = vmatprep.subr.mxu0 %v344
  %402 = vmatpush1.msra.mxu0 %v343
  %403 = vmatprep.subr.mxu0 %v341
  %404 = vmatpush1.msra.mxu0 %v340
  %405 = vmatprep.subr.mxu0 %v338
  %406 = vmatpush1.msra.mxu0 %v337
  %407 = vmatprep.subr.mxu0 %v335
  %408 = vmatpush1.msra.mxu0 %v334
  %409 = vmatprep.subr.mxu0 %v332
  %410 = vmatpush1.msra.mxu0 %v331
  %411 = vmatprep.subr.mxu0 0.0
  %412 = vmatpush2.msra.mxu0 0.0
  %413 = vmatprep.subr.mxu0 0.0
  %414 = vmatpush2.msra.mxu0 0.0
  %415 = vmatprep.subr.mxu0 0.0
  %416 = vmatpush2.msra.mxu0 0.0
  %417 = vmatprep.subr.mxu0 0.0
  %418 = vmatpush2.msra.mxu0 0.0
  %419 = vmatprep.subr.mxu0 0.0
  %420 = vmatpush2.msra.mxu0 0.0
  %421 = vmatprep.subr.mxu0 0.0
  %422 = vmatpush2.msra.mxu0 0.0
  %423 = vmatprep.subr.mxu0 0.0
  %424 = vmatpush2.msra.mxu0 0.0
  %425 = vmatprep.subr.mxu0 0.0
  %426 = vmatpush2.msra.mxu0 0.0
  %427 = vmatprep.subr.mxu0 0.0
  %428 = vmatpush2.msra.mxu0 0.0
  %429 = vmatprep.subr.mxu0 0.0
  %430 = vmatpush2.msra.mxu0 0.0
  %431 = vmatprep.subr.mxu0 0.0
  %432 = vmatpush2.msra.mxu0 0.0
  %433 = vmatprep.subr.mxu0 0.0
  %434 = vmatpush2.msra.mxu0 0.0
  %435 = vmatprep.subr.mxu0 0.0
  %436 = vmatpush2.msra.mxu0 0.0
  %437 = vmatprep.subr.mxu0 0.0
  %438 = vmatpush2.msra.mxu0 0.0
  %439 = vmatprep.subr.mxu0 0.0
  %440 = vmatpush2.msra.mxu0 0.0
  %441 = vmatprep.subr.mxu0 0.0
  %442 = vmatpush2.msra.mxu0 0.0
  %443 = vmatprep.mubr.f32.mxu0 0.0
  %444 = vmatmul.mubr.f32.gmra.mxu0 %v330
  %v445 = vpop.f32.mrf.mxu0
  %v446 = vadd.f32 %v30, %v445
  %v447 = vpop.f32.mrf.mxu0
  %v448 = vadd.f32 %v34, %v447
  %449 = vdwg.mxu0
  %450 = vmatprep.subr.mxu0 0.0
  %451 = vmatpush1.msra.mxu0 %v378
  %452 = vmatprep.subr.mxu0 0.0
  %453 = vmatpush1.msra.mxu0 %v375
  %454 = vmatprep.subr.mxu0 0.0
  %455 = vmatpush1.msra.mxu0 %v372
  %456 = vmatprep.subr.mxu0 0.0
  %457 = vmatpush1.msra.mxu0 %v369
  %458 = vmatprep.subr.mxu0 0.0
  %459 = vmatpush1.msra.mxu0 %v366
  %460 = vmatprep.subr.mxu0 0.0
  %461 = vmatpush1.msra.mxu0 %v363
  %462 = vmatprep.subr.mxu0 0.0
  %463 = vmatpush1.msra.mxu0 %v360
  %464 = vmatprep.subr.mxu0 0.0
  %465 = vmatpush1.msra.mxu0 %v357
  %466 = vmatprep.subr.mxu0 0.0
  %467 = vmatpush1.msra.mxu0 %v354
  %468 = vmatprep.subr.mxu0 0.0
  %469 = vmatpush1.msra.mxu0 %v351
  %470 = vmatprep.subr.mxu0 0.0
  %471 = vmatpush1.msra.mxu0 %v348
  %472 = vmatprep.subr.mxu0 0.0
  %473 = vmatpush1.msra.mxu0 %v345
  %474 = vmatprep.subr.mxu0 0.0
  %475 = vmatpush1.msra.mxu0 %v342
  %476 = vmatprep.subr.mxu0 0.0
  %477 = vmatpush1.msra.mxu0 %v339
  %478 = vmatprep.subr.mxu0 0.0
  %479 = vmatpush1.msra.mxu0 %v336
  %480 = vmatprep.subr.mxu0 0.0
  %481 = vmatpush1.msra.mxu0 %v333
  %482 = vmatprep.subr.mxu0 0.0
  %483 = vmatpush2.msra.mxu0 0.0
  %484 = vmatprep.subr.mxu0 0.0
  %485 = vmatpush2.msra.mxu0 0.0
  %486 = vmatprep.subr.mxu0 0.0
  %487 = vmatpush2.msra.mxu0 0.0
  %488 = vmatprep.subr.mxu0 0.0
  %489 = vmatpush2.msra.mxu0 0.0
  %490 = vmatprep.subr.mxu0 0.0
  %491 = vmatpush2.msra.mxu0 0.0
  %492 = vmatprep.subr.mxu0 0.0
  %493 = vmatpush2.msra.mxu0 0.0
  %494 = vmatprep.subr.mxu0 0.0
  %495 = vmatpush2.msra.mxu0 0.0
  %496 = vmatprep.subr.mxu0 0.0
  %497 = vmatpush2.msra.mxu0 0.0
  %498 = vmatprep.subr.mxu0 0.0
  %499 = vmatpush2.msra.mxu0 0.0
  %500 = vmatprep.subr.mxu0 0.0
  %501 = vmatpush2.msra.mxu0 0.0
  %502 = vmatprep.subr.mxu0 0.0
  %503 = vmatpush2.msra.mxu0 0.0
  %504 = vmatprep.subr.mxu0 0.0
  %505 = vmatpush2.msra.mxu0 0.0
  %506 = vmatprep.subr.mxu0 0.0
  %507 = vmatpush2.msra.mxu0 0.0
  %508 = vmatprep.subr.mxu0 0.0
  %509 = vmatpush2.msra.mxu0 0.0
  %510 = vmatprep.subr.mxu0 0.0
  %511 = vmatpush2.msra.mxu0 0.0
  %512 = vmatprep.subr.mxu0 0.0
  %513 = vmatpush2.msra.mxu0 0.0
  %514 = vmatprep.mubr.f32.mxu0 0.0
  %515 = vmatmul.mubr.f32.gmra.mxu0 %v330
  %v516 = vpop.f32.mrf.mxu0
  %v517 = vadd.f32 %v38, %v516
  %v518 = vpop.f32.mrf.mxu0
  %519 = vdwg.mxu0
  %s520 = scalar_lea.vmem %s2, 384
  %v521 = vld [vmem:[%s520] sm:$0xff]
  %v522 = vld [vmem:[%s520 + $0x8] sm:$0xff]
  %v523 = vld [vmem:[%s520 + $0x10] sm:$0xff]
  %v524 = vld [vmem:[%s520 + $0x18] sm:$0xff]
  %v525 = vld [vmem:[%s520 + $0x20] sm:$0xff]
  %v526 = vld [vmem:[%s520 + $0x28] sm:$0xff]
  %v527 = vld [vmem:[%s520 + $0x30] sm:$0xff]
  %v528 = vld [vmem:[%s520 + $0x38] sm:$0xff]
  %v529 = vld [vmem:[%s520 + $0x40] sm:$0xff]
  %v530 = vld [vmem:[%s520 + $0x48] sm:$0xff]
  %v531 = vld [vmem:[%s520 + $0x50] sm:$0xff]
  %v532 = vld [vmem:[%s520 + $0x58] sm:$0xff]
  %v533 = vld [vmem:[%s520 + $0x60] sm:$0xff]
  %v534 = vld [vmem:[%s520 + $0x68] sm:$0xff]
  %v535 = vld [vmem:[%s520 + $0x70] sm:$0xff]
  %v536 = vld [vmem:[%s520 + $0x78] sm:$0xff]
  %v537 = vld [vmem:[%s520 + $0x80] sm:$0xff]
  %v538 = vld [vmem:[%s520 + $0x88] sm:$0xff]
  %v539 = vld [vmem:[%s520 + $0x90] sm:$0xff]
  %v540 = vld [vmem:[%s520 + $0x98] sm:$0xff]
  %v541 = vld [vmem:[%s520 + $0xa0] sm:$0xff]
  %v542 = vld [vmem:[%s520 + $0xa8] sm:$0xff]
  %v543 = vld [vmem:[%s520 + $0xb0] sm:$0xff]
  %v544 = vld [vmem:[%s520 + $0xb8] sm:$0xff]
  %v545 = vld [vmem:[%s520 + $0xc0] sm:$0xff]
  %v546 = vld [vmem:[%s520 + $0xc8] sm:$0xff]
  %v547 = vld [vmem:[%s520 + $0xd0] sm:$0xff]
  %v548 = vld [vmem:[%s520 + $0xd8] sm:$0xff]
  %v549 = vld [vmem:[%s520 + $0xe0] sm:$0xff]
  %v550 = vld [vmem:[%s520 + $0xe8] sm:$0xff]
  %v551 = vld [vmem:[%s520 + $0xf0] sm:$0xff]
  %v552 = vld [vmem:[%s520 + $0xf8] sm:$0xff]
  %v553 = vld [vmem:[%s520 + $0x100] sm:$0xff]
  %v554 = vld [vmem:[%s520 + $0x108] sm:$0xff]
  %v555 = vld [vmem:[%s520 + $0x110] sm:$0xff]
  %v556 = vld [vmem:[%s520 + $0x118] sm:$0xff]
  %v557 = vld [vmem:[%s520 + $0x120] sm:$0xff]
  %v558 = vld [vmem:[%s520 + $0x128] sm:$0xff]
  %v559 = vld [vmem:[%s520 + $0x130] sm:$0xff]
  %v560 = vld [vmem:[%s520 + $0x138] sm:$0xff]
  %v561 = vld [vmem:[%s520 + $0x140] sm:$0xff]
  %v562 = vld [vmem:[%s520 + $0x148] sm:$0xff]
  %v563 = vld [vmem:[%s520 + $0x150] sm:$0xff]
  %v564 = vld [vmem:[%s520 + $0x158] sm:$0xff]
  %v565 = vld [vmem:[%s520 + $0x160] sm:$0xff]
  %v566 = vld [vmem:[%s520 + $0x168] sm:$0xff]
  %v567 = vld [vmem:[%s520 + $0x170] sm:$0xff]
  %v568 = vld [vmem:[%s520 + $0x178] sm:$0xff]
  %569 = vmatprep.subr.mxu0 %v567
  %570 = vmatpush1.msra.mxu0 %v566
  %571 = vmatprep.subr.mxu0 %v564
  %572 = vmatpush1.msra.mxu0 %v563
  %573 = vmatprep.subr.mxu0 %v561
  %574 = vmatpush1.msra.mxu0 %v560
  %575 = vmatprep.subr.mxu0 %v558
  %576 = vmatpush1.msra.mxu0 %v557
  %577 = vmatprep.subr.mxu0 %v555
  %578 = vmatpush1.msra.mxu0 %v554
  %579 = vmatprep.subr.mxu0 %v552
  %580 = vmatpush1.msra.mxu0 %v551
  %581 = vmatprep.subr.mxu0 %v549
  %582 = vmatpush1.msra.mxu0 %v548
  %583 = vmatprep.subr.mxu0 %v546
  %584 = vmatpush1.msra.mxu0 %v545
  %585 = vmatprep.subr.mxu0 %v543
  %586 = vmatpush1.msra.mxu0 %v542
  %587 = vmatprep.subr.mxu0 %v540
  %588 = vmatpush1.msra.mxu0 %v539
  %589 = vmatprep.subr.mxu0 %v537
  %590 = vmatpush1.msra.mxu0 %v536
  %591 = vmatprep.subr.mxu0 %v534
  %592 = vmatpush1.msra.mxu0 %v533
  %593 = vmatprep.subr.mxu0 %v531
  %594 = vmatpush1.msra.mxu0 %v530
  %595 = vmatprep.subr.mxu0 %v528
  %596 = vmatpush1.msra.mxu0 %v527
  %597 = vmatprep.subr.mxu0 %v525
  %598 = vmatpush1.msra.mxu0 %v524
  %599 = vmatprep.subr.mxu0 %v522
  %600 = vmatpush1.msra.mxu0 %v521
  %601 = vmatprep.subr.mxu0 0.0
  %602 = vmatpush2.msra.mxu0 0.0
  %603 = vmatprep.subr.mxu0 0.0
  %604 = vmatpush2.msra.mxu0 0.0
  %605 = vmatprep.subr.mxu0 0.0
  %606 = vmatpush2.msra.mxu0 0.0
  %607 = vmatprep.subr.mxu0 0.0
  %608 = vmatpush2.msra.mxu0 0.0
  %609 = vmatprep.subr.mxu0 0.0
  %610 = vmatpush2.msra.mxu0 0.0
  %611 = vmatprep.subr.mxu0 0.0
  %612 = vmatpush2.msra.mxu0 0.0
  %613 = vmatprep.subr.mxu0 0.0
  %614 = vmatpush2.msra.mxu0 0.0
  %615 = vmatprep.subr.mxu0 0.0
  %616 = vmatpush2.msra.mxu0 0.0
  %617 = vmatprep.subr.mxu0 0.0
  %618 = vmatpush2.msra.mxu0 0.0
  %619 = vmatprep.subr.mxu0 0.0
  %620 = vmatpush2.msra.mxu0 0.0
  %621 = vmatprep.subr.mxu0 0.0
  %622 = vmatpush2.msra.mxu0 0.0
  %623 = vmatprep.subr.mxu0 0.0
  %624 = vmatpush2.msra.mxu0 0.0
  %625 = vmatprep.subr.mxu0 0.0
  %626 = vmatpush2.msra.mxu0 0.0
  %627 = vmatprep.subr.mxu0 0.0
  %628 = vmatpush2.msra.mxu0 0.0
  %629 = vmatprep.subr.mxu0 0.0
  %630 = vmatpush2.msra.mxu0 0.0
  %631 = vmatprep.subr.mxu0 0.0
  %632 = vmatpush2.msra.mxu0 0.0
  %633 = vmatprep.mubr.f32.mxu0 0.0
  %634 = vmatmul.mubr.f32.gmra.mxu0 %v115
  %v635 = vpop.f32.mrf.mxu0
  %v636 = vadd.f32 %v83, %v635
  %v637 = vpop.f32.mrf.mxu0
  %v638 = vadd.f32 %v87, %v637
  %639 = vdwg.mxu0
  %640 = vmatprep.subr.mxu0 0.0
  %641 = vmatpush1.msra.mxu0 %v568
  %642 = vmatprep.subr.mxu0 0.0
  %643 = vmatpush1.msra.mxu0 %v565
  %644 = vmatprep.subr.mxu0 0.0
  %645 = vmatpush1.msra.mxu0 %v562
  %646 = vmatprep.subr.mxu0 0.0
  %647 = vmatpush1.msra.mxu0 %v559
  %648 = vmatprep.subr.mxu0 0.0
  %649 = vmatpush1.msra.mxu0 %v556
  %650 = vmatprep.subr.mxu0 0.0
  %651 = vmatpush1.msra.mxu0 %v553
  %652 = vmatprep.subr.mxu0 0.0
  %653 = vmatpush1.msra.mxu0 %v550
  %654 = vmatprep.subr.mxu0 0.0
  %655 = vmatpush1.msra.mxu0 %v547
  %656 = vmatprep.subr.mxu0 0.0
  %657 = vmatpush1.msra.mxu0 %v544
  %658 = vmatprep.subr.mxu0 0.0
  %659 = vmatpush1.msra.mxu0 %v541
  %660 = vmatprep.subr.mxu0 0.0
  %661 = vmatpush1.msra.mxu0 %v538
  %662 = vmatprep.subr.mxu0 0.0
  %663 = vmatpush1.msra.mxu0 %v535
  %664 = vmatprep.subr.mxu0 0.0
  %665 = vmatpush1.msra.mxu0 %v532
  %666 = vmatprep.subr.mxu0 0.0
  %667 = vmatpush1.msra.mxu0 %v529
  %668 = vmatprep.subr.mxu0 0.0
  %669 = vmatpush1.msra.mxu0 %v526
  %670 = vmatprep.subr.mxu0 0.0
  %671 = vmatpush1.msra.mxu0 %v523
  %672 = vmatprep.subr.mxu0 0.0
  %673 = vmatpush2.msra.mxu0 0.0
  %674 = vmatprep.subr.mxu0 0.0
  %675 = vmatpush2.msra.mxu0 0.0
  %676 = vmatprep.subr.mxu0 0.0
  %677 = vmatpush2.msra.mxu0 0.0
  %678 = vmatprep.subr.mxu0 0.0
  %679 = vmatpush2.msra.mxu0 0.0
  %680 = vmatprep.subr.mxu0 0.0
  %681 = vmatpush2.msra.mxu0 0.0
  %682 = vmatprep.subr.mxu0 0.0
  %683 = vmatpush2.msra.mxu0 0.0
  %684 = vmatprep.subr.mxu0 0.0
  %685 = vmatpush2.msra.mxu0 0.0
  %686 = vmatprep.subr.mxu0 0.0
  %687 = vmatpush2.msra.mxu0 0.0
  %688 = vmatprep.subr.mxu0 0.0
  %689 = vmatpush2.msra.mxu0 0.0
  %690 = vmatprep.subr.mxu0 0.0
  %691 = vmatpush2.msra.mxu0 0.0
  %692 = vmatprep.subr.mxu0 0.0
  %693 = vmatpush2.msra.mxu0 0.0
  %694 = vmatprep.subr.mxu0 0.0
  %695 = vmatpush2.msra.mxu0 0.0
  %696 = vmatprep.subr.mxu0 0.0
  %697 = vmatpush2.msra.mxu0 0.0
  %698 = vmatprep.subr.mxu0 0.0
  %699 = vmatpush2.msra.mxu0 0.0
  %700 = vmatprep.subr.mxu0 0.0
  %701 = vmatpush2.msra.mxu0 0.0
  %702 = vmatprep.subr.mxu0 0.0
  %703 = vmatpush2.msra.mxu0 0.0
  %704 = vmatprep.mubr.f32.mxu0 0.0
  %705 = vmatmul.mubr.f32.gmra.mxu0 %v115
  %v706 = vpop.f32.mrf.mxu0
  %v707 = vadd.f32 %v91, %v706
  %v708 = vpop.f32.mrf.mxu0
  %709 = vdwg.mxu0
  %v710 = vadd.f32 %v446, %v636
  %v711 = vxor.u32 %v710, 2147483648
  %v712 = vmul.f32 %v711, 1.442695
  %v713 = vpow.pop %v712
  %v714 = vadd.f32 %v713, 1.0
  %v715 = vrcp.pop %v714
  %v716 = vmul.f32 1.0, %v715
  %v717 = vadd.f32 %v448, %v638
  %v718 = vxor.u32 %v717, 2147483648
  %v719 = vmul.f32 %v718, 1.442695
  %v720 = vpow.pop %v719
  %v721 = vadd.f32 %v720, 1.0
  %v722 = vrcp.pop %v721
  %v723 = vmul.f32 1.0, %v722
  %v724 = vmul.f32 %v716, %v707
  %v725 = vadd.f32 %v517, %v724
  %v726 = vtanh.pop %v725
  %v727 = vsub.f32 1.0, %v723
  %v728 = vmul.f32 %v727, %v726
  %v729 = vmul.f32 %v723, %v115
  %v730 = vadd.f32 %v728, %v729
  %s731 = scalar_lea.vmem %s3, 384
  %v732 = vld [vmem:[%s731] sm:$0xff]
  %v733 = vld [vmem:[%s731 + $0x8] sm:$0xff]
  %v734 = vld [vmem:[%s731 + $0x10] sm:$0xff]
  %v735 = vld [vmem:[%s731 + $0x18] sm:$0xff]
  %v736 = vld [vmem:[%s731 + $0x20] sm:$0xff]
  %v737 = vld [vmem:[%s731 + $0x28] sm:$0xff]
  %v738 = vld [vmem:[%s731 + $0x30] sm:$0xff]
  %v739 = vld [vmem:[%s731 + $0x38] sm:$0xff]
  %v740 = vld [vmem:[%s731 + $0x40] sm:$0xff]
  %v741 = vld [vmem:[%s731 + $0x48] sm:$0xff]
  %v742 = vld [vmem:[%s731 + $0x50] sm:$0xff]
  %v743 = vld [vmem:[%s731 + $0x58] sm:$0xff]
  %v744 = vld [vmem:[%s731 + $0x60] sm:$0xff]
  %v745 = vld [vmem:[%s731 + $0x68] sm:$0xff]
  %v746 = vld [vmem:[%s731 + $0x70] sm:$0xff]
  %v747 = vld [vmem:[%s731 + $0x78] sm:$0xff]
  %v748 = vld [vmem:[%s731 + $0x80] sm:$0xff]
  %v749 = vld [vmem:[%s731 + $0x88] sm:$0xff]
  %v750 = vld [vmem:[%s731 + $0x90] sm:$0xff]
  %v751 = vld [vmem:[%s731 + $0x98] sm:$0xff]
  %v752 = vld [vmem:[%s731 + $0xa0] sm:$0xff]
  %v753 = vld [vmem:[%s731 + $0xa8] sm:$0xff]
  %v754 = vld [vmem:[%s731 + $0xb0] sm:$0xff]
  %v755 = vld [vmem:[%s731 + $0xb8] sm:$0xff]
  %v756 = vld [vmem:[%s731 + $0xc0] sm:$0xff]
  %v757 = vld [vmem:[%s731 + $0xc8] sm:$0xff]
  %v758 = vld [vmem:[%s731 + $0xd0] sm:$0xff]
  %v759 = vld [vmem:[%s731 + $0xd8] sm:$0xff]
  %v760 = vld [vmem:[%s731 + $0xe0] sm:$0xff]
  %v761 = vld [vmem:[%s731 + $0xe8] sm:$0xff]
  %v762 = vld [vmem:[%s731 + $0xf0] sm:$0xff]
  %v763 = vld [vmem:[%s731 + $0xf8] sm:$0xff]
  %v764 = vld [vmem:[%s731 + $0x100] sm:$0xff]
  %v765 = vld [vmem:[%s731 + $0x108] sm:$0xff]
  %v766 = vld [vmem:[%s731 + $0x110] sm:$0xff]
  %v767 = vld [vmem:[%s731 + $0x118] sm:$0xff]
  %v768 = vld [vmem:[%s731 + $0x120] sm:$0xff]
  %v769 = vld [vmem:[%s731 + $0x128] sm:$0xff]
  %v770 = vld [vmem:[%s731 + $0x130] sm:$0xff]
  %v771 = vld [vmem:[%s731 + $0x138] sm:$0xff]
  %v772 = vld [vmem:[%s731 + $0x140] sm:$0xff]
  %v773 = vld [vmem:[%s731 + $0x148] sm:$0xff]
  %v774 = vld [vmem:[%s731 + $0x150] sm:$0xff]
  %v775 = vld [vmem:[%s731 + $0x158] sm:$0xff]
  %v776 = vld [vmem:[%s731 + $0x160] sm:$0xff]
  %v777 = vld [vmem:[%s731 + $0x168] sm:$0xff]
  %v778 = vld [vmem:[%s731 + $0x170] sm:$0xff]
  %v779 = vld [vmem:[%s731 + $0x178] sm:$0xff]
  %780 = vmatprep.subr.mxu0 %v778
  %781 = vmatpush1.msra.mxu0 %v777
  %782 = vmatprep.subr.mxu0 %v775
  %783 = vmatpush1.msra.mxu0 %v774
  %784 = vmatprep.subr.mxu0 %v772
  %785 = vmatpush1.msra.mxu0 %v771
  %786 = vmatprep.subr.mxu0 %v769
  %787 = vmatpush1.msra.mxu0 %v768
  %788 = vmatprep.subr.mxu0 %v766
  %789 = vmatpush1.msra.mxu0 %v765
  %790 = vmatprep.subr.mxu0 %v763
  %791 = vmatpush1.msra.mxu0 %v762
  %792 = vmatprep.subr.mxu0 %v760
  %793 = vmatpush1.msra.mxu0 %v759
  %794 = vmatprep.subr.mxu0 %v757
  %795 = vmatpush1.msra.mxu0 %v756
  %796 = vmatprep.subr.mxu0 %v754
  %797 = vmatpush1.msra.mxu0 %v753
  %798 = vmatprep.subr.mxu0 %v751
  %799 = vmatpush1.msra.mxu0 %v750
  %800 = vmatprep.subr.mxu0 %v748
  %801 = vmatpush1.msra.mxu0 %v747
  %802 = vmatprep.subr.mxu0 %v745
  %803 = vmatpush1.msra.mxu0 %v744
  %804 = vmatprep.subr.mxu0 %v742
  %805 = vmatpush1.msra.mxu0 %v741
  %806 = vmatprep.subr.mxu0 %v739
  %807 = vmatpush1.msra.mxu0 %v738
  %808 = vmatprep.subr.mxu0 %v736
  %809 = vmatpush1.msra.mxu0 %v735
  %810 = vmatprep.subr.mxu0 %v733
  %811 = vmatpush1.msra.mxu0 %v732
  %812 = vmatprep.subr.mxu0 0.0
  %813 = vmatpush2.msra.mxu0 0.0
  %814 = vmatprep.subr.mxu0 0.0
  %815 = vmatpush2.msra.mxu0 0.0
  %816 = vmatprep.subr.mxu0 0.0
  %817 = vmatpush2.msra.mxu0 0.0
  %818 = vmatprep.subr.mxu0 0.0
  %819 = vmatpush2.msra.mxu0 0.0
  %820 = vmatprep.subr.mxu0 0.0
  %821 = vmatpush2.msra.mxu0 0.0
  %822 = vmatprep.subr.mxu0 0.0
  %823 = vmatpush2.msra.mxu0 0.0
  %824 = vmatprep.subr.mxu0 0.0
  %825 = vmatpush2.msra.mxu0 0.0
  %826 = vmatprep.subr.mxu0 0.0
  %827 = vmatpush2.msra.mxu0 0.0
  %828 = vmatprep.subr.mxu0 0.0
  %829 = vmatpush2.msra.mxu0 0.0
  %830 = vmatprep.subr.mxu0 0.0
  %831 = vmatpush2.msra.mxu0 0.0
  %832 = vmatprep.subr.mxu0 0.0
  %833 = vmatpush2.msra.mxu0 0.0
  %834 = vmatprep.subr.mxu0 0.0
  %835 = vmatpush2.msra.mxu0 0.0
  %836 = vmatprep.subr.mxu0 0.0
  %837 = vmatpush2.msra.mxu0 0.0
  %838 = vmatprep.subr.mxu0 0.0
  %839 = vmatpush2.msra.mxu0 0.0
  %840 = vmatprep.subr.mxu0 0.0
  %841 = vmatpush2.msra.mxu0 0.0
  %842 = vmatprep.subr.mxu0 0.0
  %843 = vmatpush2.msra.mxu0 0.0
  %844 = vmatprep.mubr.f32.mxu0 0.0
  %845 = vmatmul.mubr.f32.gmra.mxu0 %v730
  %v846 = vpop.f32.mrf.mxu0
  %v847 = vadd.f32 %v48, %v846
  %v848 = vpop.f32.mrf.mxu0
  %v849 = vadd.f32 %v52, %v848
  %850 = vdwg.mxu0
  %851 = vmatprep.subr.mxu0 0.0
  %852 = vmatpush1.msra.mxu0 %v779
  %853 = vmatprep.subr.mxu0 0.0
  %854 = vmatpush1.msra.mxu0 %v776
  %855 = vmatprep.subr.mxu0 0.0
  %856 = vmatpush1.msra.mxu0 %v773
  %857 = vmatprep.subr.mxu0 0.0
  %858 = vmatpush1.msra.mxu0 %v770
  %859 = vmatprep.subr.mxu0 0.0
  %860 = vmatpush1.msra.mxu0 %v767
  %861 = vmatprep.subr.mxu0 0.0
  %862 = vmatpush1.msra.mxu0 %v764
  %863 = vmatprep.subr.mxu0 0.0
  %864 = vmatpush1.msra.mxu0 %v761
  %865 = vmatprep.subr.mxu0 0.0
  %866 = vmatpush1.msra.mxu0 %v758
  %867 = vmatprep.subr.mxu0 0.0
  %868 = vmatpush1.msra.mxu0 %v755
  %869 = vmatprep.subr.mxu0 0.0
  %870 = vmatpush1.msra.mxu0 %v752
  %871 = vmatprep.subr.mxu0 0.0
  %872 = vmatpush1.msra.mxu0 %v749
  %873 = vmatprep.subr.mxu0 0.0
  %874 = vmatpush1.msra.mxu0 %v746
  %875 = vmatprep.subr.mxu0 0.0
  %876 = vmatpush1.msra.mxu0 %v743
  %877 = vmatprep.subr.mxu0 0.0
  %878 = vmatpush1.msra.mxu0 %v740
  %879 = vmatprep.subr.mxu0 0.0
  %880 = vmatpush1.msra.mxu0 %v737
  %881 = vmatprep.subr.mxu0 0.0
  %882 = vmatpush1.msra.mxu0 %v734
  %883 = vmatprep.subr.mxu0 0.0
  %884 = vmatpush2.msra.mxu0 0.0
  %885 = vmatprep.subr.mxu0 0.0
  %886 = vmatpush2.msra.mxu0 0.0
  %887 = vmatprep.subr.mxu0 0.0
  %888 = vmatpush2.msra.mxu0 0.0
  %889 = vmatprep.subr.mxu0 0.0
  %890 = vmatpush2.msra.mxu0 0.0
  %891 = vmatprep.subr.mxu0 0.0
  %892 = vmatpush2.msra.mxu0 0.0
  %893 = vmatprep.subr.mxu0 0.0
  %894 = vmatpush2.msra.mxu0 0.0
  %895 = vmatprep.subr.mxu0 0.0
  %896 = vmatpush2.msra.mxu0 0.0
  %897 = vmatprep.subr.mxu0 0.0
  %898 = vmatpush2.msra.mxu0 0.0
  %899 = vmatprep.subr.mxu0 0.0
  %900 = vmatpush2.msra.mxu0 0.0
  %901 = vmatprep.subr.mxu0 0.0
  %902 = vmatpush2.msra.mxu0 0.0
  %903 = vmatprep.subr.mxu0 0.0
  %904 = vmatpush2.msra.mxu0 0.0
  %905 = vmatprep.subr.mxu0 0.0
  %906 = vmatpush2.msra.mxu0 0.0
  %907 = vmatprep.subr.mxu0 0.0
  %908 = vmatpush2.msra.mxu0 0.0
  %909 = vmatprep.subr.mxu0 0.0
  %910 = vmatpush2.msra.mxu0 0.0
  %911 = vmatprep.subr.mxu0 0.0
  %912 = vmatpush2.msra.mxu0 0.0
  %913 = vmatprep.subr.mxu0 0.0
  %914 = vmatpush2.msra.mxu0 0.0
  %915 = vmatprep.mubr.f32.mxu0 0.0
  %916 = vmatmul.mubr.f32.gmra.mxu0 %v730
  %v917 = vpop.f32.mrf.mxu0
  %v918 = vadd.f32 %v56, %v917
  %v919 = vpop.f32.mrf.mxu0
  %920 = vdwg.mxu0
  %s921 = scalar_lea.vmem %s2, 768
  %v922 = vld [vmem:[%s921] sm:$0xff]
  %v923 = vld [vmem:[%s921 + $0x8] sm:$0xff]
  %v924 = vld [vmem:[%s921 + $0x10] sm:$0xff]
  %v925 = vld [vmem:[%s921 + $0x18] sm:$0xff]
  %v926 = vld [vmem:[%s921 + $0x20] sm:$0xff]
  %v927 = vld [vmem:[%s921 + $0x28] sm:$0xff]
  %v928 = vld [vmem:[%s921 + $0x30] sm:$0xff]
  %v929 = vld [vmem:[%s921 + $0x38] sm:$0xff]
  %v930 = vld [vmem:[%s921 + $0x40] sm:$0xff]
  %v931 = vld [vmem:[%s921 + $0x48] sm:$0xff]
  %v932 = vld [vmem:[%s921 + $0x50] sm:$0xff]
  %v933 = vld [vmem:[%s921 + $0x58] sm:$0xff]
  %v934 = vld [vmem:[%s921 + $0x60] sm:$0xff]
  %v935 = vld [vmem:[%s921 + $0x68] sm:$0xff]
  %v936 = vld [vmem:[%s921 + $0x70] sm:$0xff]
  %v937 = vld [vmem:[%s921 + $0x78] sm:$0xff]
  %v938 = vld [vmem:[%s921 + $0x80] sm:$0xff]
  %v939 = vld [vmem:[%s921 + $0x88] sm:$0xff]
  %v940 = vld [vmem:[%s921 + $0x90] sm:$0xff]
  %v941 = vld [vmem:[%s921 + $0x98] sm:$0xff]
  %v942 = vld [vmem:[%s921 + $0xa0] sm:$0xff]
  %v943 = vld [vmem:[%s921 + $0xa8] sm:$0xff]
  %v944 = vld [vmem:[%s921 + $0xb0] sm:$0xff]
  %v945 = vld [vmem:[%s921 + $0xb8] sm:$0xff]
  %v946 = vld [vmem:[%s921 + $0xc0] sm:$0xff]
  %v947 = vld [vmem:[%s921 + $0xc8] sm:$0xff]
  %v948 = vld [vmem:[%s921 + $0xd0] sm:$0xff]
  %v949 = vld [vmem:[%s921 + $0xd8] sm:$0xff]
  %v950 = vld [vmem:[%s921 + $0xe0] sm:$0xff]
  %v951 = vld [vmem:[%s921 + $0xe8] sm:$0xff]
  %v952 = vld [vmem:[%s921 + $0xf0] sm:$0xff]
  %v953 = vld [vmem:[%s921 + $0xf8] sm:$0xff]
  %v954 = vld [vmem:[%s921 + $0x100] sm:$0xff]
  %v955 = vld [vmem:[%s921 + $0x108] sm:$0xff]
  %v956 = vld [vmem:[%s921 + $0x110] sm:$0xff]
  %v957 = vld [vmem:[%s921 + $0x118] sm:$0xff]
  %v958 = vld [vmem:[%s921 + $0x120] sm:$0xff]
  %v959 = vld [vmem:[%s921 + $0x128] sm:$0xff]
  %v960 = vld [vmem:[%s921 + $0x130] sm:$0xff]
  %v961 = vld [vmem:[%s921 + $0x138] sm:$0xff]
  %v962 = vld [vmem:[%s921 + $0x140] sm:$0xff]
  %v963 = vld [vmem:[%s921 + $0x148] sm:$0xff]
  %v964 = vld [vmem:[%s921 + $0x150] sm:$0xff]
  %v965 = vld [vmem:[%s921 + $0x158] sm:$0xff]
  %v966 = vld [vmem:[%s921 + $0x160] sm:$0xff]
  %v967 = vld [vmem:[%s921 + $0x168] sm:$0xff]
  %v968 = vld [vmem:[%s921 + $0x170] sm:$0xff]
  %v969 = vld [vmem:[%s921 + $0x178] sm:$0xff]
  %970 = vmatprep.subr.mxu0 %v968
  %971 = vmatpush1.msra.mxu0 %v967
  %972 = vmatprep.subr.mxu0 %v965
  %973 = vmatpush1.msra.mxu0 %v964
  %974 = vmatprep.subr.mxu0 %v962
  %975 = vmatpush1.msra.mxu0 %v961
  %976 = vmatprep.subr.mxu0 %v959
  %977 = vmatpush1.msra.mxu0 %v958
  %978 = vmatprep.subr.mxu0 %v956
  %979 = vmatpush1.msra.mxu0 %v955
  %980 = vmatprep.subr.mxu0 %v953
  %981 = vmatpush1.msra.mxu0 %v952
  %982 = vmatprep.subr.mxu0 %v950
  %983 = vmatpush1.msra.mxu0 %v949
  %984 = vmatprep.subr.mxu0 %v947
  %985 = vmatpush1.msra.mxu0 %v946
  %986 = vmatprep.subr.mxu0 %v944
  %987 = vmatpush1.msra.mxu0 %v943
  %988 = vmatprep.subr.mxu0 %v941
  %989 = vmatpush1.msra.mxu0 %v940
  %990 = vmatprep.subr.mxu0 %v938
  %991 = vmatpush1.msra.mxu0 %v937
  %992 = vmatprep.subr.mxu0 %v935
  %993 = vmatpush1.msra.mxu0 %v934
  %994 = vmatprep.subr.mxu0 %v932
  %995 = vmatpush1.msra.mxu0 %v931
  %996 = vmatprep.subr.mxu0 %v929
  %997 = vmatpush1.msra.mxu0 %v928
  %998 = vmatprep.subr.mxu0 %v926
  %999 = vmatpush1.msra.mxu0 %v925
  %1000 = vmatprep.subr.mxu0 %v923
  %1001 = vmatpush1.msra.mxu0 %v922
  %1002 = vmatprep.subr.mxu0 0.0
  %1003 = vmatpush2.msra.mxu0 0.0
  %1004 = vmatprep.subr.mxu0 0.0
  %1005 = vmatpush2.msra.mxu0 0.0
  %1006 = vmatprep.subr.mxu0 0.0
  %1007 = vmatpush2.msra.mxu0 0.0
  %1008 = vmatprep.subr.mxu0 0.0
  %1009 = vmatpush2.msra.mxu0 0.0
  %1010 = vmatprep.subr.mxu0 0.0
  %1011 = vmatpush2.msra.mxu0 0.0
  %1012 = vmatprep.subr.mxu0 0.0
  %1013 = vmatpush2.msra.mxu0 0.0
  %1014 = vmatprep.subr.mxu0 0.0
  %1015 = vmatpush2.msra.mxu0 0.0
  %1016 = vmatprep.subr.mxu0 0.0
  %1017 = vmatpush2.msra.mxu0 0.0
  %1018 = vmatprep.subr.mxu0 0.0
  %1019 = vmatpush2.msra.mxu0 0.0
  %1020 = vmatprep.subr.mxu0 0.0
  %1021 = vmatpush2.msra.mxu0 0.0
  %1022 = vmatprep.subr.mxu0 0.0
  %1023 = vmatpush2.msra.mxu0 0.0
  %1024 = vmatprep.subr.mxu0 0.0
  %1025 = vmatpush2.msra.mxu0 0.0
  %1026 = vmatprep.subr.mxu0 0.0
  %1027 = vmatpush2.msra.mxu0 0.0
  %1028 = vmatprep.subr.mxu0 0.0
  %1029 = vmatpush2.msra.mxu0 0.0
  %1030 = vmatprep.subr.mxu0 0.0
  %1031 = vmatpush2.msra.mxu0 0.0
  %1032 = vmatprep.subr.mxu0 0.0
  %1033 = vmatpush2.msra.mxu0 0.0
  %1034 = vmatprep.mubr.f32.mxu0 0.0
  %1035 = vmatmul.mubr.f32.gmra.mxu0 %v117
  %v1036 = vpop.f32.mrf.mxu0
  %v1037 = vadd.f32 %v101, %v1036
  %v1038 = vpop.f32.mrf.mxu0
  %v1039 = vadd.f32 %v105, %v1038
  %1040 = vdwg.mxu0
  %1041 = vmatprep.subr.mxu0 0.0
  %1042 = vmatpush1.msra.mxu0 %v969
  %1043 = vmatprep.subr.mxu0 0.0
  %1044 = vmatpush1.msra.mxu0 %v966
  %1045 = vmatprep.subr.mxu0 0.0
  %1046 = vmatpush1.msra.mxu0 %v963
  %1047 = vmatprep.subr.mxu0 0.0
  %1048 = vmatpush1.msra.mxu0 %v960
  %1049 = vmatprep.subr.mxu0 0.0
  %1050 = vmatpush1.msra.mxu0 %v957
  %1051 = vmatprep.subr.mxu0 0.0
  %1052 = vmatpush1.msra.mxu0 %v954
  %1053 = vmatprep.subr.mxu0 0.0
  %1054 = vmatpush1.msra.mxu0 %v951
  %1055 = vmatprep.subr.mxu0 0.0
  %1056 = vmatpush1.msra.mxu0 %v948
  %1057 = vmatprep.subr.mxu0 0.0
  %1058 = vmatpush1.msra.mxu0 %v945
  %1059 = vmatprep.subr.mxu0 0.0
  %1060 = vmatpush1.msra.mxu0 %v942
  %1061 = vmatprep.subr.mxu0 0.0
  %1062 = vmatpush1.msra.mxu0 %v939
  %1063 = vmatprep.subr.mxu0 0.0
  %1064 = vmatpush1.msra.mxu0 %v936
  %1065 = vmatprep.subr.mxu0 0.0
  %1066 = vmatpush1.msra.mxu0 %v933
  %1067 = vmatprep.subr.mxu0 0.0
  %1068 = vmatpush1.msra.mxu0 %v930
  %1069 = vmatprep.subr.mxu0 0.0
  %1070 = vmatpush1.msra.mxu0 %v927
  %1071 = vmatprep.subr.mxu0 0.0
  %1072 = vmatpush1.msra.mxu0 %v924
  %1073 = vmatprep.subr.mxu0 0.0
  %1074 = vmatpush2.msra.mxu0 0.0
  %1075 = vmatprep.subr.mxu0 0.0
  %1076 = vmatpush2.msra.mxu0 0.0
  %1077 = vmatprep.subr.mxu0 0.0
  %1078 = vmatpush2.msra.mxu0 0.0
  %1079 = vmatprep.subr.mxu0 0.0
  %1080 = vmatpush2.msra.mxu0 0.0
  %1081 = vmatprep.subr.mxu0 0.0
  %1082 = vmatpush2.msra.mxu0 0.0
  %1083 = vmatprep.subr.mxu0 0.0
  %1084 = vmatpush2.msra.mxu0 0.0
  %1085 = vmatprep.subr.mxu0 0.0
  %1086 = vmatpush2.msra.mxu0 0.0
  %1087 = vmatprep.subr.mxu0 0.0
  %1088 = vmatpush2.msra.mxu0 0.0
  %1089 = vmatprep.subr.mxu0 0.0
  %1090 = vmatpush2.msra.mxu0 0.0
  %1091 = vmatprep.subr.mxu0 0.0
  %1092 = vmatpush2.msra.mxu0 0.0
  %1093 = vmatprep.subr.mxu0 0.0
  %1094 = vmatpush2.msra.mxu0 0.0
  %1095 = vmatprep.subr.mxu0 0.0
  %1096 = vmatpush2.msra.mxu0 0.0
  %1097 = vmatprep.subr.mxu0 0.0
  %1098 = vmatpush2.msra.mxu0 0.0
  %1099 = vmatprep.subr.mxu0 0.0
  %1100 = vmatpush2.msra.mxu0 0.0
  %1101 = vmatprep.subr.mxu0 0.0
  %1102 = vmatpush2.msra.mxu0 0.0
  %1103 = vmatprep.subr.mxu0 0.0
  %1104 = vmatpush2.msra.mxu0 0.0
  %1105 = vmatprep.mubr.f32.mxu0 0.0
  %1106 = vmatmul.mubr.f32.gmra.mxu0 %v117
  %v1107 = vpop.f32.mrf.mxu0
  %v1108 = vadd.f32 %v109, %v1107
  %v1109 = vpop.f32.mrf.mxu0
  %1110 = vdwg.mxu0
  %v1111 = vadd.f32 %v847, %v1037
  %v1112 = vxor.u32 %v1111, 2147483648
  %v1113 = vmul.f32 %v1112, 1.442695
  %v1114 = vpow.pop %v1113
  %v1115 = vadd.f32 %v1114, 1.0
  %v1116 = vrcp.pop %v1115
  %v1117 = vmul.f32 1.0, %v1116
  %v1118 = vadd.f32 %v849, %v1039
  %v1119 = vxor.u32 %v1118, 2147483648
  %v1120 = vmul.f32 %v1119, 1.442695
  %v1121 = vpow.pop %v1120
  %v1122 = vadd.f32 %v1121, 1.0
  %v1123 = vrcp.pop %v1122
  %v1124 = vmul.f32 1.0, %v1123
  %v1125 = vmul.f32 %v1117, %v1108
  %v1126 = vadd.f32 %v918, %v1125
  %v1127 = vtanh.pop %v1126
  %v1128 = vsub.f32 1.0, %v1124
  %v1129 = vmul.f32 %v1128, %v1127
  %v1130 = vmul.f32 %v1124, %v117
  %v1131 = vadd.f32 %v1129, %v1130
  %1132 = vst [vmem:[%s6] sm:$0xff] %v1131
  %s1133 = scalar_lea.vmem %s0, 24
  %v1134 = vld [vmem:[%s1133] sm:$0xff]
  %v1135 = vld [vmem:[%s1133 + $0x8] sm:$0xff]
  %v1136 = vld [vmem:[%s1133 + $0x10] sm:$0xff]
  %v1137 = vld [vmem:[%s2] sm:$0xff]
  %v1138 = vld [vmem:[%s2 + $0x8] sm:$0xff]
  %v1139 = vld [vmem:[%s2 + $0x10] sm:$0xff]
  %v1140 = vld [vmem:[%s2 + $0x18] sm:$0xff]
  %v1141 = vld [vmem:[%s2 + $0x20] sm:$0xff]
  %v1142 = vld [vmem:[%s2 + $0x28] sm:$0xff]
  %v1143 = vld [vmem:[%s2 + $0x30] sm:$0xff]
  %v1144 = vld [vmem:[%s2 + $0x38] sm:$0xff]
  %v1145 = vld [vmem:[%s2 + $0x40] sm:$0xff]
  %v1146 = vld [vmem:[%s2 + $0x48] sm:$0xff]
  %v1147 = vld [vmem:[%s2 + $0x50] sm:$0xff]
  %v1148 = vld [vmem:[%s2 + $0x58] sm:$0xff]
  %v1149 = vld [vmem:[%s2 + $0x60] sm:$0xff]
  %v1150 = vld [vmem:[%s2 + $0x68] sm:$0xff]
  %v1151 = vld [vmem:[%s2 + $0x70] sm:$0xff]
  %v1152 = vld [vmem:[%s2 + $0x78] sm:$0xff]
  %v1153 = vld [vmem:[%s2 + $0x80] sm:$0xff]
  %v1154 = vld [vmem:[%s2 + $0x88] sm:$0xff]
  %v1155 = vld [vmem:[%s2 + $0x90] sm:$0xff]
  %v1156 = vld [vmem:[%s2 + $0x98] sm:$0xff]
  %v1157 = vld [vmem:[%s2 + $0xa0] sm:$0xff]
  %v1158 = vld [vmem:[%s2 + $0xa8] sm:$0xff]
  %v1159 = vld [vmem:[%s2 + $0xb0] sm:$0xff]
  %v1160 = vld [vmem:[%s2 + $0xb8] sm:$0xff]
  %v1161 = vld [vmem:[%s2 + $0xc0] sm:$0xff]
  %v1162 = vld [vmem:[%s2 + $0xc8] sm:$0xff]
  %v1163 = vld [vmem:[%s2 + $0xd0] sm:$0xff]
  %v1164 = vld [vmem:[%s2 + $0xd8] sm:$0xff]
  %v1165 = vld [vmem:[%s2 + $0xe0] sm:$0xff]
  %v1166 = vld [vmem:[%s2 + $0xe8] sm:$0xff]
  %v1167 = vld [vmem:[%s2 + $0xf0] sm:$0xff]
  %v1168 = vld [vmem:[%s2 + $0xf8] sm:$0xff]
  %v1169 = vld [vmem:[%s2 + $0x100] sm:$0xff]
  %v1170 = vld [vmem:[%s2 + $0x108] sm:$0xff]
  %v1171 = vld [vmem:[%s2 + $0x110] sm:$0xff]
  %v1172 = vld [vmem:[%s2 + $0x118] sm:$0xff]
  %v1173 = vld [vmem:[%s2 + $0x120] sm:$0xff]
  %v1174 = vld [vmem:[%s2 + $0x128] sm:$0xff]
  %v1175 = vld [vmem:[%s2 + $0x130] sm:$0xff]
  %v1176 = vld [vmem:[%s2 + $0x138] sm:$0xff]
  %v1177 = vld [vmem:[%s2 + $0x140] sm:$0xff]
  %v1178 = vld [vmem:[%s2 + $0x148] sm:$0xff]
  %v1179 = vld [vmem:[%s2 + $0x150] sm:$0xff]
  %v1180 = vld [vmem:[%s2 + $0x158] sm:$0xff]
  %v1181 = vld [vmem:[%s2 + $0x160] sm:$0xff]
  %v1182 = vld [vmem:[%s2 + $0x168] sm:$0xff]
  %v1183 = vld [vmem:[%s2 + $0x170] sm:$0xff]
  %v1184 = vld [vmem:[%s2 + $0x178] sm:$0xff]
  %1185 = vmatprep.subr.mxu0 %v1183
  %1186 = vmatpush1.msra.mxu0 %v1182
  %1187 = vmatprep.subr.mxu0 %v1180
  %1188 = vmatpush1.msra.mxu0 %v1179
  %1189 = vmatprep.subr.mxu0 %v1177
  %1190 = vmatpush1.msra.mxu0 %v1176
  %1191 = vmatprep.subr.mxu0 %v1174
  %1192 = vmatpush1.msra.mxu0 %v1173
  %1193 = vmatprep.subr.mxu0 %v1171
  %1194 = vmatpush1.msra.mxu0 %v1170
  %1195 = vmatprep.subr.mxu0 %v1168
  %1196 = vmatpush1.msra.mxu0 %v1167
  %1197 = vmatprep.subr.mxu0 %v1165
  %1198 = vmatpush1.msra.mxu0 %v1164
  %1199 = vmatprep.subr.mxu0 %v1162
  %1200 = vmatpush1.msra.mxu0 %v1161
  %1201 = vmatprep.subr.mxu0 %v1159
  %1202 = vmatpush1.msra.mxu0 %v1158
  %1203 = vmatprep.subr.mxu0 %v1156
  %1204 = vmatpush1.msra.mxu0 %v1155
  %1205 = vmatprep.subr.mxu0 %v1153
  %1206 = vmatpush1.msra.mxu0 %v1152
  %1207 = vmatprep.subr.mxu0 %v1150
  %1208 = vmatpush1.msra.mxu0 %v1149
  %1209 = vmatprep.subr.mxu0 %v1147
  %1210 = vmatpush1.msra.mxu0 %v1146
  %1211 = vmatprep.subr.mxu0 %v1144
  %1212 = vmatpush1.msra.mxu0 %v1143
  %1213 = vmatprep.subr.mxu0 %v1141
  %1214 = vmatpush1.msra.mxu0 %v1140
  %1215 = vmatprep.subr.mxu0 %v1138
  %1216 = vmatpush1.msra.mxu0 %v1137
  %1217 = vmatprep.subr.mxu0 0.0
  %1218 = vmatpush2.msra.mxu0 0.0
  %1219 = vmatprep.subr.mxu0 0.0
  %1220 = vmatpush2.msra.mxu0 0.0
  %1221 = vmatprep.subr.mxu0 0.0
  %1222 = vmatpush2.msra.mxu0 0.0
  %1223 = vmatprep.subr.mxu0 0.0
  %1224 = vmatpush2.msra.mxu0 0.0
  %1225 = vmatprep.subr.mxu0 0.0
  %1226 = vmatpush2.msra.mxu0 0.0
  %1227 = vmatprep.subr.mxu0 0.0
  %1228 = vmatpush2.msra.mxu0 0.0
  %1229 = vmatprep.subr.mxu0 0.0
  %1230 = vmatpush2.msra.mxu0 0.0
  %1231 = vmatprep.subr.mxu0 0.0
  %1232 = vmatpush2.msra.mxu0 0.0
  %1233 = vmatprep.subr.mxu0 0.0
  %1234 = vmatpush2.msra.mxu0 0.0
  %1235 = vmatprep.subr.mxu0 0.0
  %1236 = vmatpush2.msra.mxu0 0.0
  %1237 = vmatprep.subr.mxu0 0.0
  %1238 = vmatpush2.msra.mxu0 0.0
  %1239 = vmatprep.subr.mxu0 0.0
  %1240 = vmatpush2.msra.mxu0 0.0
  %1241 = vmatprep.subr.mxu0 0.0
  %1242 = vmatpush2.msra.mxu0 0.0
  %1243 = vmatprep.subr.mxu0 0.0
  %1244 = vmatpush2.msra.mxu0 0.0
  %1245 = vmatprep.subr.mxu0 0.0
  %1246 = vmatpush2.msra.mxu0 0.0
  %1247 = vmatprep.subr.mxu0 0.0
  %1248 = vmatpush2.msra.mxu0 0.0
  %1249 = vmatprep.mubr.f32.mxu0 0.0
  %1250 = vmatmul.mubr.f32.gmra.mxu0 %v330
  %v1251 = vpop.f32.mrf.mxu0
  %v1252 = vadd.f32 %v65, %v1251
  %v1253 = vpop.f32.mrf.mxu0
  %v1254 = vadd.f32 %v69, %v1253
  %1255 = vdwg.mxu0
  %1256 = vmatprep.subr.mxu0 0.0
  %1257 = vmatpush1.msra.mxu0 %v1184
  %1258 = vmatprep.subr.mxu0 0.0
  %1259 = vmatpush1.msra.mxu0 %v1181
  %1260 = vmatprep.subr.mxu0 0.0
  %1261 = vmatpush1.msra.mxu0 %v1178
  %1262 = vmatprep.subr.mxu0 0.0
  %1263 = vmatpush1.msra.mxu0 %v1175
  %1264 = vmatprep.subr.mxu0 0.0
  %1265 = vmatpush1.msra.mxu0 %v1172
  %1266 = vmatprep.subr.mxu0 0.0
  %1267 = vmatpush1.msra.mxu0 %v1169
  %1268 = vmatprep.subr.mxu0 0.0
  %1269 = vmatpush1.msra.mxu0 %v1166
  %1270 = vmatprep.subr.mxu0 0.0
  %1271 = vmatpush1.msra.mxu0 %v1163
  %1272 = vmatprep.subr.mxu0 0.0
  %1273 = vmatpush1.msra.mxu0 %v1160
  %1274 = vmatprep.subr.mxu0 0.0
  %1275 = vmatpush1.msra.mxu0 %v1157
  %1276 = vmatprep.subr.mxu0 0.0
  %1277 = vmatpush1.msra.mxu0 %v1154
  %1278 = vmatprep.subr.mxu0 0.0
  %1279 = vmatpush1.msra.mxu0 %v1151
  %1280 = vmatprep.subr.mxu0 0.0
  %1281 = vmatpush1.msra.mxu0 %v1148
  %1282 = vmatprep.subr.mxu0 0.0
  %1283 = vmatpush1.msra.mxu0 %v1145
  %1284 = vmatprep.subr.mxu0 0.0
  %1285 = vmatpush1.msra.mxu0 %v1142
  %1286 = vmatprep.subr.mxu0 0.0
  %1287 = vmatpush1.msra.mxu0 %v1139
  %1288 = vmatprep.subr.mxu0 0.0
  %1289 = vmatpush2.msra.mxu0 0.0
  %1290 = vmatprep.subr.mxu0 0.0
  %1291 = vmatpush2.msra.mxu0 0.0
  %1292 = vmatprep.subr.mxu0 0.0
  %1293 = vmatpush2.msra.mxu0 0.0
  %1294 = vmatprep.subr.mxu0 0.0
  %1295 = vmatpush2.msra.mxu0 0.0
  %1296 = vmatprep.subr.mxu0 0.0
  %1297 = vmatpush2.msra.mxu0 0.0
  %1298 = vmatprep.subr.mxu0 0.0
  %1299 = vmatpush2.msra.mxu0 0.0
  %1300 = vmatprep.subr.mxu0 0.0
  %1301 = vmatpush2.msra.mxu0 0.0
  %1302 = vmatprep.subr.mxu0 0.0
  %1303 = vmatpush2.msra.mxu0 0.0
  %1304 = vmatprep.subr.mxu0 0.0
  %1305 = vmatpush2.msra.mxu0 0.0
  %1306 = vmatprep.subr.mxu0 0.0
  %1307 = vmatpush2.msra.mxu0 0.0
  %1308 = vmatprep.subr.mxu0 0.0
  %1309 = vmatpush2.msra.mxu0 0.0
  %1310 = vmatprep.subr.mxu0 0.0
  %1311 = vmatpush2.msra.mxu0 0.0
  %1312 = vmatprep.subr.mxu0 0.0
  %1313 = vmatpush2.msra.mxu0 0.0
  %1314 = vmatprep.subr.mxu0 0.0
  %1315 = vmatpush2.msra.mxu0 0.0
  %1316 = vmatprep.subr.mxu0 0.0
  %1317 = vmatpush2.msra.mxu0 0.0
  %1318 = vmatprep.subr.mxu0 0.0
  %1319 = vmatpush2.msra.mxu0 0.0
  %1320 = vmatprep.mubr.f32.mxu0 0.0
  %1321 = vmatmul.mubr.f32.gmra.mxu0 %v330
  %v1322 = vpop.f32.mrf.mxu0
  %v1323 = vadd.f32 %v73, %v1322
  %v1324 = vpop.f32.mrf.mxu0
  %1325 = vdwg.mxu0
  %v1326 = vadd.f32 %v1134, %v1252
  %v1327 = vxor.u32 %v1326, 2147483648
  %v1328 = vmul.f32 %v1327, 1.442695
  %v1329 = vpow.pop %v1328
  %v1330 = vadd.f32 %v1329, 1.0
  %v1331 = vrcp.pop %v1330
  %v1332 = vmul.f32 1.0, %v1331
  %v1333 = vadd.f32 %v1135, %v1254
  %v1334 = vxor.u32 %v1333, 2147483648
  %v1335 = vmul.f32 %v1334, 1.442695
  %v1336 = vpow.pop %v1335
  %v1337 = vadd.f32 %v1336, 1.0
  %v1338 = vrcp.pop %v1337
  %v1339 = vmul.f32 1.0, %v1338
  %v1340 = vmul.f32 %v1332, %v1323
  %v1341 = vadd.f32 %v1136, %v1340
  %v1342 = vtanh.pop %v1341
  %v1343 = vsub.f32 1.0, %v1339
  %v1344 = vmul.f32 %v1343, %v1342
  %v1345 = vmul.f32 %v1339, %v330
  %v1346 = vadd.f32 %v1344, %v1345
  %v1347 = vld [vmem:[%s3] sm:$0xff]
  %v1348 = vld [vmem:[%s3 + $0x8] sm:$0xff]
  %v1349 = vld [vmem:[%s3 + $0x10] sm:$0xff]
  %v1350 = vld [vmem:[%s3 + $0x18] sm:$0xff]
  %v1351 = vld [vmem:[%s3 + $0x20] sm:$0xff]
  %v1352 = vld [vmem:[%s3 + $0x28] sm:$0xff]
  %v1353 = vld [vmem:[%s3 + $0x30] sm:$0xff]
  %v1354 = vld [vmem:[%s3 + $0x38] sm:$0xff]
  %v1355 = vld [vmem:[%s3 + $0x40] sm:$0xff]
  %v1356 = vld [vmem:[%s3 + $0x48] sm:$0xff]
  %v1357 = vld [vmem:[%s3 + $0x50] sm:$0xff]
  %v1358 = vld [vmem:[%s3 + $0x58] sm:$0xff]
  %v1359 = vld [vmem:[%s3 + $0x60] sm:$0xff]
  %v1360 = vld [vmem:[%s3 + $0x68] sm:$0xff]
  %v1361 = vld [vmem:[%s3 + $0x70] sm:$0xff]
  %v1362 = vld [vmem:[%s3 + $0x78] sm:$0xff]
  %v1363 = vld [vmem:[%s3 + $0x80] sm:$0xff]
  %v1364 = vld [vmem:[%s3 + $0x88] sm:$0xff]
  %v1365 = vld [vmem:[%s3 + $0x90] sm:$0xff]
  %v1366 = vld [vmem:[%s3 + $0x98] sm:$0xff]
  %v1367 = vld [vmem:[%s3 + $0xa0] sm:$0xff]
  %v1368 = vld [vmem:[%s3 + $0xa8] sm:$0xff]
  %v1369 = vld [vmem:[%s3 + $0xb0] sm:$0xff]
  %v1370 = vld [vmem:[%s3 + $0xb8] sm:$0xff]
  %v1371 = vld [vmem:[%s3 + $0xc0] sm:$0xff]
  %v1372 = vld [vmem:[%s3 + $0xc8] sm:$0xff]
  %v1373 = vld [vmem:[%s3 + $0xd0] sm:$0xff]
  %v1374 = vld [vmem:[%s3 + $0xd8] sm:$0xff]
  %v1375 = vld [vmem:[%s3 + $0xe0] sm:$0xff]
  %v1376 = vld [vmem:[%s3 + $0xe8] sm:$0xff]
  %v1377 = vld [vmem:[%s3 + $0xf0] sm:$0xff]
  %v1378 = vld [vmem:[%s3 + $0xf8] sm:$0xff]
  %v1379 = vld [vmem:[%s3 + $0x100] sm:$0xff]
  %v1380 = vld [vmem:[%s3 + $0x108] sm:$0xff]
  %v1381 = vld [vmem:[%s3 + $0x110] sm:$0xff]
  %v1382 = vld [vmem:[%s3 + $0x118] sm:$0xff]
  %v1383 = vld [vmem:[%s3 + $0x120] sm:$0xff]
  %v1384 = vld [vmem:[%s3 + $0x128] sm:$0xff]
  %v1385 = vld [vmem:[%s3 + $0x130] sm:$0xff]
  %v1386 = vld [vmem:[%s3 + $0x138] sm:$0xff]
  %v1387 = vld [vmem:[%s3 + $0x140] sm:$0xff]
  %v1388 = vld [vmem:[%s3 + $0x148] sm:$0xff]
  %v1389 = vld [vmem:[%s3 + $0x150] sm:$0xff]
  %v1390 = vld [vmem:[%s3 + $0x158] sm:$0xff]
  %v1391 = vld [vmem:[%s3 + $0x160] sm:$0xff]
  %v1392 = vld [vmem:[%s3 + $0x168] sm:$0xff]
  %v1393 = vld [vmem:[%s3 + $0x170] sm:$0xff]
  %v1394 = vld [vmem:[%s3 + $0x178] sm:$0xff]
  %1395 = vmatprep.subr.mxu0 %v1393
  %1396 = vmatpush1.msra.mxu0 %v1392
  %1397 = vmatprep.subr.mxu0 %v1390
  %1398 = vmatpush1.msra.mxu0 %v1389
  %1399 = vmatprep.subr.mxu0 %v1387
  %1400 = vmatpush1.msra.mxu0 %v1386
  %1401 = vmatprep.subr.mxu0 %v1384
  %1402 = vmatpush1.msra.mxu0 %v1383
  %1403 = vmatprep.subr.mxu0 %v1381
  %1404 = vmatpush1.msra.mxu0 %v1380
  %1405 = vmatprep.subr.mxu0 %v1378
  %1406 = vmatpush1.msra.mxu0 %v1377
  %1407 = vmatprep.subr.mxu0 %v1375
  %1408 = vmatpush1.msra.mxu0 %v1374
  %1409 = vmatprep.subr.mxu0 %v1372
  %1410 = vmatpush1.msra.mxu0 %v1371
  %1411 = vmatprep.subr.mxu0 %v1369
  %1412 = vmatpush1.msra.mxu0 %v1368
  %1413 = vmatprep.subr.mxu0 %v1366
  %1414 = vmatpush1.msra.mxu0 %v1365
  %1415 = vmatprep.subr.mxu0 %v1363
  %1416 = vmatpush1.msra.mxu0 %v1362
  %1417 = vmatprep.subr.mxu0 %v1360
  %1418 = vmatpush1.msra.mxu0 %v1359
  %1419 = vmatprep.subr.mxu0 %v1357
  %1420 = vmatpush1.msra.mxu0 %v1356
  %1421 = vmatprep.subr.mxu0 %v1354
  %1422 = vmatpush1.msra.mxu0 %v1353
  %1423 = vmatprep.subr.mxu0 %v1351
  %1424 = vmatpush1.msra.mxu0 %v1350
  %1425 = vmatprep.subr.mxu0 %v1348
  %1426 = vmatpush1.msra.mxu0 %v1347
  %1427 = vmatprep.subr.mxu0 0.0
  %1428 = vmatpush2.msra.mxu0 0.0
  %1429 = vmatprep.subr.mxu0 0.0
  %1430 = vmatpush2.msra.mxu0 0.0
  %1431 = vmatprep.subr.mxu0 0.0
  %1432 = vmatpush2.msra.mxu0 0.0
  %1433 = vmatprep.subr.mxu0 0.0
  %1434 = vmatpush2.msra.mxu0 0.0
  %1435 = vmatprep.subr.mxu0 0.0
  %1436 = vmatpush2.msra.mxu0 0.0
  %1437 = vmatprep.subr.mxu0 0.0
  %1438 = vmatpush2.msra.mxu0 0.0
  %1439 = vmatprep.subr.mxu0 0.0
  %1440 = vmatpush2.msra.mxu0 0.0
  %1441 = vmatprep.subr.mxu0 0.0
  %1442 = vmatpush2.msra.mxu0 0.0
  %1443 = vmatprep.subr.mxu0 0.0
  %1444 = vmatpush2.msra.mxu0 0.0
  %1445 = vmatprep.subr.mxu0 0.0
  %1446 = vmatpush2.msra.mxu0 0.0
  %1447 = vmatprep.subr.mxu0 0.0
  %1448 = vmatpush2.msra.mxu0 0.0
  %1449 = vmatprep.subr.mxu0 0.0
  %1450 = vmatpush2.msra.mxu0 0.0
  %1451 = vmatprep.subr.mxu0 0.0
  %1452 = vmatpush2.msra.mxu0 0.0
  %1453 = vmatprep.subr.mxu0 0.0
  %1454 = vmatpush2.msra.mxu0 0.0
  %1455 = vmatprep.subr.mxu0 0.0
  %1456 = vmatpush2.msra.mxu0 0.0
  %1457 = vmatprep.subr.mxu0 0.0
  %1458 = vmatpush2.msra.mxu0 0.0
  %1459 = vmatprep.mubr.f32.mxu0 0.0
  %1460 = vmatmul.mubr.f32.gmra.mxu0 %v1346
  %v1461 = vpop.f32.mrf.mxu0
  %v1462 = vadd.f32 %v30, %v1461
  %v1463 = vpop.f32.mrf.mxu0
  %v1464 = vadd.f32 %v34, %v1463
  %1465 = vdwg.mxu0
  %1466 = vmatprep.subr.mxu0 0.0
  %1467 = vmatpush1.msra.mxu0 %v1394
  %1468 = vmatprep.subr.mxu0 0.0
  %1469 = vmatpush1.msra.mxu0 %v1391
  %1470 = vmatprep.subr.mxu0 0.0
  %1471 = vmatpush1.msra.mxu0 %v1388
  %1472 = vmatprep.subr.mxu0 0.0
  %1473 = vmatpush1.msra.mxu0 %v1385
  %1474 = vmatprep.subr.mxu0 0.0
  %1475 = vmatpush1.msra.mxu0 %v1382
  %1476 = vmatprep.subr.mxu0 0.0
  %1477 = vmatpush1.msra.mxu0 %v1379
  %1478 = vmatprep.subr.mxu0 0.0
  %1479 = vmatpush1.msra.mxu0 %v1376
  %1480 = vmatprep.subr.mxu0 0.0
  %1481 = vmatpush1.msra.mxu0 %v1373
  %1482 = vmatprep.subr.mxu0 0.0
  %1483 = vmatpush1.msra.mxu0 %v1370
  %1484 = vmatprep.subr.mxu0 0.0
  %1485 = vmatpush1.msra.mxu0 %v1367
  %1486 = vmatprep.subr.mxu0 0.0
  %1487 = vmatpush1.msra.mxu0 %v1364
  %1488 = vmatprep.subr.mxu0 0.0
  %1489 = vmatpush1.msra.mxu0 %v1361
  %1490 = vmatprep.subr.mxu0 0.0
  %1491 = vmatpush1.msra.mxu0 %v1358
  %1492 = vmatprep.subr.mxu0 0.0
  %1493 = vmatpush1.msra.mxu0 %v1355
  %1494 = vmatprep.subr.mxu0 0.0
  %1495 = vmatpush1.msra.mxu0 %v1352
  %1496 = vmatprep.subr.mxu0 0.0
  %1497 = vmatpush1.msra.mxu0 %v1349
  %1498 = vmatprep.subr.mxu0 0.0
  %1499 = vmatpush2.msra.mxu0 0.0
  %1500 = vmatprep.subr.mxu0 0.0
  %1501 = vmatpush2.msra.mxu0 0.0
  %1502 = vmatprep.subr.mxu0 0.0
  %1503 = vmatpush2.msra.mxu0 0.0
  %1504 = vmatprep.subr.mxu0 0.0
  %1505 = vmatpush2.msra.mxu0 0.0
  %1506 = vmatprep.subr.mxu0 0.0
  %1507 = vmatpush2.msra.mxu0 0.0
  %1508 = vmatprep.subr.mxu0 0.0
  %1509 = vmatpush2.msra.mxu0 0.0
  %1510 = vmatprep.subr.mxu0 0.0
  %1511 = vmatpush2.msra.mxu0 0.0
  %1512 = vmatprep.subr.mxu0 0.0
  %1513 = vmatpush2.msra.mxu0 0.0
  %1514 = vmatprep.subr.mxu0 0.0
  %1515 = vmatpush2.msra.mxu0 0.0
  %1516 = vmatprep.subr.mxu0 0.0
  %1517 = vmatpush2.msra.mxu0 0.0
  %1518 = vmatprep.subr.mxu0 0.0
  %1519 = vmatpush2.msra.mxu0 0.0
  %1520 = vmatprep.subr.mxu0 0.0
  %1521 = vmatpush2.msra.mxu0 0.0
  %1522 = vmatprep.subr.mxu0 0.0
  %1523 = vmatpush2.msra.mxu0 0.0
  %1524 = vmatprep.subr.mxu0 0.0
  %1525 = vmatpush2.msra.mxu0 0.0
  %1526 = vmatprep.subr.mxu0 0.0
  %1527 = vmatpush2.msra.mxu0 0.0
  %1528 = vmatprep.subr.mxu0 0.0
  %1529 = vmatpush2.msra.mxu0 0.0
  %1530 = vmatprep.mubr.f32.mxu0 0.0
  %1531 = vmatmul.mubr.f32.gmra.mxu0 %v1346
  %v1532 = vpop.f32.mrf.mxu0
  %v1533 = vadd.f32 %v38, %v1532
  %v1534 = vpop.f32.mrf.mxu0
  %1535 = vdwg.mxu0
  %v1536 = vld [vmem:[%s520] sm:$0xff]
  %v1537 = vld [vmem:[%s520 + $0x8] sm:$0xff]
  %v1538 = vld [vmem:[%s520 + $0x10] sm:$0xff]
  %v1539 = vld [vmem:[%s520 + $0x18] sm:$0xff]
  %v1540 = vld [vmem:[%s520 + $0x20] sm:$0xff]
  %v1541 = vld [vmem:[%s520 + $0x28] sm:$0xff]
  %v1542 = vld [vmem:[%s520 + $0x30] sm:$0xff]
  %v1543 = vld [vmem:[%s520 + $0x38] sm:$0xff]
  %v1544 = vld [vmem:[%s520 + $0x40] sm:$0xff]
  %v1545 = vld [vmem:[%s520 + $0x48] sm:$0xff]
  %v1546 = vld [vmem:[%s520 + $0x50] sm:$0xff]
  %v1547 = vld [vmem:[%s520 + $0x58] sm:$0xff]
  %v1548 = vld [vmem:[%s520 + $0x60] sm:$0xff]
  %v1549 = vld [vmem:[%s520 + $0x68] sm:$0xff]
  %v1550 = vld [vmem:[%s520 + $0x70] sm:$0xff]
  %v1551 = vld [vmem:[%s520 + $0x78] sm:$0xff]
  %v1552 = vld [vmem:[%s520 + $0x80] sm:$0xff]
  %v1553 = vld [vmem:[%s520 + $0x88] sm:$0xff]
  %v1554 = vld [vmem:[%s520 + $0x90] sm:$0xff]
  %v1555 = vld [vmem:[%s520 + $0x98] sm:$0xff]
  %v1556 = vld [vmem:[%s520 + $0xa0] sm:$0xff]
  %v1557 = vld [vmem:[%s520 + $0xa8] sm:$0xff]
  %v1558 = vld [vmem:[%s520 + $0xb0] sm:$0xff]
  %v1559 = vld [vmem:[%s520 + $0xb8] sm:$0xff]
  %v1560 = vld [vmem:[%s520 + $0xc0] sm:$0xff]
  %v1561 = vld [vmem:[%s520 + $0xc8] sm:$0xff]
  %v1562 = vld [vmem:[%s520 + $0xd0] sm:$0xff]
  %v1563 = vld [vmem:[%s520 + $0xd8] sm:$0xff]
  %v1564 = vld [vmem:[%s520 + $0xe0] sm:$0xff]
  %v1565 = vld [vmem:[%s520 + $0xe8] sm:$0xff]
  %v1566 = vld [vmem:[%s520 + $0xf0] sm:$0xff]
  %v1567 = vld [vmem:[%s520 + $0xf8] sm:$0xff]
  %v1568 = vld [vmem:[%s520 + $0x100] sm:$0xff]
  %v1569 = vld [vmem:[%s520 + $0x108] sm:$0xff]
  %v1570 = vld [vmem:[%s520 + $0x110] sm:$0xff]
  %v1571 = vld [vmem:[%s520 + $0x118] sm:$0xff]
  %v1572 = vld [vmem:[%s520 + $0x120] sm:$0xff]
  %v1573 = vld [vmem:[%s520 + $0x128] sm:$0xff]
  %v1574 = vld [vmem:[%s520 + $0x130] sm:$0xff]
  %v1575 = vld [vmem:[%s520 + $0x138] sm:$0xff]
  %v1576 = vld [vmem:[%s520 + $0x140] sm:$0xff]
  %v1577 = vld [vmem:[%s520 + $0x148] sm:$0xff]
  %v1578 = vld [vmem:[%s520 + $0x150] sm:$0xff]
  %v1579 = vld [vmem:[%s520 + $0x158] sm:$0xff]
  %v1580 = vld [vmem:[%s520 + $0x160] sm:$0xff]
  %v1581 = vld [vmem:[%s520 + $0x168] sm:$0xff]
  %v1582 = vld [vmem:[%s520 + $0x170] sm:$0xff]
  %v1583 = vld [vmem:[%s520 + $0x178] sm:$0xff]
  %1584 = vmatprep.subr.mxu0 %v1582
  %1585 = vmatpush1.msra.mxu0 %v1581
  %1586 = vmatprep.subr.mxu0 %v1579
  %1587 = vmatpush1.msra.mxu0 %v1578
  %1588 = vmatprep.subr.mxu0 %v1576
  %1589 = vmatpush1.msra.mxu0 %v1575
  %1590 = vmatprep.subr.mxu0 %v1573
  %1591 = vmatpush1.msra.mxu0 %v1572
  %1592 = vmatprep.subr.mxu0 %v1570
  %1593 = vmatpush1.msra.mxu0 %v1569
  %1594 = vmatprep.subr.mxu0 %v1567
  %1595 = vmatpush1.msra.mxu0 %v1566
  %1596 = vmatprep.subr.mxu0 %v1564
  %1597 = vmatpush1.msra.mxu0 %v1563
  %1598 = vmatprep.subr.mxu0 %v1561
  %1599 = vmatpush1.msra.mxu0 %v1560
  %1600 = vmatprep.subr.mxu0 %v1558
  %1601 = vmatpush1.msra.mxu0 %v1557
  %1602 = vmatprep.subr.mxu0 %v1555
  %1603 = vmatpush1.msra.mxu0 %v1554
  %1604 = vmatprep.subr.mxu0 %v1552
  %1605 = vmatpush1.msra.mxu0 %v1551
  %1606 = vmatprep.subr.mxu0 %v1549
  %1607 = vmatpush1.msra.mxu0 %v1548
  %1608 = vmatprep.subr.mxu0 %v1546
  %1609 = vmatpush1.msra.mxu0 %v1545
  %1610 = vmatprep.subr.mxu0 %v1543
  %1611 = vmatpush1.msra.mxu0 %v1542
  %1612 = vmatprep.subr.mxu0 %v1540
  %1613 = vmatpush1.msra.mxu0 %v1539
  %1614 = vmatprep.subr.mxu0 %v1537
  %1615 = vmatpush1.msra.mxu0 %v1536
  %1616 = vmatprep.subr.mxu0 0.0
  %1617 = vmatpush2.msra.mxu0 0.0
  %1618 = vmatprep.subr.mxu0 0.0
  %1619 = vmatpush2.msra.mxu0 0.0
  %1620 = vmatprep.subr.mxu0 0.0
  %1621 = vmatpush2.msra.mxu0 0.0
  %1622 = vmatprep.subr.mxu0 0.0
  %1623 = vmatpush2.msra.mxu0 0.0
  %1624 = vmatprep.subr.mxu0 0.0
  %1625 = vmatpush2.msra.mxu0 0.0
  %1626 = vmatprep.subr.mxu0 0.0
  %1627 = vmatpush2.msra.mxu0 0.0
  %1628 = vmatprep.subr.mxu0 0.0
  %1629 = vmatpush2.msra.mxu0 0.0
  %1630 = vmatprep.subr.mxu0 0.0
  %1631 = vmatpush2.msra.mxu0 0.0
  %1632 = vmatprep.subr.mxu0 0.0
  %1633 = vmatpush2.msra.mxu0 0.0
  %1634 = vmatprep.subr.mxu0 0.0
  %1635 = vmatpush2.msra.mxu0 0.0
  %1636 = vmatprep.subr.mxu0 0.0
  %1637 = vmatpush2.msra.mxu0 0.0
  %1638 = vmatprep.subr.mxu0 0.0
  %1639 = vmatpush2.msra.mxu0 0.0
  %1640 = vmatprep.subr.mxu0 0.0
  %1641 = vmatpush2.msra.mxu0 0.0
  %1642 = vmatprep.subr.mxu0 0.0
  %1643 = vmatpush2.msra.mxu0 0.0
  %1644 = vmatprep.subr.mxu0 0.0
  %1645 = vmatpush2.msra.mxu0 0.0
  %1646 = vmatprep.subr.mxu0 0.0
  %1647 = vmatpush2.msra.mxu0 0.0
  %1648 = vmatprep.mubr.f32.mxu0 0.0
  %1649 = vmatmul.mubr.f32.gmra.mxu0 %v730
  %v1650 = vpop.f32.mrf.mxu0
  %v1651 = vadd.f32 %v83, %v1650
  %v1652 = vpop.f32.mrf.mxu0
  %v1653 = vadd.f32 %v87, %v1652
  %1654 = vdwg.mxu0
  %1655 = vmatprep.subr.mxu0 0.0
  %1656 = vmatpush1.msra.mxu0 %v1583
  %1657 = vmatprep.subr.mxu0 0.0
  %1658 = vmatpush1.msra.mxu0 %v1580
  %1659 = vmatprep.subr.mxu0 0.0
  %1660 = vmatpush1.msra.mxu0 %v1577
  %1661 = vmatprep.subr.mxu0 0.0
  %1662 = vmatpush1.msra.mxu0 %v1574
  %1663 = vmatprep.subr.mxu0 0.0
  %1664 = vmatpush1.msra.mxu0 %v1571
  %1665 = vmatprep.subr.mxu0 0.0
  %1666 = vmatpush1.msra.mxu0 %v1568
  %1667 = vmatprep.subr.mxu0 0.0
  %1668 = vmatpush1.msra.mxu0 %v1565
  %1669 = vmatprep.subr.mxu0 0.0
  %1670 = vmatpush1.msra.mxu0 %v1562
  %1671 = vmatprep.subr.mxu0 0.0
  %1672 = vmatpush1.msra.mxu0 %v1559
  %1673 = vmatprep.subr.mxu0 0.0
  %1674 = vmatpush1.msra.mxu0 %v1556
  %1675 = vmatprep.subr.mxu0 0.0
  %1676 = vmatpush1.msra.mxu0 %v1553
  %1677 = vmatprep.subr.mxu0 0.0
  %1678 = vmatpush1.msra.mxu0 %v1550
  %1679 = vmatprep.subr.mxu0 0.0
  %1680 = vmatpush1.msra.mxu0 %v1547
  %1681 = vmatprep.subr.mxu0 0.0
  %1682 = vmatpush1.msra.mxu0 %v1544
  %1683 = vmatprep.subr.mxu0 0.0
  %1684 = vmatpush1.msra.mxu0 %v1541
  %1685 = vmatprep.subr.mxu0 0.0
  %1686 = vmatpush1.msra.mxu0 %v1538
  %1687 = vmatprep.subr.mxu0 0.0
  %1688 = vmatpush2.msra.mxu0 0.0
  %1689 = vmatprep.subr.mxu0 0.0
  %1690 = vmatpush2.msra.mxu0 0.0
  %1691 = vmatprep.subr.mxu0 0.0
  %1692 = vmatpush2.msra.mxu0 0.0
  %1693 = vmatprep.subr.mxu0 0.0
  %1694 = vmatpush2.msra.mxu0 0.0
  %1695 = vmatprep.subr.mxu0 0.0
  %1696 = vmatpush2.msra.mxu0 0.0
  %1697 = vmatprep.subr.mxu0 0.0
  %1698 = vmatpush2.msra.mxu0 0.0
  %1699 = vmatprep.subr.mxu0 0.0
  %1700 = vmatpush2.msra.mxu0 0.0
  %1701 = vmatprep.subr.mxu0 0.0
  %1702 = vmatpush2.msra.mxu0 0.0
  %1703 = vmatprep.subr.mxu0 0.0
  %1704 = vmatpush2.msra.mxu0 0.0
  %1705 = vmatprep.subr.mxu0 0.0
  %1706 = vmatpush2.msra.mxu0 0.0
  %1707 = vmatprep.subr.mxu0 0.0
  %1708 = vmatpush2.msra.mxu0 0.0
  %1709 = vmatprep.subr.mxu0 0.0
  %1710 = vmatpush2.msra.mxu0 0.0
  %1711 = vmatprep.subr.mxu0 0.0
  %1712 = vmatpush2.msra.mxu0 0.0
  %1713 = vmatprep.subr.mxu0 0.0
  %1714 = vmatpush2.msra.mxu0 0.0
  %1715 = vmatprep.subr.mxu0 0.0
  %1716 = vmatpush2.msra.mxu0 0.0
  %1717 = vmatprep.subr.mxu0 0.0
  %1718 = vmatpush2.msra.mxu0 0.0
  %1719 = vmatprep.mubr.f32.mxu0 0.0
  %1720 = vmatmul.mubr.f32.gmra.mxu0 %v730
  %v1721 = vpop.f32.mrf.mxu0
  %v1722 = vadd.f32 %v91, %v1721
  %v1723 = vpop.f32.mrf.mxu0
  %1724 = vdwg.mxu0
  %v1725 = vadd.f32 %v1462, %v1651
  %v1726 = vxor.u32 %v1725, 2147483648
  %v1727 = vmul.f32 %v1726, 1.442695
  %v1728 = vpow.pop %v1727
  %v1729 = vadd.f32 %v1728, 1.0
  %v1730 = vrcp.pop %v1729
  %v1731 = vmul.f32 1.0, %v1730
  %v1732 = vadd.f32 %v1464, %v1653
  %v1733 = vxor.u32 %v1732, 2147483648
  %v1734 = vmul.f32 %v1733, 1.442695
  %v1735 = vpow.pop %v1734
  %v1736 = vadd.f32 %v1735, 1.0
  %v1737 = vrcp.pop %v1736
  %v1738 = vmul.f32 1.0, %v1737
  %v1739 = vmul.f32 %v1731, %v1722
  %v1740 = vadd.f32 %v1533, %v1739
  %v1741 = vtanh.pop %v1740
  %v1742 = vsub.f32 1.0, %v1738
  %v1743 = vmul.f32 %v1742, %v1741
  %v1744 = vmul.f32 %v1738, %v730
  %v1745 = vadd.f32 %v1743, %v1744
  %v1746 = vld [vmem:[%s731] sm:$0xff]
  %v1747 = vld [vmem:[%s731 + $0x8] sm:$0xff]
  %v1748 = vld [vmem:[%s731 + $0x10] sm:$0xff]
  %v1749 = vld [vmem:[%s731 + $0x18] sm:$0xff]
  %v1750 = vld [vmem:[%s731 + $0x20] sm:$0xff]
  %v1751 = vld [vmem:[%s731 + $0x28] sm:$0xff]
  %v1752 = vld [vmem:[%s731 + $0x30] sm:$0xff]
  %v1753 = vld [vmem:[%s731 + $0x38] sm:$0xff]
  %v1754 = vld [vmem:[%s731 + $0x40] sm:$0xff]
  %v1755 = vld [vmem:[%s731 + $0x48] sm:$0xff]
  %v1756 = vld [vmem:[%s731 + $0x50] sm:$0xff]
  %v1757 = vld [vmem:[%s731 + $0x58] sm:$0xff]
  %v1758 = vld [vmem:[%s731 + $0x60] sm:$0xff]
  %v1759 = vld [vmem:[%s731 + $0x68] sm:$0xff]
  %v1760 = vld [vmem:[%s731 + $0x70] sm:$0xff]
  %v1761 = vld [vmem:[%s731 + $0x78] sm:$0xff]
  %v1762 = vld [vmem:[%s731 + $0x80] sm:$0xff]
  %v1763 = vld [vmem:[%s731 + $0x88] sm:$0xff]
  %v1764 = vld [vmem:[%s731 + $0x90] sm:$0xff]
  %v1765 = vld [vmem:[%s731 + $0x98] sm:$0xff]
  %v1766 = vld [vmem:[%s731 + $0xa0] sm:$0xff]
  %v1767 = vld [vmem:[%s731 + $0xa8] sm:$0xff]
  %v1768 = vld [vmem:[%s731 + $0xb0] sm:$0xff]
  %v1769 = vld [vmem:[%s731 + $0xb8] sm:$0xff]
  %v1770 = vld [vmem:[%s731 + $0xc0] sm:$0xff]
  %v1771 = vld [vmem:[%s731 + $0xc8] sm:$0xff]
  %v1772 = vld [vmem:[%s731 + $0xd0] sm:$0xff]
  %v1773 = vld [vmem:[%s731 + $0xd8] sm:$0xff]
  %v1774 = vld [vmem:[%s731 + $0xe0] sm:$0xff]
  %v1775 = vld [vmem:[%s731 + $0xe8] sm:$0xff]
  %v1776 = vld [vmem:[%s731 + $0xf0] sm:$0xff]
  %v1777 = vld [vmem:[%s731 + $0xf8] sm:$0xff]
  %v1778 = vld [vmem:[%s731 + $0x100] sm:$0xff]
  %v1779 = vld [vmem:[%s731 + $0x108] sm:$0xff]
  %v1780 = vld [vmem:[%s731 + $0x110] sm:$0xff]
  %v1781 = vld [vmem:[%s731 + $0x118] sm:$0xff]
  %v1782 = vld [vmem:[%s731 + $0x120] sm:$0xff]
  %v1783 = vld [vmem:[%s731 + $0x128] sm:$0xff]
  %v1784 = vld [vmem:[%s731 + $0x130] sm:$0xff]
  %v1785 = vld [vmem:[%s731 + $0x138] sm:$0xff]
  %v1786 = vld [vmem:[%s731 + $0x140] sm:$0xff]
  %v1787 = vld [vmem:[%s731 + $0x148] sm:$0xff]
  %v1788 = vld [vmem:[%s731 + $0x150] sm:$0xff]
  %v1789 = vld [vmem:[%s731 + $0x158] sm:$0xff]
  %v1790 = vld [vmem:[%s731 + $0x160] sm:$0xff]
  %v1791 = vld [vmem:[%s731 + $0x168] sm:$0xff]
  %v1792 = vld [vmem:[%s731 + $0x170] sm:$0xff]
  %v1793 = vld [vmem:[%s731 + $0x178] sm:$0xff]
  %1794 = vmatprep.subr.mxu0 %v1792
  %1795 = vmatpush1.msra.mxu0 %v1791
  %1796 = vmatprep.subr.mxu0 %v1789
  %1797 = vmatpush1.msra.mxu0 %v1788
  %1798 = vmatprep.subr.mxu0 %v1786
  %1799 = vmatpush1.msra.mxu0 %v1785
  %1800 = vmatprep.subr.mxu0 %v1783
  %1801 = vmatpush1.msra.mxu0 %v1782
  %1802 = vmatprep.subr.mxu0 %v1780
  %1803 = vmatpush1.msra.mxu0 %v1779
  %1804 = vmatprep.subr.mxu0 %v1777
  %1805 = vmatpush1.msra.mxu0 %v1776
  %1806 = vmatprep.subr.mxu0 %v1774
  %1807 = vmatpush1.msra.mxu0 %v1773
  %1808 = vmatprep.subr.mxu0 %v1771
  %1809 = vmatpush1.msra.mxu0 %v1770
  %1810 = vmatprep.subr.mxu0 %v1768
  %1811 = vmatpush1.msra.mxu0 %v1767
  %1812 = vmatprep.subr.mxu0 %v1765
  %1813 = vmatpush1.msra.mxu0 %v1764
  %1814 = vmatprep.subr.mxu0 %v1762
  %1815 = vmatpush1.msra.mxu0 %v1761
  %1816 = vmatprep.subr.mxu0 %v1759
  %1817 = vmatpush1.msra.mxu0 %v1758
  %1818 = vmatprep.subr.mxu0 %v1756
  %1819 = vmatpush1.msra.mxu0 %v1755
  %1820 = vmatprep.subr.mxu0 %v1753
  %1821 = vmatpush1.msra.mxu0 %v1752
  %1822 = vmatprep.subr.mxu0 %v1750
  %1823 = vmatpush1.msra.mxu0 %v1749
  %1824 = vmatprep.subr.mxu0 %v1747
  %1825 = vmatpush1.msra.mxu0 %v1746
  %1826 = vmatprep.subr.mxu0 0.0
  %1827 = vmatpush2.msra.mxu0 0.0
  %1828 = vmatprep.subr.mxu0 0.0
  %1829 = vmatpush2.msra.mxu0 0.0
  %1830 = vmatprep.subr.mxu0 0.0
  %1831 = vmatpush2.msra.mxu0 0.0
  %1832 = vmatprep.subr.mxu0 0.0
  %1833 = vmatpush2.msra.mxu0 0.0
  %1834 = vmatprep.subr.mxu0 0.0
  %1835 = vmatpush2.msra.mxu0 0.0
  %1836 = vmatprep.subr.mxu0 0.0
  %1837 = vmatpush2.msra.mxu0 0.0
  %1838 = vmatprep.subr.mxu0 0.0
  %1839 = vmatpush2.msra.mxu0 0.0
  %1840 = vmatprep.subr.mxu0 0.0
  %1841 = vmatpush2.msra.mxu0 0.0
  %1842 = vmatprep.subr.mxu0 0.0
  %1843 = vmatpush2.msra.mxu0 0.0
  %1844 = vmatprep.subr.mxu0 0.0
  %1845 = vmatpush2.msra.mxu0 0.0
  %1846 = vmatprep.subr.mxu0 0.0
  %1847 = vmatpush2.msra.mxu0 0.0
  %1848 = vmatprep.subr.mxu0 0.0
  %1849 = vmatpush2.msra.mxu0 0.0
  %1850 = vmatprep.subr.mxu0 0.0
  %1851 = vmatpush2.msra.mxu0 0.0
  %1852 = vmatprep.subr.mxu0 0.0
  %1853 = vmatpush2.msra.mxu0 0.0
  %1854 = vmatprep.subr.mxu0 0.0
  %1855 = vmatpush2.msra.mxu0 0.0
  %1856 = vmatprep.subr.mxu0 0.0
  %1857 = vmatpush2.msra.mxu0 0.0
  %1858 = vmatprep.mubr.f32.mxu0 0.0
  %1859 = vmatmul.mubr.f32.gmra.mxu0 %v1745
  %v1860 = vpop.f32.mrf.mxu0
  %v1861 = vadd.f32 %v48, %v1860
  %v1862 = vpop.f32.mrf.mxu0
  %v1863 = vadd.f32 %v52, %v1862
  %1864 = vdwg.mxu0
  %1865 = vmatprep.subr.mxu0 0.0
  %1866 = vmatpush1.msra.mxu0 %v1793
  %1867 = vmatprep.subr.mxu0 0.0
  %1868 = vmatpush1.msra.mxu0 %v1790
  %1869 = vmatprep.subr.mxu0 0.0
  %1870 = vmatpush1.msra.mxu0 %v1787
  %1871 = vmatprep.subr.mxu0 0.0
  %1872 = vmatpush1.msra.mxu0 %v1784
  %1873 = vmatprep.subr.mxu0 0.0
  %1874 = vmatpush1.msra.mxu0 %v1781
  %1875 = vmatprep.subr.mxu0 0.0
  %1876 = vmatpush1.msra.mxu0 %v1778
  %1877 = vmatprep.subr.mxu0 0.0
  %1878 = vmatpush1.msra.mxu0 %v1775
  %1879 = vmatprep.subr.mxu0 0.0
  %1880 = vmatpush1.msra.mxu0 %v1772
  %1881 = vmatprep.subr.mxu0 0.0
  %1882 = vmatpush1.msra.mxu0 %v1769
  %1883 = vmatprep.subr.mxu0 0.0
  %1884 = vmatpush1.msra.mxu0 %v1766
  %1885 = vmatprep.subr.mxu0 0.0
  %1886 = vmatpush1.msra.mxu0 %v1763
  %1887 = vmatprep.subr.mxu0 0.0
  %1888 = vmatpush1.msra.mxu0 %v1760
  %1889 = vmatprep.subr.mxu0 0.0
  %1890 = vmatpush1.msra.mxu0 %v1757
  %1891 = vmatprep.subr.mxu0 0.0
  %1892 = vmatpush1.msra.mxu0 %v1754
  %1893 = vmatprep.subr.mxu0 0.0
  %1894 = vmatpush1.msra.mxu0 %v1751
  %1895 = vmatprep.subr.mxu0 0.0
  %1896 = vmatpush1.msra.mxu0 %v1748
  %1897 = vmatprep.subr.mxu0 0.0
  %1898 = vmatpush2.msra.mxu0 0.0
  %1899 = vmatprep.subr.mxu0 0.0
  %1900 = vmatpush2.msra.mxu0 0.0
  %1901 = vmatprep.subr.mxu0 0.0
  %1902 = vmatpush2.msra.mxu0 0.0
  %1903 = vmatprep.subr.mxu0 0.0
  %1904 = vmatpush2.msra.mxu0 0.0
  %1905 = vmatprep.subr.mxu0 0.0
  %1906 = vmatpush2.msra.mxu0 0.0
  %1907 = vmatprep.subr.mxu0 0.0
  %1908 = vmatpush2.msra.mxu0 0.0
  %1909 = vmatprep.subr.mxu0 0.0
  %1910 = vmatpush2.msra.mxu0 0.0
  %1911 = vmatprep.subr.mxu0 0.0
  %1912 = vmatpush2.msra.mxu0 0.0
  %1913 = vmatprep.subr.mxu0 0.0
  %1914 = vmatpush2.msra.mxu0 0.0
  %1915 = vmatprep.subr.mxu0 0.0
  %1916 = vmatpush2.msra.mxu0 0.0
  %1917 = vmatprep.subr.mxu0 0.0
  %1918 = vmatpush2.msra.mxu0 0.0
  %1919 = vmatprep.subr.mxu0 0.0
  %1920 = vmatpush2.msra.mxu0 0.0
  %1921 = vmatprep.subr.mxu0 0.0
  %1922 = vmatpush2.msra.mxu0 0.0
  %1923 = vmatprep.subr.mxu0 0.0
  %1924 = vmatpush2.msra.mxu0 0.0
  %1925 = vmatprep.subr.mxu0 0.0
  %1926 = vmatpush2.msra.mxu0 0.0
  %1927 = vmatprep.subr.mxu0 0.0
  %1928 = vmatpush2.msra.mxu0 0.0
  %1929 = vmatprep.mubr.f32.mxu0 0.0
  %1930 = vmatmul.mubr.f32.gmra.mxu0 %v1745
  %v1931 = vpop.f32.mrf.mxu0
  %v1932 = vadd.f32 %v56, %v1931
  %v1933 = vpop.f32.mrf.mxu0
  %1934 = vdwg.mxu0
  %v1935 = vld [vmem:[%s921] sm:$0xff]
  %v1936 = vld [vmem:[%s921 + $0x8] sm:$0xff]
  %v1937 = vld [vmem:[%s921 + $0x10] sm:$0xff]
  %v1938 = vld [vmem:[%s921 + $0x18] sm:$0xff]
  %v1939 = vld [vmem:[%s921 + $0x20] sm:$0xff]
  %v1940 = vld [vmem:[%s921 + $0x28] sm:$0xff]
  %v1941 = vld [vmem:[%s921 + $0x30] sm:$0xff]
  %v1942 = vld [vmem:[%s921 + $0x38] sm:$0xff]
  %v1943 = vld [vmem:[%s921 + $0x40] sm:$0xff]
  %v1944 = vld [vmem:[%s921 + $0x48] sm:$0xff]
  %v1945 = vld [vmem:[%s921 + $0x50] sm:$0xff]
  %v1946 = vld [vmem:[%s921 + $0x58] sm:$0xff]
  %v1947 = vld [vmem:[%s921 + $0x60] sm:$0xff]
  %v1948 = vld [vmem:[%s921 + $0x68] sm:$0xff]
  %v1949 = vld [vmem:[%s921 + $0x70] sm:$0xff]
  %v1950 = vld [vmem:[%s921 + $0x78] sm:$0xff]
  %v1951 = vld [vmem:[%s921 + $0x80] sm:$0xff]
  %v1952 = vld [vmem:[%s921 + $0x88] sm:$0xff]
  %v1953 = vld [vmem:[%s921 + $0x90] sm:$0xff]
  %v1954 = vld [vmem:[%s921 + $0x98] sm:$0xff]
  %v1955 = vld [vmem:[%s921 + $0xa0] sm:$0xff]
  %v1956 = vld [vmem:[%s921 + $0xa8] sm:$0xff]
  %v1957 = vld [vmem:[%s921 + $0xb0] sm:$0xff]
  %v1958 = vld [vmem:[%s921 + $0xb8] sm:$0xff]
  %v1959 = vld [vmem:[%s921 + $0xc0] sm:$0xff]
  %v1960 = vld [vmem:[%s921 + $0xc8] sm:$0xff]
  %v1961 = vld [vmem:[%s921 + $0xd0] sm:$0xff]
  %v1962 = vld [vmem:[%s921 + $0xd8] sm:$0xff]
  %v1963 = vld [vmem:[%s921 + $0xe0] sm:$0xff]
  %v1964 = vld [vmem:[%s921 + $0xe8] sm:$0xff]
  %v1965 = vld [vmem:[%s921 + $0xf0] sm:$0xff]
  %v1966 = vld [vmem:[%s921 + $0xf8] sm:$0xff]
  %v1967 = vld [vmem:[%s921 + $0x100] sm:$0xff]
  %v1968 = vld [vmem:[%s921 + $0x108] sm:$0xff]
  %v1969 = vld [vmem:[%s921 + $0x110] sm:$0xff]
  %v1970 = vld [vmem:[%s921 + $0x118] sm:$0xff]
  %v1971 = vld [vmem:[%s921 + $0x120] sm:$0xff]
  %v1972 = vld [vmem:[%s921 + $0x128] sm:$0xff]
  %v1973 = vld [vmem:[%s921 + $0x130] sm:$0xff]
  %v1974 = vld [vmem:[%s921 + $0x138] sm:$0xff]
  %v1975 = vld [vmem:[%s921 + $0x140] sm:$0xff]
  %v1976 = vld [vmem:[%s921 + $0x148] sm:$0xff]
  %v1977 = vld [vmem:[%s921 + $0x150] sm:$0xff]
  %v1978 = vld [vmem:[%s921 + $0x158] sm:$0xff]
  %v1979 = vld [vmem:[%s921 + $0x160] sm:$0xff]
  %v1980 = vld [vmem:[%s921 + $0x168] sm:$0xff]
  %v1981 = vld [vmem:[%s921 + $0x170] sm:$0xff]
  %v1982 = vld [vmem:[%s921 + $0x178] sm:$0xff]
  %1983 = vmatprep.subr.mxu0 %v1981
  %1984 = vmatpush1.msra.mxu0 %v1980
  %1985 = vmatprep.subr.mxu0 %v1978
  %1986 = vmatpush1.msra.mxu0 %v1977
  %1987 = vmatprep.subr.mxu0 %v1975
  %1988 = vmatpush1.msra.mxu0 %v1974
  %1989 = vmatprep.subr.mxu0 %v1972
  %1990 = vmatpush1.msra.mxu0 %v1971
  %1991 = vmatprep.subr.mxu0 %v1969
  %1992 = vmatpush1.msra.mxu0 %v1968
  %1993 = vmatprep.subr.mxu0 %v1966
  %1994 = vmatpush1.msra.mxu0 %v1965
  %1995 = vmatprep.subr.mxu0 %v1963
  %1996 = vmatpush1.msra.mxu0 %v1962
  %1997 = vmatprep.subr.mxu0 %v1960
  %1998 = vmatpush1.msra.mxu0 %v1959
  %1999 = vmatprep.subr.mxu0 %v1957
  %2000 = vmatpush1.msra.mxu0 %v1956
  %2001 = vmatprep.subr.mxu0 %v1954
  %2002 = vmatpush1.msra.mxu0 %v1953
  %2003 = vmatprep.subr.mxu0 %v1951
  %2004 = vmatpush1.msra.mxu0 %v1950
  %2005 = vmatprep.subr.mxu0 %v1948
  %2006 = vmatpush1.msra.mxu0 %v1947
  %2007 = vmatprep.subr.mxu0 %v1945
  %2008 = vmatpush1.msra.mxu0 %v1944
  %2009 = vmatprep.subr.mxu0 %v1942
  %2010 = vmatpush1.msra.mxu0 %v1941
  %2011 = vmatprep.subr.mxu0 %v1939
  %2012 = vmatpush1.msra.mxu0 %v1938
  %2013 = vmatprep.subr.mxu0 %v1936
  %2014 = vmatpush1.msra.mxu0 %v1935
  %2015 = vmatprep.subr.mxu0 0.0
  %2016 = vmatpush2.msra.mxu0 0.0
  %2017 = vmatprep.subr.mxu0 0.0
  %2018 = vmatpush2.msra.mxu0 0.0
  %2019 = vmatprep.subr.mxu0 0.0
  %2020 = vmatpush2.msra.mxu0 0.0
  %2021 = vmatprep.subr.mxu0 0.0
  %2022 = vmatpush2.msra.mxu0 0.0
  %2023 = vmatprep.subr.mxu0 0.0
  %2024 = vmatpush2.msra.mxu0 0.0
  %2025 = vmatprep.subr.mxu0 0.0
  %2026 = vmatpush2.msra.mxu0 0.0
  %2027 = vmatprep.subr.mxu0 0.0
  %2028 = vmatpush2.msra.mxu0 0.0
  %2029 = vmatprep.subr.mxu0 0.0
  %2030 = vmatpush2.msra.mxu0 0.0
  %2031 = vmatprep.subr.mxu0 0.0
  %2032 = vmatpush2.msra.mxu0 0.0
  %2033 = vmatprep.subr.mxu0 0.0
  %2034 = vmatpush2.msra.mxu0 0.0
  %2035 = vmatprep.subr.mxu0 0.0
  %2036 = vmatpush2.msra.mxu0 0.0
  %2037 = vmatprep.subr.mxu0 0.0
  %2038 = vmatpush2.msra.mxu0 0.0
  %2039 = vmatprep.subr.mxu0 0.0
  %2040 = vmatpush2.msra.mxu0 0.0
  %2041 = vmatprep.subr.mxu0 0.0
  %2042 = vmatpush2.msra.mxu0 0.0
  %2043 = vmatprep.subr.mxu0 0.0
  %2044 = vmatpush2.msra.mxu0 0.0
  %2045 = vmatprep.subr.mxu0 0.0
  %2046 = vmatpush2.msra.mxu0 0.0
  %2047 = vmatprep.mubr.f32.mxu0 0.0
  %2048 = vmatmul.mubr.f32.gmra.mxu0 %v1131
  %v2049 = vpop.f32.mrf.mxu0
  %v2050 = vadd.f32 %v101, %v2049
  %v2051 = vpop.f32.mrf.mxu0
  %v2052 = vadd.f32 %v105, %v2051
  %2053 = vdwg.mxu0
  %2054 = vmatprep.subr.mxu0 0.0
  %2055 = vmatpush1.msra.mxu0 %v1982
  %2056 = vmatprep.subr.mxu0 0.0
  %2057 = vmatpush1.msra.mxu0 %v1979
  %2058 = vmatprep.subr.mxu0 0.0
  %2059 = vmatpush1.msra.mxu0 %v1976
  %2060 = vmatprep.subr.mxu0 0.0
  %2061 = vmatpush1.msra.mxu0 %v1973
  %2062 = vmatprep.subr.mxu0 0.0
  %2063 = vmatpush1.msra.mxu0 %v1970
  %2064 = vmatprep.subr.mxu0 0.0
  %2065 = vmatpush1.msra.mxu0 %v1967
  %2066 = vmatprep.subr.mxu0 0.0
  %2067 = vmatpush1.msra.mxu0 %v1964
  %2068 = vmatprep.subr.mxu0 0.0
  %2069 = vmatpush1.msra.mxu0 %v1961
  %2070 = vmatprep.subr.mxu0 0.0
  %2071 = vmatpush1.msra.mxu0 %v1958
  %2072 = vmatprep.subr.mxu0 0.0
  %2073 = vmatpush1.msra.mxu0 %v1955
  %2074 = vmatprep.subr.mxu0 0.0
  %2075 = vmatpush1.msra.mxu0 %v1952
  %2076 = vmatprep.subr.mxu0 0.0
  %2077 = vmatpush1.msra.mxu0 %v1949
  %2078 = vmatprep.subr.mxu0 0.0
  %2079 = vmatpush1.msra.mxu0 %v1946
  %2080 = vmatprep.subr.mxu0 0.0
  %2081 = vmatpush1.msra.mxu0 %v1943
  %2082 = vmatprep.subr.mxu0 0.0
  %2083 = vmatpush1.msra.mxu0 %v1940
  %2084 = vmatprep.subr.mxu0 0.0
  %2085 = vmatpush1.msra.mxu0 %v1937
  %2086 = vmatprep.subr.mxu0 0.0
  %2087 = vmatpush2.msra.mxu0 0.0
  %2088 = vmatprep.subr.mxu0 0.0
  %2089 = vmatpush2.msra.mxu0 0.0
  %2090 = vmatprep.subr.mxu0 0.0
  %2091 = vmatpush2.msra.mxu0 0.0
  %2092 = vmatprep.subr.mxu0 0.0
  %2093 = vmatpush2.msra.mxu0 0.0
  %2094 = vmatprep.subr.mxu0 0.0
  %2095 = vmatpush2.msra.mxu0 0.0
  %2096 = vmatprep.subr.mxu0 0.0
  %2097 = vmatpush2.msra.mxu0 0.0
  %2098 = vmatprep.subr.mxu0 0.0
  %2099 = vmatpush2.msra.mxu0 0.0
  %2100 = vmatprep.subr.mxu0 0.0
  %2101 = vmatpush2.msra.mxu0 0.0
  %2102 = vmatprep.subr.mxu0 0.0
  %2103 = vmatpush2.msra.mxu0 0.0
  %2104 = vmatprep.subr.mxu0 0.0
  %2105 = vmatpush2.msra.mxu0 0.0
  %2106 = vmatprep.subr.mxu0 0.0
  %2107 = vmatpush2.msra.mxu0 0.0
  %2108 = vmatprep.subr.mxu0 0.0
  %2109 = vmatpush2.msra.mxu0 0.0
  %2110 = vmatprep.subr.mxu0 0.0
  %2111 = vmatpush2.msra.mxu0 0.0
  %2112 = vmatprep.subr.mxu0 0.0
  %2113 = vmatpush2.msra.mxu0 0.0
  %2114 = vmatprep.subr.mxu0 0.0
  %2115 = vmatpush2.msra.mxu0 0.0
  %2116 = vmatprep.subr.mxu0 0.0
  %2117 = vmatpush2.msra.mxu0 0.0
  %2118 = vmatprep.mubr.f32.mxu0 0.0
  %2119 = vmatmul.mubr.f32.gmra.mxu0 %v1131
  %v2120 = vpop.f32.mrf.mxu0
  %v2121 = vadd.f32 %v109, %v2120
  %v2122 = vpop.f32.mrf.mxu0
  %2123 = vdwg.mxu0
  %v2124 = vadd.f32 %v1861, %v2050
  %v2125 = vxor.u32 %v2124, 2147483648
  %v2126 = vmul.f32 %v2125, 1.442695
  %v2127 = vpow.pop %v2126
  %v2128 = vadd.f32 %v2127, 1.0
  %v2129 = vrcp.pop %v2128
  %v2130 = vmul.f32 1.0, %v2129
  %v2131 = vadd.f32 %v1863, %v2052
  %v2132 = vxor.u32 %v2131, 2147483648
  %v2133 = vmul.f32 %v2132, 1.442695
  %v2134 = vpow.pop %v2133
  %v2135 = vadd.f32 %v2134, 1.0
  %v2136 = vrcp.pop %v2135
  %v2137 = vmul.f32 1.0, %v2136
  %v2138 = vmul.f32 %v2130, %v2121
  %v2139 = vadd.f32 %v1932, %v2138
  %v2140 = vtanh.pop %v2139
  %v2141 = vsub.f32 1.0, %v2137
  %v2142 = vmul.f32 %v2141, %v2140
  %v2143 = vmul.f32 %v2137, %v1131
  %v2144 = vadd.f32 %v2142, %v2143
  %s2145 = scalar_lea.vmem %s6, 8
  %2146 = vst [vmem:[%s2145] sm:$0xff] %v2144
  %s2147 = scalar_lea.vmem %s0, 48
  %v2148 = vld [vmem:[%s2147] sm:$0xff]
  %v2149 = vld [vmem:[%s2147 + $0x8] sm:$0xff]
  %v2150 = vld [vmem:[%s2147 + $0x10] sm:$0xff]
  %v2151 = vld [vmem:[%s2] sm:$0xff]
  %v2152 = vld [vmem:[%s2 + $0x8] sm:$0xff]
  %v2153 = vld [vmem:[%s2 + $0x10] sm:$0xff]
  %v2154 = vld [vmem:[%s2 + $0x18] sm:$0xff]
  %v2155 = vld [vmem:[%s2 + $0x20] sm:$0xff]
  %v2156 = vld [vmem:[%s2 + $0x28] sm:$0xff]
  %v2157 = vld [vmem:[%s2 + $0x30] sm:$0xff]
  %v2158 = vld [vmem:[%s2 + $0x38] sm:$0xff]
  %v2159 = vld [vmem:[%s2 + $0x40] sm:$0xff]
  %v2160 = vld [vmem:[%s2 + $0x48] sm:$0xff]
  %v2161 = vld [vmem:[%s2 + $0x50] sm:$0xff]
  %v2162 = vld [vmem:[%s2 + $0x58] sm:$0xff]
  %v2163 = vld [vmem:[%s2 + $0x60] sm:$0xff]
  %v2164 = vld [vmem:[%s2 + $0x68] sm:$0xff]
  %v2165 = vld [vmem:[%s2 + $0x70] sm:$0xff]
  %v2166 = vld [vmem:[%s2 + $0x78] sm:$0xff]
  %v2167 = vld [vmem:[%s2 + $0x80] sm:$0xff]
  %v2168 = vld [vmem:[%s2 + $0x88] sm:$0xff]
  %v2169 = vld [vmem:[%s2 + $0x90] sm:$0xff]
  %v2170 = vld [vmem:[%s2 + $0x98] sm:$0xff]
  %v2171 = vld [vmem:[%s2 + $0xa0] sm:$0xff]
  %v2172 = vld [vmem:[%s2 + $0xa8] sm:$0xff]
  %v2173 = vld [vmem:[%s2 + $0xb0] sm:$0xff]
  %v2174 = vld [vmem:[%s2 + $0xb8] sm:$0xff]
  %v2175 = vld [vmem:[%s2 + $0xc0] sm:$0xff]
  %v2176 = vld [vmem:[%s2 + $0xc8] sm:$0xff]
  %v2177 = vld [vmem:[%s2 + $0xd0] sm:$0xff]
  %v2178 = vld [vmem:[%s2 + $0xd8] sm:$0xff]
  %v2179 = vld [vmem:[%s2 + $0xe0] sm:$0xff]
  %v2180 = vld [vmem:[%s2 + $0xe8] sm:$0xff]
  %v2181 = vld [vmem:[%s2 + $0xf0] sm:$0xff]
  %v2182 = vld [vmem:[%s2 + $0xf8] sm:$0xff]
  %v2183 = vld [vmem:[%s2 + $0x100] sm:$0xff]
  %v2184 = vld [vmem:[%s2 + $0x108] sm:$0xff]
  %v2185 = vld [vmem:[%s2 + $0x110] sm:$0xff]
  %v2186 = vld [vmem:[%s2 + $0x118] sm:$0xff]
  %v2187 = vld [vmem:[%s2 + $0x120] sm:$0xff]
  %v2188 = vld [vmem:[%s2 + $0x128] sm:$0xff]
  %v2189 = vld [vmem:[%s2 + $0x130] sm:$0xff]
  %v2190 = vld [vmem:[%s2 + $0x138] sm:$0xff]
  %v2191 = vld [vmem:[%s2 + $0x140] sm:$0xff]
  %v2192 = vld [vmem:[%s2 + $0x148] sm:$0xff]
  %v2193 = vld [vmem:[%s2 + $0x150] sm:$0xff]
  %v2194 = vld [vmem:[%s2 + $0x158] sm:$0xff]
  %v2195 = vld [vmem:[%s2 + $0x160] sm:$0xff]
  %v2196 = vld [vmem:[%s2 + $0x168] sm:$0xff]
  %v2197 = vld [vmem:[%s2 + $0x170] sm:$0xff]
  %v2198 = vld [vmem:[%s2 + $0x178] sm:$0xff]
  %2199 = vmatprep.subr.mxu0 %v2197
  %2200 = vmatpush1.msra.mxu0 %v2196
  %2201 = vmatprep.subr.mxu0 %v2194
  %2202 = vmatpush1.msra.mxu0 %v2193
  %2203 = vmatprep.subr.mxu0 %v2191
  %2204 = vmatpush1.msra.mxu0 %v2190
  %2205 = vmatprep.subr.mxu0 %v2188
  %2206 = vmatpush1.msra.mxu0 %v2187
  %2207 = vmatprep.subr.mxu0 %v2185
  %2208 = vmatpush1.msra.mxu0 %v2184
  %2209 = vmatprep.subr.mxu0 %v2182
  %2210 = vmatpush1.msra.mxu0 %v2181
  %2211 = vmatprep.subr.mxu0 %v2179
  %2212 = vmatpush1.msra.mxu0 %v2178
  %2213 = vmatprep.subr.mxu0 %v2176
  %2214 = vmatpush1.msra.mxu0 %v2175
  %2215 = vmatprep.subr.mxu0 %v2173
  %2216 = vmatpush1.msra.mxu0 %v2172
  %2217 = vmatprep.subr.mxu0 %v2170
  %2218 = vmatpush1.msra.mxu0 %v2169
  %2219 = vmatprep.subr.mxu0 %v2167
  %2220 = vmatpush1.msra.mxu0 %v2166
  %2221 = vmatprep.subr.mxu0 %v2164
  %2222 = vmatpush1.msra.mxu0 %v2163
  %2223 = vmatprep.subr.mxu0 %v2161
  %2224 = vmatpush1.msra.mxu0 %v2160
  %2225 = vmatprep.subr.mxu0 %v2158
  %2226 = vmatpush1.msra.mxu0 %v2157
  %2227 = vmatprep.subr.mxu0 %v2155
  %2228 = vmatpush1.msra.mxu0 %v2154
  %2229 = vmatprep.subr.mxu0 %v2152
  %2230 = vmatpush1.msra.mxu0 %v2151
  %2231 = vmatprep.subr.mxu0 0.0
  %2232 = vmatpush2.msra.mxu0 0.0
  %2233 = vmatprep.subr.mxu0 0.0
  %2234 = vmatpush2.msra.mxu0 0.0
  %2235 = vmatprep.subr.mxu0 0.0
  %2236 = vmatpush2.msra.mxu0 0.0
  %2237 = vmatprep.subr.mxu0 0.0
  %2238 = vmatpush2.msra.mxu0 0.0
  %2239 = vmatprep.subr.mxu0 0.0
  %2240 = vmatpush2.msra.mxu0 0.0
  %2241 = vmatprep.subr.mxu0 0.0
  %2242 = vmatpush2.msra.mxu0 0.0
  %2243 = vmatprep.subr.mxu0 0.0
  %2244 = vmatpush2.msra.mxu0 0.0
  %2245 = vmatprep.subr.mxu0 0.0
  %2246 = vmatpush2.msra.mxu0 0.0
  %2247 = vmatprep.subr.mxu0 0.0
  %2248 = vmatpush2.msra.mxu0 0.0
  %2249 = vmatprep.subr.mxu0 0.0
  %2250 = vmatpush2.msra.mxu0 0.0
  %2251 = vmatprep.subr.mxu0 0.0
  %2252 = vmatpush2.msra.mxu0 0.0
  %2253 = vmatprep.subr.mxu0 0.0
  %2254 = vmatpush2.msra.mxu0 0.0
  %2255 = vmatprep.subr.mxu0 0.0
  %2256 = vmatpush2.msra.mxu0 0.0
  %2257 = vmatprep.subr.mxu0 0.0
  %2258 = vmatpush2.msra.mxu0 0.0
  %2259 = vmatprep.subr.mxu0 0.0
  %2260 = vmatpush2.msra.mxu0 0.0
  %2261 = vmatprep.subr.mxu0 0.0
  %2262 = vmatpush2.msra.mxu0 0.0
  %2263 = vmatprep.mubr.f32.mxu0 0.0
  %2264 = vmatmul.mubr.f32.gmra.mxu0 %v1346
  %v2265 = vpop.f32.mrf.mxu0
  %v2266 = vadd.f32 %v65, %v2265
  %v2267 = vpop.f32.mrf.mxu0
  %v2268 = vadd.f32 %v69, %v2267
  %2269 = vdwg.mxu0
  %2270 = vmatprep.subr.mxu0 0.0
  %2271 = vmatpush1.msra.mxu0 %v2198
  %2272 = vmatprep.subr.mxu0 0.0
  %2273 = vmatpush1.msra.mxu0 %v2195
  %2274 = vmatprep.subr.mxu0 0.0
  %2275 = vmatpush1.msra.mxu0 %v2192
  %2276 = vmatprep.subr.mxu0 0.0
  %2277 = vmatpush1.msra.mxu0 %v2189
  %2278 = vmatprep.subr.mxu0 0.0
  %2279 = vmatpush1.msra.mxu0 %v2186
  %2280 = vmatprep.subr.mxu0 0.0
  %2281 = vmatpush1.msra.mxu0 %v2183
  %2282 = vmatprep.subr.mxu0 0.0
  %2283 = vmatpush1.msra.mxu0 %v2180
  %2284 = vmatprep.subr.mxu0 0.0
  %2285 = vmatpush1.msra.mxu0 %v2177
  %2286 = vmatprep.subr.mxu0 0.0
  %2287 = vmatpush1.msra.mxu0 %v2174
  %2288 = vmatprep.subr.mxu0 0.0
  %2289 = vmatpush1.msra.mxu0 %v2171
  %2290 = vmatprep.subr.mxu0 0.0
  %2291 = vmatpush1.msra.mxu0 %v2168
  %2292 = vmatprep.subr.mxu0 0.0
  %2293 = vmatpush1.msra.mxu0 %v2165
  %2294 = vmatprep.subr.mxu0 0.0
  %2295 = vmatpush1.msra.mxu0 %v2162
  %2296 = vmatprep.subr.mxu0 0.0
  %2297 = vmatpush1.msra.mxu0 %v2159
  %2298 = vmatprep.subr.mxu0 0.0
  %2299 = vmatpush1.msra.mxu0 %v2156
  %2300 = vmatprep.subr.mxu0 0.0
  %2301 = vmatpush1.msra.mxu0 %v2153
  %2302 = vmatprep.subr.mxu0 0.0
  %2303 = vmatpush2.msra.mxu0 0.0
  %2304 = vmatprep.subr.mxu0 0.0
  %2305 = vmatpush2.msra.mxu0 0.0
  %2306 = vmatprep.subr.mxu0 0.0
  %2307 = vmatpush2.msra.mxu0 0.0
  %2308 = vmatprep.subr.mxu0 0.0
  %2309 = vmatpush2.msra.mxu0 0.0
  %2310 = vmatprep.subr.mxu0 0.0
  %2311 = vmatpush2.msra.mxu0 0.0
  %2312 = vmatprep.subr.mxu0 0.0
  %2313 = vmatpush2.msra.mxu0 0.0
  %2314 = vmatprep.subr.mxu0 0.0
  %2315 = vmatpush2.msra.mxu0 0.0
  %2316 = vmatprep.subr.mxu0 0.0
  %2317 = vmatpush2.msra.mxu0 0.0
  %2318 = vmatprep.subr.mxu0 0.0
  %2319 = vmatpush2.msra.mxu0 0.0
  %2320 = vmatprep.subr.mxu0 0.0
  %2321 = vmatpush2.msra.mxu0 0.0
  %2322 = vmatprep.subr.mxu0 0.0
  %2323 = vmatpush2.msra.mxu0 0.0
  %2324 = vmatprep.subr.mxu0 0.0
  %2325 = vmatpush2.msra.mxu0 0.0
  %2326 = vmatprep.subr.mxu0 0.0
  %2327 = vmatpush2.msra.mxu0 0.0
  %2328 = vmatprep.subr.mxu0 0.0
  %2329 = vmatpush2.msra.mxu0 0.0
  %2330 = vmatprep.subr.mxu0 0.0
  %2331 = vmatpush2.msra.mxu0 0.0
  %2332 = vmatprep.subr.mxu0 0.0
  %2333 = vmatpush2.msra.mxu0 0.0
  %2334 = vmatprep.mubr.f32.mxu0 0.0
  %2335 = vmatmul.mubr.f32.gmra.mxu0 %v1346
  %v2336 = vpop.f32.mrf.mxu0
  %v2337 = vadd.f32 %v73, %v2336
  %v2338 = vpop.f32.mrf.mxu0
  %2339 = vdwg.mxu0
  %v2340 = vadd.f32 %v2148, %v2266
  %v2341 = vxor.u32 %v2340, 2147483648
  %v2342 = vmul.f32 %v2341, 1.442695
  %v2343 = vpow.pop %v2342
  %v2344 = vadd.f32 %v2343, 1.0
  %v2345 = vrcp.pop %v2344
  %v2346 = vmul.f32 1.0, %v2345
  %v2347 = vadd.f32 %v2149, %v2268
  %v2348 = vxor.u32 %v2347, 2147483648
  %v2349 = vmul.f32 %v2348, 1.442695
  %v2350 = vpow.pop %v2349
  %v2351 = vadd.f32 %v2350, 1.0
  %v2352 = vrcp.pop %v2351
  %v2353 = vmul.f32 1.0, %v2352
  %v2354 = vmul.f32 %v2346, %v2337
  %v2355 = vadd.f32 %v2150, %v2354
  %v2356 = vtanh.pop %v2355
  %v2357 = vsub.f32 1.0, %v2353
  %v2358 = vmul.f32 %v2357, %v2356
  %v2359 = vmul.f32 %v2353, %v1346
  %v2360 = vadd.f32 %v2358, %v2359
  %v2361 = vld [vmem:[%s3] sm:$0xff]
  %v2362 = vld [vmem:[%s3 + $0x8] sm:$0xff]
  %v2363 = vld [vmem:[%s3 + $0x10] sm:$0xff]
  %v2364 = vld [vmem:[%s3 + $0x18] sm:$0xff]
  %v2365 = vld [vmem:[%s3 + $0x20] sm:$0xff]
  %v2366 = vld [vmem:[%s3 + $0x28] sm:$0xff]
  %v2367 = vld [vmem:[%s3 + $0x30] sm:$0xff]
  %v2368 = vld [vmem:[%s3 + $0x38] sm:$0xff]
  %v2369 = vld [vmem:[%s3 + $0x40] sm:$0xff]
  %v2370 = vld [vmem:[%s3 + $0x48] sm:$0xff]
  %v2371 = vld [vmem:[%s3 + $0x50] sm:$0xff]
  %v2372 = vld [vmem:[%s3 + $0x58] sm:$0xff]
  %v2373 = vld [vmem:[%s3 + $0x60] sm:$0xff]
  %v2374 = vld [vmem:[%s3 + $0x68] sm:$0xff]
  %v2375 = vld [vmem:[%s3 + $0x70] sm:$0xff]
  %v2376 = vld [vmem:[%s3 + $0x78] sm:$0xff]
  %v2377 = vld [vmem:[%s3 + $0x80] sm:$0xff]
  %v2378 = vld [vmem:[%s3 + $0x88] sm:$0xff]
  %v2379 = vld [vmem:[%s3 + $0x90] sm:$0xff]
  %v2380 = vld [vmem:[%s3 + $0x98] sm:$0xff]
  %v2381 = vld [vmem:[%s3 + $0xa0] sm:$0xff]
  %v2382 = vld [vmem:[%s3 + $0xa8] sm:$0xff]
  %v2383 = vld [vmem:[%s3 + $0xb0] sm:$0xff]
  %v2384 = vld [vmem:[%s3 + $0xb8] sm:$0xff]
  %v2385 = vld [vmem:[%s3 + $0xc0] sm:$0xff]
  %v2386 = vld [vmem:[%s3 + $0xc8] sm:$0xff]
  %v2387 = vld [vmem:[%s3 + $0xd0] sm:$0xff]
  %v2388 = vld [vmem:[%s3 + $0xd8] sm:$0xff]
  %v2389 = vld [vmem:[%s3 + $0xe0] sm:$0xff]
  %v2390 = vld [vmem:[%s3 + $0xe8] sm:$0xff]
  %v2391 = vld [vmem:[%s3 + $0xf0] sm:$0xff]
  %v2392 = vld [vmem:[%s3 + $0xf8] sm:$0xff]
  %v2393 = vld [vmem:[%s3 + $0x100] sm:$0xff]
  %v2394 = vld [vmem:[%s3 + $0x108] sm:$0xff]
  %v2395 = vld [vmem:[%s3 + $0x110] sm:$0xff]
  %v2396 = vld [vmem:[%s3 + $0x118] sm:$0xff]
  %v2397 = vld [vmem:[%s3 + $0x120] sm:$0xff]
  %v2398 = vld [vmem:[%s3 + $0x128] sm:$0xff]
  %v2399 = vld [vmem:[%s3 + $0x130] sm:$0xff]
  %v2400 = vld [vmem:[%s3 + $0x138] sm:$0xff]
  %v2401 = vld [vmem:[%s3 + $0x140] sm:$0xff]
  %v2402 = vld [vmem:[%s3 + $0x148] sm:$0xff]
  %v2403 = vld [vmem:[%s3 + $0x150] sm:$0xff]
  %v2404 = vld [vmem:[%s3 + $0x158] sm:$0xff]
  %v2405 = vld [vmem:[%s3 + $0x160] sm:$0xff]
  %v2406 = vld [vmem:[%s3 + $0x168] sm:$0xff]
  %v2407 = vld [vmem:[%s3 + $0x170] sm:$0xff]
  %v2408 = vld [vmem:[%s3 + $0x178] sm:$0xff]
  %2409 = vmatprep.subr.mxu0 %v2407
  %2410 = vmatpush1.msra.mxu0 %v2406
  %2411 = vmatprep.subr.mxu0 %v2404
  %2412 = vmatpush1.msra.mxu0 %v2403
  %2413 = vmatprep.subr.mxu0 %v2401
  %2414 = vmatpush1.msra.mxu0 %v2400
  %2415 = vmatprep.subr.mxu0 %v2398
  %2416 = vmatpush1.msra.mxu0 %v2397
  %2417 = vmatprep.subr.mxu0 %v2395
  %2418 = vmatpush1.msra.mxu0 %v2394
  %2419 = vmatprep.subr.mxu0 %v2392
  %2420 = vmatpush1.msra.mxu0 %v2391
  %2421 = vmatprep.subr.mxu0 %v2389
  %2422 = vmatpush1.msra.mxu0 %v2388
  %2423 = vmatprep.subr.mxu0 %v2386
  %2424 = vmatpush1.msra.mxu0 %v2385
  %2425 = vmatprep.subr.mxu0 %v2383
  %2426 = vmatpush1.msra.mxu0 %v2382
  %2427 = vmatprep.subr.mxu0 %v2380
  %2428 = vmatpush1.msra.mxu0 %v2379
  %2429 = vmatprep.subr.mxu0 %v2377
  %2430 = vmatpush1.msra.mxu0 %v2376
  %2431 = vmatprep.subr.mxu0 %v2374
  %2432 = vmatpush1.msra.mxu0 %v2373
  %2433 = vmatprep.subr.mxu0 %v2371
  %2434 = vmatpush1.msra.mxu0 %v2370
  %2435 = vmatprep.subr.mxu0 %v2368
  %2436 = vmatpush1.msra.mxu0 %v2367
  %2437 = vmatprep.subr.mxu0 %v2365
  %2438 = vmatpush1.msra.mxu0 %v2364
  %2439 = vmatprep.subr.mxu0 %v2362
  %2440 = vmatpush1.msra.mxu0 %v2361
  %2441 = vmatprep.subr.mxu0 0.0
  %2442 = vmatpush2.msra.mxu0 0.0
  %2443 = vmatprep.subr.mxu0 0.0
  %2444 = vmatpush2.msra.mxu0 0.0
  %2445 = vmatprep.subr.mxu0 0.0
  %2446 = vmatpush2.msra.mxu0 0.0
  %2447 = vmatprep.subr.mxu0 0.0
  %2448 = vmatpush2.msra.mxu0 0.0
  %2449 = vmatprep.subr.mxu0 0.0
  %2450 = vmatpush2.msra.mxu0 0.0
  %2451 = vmatprep.subr.mxu0 0.0
  %2452 = vmatpush2.msra.mxu0 0.0
  %2453 = vmatprep.subr.mxu0 0.0
  %2454 = vmatpush2.msra.mxu0 0.0
  %2455 = vmatprep.subr.mxu0 0.0
  %2456 = vmatpush2.msra.mxu0 0.0
  %2457 = vmatprep.subr.mxu0 0.0
  %2458 = vmatpush2.msra.mxu0 0.0
  %2459 = vmatprep.subr.mxu0 0.0
  %2460 = vmatpush2.msra.mxu0 0.0
  %2461 = vmatprep.subr.mxu0 0.0
  %2462 = vmatpush2.msra.mxu0 0.0
  %2463 = vmatprep.subr.mxu0 0.0
  %2464 = vmatpush2.msra.mxu0 0.0
  %2465 = vmatprep.subr.mxu0 0.0
  %2466 = vmatpush2.msra.mxu0 0.0
  %2467 = vmatprep.subr.mxu0 0.0
  %2468 = vmatpush2.msra.mxu0 0.0
  %2469 = vmatprep.subr.mxu0 0.0
  %2470 = vmatpush2.msra.mxu0 0.0
  %2471 = vmatprep.subr.mxu0 0.0
  %2472 = vmatpush2.msra.mxu0 0.0
  %2473 = vmatprep.mubr.f32.mxu0 0.0
  %2474 = vmatmul.mubr.f32.gmra.mxu0 %v2360
  %v2475 = vpop.f32.mrf.mxu0
  %v2476 = vadd.f32 %v30, %v2475
  %v2477 = vpop.f32.mrf.mxu0
  %v2478 = vadd.f32 %v34, %v2477
  %2479 = vdwg.mxu0
  %2480 = vmatprep.subr.mxu0 0.0
  %2481 = vmatpush1.msra.mxu0 %v2408
  %2482 = vmatprep.subr.mxu0 0.0
  %2483 = vmatpush1.msra.mxu0 %v2405
  %2484 = vmatprep.subr.mxu0 0.0
  %2485 = vmatpush1.msra.mxu0 %v2402
  %2486 = vmatprep.subr.mxu0 0.0
  %2487 = vmatpush1.msra.mxu0 %v2399
  %2488 = vmatprep.subr.mxu0 0.0
  %2489 = vmatpush1.msra.mxu0 %v2396
  %2490 = vmatprep.subr.mxu0 0.0
  %2491 = vmatpush1.msra.mxu0 %v2393
  %2492 = vmatprep.subr.mxu0 0.0
  %2493 = vmatpush1.msra.mxu0 %v2390
  %2494 = vmatprep.subr.mxu0 0.0
  %2495 = vmatpush1.msra.mxu0 %v2387
  %2496 = vmatprep.subr.mxu0 0.0
  %2497 = vmatpush1.msra.mxu0 %v2384
  %2498 = vmatprep.subr.mxu0 0.0
  %2499 = vmatpush1.msra.mxu0 %v2381
  %2500 = vmatprep.subr.mxu0 0.0
  %2501 = vmatpush1.msra.mxu0 %v2378
  %2502 = vmatprep.subr.mxu0 0.0
  %2503 = vmatpush1.msra.mxu0 %v2375
  %2504 = vmatprep.subr.mxu0 0.0
  %2505 = vmatpush1.msra.mxu0 %v2372
  %2506 = vmatprep.subr.mxu0 0.0
  %2507 = vmatpush1.msra.mxu0 %v2369
  %2508 = vmatprep.subr.mxu0 0.0
  %2509 = vmatpush1.msra.mxu0 %v2366
  %2510 = vmatprep.subr.mxu0 0.0
  %2511 = vmatpush1.msra.mxu0 %v2363
  %2512 = vmatprep.subr.mxu0 0.0
  %2513 = vmatpush2.msra.mxu0 0.0
  %2514 = vmatprep.subr.mxu0 0.0
  %2515 = vmatpush2.msra.mxu0 0.0
  %2516 = vmatprep.subr.mxu0 0.0
  %2517 = vmatpush2.msra.mxu0 0.0
  %2518 = vmatprep.subr.mxu0 0.0
  %2519 = vmatpush2.msra.mxu0 0.0
  %2520 = vmatprep.subr.mxu0 0.0
  %2521 = vmatpush2.msra.mxu0 0.0
  %2522 = vmatprep.subr.mxu0 0.0
  %2523 = vmatpush2.msra.mxu0 0.0
  %2524 = vmatprep.subr.mxu0 0.0
  %2525 = vmatpush2.msra.mxu0 0.0
  %2526 = vmatprep.subr.mxu0 0.0
  %2527 = vmatpush2.msra.mxu0 0.0
  %2528 = vmatprep.subr.mxu0 0.0
  %2529 = vmatpush2.msra.mxu0 0.0
  %2530 = vmatprep.subr.mxu0 0.0
  %2531 = vmatpush2.msra.mxu0 0.0
  %2532 = vmatprep.subr.mxu0 0.0
  %2533 = vmatpush2.msra.mxu0 0.0
  %2534 = vmatprep.subr.mxu0 0.0
  %2535 = vmatpush2.msra.mxu0 0.0
  %2536 = vmatprep.subr.mxu0 0.0
  %2537 = vmatpush2.msra.mxu0 0.0
  %2538 = vmatprep.subr.mxu0 0.0
  %2539 = vmatpush2.msra.mxu0 0.0
  %2540 = vmatprep.subr.mxu0 0.0
  %2541 = vmatpush2.msra.mxu0 0.0
  %2542 = vmatprep.subr.mxu0 0.0
  %2543 = vmatpush2.msra.mxu0 0.0
  %2544 = vmatprep.mubr.f32.mxu0 0.0
  %2545 = vmatmul.mubr.f32.gmra.mxu0 %v2360
  %v2546 = vpop.f32.mrf.mxu0
  %v2547 = vadd.f32 %v38, %v2546
  %v2548 = vpop.f32.mrf.mxu0
  %2549 = vdwg.mxu0
  %v2550 = vld [vmem:[%s520] sm:$0xff]
  %v2551 = vld [vmem:[%s520 + $0x8] sm:$0xff]
  %v2552 = vld [vmem:[%s520 + $0x10] sm:$0xff]
  %v2553 = vld [vmem:[%s520 + $0x18] sm:$0xff]
  %v2554 = vld [vmem:[%s520 + $0x20] sm:$0xff]
  %v2555 = vld [vmem:[%s520 + $0x28] sm:$0xff]
  %v2556 = vld [vmem:[%s520 + $0x30] sm:$0xff]
  %v2557 = vld [vmem:[%s520 + $0x38] sm:$0xff]
  %v2558 = vld [vmem:[%s520 + $0x40] sm:$0xff]
  %v2559 = vld [vmem:[%s520 + $0x48] sm:$0xff]
  %v2560 = vld [vmem:[%s520 + $0x50] sm:$0xff]
  %v2561 = vld [vmem:[%s520 + $0x58] sm:$0xff]
  %v2562 = vld [vmem:[%s520 + $0x60] sm:$0xff]
  %v2563 = vld [vmem:[%s520 + $0x68] sm:$0xff]
  %v2564 = vld [vmem:[%s520 + $0x70] sm:$0xff]
  %v2565 = vld [vmem:[%s520 + $0x78] sm:$0xff]
  %v2566 = vld [vmem:[%s520 + $0x80] sm:$0xff]
  %v2567 = vld [vmem:[%s520 + $0x88] sm:$0xff]
  %v2568 = vld [vmem:[%s520 + $0x90] sm:$0xff]
  %v2569 = vld [vmem:[%s520 + $0x98] sm:$0xff]
  %v2570 = vld [vmem:[%s520 + $0xa0] sm:$0xff]
  %v2571 = vld [vmem:[%s520 + $0xa8] sm:$0xff]
  %v2572 = vld [vmem:[%s520 + $0xb0] sm:$0xff]
  %v2573 = vld [vmem:[%s520 + $0xb8] sm:$0xff]
  %v2574 = vld [vmem:[%s520 + $0xc0] sm:$0xff]
  %v2575 = vld [vmem:[%s520 + $0xc8] sm:$0xff]
  %v2576 = vld [vmem:[%s520 + $0xd0] sm:$0xff]
  %v2577 = vld [vmem:[%s520 + $0xd8] sm:$0xff]
  %v2578 = vld [vmem:[%s520 + $0xe0] sm:$0xff]
  %v2579 = vld [vmem:[%s520 + $0xe8] sm:$0xff]
  %v2580 = vld [vmem:[%s520 + $0xf0] sm:$0xff]
  %v2581 = vld [vmem:[%s520 + $0xf8] sm:$0xff]
  %v2582 = vld [vmem:[%s520 + $0x100] sm:$0xff]
  %v2583 = vld [vmem:[%s520 + $0x108] sm:$0xff]
  %v2584 = vld [vmem:[%s520 + $0x110] sm:$0xff]
  %v2585 = vld [vmem:[%s520 + $0x118] sm:$0xff]
  %v2586 = vld [vmem:[%s520 + $0x120] sm:$0xff]
  %v2587 = vld [vmem:[%s520 + $0x128] sm:$0xff]
  %v2588 = vld [vmem:[%s520 + $0x130] sm:$0xff]
  %v2589 = vld [vmem:[%s520 + $0x138] sm:$0xff]
  %v2590 = vld [vmem:[%s520 + $0x140] sm:$0xff]
  %v2591 = vld [vmem:[%s520 + $0x148] sm:$0xff]
  %v2592 = vld [vmem:[%s520 + $0x150] sm:$0xff]
  %v2593 = vld [vmem:[%s520 + $0x158] sm:$0xff]
  %v2594 = vld [vmem:[%s520 + $0x160] sm:$0xff]
  %v2595 = vld [vmem:[%s520 + $0x168] sm:$0xff]
  %v2596 = vld [vmem:[%s520 + $0x170] sm:$0xff]
  %v2597 = vld [vmem:[%s520 + $0x178] sm:$0xff]
  %2598 = vmatprep.subr.mxu0 %v2596
  %2599 = vmatpush1.msra.mxu0 %v2595
  %2600 = vmatprep.subr.mxu0 %v2593
  %2601 = vmatpush1.msra.mxu0 %v2592
  %2602 = vmatprep.subr.mxu0 %v2590
  %2603 = vmatpush1.msra.mxu0 %v2589
  %2604 = vmatprep.subr.mxu0 %v2587
  %2605 = vmatpush1.msra.mxu0 %v2586
  %2606 = vmatprep.subr.mxu0 %v2584
  %2607 = vmatpush1.msra.mxu0 %v2583
  %2608 = vmatprep.subr.mxu0 %v2581
  %2609 = vmatpush1.msra.mxu0 %v2580
  %2610 = vmatprep.subr.mxu0 %v2578
  %2611 = vmatpush1.msra.mxu0 %v2577
  %2612 = vmatprep.subr.mxu0 %v2575
  %2613 = vmatpush1.msra.mxu0 %v2574
  %2614 = vmatprep.subr.mxu0 %v2572
  %2615 = vmatpush1.msra.mxu0 %v2571
  %2616 = vmatprep.subr.mxu0 %v2569
  %2617 = vmatpush1.msra.mxu0 %v2568
  %2618 = vmatprep.subr.mxu0 %v2566
  %2619 = vmatpush1.msra.mxu0 %v2565
  %2620 = vmatprep.subr.mxu0 %v2563
  %2621 = vmatpush1.msra.mxu0 %v2562
  %2622 = vmatprep.subr.mxu0 %v2560
  %2623 = vmatpush1.msra.mxu0 %v2559
  %2624 = vmatprep.subr.mxu0 %v2557
  %2625 = vmatpush1.msra.mxu0 %v2556
  %2626 = vmatprep.subr.mxu0 %v2554
  %2627 = vmatpush1.msra.mxu0 %v2553
  %2628 = vmatprep.subr.mxu0 %v2551
  %2629 = vmatpush1.msra.mxu0 %v2550
  %2630 = vmatprep.subr.mxu0 0.0
  %2631 = vmatpush2.msra.mxu0 0.0
  %2632 = vmatprep.subr.mxu0 0.0
  %2633 = vmatpush2.msra.mxu0 0.0
  %2634 = vmatprep.subr.mxu0 0.0
  %2635 = vmatpush2.msra.mxu0 0.0
  %2636 = vmatprep.subr.mxu0 0.0
  %2637 = vmatpush2.msra.mxu0 0.0
  %2638 = vmatprep.subr.mxu0 0.0
  %2639 = vmatpush2.msra.mxu0 0.0
  %2640 = vmatprep.subr.mxu0 0.0
  %2641 = vmatpush2.msra.mxu0 0.0
  %2642 = vmatprep.subr.mxu0 0.0
  %2643 = vmatpush2.msra.mxu0 0.0
  %2644 = vmatprep.subr.mxu0 0.0
  %2645 = vmatpush2.msra.mxu0 0.0
  %2646 = vmatprep.subr.mxu0 0.0
  %2647 = vmatpush2.msra.mxu0 0.0
  %2648 = vmatprep.subr.mxu0 0.0
  %2649 = vmatpush2.msra.mxu0 0.0
  %2650 = vmatprep.subr.mxu0 0.0
  %2651 = vmatpush2.msra.mxu0 0.0
  %2652 = vmatprep.subr.mxu0 0.0
  %2653 = vmatpush2.msra.mxu0 0.0
  %2654 = vmatprep.subr.mxu0 0.0
  %2655 = vmatpush2.msra.mxu0 0.0
  %2656 = vmatprep.subr.mxu0 0.0
  %2657 = vmatpush2.msra.mxu0 0.0
  %2658 = vmatprep.subr.mxu0 0.0
  %2659 = vmatpush2.msra.mxu0 0.0
  %2660 = vmatprep.subr.mxu0 0.0
  %2661 = vmatpush2.msra.mxu0 0.0
  %2662 = vmatprep.mubr.f32.mxu0 0.0
  %2663 = vmatmul.mubr.f32.gmra.mxu0 %v1745
  %v2664 = vpop.f32.mrf.mxu0
  %v2665 = vadd.f32 %v83, %v2664
  %v2666 = vpop.f32.mrf.mxu0
  %v2667 = vadd.f32 %v87, %v2666
  %2668 = vdwg.mxu0
  %2669 = vmatprep.subr.mxu0 0.0
  %2670 = vmatpush1.msra.mxu0 %v2597
  %2671 = vmatprep.subr.mxu0 0.0
  %2672 = vmatpush1.msra.mxu0 %v2594
  %2673 = vmatprep.subr.mxu0 0.0
  %2674 = vmatpush1.msra.mxu0 %v2591
  %2675 = vmatprep.subr.mxu0 0.0
  %2676 = vmatpush1.msra.mxu0 %v2588
  %2677 = vmatprep.subr.mxu0 0.0
  %2678 = vmatpush1.msra.mxu0 %v2585
  %2679 = vmatprep.subr.mxu0 0.0
  %2680 = vmatpush1.msra.mxu0 %v2582
  %2681 = vmatprep.subr.mxu0 0.0
  %2682 = vmatpush1.msra.mxu0 %v2579
  %2683 = vmatprep.subr.mxu0 0.0
  %2684 = vmatpush1.msra.mxu0 %v2576
  %2685 = vmatprep.subr.mxu0 0.0
  %2686 = vmatpush1.msra.mxu0 %v2573
  %2687 = vmatprep.subr.mxu0 0.0
  %2688 = vmatpush1.msra.mxu0 %v2570
  %2689 = vmatprep.subr.mxu0 0.0
  %2690 = vmatpush1.msra.mxu0 %v2567
  %2691 = vmatprep.subr.mxu0 0.0
  %2692 = vmatpush1.msra.mxu0 %v2564
  %2693 = vmatprep.subr.mxu0 0.0
  %2694 = vmatpush1.msra.mxu0 %v2561
  %2695 = vmatprep.subr.mxu0 0.0
  %2696 = vmatpush1.msra.mxu0 %v2558
  %2697 = vmatprep.subr.mxu0 0.0
  %2698 = vmatpush1.msra.mxu0 %v2555
  %2699 = vmatprep.subr.mxu0 0.0
  %2700 = vmatpush1.msra.mxu0 %v2552
  %2701 = vmatprep.subr.mxu0 0.0
  %2702 = vmatpush2.msra.mxu0 0.0
  %2703 = vmatprep.subr.mxu0 0.0
  %2704 = vmatpush2.msra.mxu0 0.0
  %2705 = vmatprep.subr.mxu0 0.0
  %2706 = vmatpush2.msra.mxu0 0.0
  %2707 = vmatprep.subr.mxu0 0.0
  %2708 = vmatpush2.msra.mxu0 0.0
  %2709 = vmatprep.subr.mxu0 0.0
  %2710 = vmatpush2.msra.mxu0 0.0
  %2711 = vmatprep.subr.mxu0 0.0
  %2712 = vmatpush2.msra.mxu0 0.0
  %2713 = vmatprep.subr.mxu0 0.0
  %2714 = vmatpush2.msra.mxu0 0.0
  %2715 = vmatprep.subr.mxu0 0.0
  %2716 = vmatpush2.msra.mxu0 0.0
  %2717 = vmatprep.subr.mxu0 0.0
  %2718 = vmatpush2.msra.mxu0 0.0
  %2719 = vmatprep.subr.mxu0 0.0
  %2720 = vmatpush2.msra.mxu0 0.0
  %2721 = vmatprep.subr.mxu0 0.0
  %2722 = vmatpush2.msra.mxu0 0.0
  %2723 = vmatprep.subr.mxu0 0.0
  %2724 = vmatpush2.msra.mxu0 0.0
  %2725 = vmatprep.subr.mxu0 0.0
  %2726 = vmatpush2.msra.mxu0 0.0
  %2727 = vmatprep.subr.mxu0 0.0
  %2728 = vmatpush2.msra.mxu0 0.0
  %2729 = vmatprep.subr.mxu0 0.0
  %2730 = vmatpush2.msra.mxu0 0.0
  %2731 = vmatprep.subr.mxu0 0.0
  %2732 = vmatpush2.msra.mxu0 0.0
  %2733 = vmatprep.mubr.f32.mxu0 0.0
  %2734 = vmatmul.mubr.f32.gmra.mxu0 %v1745
  %v2735 = vpop.f32.mrf.mxu0
  %v2736 = vadd.f32 %v91, %v2735
  %v2737 = vpop.f32.mrf.mxu0
  %2738 = vdwg.mxu0
  %v2739 = vadd.f32 %v2476, %v2665
  %v2740 = vxor.u32 %v2739, 2147483648
  %v2741 = vmul.f32 %v2740, 1.442695
  %v2742 = vpow.pop %v2741
  %v2743 = vadd.f32 %v2742, 1.0
  %v2744 = vrcp.pop %v2743
  %v2745 = vmul.f32 1.0, %v2744
  %v2746 = vadd.f32 %v2478, %v2667
  %v2747 = vxor.u32 %v2746, 2147483648
  %v2748 = vmul.f32 %v2747, 1.442695
  %v2749 = vpow.pop %v2748
  %v2750 = vadd.f32 %v2749, 1.0
  %v2751 = vrcp.pop %v2750
  %v2752 = vmul.f32 1.0, %v2751
  %v2753 = vmul.f32 %v2745, %v2736
  %v2754 = vadd.f32 %v2547, %v2753
  %v2755 = vtanh.pop %v2754
  %v2756 = vsub.f32 1.0, %v2752
  %v2757 = vmul.f32 %v2756, %v2755
  %v2758 = vmul.f32 %v2752, %v1745
  %v2759 = vadd.f32 %v2757, %v2758
  %v2760 = vld [vmem:[%s731] sm:$0xff]
  %v2761 = vld [vmem:[%s731 + $0x8] sm:$0xff]
  %v2762 = vld [vmem:[%s731 + $0x10] sm:$0xff]
  %v2763 = vld [vmem:[%s731 + $0x18] sm:$0xff]
  %v2764 = vld [vmem:[%s731 + $0x20] sm:$0xff]
  %v2765 = vld [vmem:[%s731 + $0x28] sm:$0xff]
  %v2766 = vld [vmem:[%s731 + $0x30] sm:$0xff]
  %v2767 = vld [vmem:[%s731 + $0x38] sm:$0xff]
  %v2768 = vld [vmem:[%s731 + $0x40] sm:$0xff]
  %v2769 = vld [vmem:[%s731 + $0x48] sm:$0xff]
  %v2770 = vld [vmem:[%s731 + $0x50] sm:$0xff]
  %v2771 = vld [vmem:[%s731 + $0x58] sm:$0xff]
  %v2772 = vld [vmem:[%s731 + $0x60] sm:$0xff]
  %v2773 = vld [vmem:[%s731 + $0x68] sm:$0xff]
  %v2774 = vld [vmem:[%s731 + $0x70] sm:$0xff]
  %v2775 = vld [vmem:[%s731 + $0x78] sm:$0xff]
  %v2776 = vld [vmem:[%s731 + $0x80] sm:$0xff]
  %v2777 = vld [vmem:[%s731 + $0x88] sm:$0xff]
  %v2778 = vld [vmem:[%s731 + $0x90] sm:$0xff]
  %v2779 = vld [vmem:[%s731 + $0x98] sm:$0xff]
  %v2780 = vld [vmem:[%s731 + $0xa0] sm:$0xff]
  %v2781 = vld [vmem:[%s731 + $0xa8] sm:$0xff]
  %v2782 = vld [vmem:[%s731 + $0xb0] sm:$0xff]
  %v2783 = vld [vmem:[%s731 + $0xb8] sm:$0xff]
  %v2784 = vld [vmem:[%s731 + $0xc0] sm:$0xff]
  %v2785 = vld [vmem:[%s731 + $0xc8] sm:$0xff]
  %v2786 = vld [vmem:[%s731 + $0xd0] sm:$0xff]
  %v2787 = vld [vmem:[%s731 + $0xd8] sm:$0xff]
  %v2788 = vld [vmem:[%s731 + $0xe0] sm:$0xff]
  %v2789 = vld [vmem:[%s731 + $0xe8] sm:$0xff]
  %v2790 = vld [vmem:[%s731 + $0xf0] sm:$0xff]
  %v2791 = vld [vmem:[%s731 + $0xf8] sm:$0xff]
  %v2792 = vld [vmem:[%s731 + $0x100] sm:$0xff]
  %v2793 = vld [vmem:[%s731 + $0x108] sm:$0xff]
  %v2794 = vld [vmem:[%s731 + $0x110] sm:$0xff]
  %v2795 = vld [vmem:[%s731 + $0x118] sm:$0xff]
  %v2796 = vld [vmem:[%s731 + $0x120] sm:$0xff]
  %v2797 = vld [vmem:[%s731 + $0x128] sm:$0xff]
  %v2798 = vld [vmem:[%s731 + $0x130] sm:$0xff]
  %v2799 = vld [vmem:[%s731 + $0x138] sm:$0xff]
  %v2800 = vld [vmem:[%s731 + $0x140] sm:$0xff]
  %v2801 = vld [vmem:[%s731 + $0x148] sm:$0xff]
  %v2802 = vld [vmem:[%s731 + $0x150] sm:$0xff]
  %v2803 = vld [vmem:[%s731 + $0x158] sm:$0xff]
  %v2804 = vld [vmem:[%s731 + $0x160] sm:$0xff]
  %v2805 = vld [vmem:[%s731 + $0x168] sm:$0xff]
  %v2806 = vld [vmem:[%s731 + $0x170] sm:$0xff]
  %v2807 = vld [vmem:[%s731 + $0x178] sm:$0xff]
  %2808 = vmatprep.subr.mxu0 %v2806
  %2809 = vmatpush1.msra.mxu0 %v2805
  %2810 = vmatprep.subr.mxu0 %v2803
  %2811 = vmatpush1.msra.mxu0 %v2802
  %2812 = vmatprep.subr.mxu0 %v2800
  %2813 = vmatpush1.msra.mxu0 %v2799
  %2814 = vmatprep.subr.mxu0 %v2797
  %2815 = vmatpush1.msra.mxu0 %v2796
  %2816 = vmatprep.subr.mxu0 %v2794
  %2817 = vmatpush1.msra.mxu0 %v2793
  %2818 = vmatprep.subr.mxu0 %v2791
  %2819 = vmatpush1.msra.mxu0 %v2790
  %2820 = vmatprep.subr.mxu0 %v2788
  %2821 = vmatpush1.msra.mxu0 %v2787
  %2822 = vmatprep.subr.mxu0 %v2785
  %2823 = vmatpush1.msra.mxu0 %v2784
  %2824 = vmatprep.subr.mxu0 %v2782
  %2825 = vmatpush1.msra.mxu0 %v2781
  %2826 = vmatprep.subr.mxu0 %v2779
  %2827 = vmatpush1.msra.mxu0 %v2778
  %2828 = vmatprep.subr.mxu0 %v2776
  %2829 = vmatpush1.msra.mxu0 %v2775
  %2830 = vmatprep.subr.mxu0 %v2773
  %2831 = vmatpush1.msra.mxu0 %v2772
  %2832 = vmatprep.subr.mxu0 %v2770
  %2833 = vmatpush1.msra.mxu0 %v2769
  %2834 = vmatprep.subr.mxu0 %v2767
  %2835 = vmatpush1.msra.mxu0 %v2766
  %2836 = vmatprep.subr.mxu0 %v2764
  %2837 = vmatpush1.msra.mxu0 %v2763
  %2838 = vmatprep.subr.mxu0 %v2761
  %2839 = vmatpush1.msra.mxu0 %v2760
  %2840 = vmatprep.subr.mxu0 0.0
  %2841 = vmatpush2.msra.mxu0 0.0
  %2842 = vmatprep.subr.mxu0 0.0
  %2843 = vmatpush2.msra.mxu0 0.0
  %2844 = vmatprep.subr.mxu0 0.0
  %2845 = vmatpush2.msra.mxu0 0.0
  %2846 = vmatprep.subr.mxu0 0.0
  %2847 = vmatpush2.msra.mxu0 0.0
  %2848 = vmatprep.subr.mxu0 0.0
  %2849 = vmatpush2.msra.mxu0 0.0
  %2850 = vmatprep.subr.mxu0 0.0
  %2851 = vmatpush2.msra.mxu0 0.0
  %2852 = vmatprep.subr.mxu0 0.0
  %2853 = vmatpush2.msra.mxu0 0.0
  %2854 = vmatprep.subr.mxu0 0.0
  %2855 = vmatpush2.msra.mxu0 0.0
  %2856 = vmatprep.subr.mxu0 0.0
  %2857 = vmatpush2.msra.mxu0 0.0
  %2858 = vmatprep.subr.mxu0 0.0
  %2859 = vmatpush2.msra.mxu0 0.0
  %2860 = vmatprep.subr.mxu0 0.0
  %2861 = vmatpush2.msra.mxu0 0.0
  %2862 = vmatprep.subr.mxu0 0.0
  %2863 = vmatpush2.msra.mxu0 0.0
  %2864 = vmatprep.subr.mxu0 0.0
  %2865 = vmatpush2.msra.mxu0 0.0
  %2866 = vmatprep.subr.mxu0 0.0
  %2867 = vmatpush2.msra.mxu0 0.0
  %2868 = vmatprep.subr.mxu0 0.0
  %2869 = vmatpush2.msra.mxu0 0.0
  %2870 = vmatprep.subr.mxu0 0.0
  %2871 = vmatpush2.msra.mxu0 0.0
  %2872 = vmatprep.mubr.f32.mxu0 0.0
  %2873 = vmatmul.mubr.f32.gmra.mxu0 %v2759
  %v2874 = vpop.f32.mrf.mxu0
  %v2875 = vadd.f32 %v48, %v2874
  %v2876 = vpop.f32.mrf.mxu0
  %v2877 = vadd.f32 %v52, %v2876
  %2878 = vdwg.mxu0
  %2879 = vmatprep.subr.mxu0 0.0
  %2880 = vmatpush1.msra.mxu0 %v2807
  %2881 = vmatprep.subr.mxu0 0.0
  %2882 = vmatpush1.msra.mxu0 %v2804
  %2883 = vmatprep.subr.mxu0 0.0
  %2884 = vmatpush1.msra.mxu0 %v2801
  %2885 = vmatprep.subr.mxu0 0.0
  %2886 = vmatpush1.msra.mxu0 %v2798
  %2887 = vmatprep.subr.mxu0 0.0
  %2888 = vmatpush1.msra.mxu0 %v2795
  %2889 = vmatprep.subr.mxu0 0.0
  %2890 = vmatpush1.msra.mxu0 %v2792
  %2891 = vmatprep.subr.mxu0 0.0
  %2892 = vmatpush1.msra.mxu0 %v2789
  %2893 = vmatprep.subr.mxu0 0.0
  %2894 = vmatpush1.msra.mxu0 %v2786
  %2895 = vmatprep.subr.mxu0 0.0
  %2896 = vmatpush1.msra.mxu0 %v2783
  %2897 = vmatprep.subr.mxu0 0.0
  %2898 = vmatpush1.msra.mxu0 %v2780
  %2899 = vmatprep.subr.mxu0 0.0
  %2900 = vmatpush1.msra.mxu0 %v2777
  %2901 = vmatprep.subr.mxu0 0.0
  %2902 = vmatpush1.msra.mxu0 %v2774
  %2903 = vmatprep.subr.mxu0 0.0
  %2904 = vmatpush1.msra.mxu0 %v2771
  %2905 = vmatprep.subr.mxu0 0.0
  %2906 = vmatpush1.msra.mxu0 %v2768
  %2907 = vmatprep.subr.mxu0 0.0
  %2908 = vmatpush1.msra.mxu0 %v2765
  %2909 = vmatprep.subr.mxu0 0.0
  %2910 = vmatpush1.msra.mxu0 %v2762
  %2911 = vmatprep.subr.mxu0 0.0
  %2912 = vmatpush2.msra.mxu0 0.0
  %2913 = vmatprep.subr.mxu0 0.0
  %2914 = vmatpush2.msra.mxu0 0.0
  %2915 = vmatprep.subr.mxu0 0.0
  %2916 = vmatpush2.msra.mxu0 0.0
  %2917 = vmatprep.subr.mxu0 0.0
  %2918 = vmatpush2.msra.mxu0 0.0
  %2919 = vmatprep.subr.mxu0 0.0
  %2920 = vmatpush2.msra.mxu0 0.0
  %2921 = vmatprep.subr.mxu0 0.0
  %2922 = vmatpush2.msra.mxu0 0.0
  %2923 = vmatprep.subr.mxu0 0.0
  %2924 = vmatpush2.msra.mxu0 0.0
  %2925 = vmatprep.subr.mxu0 0.0
  %2926 = vmatpush2.msra.mxu0 0.0
  %2927 = vmatprep.subr.mxu0 0.0
  %2928 = vmatpush2.msra.mxu0 0.0
  %2929 = vmatprep.subr.mxu0 0.0
  %2930 = vmatpush2.msra.mxu0 0.0
  %2931 = vmatprep.subr.mxu0 0.0
  %2932 = vmatpush2.msra.mxu0 0.0
  %2933 = vmatprep.subr.mxu0 0.0
  %2934 = vmatpush2.msra.mxu0 0.0
  %2935 = vmatprep.subr.mxu0 0.0
  %2936 = vmatpush2.msra.mxu0 0.0
  %2937 = vmatprep.subr.mxu0 0.0
  %2938 = vmatpush2.msra.mxu0 0.0
  %2939 = vmatprep.subr.mxu0 0.0
  %2940 = vmatpush2.msra.mxu0 0.0
  %2941 = vmatprep.subr.mxu0 0.0
  %2942 = vmatpush2.msra.mxu0 0.0
  %2943 = vmatprep.mubr.f32.mxu0 0.0
  %2944 = vmatmul.mubr.f32.gmra.mxu0 %v2759
  %v2945 = vpop.f32.mrf.mxu0
  %v2946 = vadd.f32 %v56, %v2945
  %v2947 = vpop.f32.mrf.mxu0
  %2948 = vdwg.mxu0
  %v2949 = vld [vmem:[%s921] sm:$0xff]
  %v2950 = vld [vmem:[%s921 + $0x8] sm:$0xff]
  %v2951 = vld [vmem:[%s921 + $0x10] sm:$0xff]
  %v2952 = vld [vmem:[%s921 + $0x18] sm:$0xff]
  %v2953 = vld [vmem:[%s921 + $0x20] sm:$0xff]
  %v2954 = vld [vmem:[%s921 + $0x28] sm:$0xff]
  %v2955 = vld [vmem:[%s921 + $0x30] sm:$0xff]
  %v2956 = vld [vmem:[%s921 + $0x38] sm:$0xff]
  %v2957 = vld [vmem:[%s921 + $0x40] sm:$0xff]
  %v2958 = vld [vmem:[%s921 + $0x48] sm:$0xff]
  %v2959 = vld [vmem:[%s921 + $0x50] sm:$0xff]
  %v2960 = vld [vmem:[%s921 + $0x58] sm:$0xff]
  %v2961 = vld [vmem:[%s921 + $0x60] sm:$0xff]
  %v2962 = vld [vmem:[%s921 + $0x68] sm:$0xff]
  %v2963 = vld [vmem:[%s921 + $0x70] sm:$0xff]
  %v2964 = vld [vmem:[%s921 + $0x78] sm:$0xff]
  %v2965 = vld [vmem:[%s921 + $0x80] sm:$0xff]
  %v2966 = vld [vmem:[%s921 + $0x88] sm:$0xff]
  %v2967 = vld [vmem:[%s921 + $0x90] sm:$0xff]
  %v2968 = vld [vmem:[%s921 + $0x98] sm:$0xff]
  %v2969 = vld [vmem:[%s921 + $0xa0] sm:$0xff]
  %v2970 = vld [vmem:[%s921 + $0xa8] sm:$0xff]
  %v2971 = vld [vmem:[%s921 + $0xb0] sm:$0xff]
  %v2972 = vld [vmem:[%s921 + $0xb8] sm:$0xff]
  %v2973 = vld [vmem:[%s921 + $0xc0] sm:$0xff]
  %v2974 = vld [vmem:[%s921 + $0xc8] sm:$0xff]
  %v2975 = vld [vmem:[%s921 + $0xd0] sm:$0xff]
  %v2976 = vld [vmem:[%s921 + $0xd8] sm:$0xff]
  %v2977 = vld [vmem:[%s921 + $0xe0] sm:$0xff]
  %v2978 = vld [vmem:[%s921 + $0xe8] sm:$0xff]
  %v2979 = vld [vmem:[%s921 + $0xf0] sm:$0xff]
  %v2980 = vld [vmem:[%s921 + $0xf8] sm:$0xff]
  %v2981 = vld [vmem:[%s921 + $0x100] sm:$0xff]
  %v2982 = vld [vmem:[%s921 + $0x108] sm:$0xff]
  %v2983 = vld [vmem:[%s921 + $0x110] sm:$0xff]
  %v2984 = vld [vmem:[%s921 + $0x118] sm:$0xff]
  %v2985 = vld [vmem:[%s921 + $0x120] sm:$0xff]
  %v2986 = vld [vmem:[%s921 + $0x128] sm:$0xff]
  %v2987 = vld [vmem:[%s921 + $0x130] sm:$0xff]
  %v2988 = vld [vmem:[%s921 + $0x138] sm:$0xff]
  %v2989 = vld [vmem:[%s921 + $0x140] sm:$0xff]
  %v2990 = vld [vmem:[%s921 + $0x148] sm:$0xff]
  %v2991 = vld [vmem:[%s921 + $0x150] sm:$0xff]
  %v2992 = vld [vmem:[%s921 + $0x158] sm:$0xff]
  %v2993 = vld [vmem:[%s921 + $0x160] sm:$0xff]
  %v2994 = vld [vmem:[%s921 + $0x168] sm:$0xff]
  %v2995 = vld [vmem:[%s921 + $0x170] sm:$0xff]
  %v2996 = vld [vmem:[%s921 + $0x178] sm:$0xff]
  %2997 = vmatprep.subr.mxu0 %v2995
  %2998 = vmatpush1.msra.mxu0 %v2994
  %2999 = vmatprep.subr.mxu0 %v2992
  %3000 = vmatpush1.msra.mxu0 %v2991
  %3001 = vmatprep.subr.mxu0 %v2989
  %3002 = vmatpush1.msra.mxu0 %v2988
  %3003 = vmatprep.subr.mxu0 %v2986
  %3004 = vmatpush1.msra.mxu0 %v2985
  %3005 = vmatprep.subr.mxu0 %v2983
  %3006 = vmatpush1.msra.mxu0 %v2982
  %3007 = vmatprep.subr.mxu0 %v2980
  %3008 = vmatpush1.msra.mxu0 %v2979
  %3009 = vmatprep.subr.mxu0 %v2977
  %3010 = vmatpush1.msra.mxu0 %v2976
  %3011 = vmatprep.subr.mxu0 %v2974
  %3012 = vmatpush1.msra.mxu0 %v2973
  %3013 = vmatprep.subr.mxu0 %v2971
  %3014 = vmatpush1.msra.mxu0 %v2970
  %3015 = vmatprep.subr.mxu0 %v2968
  %3016 = vmatpush1.msra.mxu0 %v2967
  %3017 = vmatprep.subr.mxu0 %v2965
  %3018 = vmatpush1.msra.mxu0 %v2964
  %3019 = vmatprep.subr.mxu0 %v2962
  %3020 = vmatpush1.msra.mxu0 %v2961
  %3021 = vmatprep.subr.mxu0 %v2959
  %3022 = vmatpush1.msra.mxu0 %v2958
  %3023 = vmatprep.subr.mxu0 %v2956
  %3024 = vmatpush1.msra.mxu0 %v2955
  %3025 = vmatprep.subr.mxu0 %v2953
  %3026 = vmatpush1.msra.mxu0 %v2952
  %3027 = vmatprep.subr.mxu0 %v2950
  %3028 = vmatpush1.msra.mxu0 %v2949
  %3029 = vmatprep.subr.mxu0 0.0
  %3030 = vmatpush2.msra.mxu0 0.0
  %3031 = vmatprep.subr.mxu0 0.0
  %3032 = vmatpush2.msra.mxu0 0.0
  %3033 = vmatprep.subr.mxu0 0.0
  %3034 = vmatpush2.msra.mxu0 0.0
  %3035 = vmatprep.subr.mxu0 0.0
  %3036 = vmatpush2.msra.mxu0 0.0
  %3037 = vmatprep.subr.mxu0 0.0
  %3038 = vmatpush2.msra.mxu0 0.0
  %3039 = vmatprep.subr.mxu0 0.0
  %3040 = vmatpush2.msra.mxu0 0.0
  %3041 = vmatprep.subr.mxu0 0.0
  %3042 = vmatpush2.msra.mxu0 0.0
  %3043 = vmatprep.subr.mxu0 0.0
  %3044 = vmatpush2.msra.mxu0 0.0
  %3045 = vmatprep.subr.mxu0 0.0
  %3046 = vmatpush2.msra.mxu0 0.0
  %3047 = vmatprep.subr.mxu0 0.0
  %3048 = vmatpush2.msra.mxu0 0.0
  %3049 = vmatprep.subr.mxu0 0.0
  %3050 = vmatpush2.msra.mxu0 0.0
  %3051 = vmatprep.subr.mxu0 0.0
  %3052 = vmatpush2.msra.mxu0 0.0
  %3053 = vmatprep.subr.mxu0 0.0
  %3054 = vmatpush2.msra.mxu0 0.0
  %3055 = vmatprep.subr.mxu0 0.0
  %3056 = vmatpush2.msra.mxu0 0.0
  %3057 = vmatprep.subr.mxu0 0.0
  %3058 = vmatpush2.msra.mxu0 0.0
  %3059 = vmatprep.subr.mxu0 0.0
  %3060 = vmatpush2.msra.mxu0 0.0
  %3061 = vmatprep.mubr.f32.mxu0 0.0
  %3062 = vmatmul.mubr.f32.gmra.mxu0 %v2144
  %v3063 = vpop.f32.mrf.mxu0
  %v3064 = vadd.f32 %v101, %v3063
  %v3065 = vpop.f32.mrf.mxu0
  %v3066 = vadd.f32 %v105, %v3065
  %3067 = vdwg.mxu0
  %3068 = vmatprep.subr.mxu0 0.0
  %3069 = vmatpush1.msra.mxu0 %v2996
  %3070 = vmatprep.subr.mxu0 0.0
  %3071 = vmatpush1.msra.mxu0 %v2993
  %3072 = vmatprep.subr.mxu0 0.0
  %3073 = vmatpush1.msra.mxu0 %v2990
  %3074 = vmatprep.subr.mxu0 0.0
  %3075 = vmatpush1.msra.mxu0 %v2987
  %3076 = vmatprep.subr.mxu0 0.0
  %3077 = vmatpush1.msra.mxu0 %v2984
  %3078 = vmatprep.subr.mxu0 0.0
  %3079 = vmatpush1.msra.mxu0 %v2981
  %3080 = vmatprep.subr.mxu0 0.0
  %3081 = vmatpush1.msra.mxu0 %v2978
  %3082 = vmatprep.subr.mxu0 0.0
  %3083 = vmatpush1.msra.mxu0 %v2975
  %3084 = vmatprep.subr.mxu0 0.0
  %3085 = vmatpush1.msra.mxu0 %v2972
  %3086 = vmatprep.subr.mxu0 0.0
  %3087 = vmatpush1.msra.mxu0 %v2969
  %3088 = vmatprep.subr.mxu0 0.0
  %3089 = vmatpush1.msra.mxu0 %v2966
  %3090 = vmatprep.subr.mxu0 0.0
  %3091 = vmatpush1.msra.mxu0 %v2963
  %3092 = vmatprep.subr.mxu0 0.0
  %3093 = vmatpush1.msra.mxu0 %v2960
  %3094 = vmatprep.subr.mxu0 0.0
  %3095 = vmatpush1.msra.mxu0 %v2957
  %3096 = vmatprep.subr.mxu0 0.0
  %3097 = vmatpush1.msra.mxu0 %v2954
  %3098 = vmatprep.subr.mxu0 0.0
  %3099 = vmatpush1.msra.mxu0 %v2951
  %3100 = vmatprep.subr.mxu0 0.0
  %3101 = vmatpush2.msra.mxu0 0.0
  %3102 = vmatprep.subr.mxu0 0.0
  %3103 = vmatpush2.msra.mxu0 0.0
  %3104 = vmatprep.subr.mxu0 0.0
  %3105 = vmatpush2.msra.mxu0 0.0
  %3106 = vmatprep.subr.mxu0 0.0
  %3107 = vmatpush2.msra.mxu0 0.0
  %3108 = vmatprep.subr.mxu0 0.0
  %3109 = vmatpush2.msra.mxu0 0.0
  %3110 = vmatprep.subr.mxu0 0.0
  %3111 = vmatpush2.msra.mxu0 0.0
  %3112 = vmatprep.subr.mxu0 0.0
  %3113 = vmatpush2.msra.mxu0 0.0
  %3114 = vmatprep.subr.mxu0 0.0
  %3115 = vmatpush2.msra.mxu0 0.0
  %3116 = vmatprep.subr.mxu0 0.0
  %3117 = vmatpush2.msra.mxu0 0.0
  %3118 = vmatprep.subr.mxu0 0.0
  %3119 = vmatpush2.msra.mxu0 0.0
  %3120 = vmatprep.subr.mxu0 0.0
  %3121 = vmatpush2.msra.mxu0 0.0
  %3122 = vmatprep.subr.mxu0 0.0
  %3123 = vmatpush2.msra.mxu0 0.0
  %3124 = vmatprep.subr.mxu0 0.0
  %3125 = vmatpush2.msra.mxu0 0.0
  %3126 = vmatprep.subr.mxu0 0.0
  %3127 = vmatpush2.msra.mxu0 0.0
  %3128 = vmatprep.subr.mxu0 0.0
  %3129 = vmatpush2.msra.mxu0 0.0
  %3130 = vmatprep.subr.mxu0 0.0
  %3131 = vmatpush2.msra.mxu0 0.0
  %3132 = vmatprep.mubr.f32.mxu0 0.0
  %3133 = vmatmul.mubr.f32.gmra.mxu0 %v2144
  %v3134 = vpop.f32.mrf.mxu0
  %v3135 = vadd.f32 %v109, %v3134
  %v3136 = vpop.f32.mrf.mxu0
  %3137 = vdwg.mxu0
  %v3138 = vadd.f32 %v2875, %v3064
  %v3139 = vxor.u32 %v3138, 2147483648
  %v3140 = vmul.f32 %v3139, 1.442695
  %v3141 = vpow.pop %v3140
  %v3142 = vadd.f32 %v3141, 1.0
  %v3143 = vrcp.pop %v3142
  %v3144 = vmul.f32 1.0, %v3143
  %v3145 = vadd.f32 %v2877, %v3066
  %v3146 = vxor.u32 %v3145, 2147483648
  %v3147 = vmul.f32 %v3146, 1.442695
  %v3148 = vpow.pop %v3147
  %v3149 = vadd.f32 %v3148, 1.0
  %v3150 = vrcp.pop %v3149
  %v3151 = vmul.f32 1.0, %v3150
  %v3152 = vmul.f32 %v3144, %v3135
  %v3153 = vadd.f32 %v2946, %v3152
  %v3154 = vtanh.pop %v3153
  %v3155 = vsub.f32 1.0, %v3151
  %v3156 = vmul.f32 %v3155, %v3154
  %v3157 = vmul.f32 %v3151, %v2144
  %v3158 = vadd.f32 %v3156, %v3157
  %s3159 = scalar_lea.vmem %s6, 16
  %3160 = vst [vmem:[%s3159] sm:$0xff] %v3158
  %s3161 = scalar_lea.vmem %s0, 72
  %v3162 = vld [vmem:[%s3161] sm:$0xff]
  %v3163 = vld [vmem:[%s3161 + $0x8] sm:$0xff]
  %v3164 = vld [vmem:[%s3161 + $0x10] sm:$0xff]
  %v3165 = vld [vmem:[%s2] sm:$0xff]
  %v3166 = vld [vmem:[%s2 + $0x8] sm:$0xff]
  %v3167 = vld [vmem:[%s2 + $0x10] sm:$0xff]
  %v3168 = vld [vmem:[%s2 + $0x18] sm:$0xff]
  %v3169 = vld [vmem:[%s2 + $0x20] sm:$0xff]
  %v3170 = vld [vmem:[%s2 + $0x28] sm:$0xff]
  %v3171 = vld [vmem:[%s2 + $0x30] sm:$0xff]
  %v3172 = vld [vmem:[%s2 + $0x38] sm:$0xff]
  %v3173 = vld [vmem:[%s2 + $0x40] sm:$0xff]
  %v3174 = vld [vmem:[%s2 + $0x48] sm:$0xff]
  %v3175 = vld [vmem:[%s2 + $0x50] sm:$0xff]
  %v3176 = vld [vmem:[%s2 + $0x58] sm:$0xff]
  %v3177 = vld [vmem:[%s2 + $0x60] sm:$0xff]
  %v3178 = vld [vmem:[%s2 + $0x68] sm:$0xff]
  %v3179 = vld [vmem:[%s2 + $0x70] sm:$0xff]
  %v3180 = vld [vmem:[%s2 + $0x78] sm:$0xff]
  %v3181 = vld [vmem:[%s2 + $0x80] sm:$0xff]
  %v3182 = vld [vmem:[%s2 + $0x88] sm:$0xff]
  %v3183 = vld [vmem:[%s2 + $0x90] sm:$0xff]
  %v3184 = vld [vmem:[%s2 + $0x98] sm:$0xff]
  %v3185 = vld [vmem:[%s2 + $0xa0] sm:$0xff]
  %v3186 = vld [vmem:[%s2 + $0xa8] sm:$0xff]
  %v3187 = vld [vmem:[%s2 + $0xb0] sm:$0xff]
  %v3188 = vld [vmem:[%s2 + $0xb8] sm:$0xff]
  %v3189 = vld [vmem:[%s2 + $0xc0] sm:$0xff]
  %v3190 = vld [vmem:[%s2 + $0xc8] sm:$0xff]
  %v3191 = vld [vmem:[%s2 + $0xd0] sm:$0xff]
  %v3192 = vld [vmem:[%s2 + $0xd8] sm:$0xff]
  %v3193 = vld [vmem:[%s2 + $0xe0] sm:$0xff]
  %v3194 = vld [vmem:[%s2 + $0xe8] sm:$0xff]
  %v3195 = vld [vmem:[%s2 + $0xf0] sm:$0xff]
  %v3196 = vld [vmem:[%s2 + $0xf8] sm:$0xff]
  %v3197 = vld [vmem:[%s2 + $0x100] sm:$0xff]
  %v3198 = vld [vmem:[%s2 + $0x108] sm:$0xff]
  %v3199 = vld [vmem:[%s2 + $0x110] sm:$0xff]
  %v3200 = vld [vmem:[%s2 + $0x118] sm:$0xff]
  %v3201 = vld [vmem:[%s2 + $0x120] sm:$0xff]
  %v3202 = vld [vmem:[%s2 + $0x128] sm:$0xff]
  %v3203 = vld [vmem:[%s2 + $0x130] sm:$0xff]
  %v3204 = vld [vmem:[%s2 + $0x138] sm:$0xff]
  %v3205 = vld [vmem:[%s2 + $0x140] sm:$0xff]
  %v3206 = vld [vmem:[%s2 + $0x148] sm:$0xff]
  %v3207 = vld [vmem:[%s2 + $0x150] sm:$0xff]
  %v3208 = vld [vmem:[%s2 + $0x158] sm:$0xff]
  %v3209 = vld [vmem:[%s2 + $0x160] sm:$0xff]
  %v3210 = vld [vmem:[%s2 + $0x168] sm:$0xff]
  %v3211 = vld [vmem:[%s2 + $0x170] sm:$0xff]
  %v3212 = vld [vmem:[%s2 + $0x178] sm:$0xff]
  %3213 = vmatprep.subr.mxu0 %v3211
  %3214 = vmatpush1.msra.mxu0 %v3210
  %3215 = vmatprep.subr.mxu0 %v3208
  %3216 = vmatpush1.msra.mxu0 %v3207
  %3217 = vmatprep.subr.mxu0 %v3205
  %3218 = vmatpush1.msra.mxu0 %v3204
  %3219 = vmatprep.subr.mxu0 %v3202
  %3220 = vmatpush1.msra.mxu0 %v3201
  %3221 = vmatprep.subr.mxu0 %v3199
  %3222 = vmatpush1.msra.mxu0 %v3198
  %3223 = vmatprep.subr.mxu0 %v3196
  %3224 = vmatpush1.msra.mxu0 %v3195
  %3225 = vmatprep.subr.mxu0 %v3193
  %3226 = vmatpush1.msra.mxu0 %v3192
  %3227 = vmatprep.subr.mxu0 %v3190
  %3228 = vmatpush1.msra.mxu0 %v3189
  %3229 = vmatprep.subr.mxu0 %v3187
  %3230 = vmatpush1.msra.mxu0 %v3186
  %3231 = vmatprep.subr.mxu0 %v3184
  %3232 = vmatpush1.msra.mxu0 %v3183
  %3233 = vmatprep.subr.mxu0 %v3181
  %3234 = vmatpush1.msra.mxu0 %v3180
  %3235 = vmatprep.subr.mxu0 %v3178
  %3236 = vmatpush1.msra.mxu0 %v3177
  %3237 = vmatprep.subr.mxu0 %v3175
  %3238 = vmatpush1.msra.mxu0 %v3174
  %3239 = vmatprep.subr.mxu0 %v3172
  %3240 = vmatpush1.msra.mxu0 %v3171
  %3241 = vmatprep.subr.mxu0 %v3169
  %3242 = vmatpush1.msra.mxu0 %v3168
  %3243 = vmatprep.subr.mxu0 %v3166
  %3244 = vmatpush1.msra.mxu0 %v3165
  %3245 = vmatprep.subr.mxu0 0.0
  %3246 = vmatpush2.msra.mxu0 0.0
  %3247 = vmatprep.subr.mxu0 0.0
  %3248 = vmatpush2.msra.mxu0 0.0
  %3249 = vmatprep.subr.mxu0 0.0
  %3250 = vmatpush2.msra.mxu0 0.0
  %3251 = vmatprep.subr.mxu0 0.0
  %3252 = vmatpush2.msra.mxu0 0.0
  %3253 = vmatprep.subr.mxu0 0.0
  %3254 = vmatpush2.msra.mxu0 0.0
  %3255 = vmatprep.subr.mxu0 0.0
  %3256 = vmatpush2.msra.mxu0 0.0
  %3257 = vmatprep.subr.mxu0 0.0
  %3258 = vmatpush2.msra.mxu0 0.0
  %3259 = vmatprep.subr.mxu0 0.0
  %3260 = vmatpush2.msra.mxu0 0.0
  %3261 = vmatprep.subr.mxu0 0.0
  %3262 = vmatpush2.msra.mxu0 0.0
  %3263 = vmatprep.subr.mxu0 0.0
  %3264 = vmatpush2.msra.mxu0 0.0
  %3265 = vmatprep.subr.mxu0 0.0
  %3266 = vmatpush2.msra.mxu0 0.0
  %3267 = vmatprep.subr.mxu0 0.0
  %3268 = vmatpush2.msra.mxu0 0.0
  %3269 = vmatprep.subr.mxu0 0.0
  %3270 = vmatpush2.msra.mxu0 0.0
  %3271 = vmatprep.subr.mxu0 0.0
  %3272 = vmatpush2.msra.mxu0 0.0
  %3273 = vmatprep.subr.mxu0 0.0
  %3274 = vmatpush2.msra.mxu0 0.0
  %3275 = vmatprep.subr.mxu0 0.0
  %3276 = vmatpush2.msra.mxu0 0.0
  %3277 = vmatprep.mubr.f32.mxu0 0.0
  %3278 = vmatmul.mubr.f32.gmra.mxu0 %v2360
  %v3279 = vpop.f32.mrf.mxu0
  %v3280 = vadd.f32 %v65, %v3279
  %v3281 = vpop.f32.mrf.mxu0
  %v3282 = vadd.f32 %v69, %v3281
  %3283 = vdwg.mxu0
  %3284 = vmatprep.subr.mxu0 0.0
  %3285 = vmatpush1.msra.mxu0 %v3212
  %3286 = vmatprep.subr.mxu0 0.0
  %3287 = vmatpush1.msra.mxu0 %v3209
  %3288 = vmatprep.subr.mxu0 0.0
  %3289 = vmatpush1.msra.mxu0 %v3206
  %3290 = vmatprep.subr.mxu0 0.0
  %3291 = vmatpush1.msra.mxu0 %v3203
  %3292 = vmatprep.subr.mxu0 0.0
  %3293 = vmatpush1.msra.mxu0 %v3200
  %3294 = vmatprep.subr.mxu0 0.0
  %3295 = vmatpush1.msra.mxu0 %v3197
  %3296 = vmatprep.subr.mxu0 0.0
  %3297 = vmatpush1.msra.mxu0 %v3194
  %3298 = vmatprep.subr.mxu0 0.0
  %3299 = vmatpush1.msra.mxu0 %v3191
  %3300 = vmatprep.subr.mxu0 0.0
  %3301 = vmatpush1.msra.mxu0 %v3188
  %3302 = vmatprep.subr.mxu0 0.0
  %3303 = vmatpush1.msra.mxu0 %v3185
  %3304 = vmatprep.subr.mxu0 0.0
  %3305 = vmatpush1.msra.mxu0 %v3182
  %3306 = vmatprep.subr.mxu0 0.0
  %3307 = vmatpush1.msra.mxu0 %v3179
  %3308 = vmatprep.subr.mxu0 0.0
  %3309 = vmatpush1.msra.mxu0 %v3176
  %3310 = vmatprep.subr.mxu0 0.0
  %3311 = vmatpush1.msra.mxu0 %v3173
  %3312 = vmatprep.subr.mxu0 0.0
  %3313 = vmatpush1.msra.mxu0 %v3170
  %3314 = vmatprep.subr.mxu0 0.0
  %3315 = vmatpush1.msra.mxu0 %v3167
  %3316 = vmatprep.subr.mxu0 0.0
  %3317 = vmatpush2.msra.mxu0 0.0
  %3318 = vmatprep.subr.mxu0 0.0
  %3319 = vmatpush2.msra.mxu0 0.0
  %3320 = vmatprep.subr.mxu0 0.0
  %3321 = vmatpush2.msra.mxu0 0.0
  %3322 = vmatprep.subr.mxu0 0.0
  %3323 = vmatpush2.msra.mxu0 0.0
  %3324 = vmatprep.subr.mxu0 0.0
  %3325 = vmatpush2.msra.mxu0 0.0
  %3326 = vmatprep.subr.mxu0 0.0
  %3327 = vmatpush2.msra.mxu0 0.0
  %3328 = vmatprep.subr.mxu0 0.0
  %3329 = vmatpush2.msra.mxu0 0.0
  %3330 = vmatprep.subr.mxu0 0.0
  %3331 = vmatpush2.msra.mxu0 0.0
  %3332 = vmatprep.subr.mxu0 0.0
  %3333 = vmatpush2.msra.mxu0 0.0
  %3334 = vmatprep.subr.mxu0 0.0
  %3335 = vmatpush2.msra.mxu0 0.0
  %3336 = vmatprep.subr.mxu0 0.0
  %3337 = vmatpush2.msra.mxu0 0.0
  %3338 = vmatprep.subr.mxu0 0.0
  %3339 = vmatpush2.msra.mxu0 0.0
  %3340 = vmatprep.subr.mxu0 0.0
  %3341 = vmatpush2.msra.mxu0 0.0
  %3342 = vmatprep.subr.mxu0 0.0
  %3343 = vmatpush2.msra.mxu0 0.0
  %3344 = vmatprep.subr.mxu0 0.0
  %3345 = vmatpush2.msra.mxu0 0.0
  %3346 = vmatprep.subr.mxu0 0.0
  %3347 = vmatpush2.msra.mxu0 0.0
  %3348 = vmatprep.mubr.f32.mxu0 0.0
  %3349 = vmatmul.mubr.f32.gmra.mxu0 %v2360
  %v3350 = vpop.f32.mrf.mxu0
  %v3351 = vadd.f32 %v73, %v3350
  %v3352 = vpop.f32.mrf.mxu0
  %3353 = vdwg.mxu0
  %v3354 = vadd.f32 %v3162, %v3280
  %v3355 = vxor.u32 %v3354, 2147483648
  %v3356 = vmul.f32 %v3355, 1.442695
  %v3357 = vpow.pop %v3356
  %v3358 = vadd.f32 %v3357, 1.0
  %v3359 = vrcp.pop %v3358
  %v3360 = vmul.f32 1.0, %v3359
  %v3361 = vadd.f32 %v3163, %v3282
  %v3362 = vxor.u32 %v3361, 2147483648
  %v3363 = vmul.f32 %v3362, 1.442695
  %v3364 = vpow.pop %v3363
  %v3365 = vadd.f32 %v3364, 1.0
  %v3366 = vrcp.pop %v3365
  %v3367 = vmul.f32 1.0, %v3366
  %v3368 = vmul.f32 %v3360, %v3351
  %v3369 = vadd.f32 %v3164, %v3368
  %v3370 = vtanh.pop %v3369
  %v3371 = vsub.f32 1.0, %v3367
  %v3372 = vmul.f32 %v3371, %v3370
  %v3373 = vmul.f32 %v3367, %v2360
  %v3374 = vadd.f32 %v3372, %v3373
  %v3375 = vld [vmem:[%s3] sm:$0xff]
  %v3376 = vld [vmem:[%s3 + $0x8] sm:$0xff]
  %v3377 = vld [vmem:[%s3 + $0x10] sm:$0xff]
  %v3378 = vld [vmem:[%s3 + $0x18] sm:$0xff]
  %v3379 = vld [vmem:[%s3 + $0x20] sm:$0xff]
  %v3380 = vld [vmem:[%s3 + $0x28] sm:$0xff]
  %v3381 = vld [vmem:[%s3 + $0x30] sm:$0xff]
  %v3382 = vld [vmem:[%s3 + $0x38] sm:$0xff]
  %v3383 = vld [vmem:[%s3 + $0x40] sm:$0xff]
  %v3384 = vld [vmem:[%s3 + $0x48] sm:$0xff]
  %v3385 = vld [vmem:[%s3 + $0x50] sm:$0xff]
  %v3386 = vld [vmem:[%s3 + $0x58] sm:$0xff]
  %v3387 = vld [vmem:[%s3 + $0x60] sm:$0xff]
  %v3388 = vld [vmem:[%s3 + $0x68] sm:$0xff]
  %v3389 = vld [vmem:[%s3 + $0x70] sm:$0xff]
  %v3390 = vld [vmem:[%s3 + $0x78] sm:$0xff]
  %v3391 = vld [vmem:[%s3 + $0x80] sm:$0xff]
  %v3392 = vld [vmem:[%s3 + $0x88] sm:$0xff]
  %v3393 = vld [vmem:[%s3 + $0x90] sm:$0xff]
  %v3394 = vld [vmem:[%s3 + $0x98] sm:$0xff]
  %v3395 = vld [vmem:[%s3 + $0xa0] sm:$0xff]
  %v3396 = vld [vmem:[%s3 + $0xa8] sm:$0xff]
  %v3397 = vld [vmem:[%s3 + $0xb0] sm:$0xff]
  %v3398 = vld [vmem:[%s3 + $0xb8] sm:$0xff]
  %v3399 = vld [vmem:[%s3 + $0xc0] sm:$0xff]
  %v3400 = vld [vmem:[%s3 + $0xc8] sm:$0xff]
  %v3401 = vld [vmem:[%s3 + $0xd0] sm:$0xff]
  %v3402 = vld [vmem:[%s3 + $0xd8] sm:$0xff]
  %v3403 = vld [vmem:[%s3 + $0xe0] sm:$0xff]
  %v3404 = vld [vmem:[%s3 + $0xe8] sm:$0xff]
  %v3405 = vld [vmem:[%s3 + $0xf0] sm:$0xff]
  %v3406 = vld [vmem:[%s3 + $0xf8] sm:$0xff]
  %v3407 = vld [vmem:[%s3 + $0x100] sm:$0xff]
  %v3408 = vld [vmem:[%s3 + $0x108] sm:$0xff]
  %v3409 = vld [vmem:[%s3 + $0x110] sm:$0xff]
  %v3410 = vld [vmem:[%s3 + $0x118] sm:$0xff]
  %v3411 = vld [vmem:[%s3 + $0x120] sm:$0xff]
  %v3412 = vld [vmem:[%s3 + $0x128] sm:$0xff]
  %v3413 = vld [vmem:[%s3 + $0x130] sm:$0xff]
  %v3414 = vld [vmem:[%s3 + $0x138] sm:$0xff]
  %v3415 = vld [vmem:[%s3 + $0x140] sm:$0xff]
  %v3416 = vld [vmem:[%s3 + $0x148] sm:$0xff]
  %v3417 = vld [vmem:[%s3 + $0x150] sm:$0xff]
  %v3418 = vld [vmem:[%s3 + $0x158] sm:$0xff]
  %v3419 = vld [vmem:[%s3 + $0x160] sm:$0xff]
  %v3420 = vld [vmem:[%s3 + $0x168] sm:$0xff]
  %v3421 = vld [vmem:[%s3 + $0x170] sm:$0xff]
  %v3422 = vld [vmem:[%s3 + $0x178] sm:$0xff]
  %3423 = vmatprep.subr.mxu0 %v3421
  %3424 = vmatpush1.msra.mxu0 %v3420
  %3425 = vmatprep.subr.mxu0 %v3418
  %3426 = vmatpush1.msra.mxu0 %v3417
  %3427 = vmatprep.subr.mxu0 %v3415
  %3428 = vmatpush1.msra.mxu0 %v3414
  %3429 = vmatprep.subr.mxu0 %v3412
  %3430 = vmatpush1.msra.mxu0 %v3411
  %3431 = vmatprep.subr.mxu0 %v3409
  %3432 = vmatpush1.msra.mxu0 %v3408
  %3433 = vmatprep.subr.mxu0 %v3406
  %3434 = vmatpush1.msra.mxu0 %v3405
  %3435 = vmatprep.subr.mxu0 %v3403
  %3436 = vmatpush1.msra.mxu0 %v3402
  %3437 = vmatprep.subr.mxu0 %v3400
  %3438 = vmatpush1.msra.mxu0 %v3399
  %3439 = vmatprep.subr.mxu0 %v3397
  %3440 = vmatpush1.msra.mxu0 %v3396
  %3441 = vmatprep.subr.mxu0 %v3394
  %3442 = vmatpush1.msra.mxu0 %v3393
  %3443 = vmatprep.subr.mxu0 %v3391
  %3444 = vmatpush1.msra.mxu0 %v3390
  %3445 = vmatprep.subr.mxu0 %v3388
  %3446 = vmatpush1.msra.mxu0 %v3387
  %3447 = vmatprep.subr.mxu0 %v3385
  %3448 = vmatpush1.msra.mxu0 %v3384
  %3449 = vmatprep.subr.mxu0 %v3382
  %3450 = vmatpush1.msra.mxu0 %v3381
  %3451 = vmatprep.subr.mxu0 %v3379
  %3452 = vmatpush1.msra.mxu0 %v3378
  %3453 = vmatprep.subr.mxu0 %v3376
  %3454 = vmatpush1.msra.mxu0 %v3375
  %3455 = vmatprep.subr.mxu0 0.0
  %3456 = vmatpush2.msra.mxu0 0.0
  %3457 = vmatprep.subr.mxu0 0.0
  %3458 = vmatpush2.msra.mxu0 0.0
  %3459 = vmatprep.subr.mxu0 0.0
  %3460 = vmatpush2.msra.mxu0 0.0
  %3461 = vmatprep.subr.mxu0 0.0
  %3462 = vmatpush2.msra.mxu0 0.0
  %3463 = vmatprep.subr.mxu0 0.0
  %3464 = vmatpush2.msra.mxu0 0.0
  %3465 = vmatprep.subr.mxu0 0.0
  %3466 = vmatpush2.msra.mxu0 0.0
  %3467 = vmatprep.subr.mxu0 0.0
  %3468 = vmatpush2.msra.mxu0 0.0
  %3469 = vmatprep.subr.mxu0 0.0
  %3470 = vmatpush2.msra.mxu0 0.0
  %3471 = vmatprep.subr.mxu0 0.0
  %3472 = vmatpush2.msra.mxu0 0.0
  %3473 = vmatprep.subr.mxu0 0.0
  %3474 = vmatpush2.msra.mxu0 0.0
  %3475 = vmatprep.subr.mxu0 0.0
  %3476 = vmatpush2.msra.mxu0 0.0
  %3477 = vmatprep.subr.mxu0 0.0
  %3478 = vmatpush2.msra.mxu0 0.0
  %3479 = vmatprep.subr.mxu0 0.0
  %3480 = vmatpush2.msra.mxu0 0.0
  %3481 = vmatprep.subr.mxu0 0.0
  %3482 = vmatpush2.msra.mxu0 0.0
  %3483 = vmatprep.subr.mxu0 0.0
  %3484 = vmatpush2.msra.mxu0 0.0
  %3485 = vmatprep.subr.mxu0 0.0
  %3486 = vmatpush2.msra.mxu0 0.0
  %3487 = vmatprep.mubr.f32.mxu0 0.0
  %3488 = vmatmul.mubr.f32.gmra.mxu0 %v3374
  %v3489 = vpop.f32.mrf.mxu0
  %v3490 = vadd.f32 %v30, %v3489
  %v3491 = vpop.f32.mrf.mxu0
  %v3492 = vadd.f32 %v34, %v3491
  %3493 = vdwg.mxu0
  %3494 = vmatprep.subr.mxu0 0.0
  %3495 = vmatpush1.msra.mxu0 %v3422
  %3496 = vmatprep.subr.mxu0 0.0
  %3497 = vmatpush1.msra.mxu0 %v3419
  %3498 = vmatprep.subr.mxu0 0.0
  %3499 = vmatpush1.msra.mxu0 %v3416
  %3500 = vmatprep.subr.mxu0 0.0
  %3501 = vmatpush1.msra.mxu0 %v3413
  %3502 = vmatprep.subr.mxu0 0.0
  %3503 = vmatpush1.msra.mxu0 %v3410
  %3504 = vmatprep.subr.mxu0 0.0
  %3505 = vmatpush1.msra.mxu0 %v3407
  %3506 = vmatprep.subr.mxu0 0.0
  %3507 = vmatpush1.msra.mxu0 %v3404
  %3508 = vmatprep.subr.mxu0 0.0
  %3509 = vmatpush1.msra.mxu0 %v3401
  %3510 = vmatprep.subr.mxu0 0.0
  %3511 = vmatpush1.msra.mxu0 %v3398
  %3512 = vmatprep.subr.mxu0 0.0
  %3513 = vmatpush1.msra.mxu0 %v3395
  %3514 = vmatprep.subr.mxu0 0.0
  %3515 = vmatpush1.msra.mxu0 %v3392
  %3516 = vmatprep.subr.mxu0 0.0
  %3517 = vmatpush1.msra.mxu0 %v3389
  %3518 = vmatprep.subr.mxu0 0.0
  %3519 = vmatpush1.msra.mxu0 %v3386
  %3520 = vmatprep.subr.mxu0 0.0
  %3521 = vmatpush1.msra.mxu0 %v3383
  %3522 = vmatprep.subr.mxu0 0.0
  %3523 = vmatpush1.msra.mxu0 %v3380
  %3524 = vmatprep.subr.mxu0 0.0
  %3525 = vmatpush1.msra.mxu0 %v3377
  %3526 = vmatprep.subr.mxu0 0.0
  %3527 = vmatpush2.msra.mxu0 0.0
  %3528 = vmatprep.subr.mxu0 0.0
  %3529 = vmatpush2.msra.mxu0 0.0
  %3530 = vmatprep.subr.mxu0 0.0
  %3531 = vmatpush2.msra.mxu0 0.0
  %3532 = vmatprep.subr.mxu0 0.0
  %3533 = vmatpush2.msra.mxu0 0.0
  %3534 = vmatprep.subr.mxu0 0.0
  %3535 = vmatpush2.msra.mxu0 0.0
  %3536 = vmatprep.subr.mxu0 0.0
  %3537 = vmatpush2.msra.mxu0 0.0
  %3538 = vmatprep.subr.mxu0 0.0
  %3539 = vmatpush2.msra.mxu0 0.0
  %3540 = vmatprep.subr.mxu0 0.0
  %3541 = vmatpush2.msra.mxu0 0.0
  %3542 = vmatprep.subr.mxu0 0.0
  %3543 = vmatpush2.msra.mxu0 0.0
  %3544 = vmatprep.subr.mxu0 0.0
  %3545 = vmatpush2.msra.mxu0 0.0
  %3546 = vmatprep.subr.mxu0 0.0
  %3547 = vmatpush2.msra.mxu0 0.0
  %3548 = vmatprep.subr.mxu0 0.0
  %3549 = vmatpush2.msra.mxu0 0.0
  %3550 = vmatprep.subr.mxu0 0.0
  %3551 = vmatpush2.msra.mxu0 0.0
  %3552 = vmatprep.subr.mxu0 0.0
  %3553 = vmatpush2.msra.mxu0 0.0
  %3554 = vmatprep.subr.mxu0 0.0
  %3555 = vmatpush2.msra.mxu0 0.0
  %3556 = vmatprep.subr.mxu0 0.0
  %3557 = vmatpush2.msra.mxu0 0.0
  %3558 = vmatprep.mubr.f32.mxu0 0.0
  %3559 = vmatmul.mubr.f32.gmra.mxu0 %v3374
  %v3560 = vpop.f32.mrf.mxu0
  %v3561 = vadd.f32 %v38, %v3560
  %v3562 = vpop.f32.mrf.mxu0
  %3563 = vdwg.mxu0
  %v3564 = vld [vmem:[%s520] sm:$0xff]
  %v3565 = vld [vmem:[%s520 + $0x8] sm:$0xff]
  %v3566 = vld [vmem:[%s520 + $0x10] sm:$0xff]
  %v3567 = vld [vmem:[%s520 + $0x18] sm:$0xff]
  %v3568 = vld [vmem:[%s520 + $0x20] sm:$0xff]
  %v3569 = vld [vmem:[%s520 + $0x28] sm:$0xff]
  %v3570 = vld [vmem:[%s520 + $0x30] sm:$0xff]
  %v3571 = vld [vmem:[%s520 + $0x38] sm:$0xff]
  %v3572 = vld [vmem:[%s520 + $0x40] sm:$0xff]
  %v3573 = vld [vmem:[%s520 + $0x48] sm:$0xff]
  %v3574 = vld [vmem:[%s520 + $0x50] sm:$0xff]
  %v3575 = vld [vmem:[%s520 + $0x58] sm:$0xff]
  %v3576 = vld [vmem:[%s520 + $0x60] sm:$0xff]
  %v3577 = vld [vmem:[%s520 + $0x68] sm:$0xff]
  %v3578 = vld [vmem:[%s520 + $0x70] sm:$0xff]
  %v3579 = vld [vmem:[%s520 + $0x78] sm:$0xff]
  %v3580 = vld [vmem:[%s520 + $0x80] sm:$0xff]
  %v3581 = vld [vmem:[%s520 + $0x88] sm:$0xff]
  %v3582 = vld [vmem:[%s520 + $0x90] sm:$0xff]
  %v3583 = vld [vmem:[%s520 + $0x98] sm:$0xff]
  %v3584 = vld [vmem:[%s520 + $0xa0] sm:$0xff]
  %v3585 = vld [vmem:[%s520 + $0xa8] sm:$0xff]
  %v3586 = vld [vmem:[%s520 + $0xb0] sm:$0xff]
  %v3587 = vld [vmem:[%s520 + $0xb8] sm:$0xff]
  %v3588 = vld [vmem:[%s520 + $0xc0] sm:$0xff]
  %v3589 = vld [vmem:[%s520 + $0xc8] sm:$0xff]
  %v3590 = vld [vmem:[%s520 + $0xd0] sm:$0xff]
  %v3591 = vld [vmem:[%s520 + $0xd8] sm:$0xff]
  %v3592 = vld [vmem:[%s520 + $0xe0] sm:$0xff]
  %v3593 = vld [vmem:[%s520 + $0xe8] sm:$0xff]
  %v3594 = vld [vmem:[%s520 + $0xf0] sm:$0xff]
  %v3595 = vld [vmem:[%s520 + $0xf8] sm:$0xff]
  %v3596 = vld [vmem:[%s520 + $0x100] sm:$0xff]
  %v3597 = vld [vmem:[%s520 + $0x108] sm:$0xff]
  %v3598 = vld [vmem:[%s520 + $0x110] sm:$0xff]
  %v3599 = vld [vmem:[%s520 + $0x118] sm:$0xff]
  %v3600 = vld [vmem:[%s520 + $0x120] sm:$0xff]
  %v3601 = vld [vmem:[%s520 + $0x128] sm:$0xff]
  %v3602 = vld [vmem:[%s520 + $0x130] sm:$0xff]
  %v3603 = vld [vmem:[%s520 + $0x138] sm:$0xff]
  %v3604 = vld [vmem:[%s520 + $0x140] sm:$0xff]
  %v3605 = vld [vmem:[%s520 + $0x148] sm:$0xff]
  %v3606 = vld [vmem:[%s520 + $0x150] sm:$0xff]
  %v3607 = vld [vmem:[%s520 + $0x158] sm:$0xff]
  %v3608 = vld [vmem:[%s520 + $0x160] sm:$0xff]
  %v3609 = vld [vmem:[%s520 + $0x168] sm:$0xff]
  %v3610 = vld [vmem:[%s520 + $0x170] sm:$0xff]
  %v3611 = vld [vmem:[%s520 + $0x178] sm:$0xff]
  %3612 = vmatprep.subr.mxu0 %v3610
  %3613 = vmatpush1.msra.mxu0 %v3609
  %3614 = vmatprep.subr.mxu0 %v3607
  %3615 = vmatpush1.msra.mxu0 %v3606
  %3616 = vmatprep.subr.mxu0 %v3604
  %3617 = vmatpush1.msra.mxu0 %v3603
  %3618 = vmatprep.subr.mxu0 %v3601
  %3619 = vmatpush1.msra.mxu0 %v3600
  %3620 = vmatprep.subr.mxu0 %v3598
  %3621 = vmatpush1.msra.mxu0 %v3597
  %3622 = vmatprep.subr.mxu0 %v3595
  %3623 = vmatpush1.msra.mxu0 %v3594
  %3624 = vmatprep.subr.mxu0 %v3592
  %3625 = vmatpush1.msra.mxu0 %v3591
  %3626 = vmatprep.subr.mxu0 %v3589
  %3627 = vmatpush1.msra.mxu0 %v3588
  %3628 = vmatprep.subr.mxu0 %v3586
  %3629 = vmatpush1.msra.mxu0 %v3585
  %3630 = vmatprep.subr.mxu0 %v3583
  %3631 = vmatpush1.msra.mxu0 %v3582
  %3632 = vmatprep.subr.mxu0 %v3580
  %3633 = vmatpush1.msra.mxu0 %v3579
  %3634 = vmatprep.subr.mxu0 %v3577
  %3635 = vmatpush1.msra.mxu0 %v3576
  %3636 = vmatprep.subr.mxu0 %v3574
  %3637 = vmatpush1.msra.mxu0 %v3573
  %3638 = vmatprep.subr.mxu0 %v3571
  %3639 = vmatpush1.msra.mxu0 %v3570
  %3640 = vmatprep.subr.mxu0 %v3568
  %3641 = vmatpush1.msra.mxu0 %v3567
  %3642 = vmatprep.subr.mxu0 %v3565
  %3643 = vmatpush1.msra.mxu0 %v3564
  %3644 = vmatprep.subr.mxu0 0.0
  %3645 = vmatpush2.msra.mxu0 0.0
  %3646 = vmatprep.subr.mxu0 0.0
  %3647 = vmatpush2.msra.mxu0 0.0
  %3648 = vmatprep.subr.mxu0 0.0
  %3649 = vmatpush2.msra.mxu0 0.0
  %3650 = vmatprep.subr.mxu0 0.0
  %3651 = vmatpush2.msra.mxu0 0.0
  %3652 = vmatprep.subr.mxu0 0.0
  %3653 = vmatpush2.msra.mxu0 0.0
  %3654 = vmatprep.subr.mxu0 0.0
  %3655 = vmatpush2.msra.mxu0 0.0
  %3656 = vmatprep.subr.mxu0 0.0
  %3657 = vmatpush2.msra.mxu0 0.0
  %3658 = vmatprep.subr.mxu0 0.0
  %3659 = vmatpush2.msra.mxu0 0.0
  %3660 = vmatprep.subr.mxu0 0.0
  %3661 = vmatpush2.msra.mxu0 0.0
  %3662 = vmatprep.subr.mxu0 0.0
  %3663 = vmatpush2.msra.mxu0 0.0
  %3664 = vmatprep.subr.mxu0 0.0
  %3665 = vmatpush2.msra.mxu0 0.0
  %3666 = vmatprep.subr.mxu0 0.0
  %3667 = vmatpush2.msra.mxu0 0.0
  %3668 = vmatprep.subr.mxu0 0.0
  %3669 = vmatpush2.msra.mxu0 0.0
  %3670 = vmatprep.subr.mxu0 0.0
  %3671 = vmatpush2.msra.mxu0 0.0
  %3672 = vmatprep.subr.mxu0 0.0
  %3673 = vmatpush2.msra.mxu0 0.0
  %3674 = vmatprep.subr.mxu0 0.0
  %3675 = vmatpush2.msra.mxu0 0.0
  %3676 = vmatprep.mubr.f32.mxu0 0.0
  %3677 = vmatmul.mubr.f32.gmra.mxu0 %v2759
  %v3678 = vpop.f32.mrf.mxu0
  %v3679 = vadd.f32 %v83, %v3678
  %v3680 = vpop.f32.mrf.mxu0
  %v3681 = vadd.f32 %v87, %v3680
  %3682 = vdwg.mxu0
  %3683 = vmatprep.subr.mxu0 0.0
  %3684 = vmatpush1.msra.mxu0 %v3611
  %3685 = vmatprep.subr.mxu0 0.0
  %3686 = vmatpush1.msra.mxu0 %v3608
  %3687 = vmatprep.subr.mxu0 0.0
  %3688 = vmatpush1.msra.mxu0 %v3605
  %3689 = vmatprep.subr.mxu0 0.0
  %3690 = vmatpush1.msra.mxu0 %v3602
  %3691 = vmatprep.subr.mxu0 0.0
  %3692 = vmatpush1.msra.mxu0 %v3599
  %3693 = vmatprep.subr.mxu0 0.0
  %3694 = vmatpush1.msra.mxu0 %v3596
  %3695 = vmatprep.subr.mxu0 0.0
  %3696 = vmatpush1.msra.mxu0 %v3593
  %3697 = vmatprep.subr.mxu0 0.0
  %3698 = vmatpush1.msra.mxu0 %v3590
  %3699 = vmatprep.subr.mxu0 0.0
  %3700 = vmatpush1.msra.mxu0 %v3587
  %3701 = vmatprep.subr.mxu0 0.0
  %3702 = vmatpush1.msra.mxu0 %v3584
  %3703 = vmatprep.subr.mxu0 0.0
  %3704 = vmatpush1.msra.mxu0 %v3581
  %3705 = vmatprep.subr.mxu0 0.0
  %3706 = vmatpush1.msra.mxu0 %v3578
  %3707 = vmatprep.subr.mxu0 0.0
  %3708 = vmatpush1.msra.mxu0 %v3575
  %3709 = vmatprep.subr.mxu0 0.0
  %3710 = vmatpush1.msra.mxu0 %v3572
  %3711 = vmatprep.subr.mxu0 0.0
  %3712 = vmatpush1.msra.mxu0 %v3569
  %3713 = vmatprep.subr.mxu0 0.0
  %3714 = vmatpush1.msra.mxu0 %v3566
  %3715 = vmatprep.subr.mxu0 0.0
  %3716 = vmatpush2.msra.mxu0 0.0
  %3717 = vmatprep.subr.mxu0 0.0
  %3718 = vmatpush2.msra.mxu0 0.0
  %3719 = vmatprep.subr.mxu0 0.0
  %3720 = vmatpush2.msra.mxu0 0.0
  %3721 = vmatprep.subr.mxu0 0.0
  %3722 = vmatpush2.msra.mxu0 0.0
  %3723 = vmatprep.subr.mxu0 0.0
  %3724 = vmatpush2.msra.mxu0 0.0
  %3725 = vmatprep.subr.mxu0 0.0
  %3726 = vmatpush2.msra.mxu0 0.0
  %3727 = vmatprep.subr.mxu0 0.0
  %3728 = vmatpush2.msra.mxu0 0.0
  %3729 = vmatprep.subr.mxu0 0.0
  %3730 = vmatpush2.msra.mxu0 0.0
  %3731 = vmatprep.subr.mxu0 0.0
  %3732 = vmatpush2.msra.mxu0 0.0
  %3733 = vmatprep.subr.mxu0 0.0
  %3734 = vmatpush2.msra.mxu0 0.0
  %3735 = vmatprep.subr.mxu0 0.0
  %3736 = vmatpush2.msra.mxu0 0.0
  %3737 = vmatprep.subr.mxu0 0.0
  %3738 = vmatpush2.msra.mxu0 0.0
  %3739 = vmatprep.subr.mxu0 0.0
  %3740 = vmatpush2.msra.mxu0 0.0
  %3741 = vmatprep.subr.mxu0 0.0
  %3742 = vmatpush2.msra.mxu0 0.0
  %3743 = vmatprep.subr.mxu0 0.0
  %3744 = vmatpush2.msra.mxu0 0.0
  %3745 = vmatprep.subr.mxu0 0.0
  %3746 = vmatpush2.msra.mxu0 0.0
  %3747 = vmatprep.mubr.f32.mxu0 0.0
  %3748 = vmatmul.mubr.f32.gmra.mxu0 %v2759
  %v3749 = vpop.f32.mrf.mxu0
  %v3750 = vadd.f32 %v91, %v3749
  %v3751 = vpop.f32.mrf.mxu0
  %3752 = vdwg.mxu0
  %v3753 = vadd.f32 %v3490, %v3679
  %v3754 = vxor.u32 %v3753, 2147483648
  %v3755 = vmul.f32 %v3754, 1.442695
  %v3756 = vpow.pop %v3755
  %v3757 = vadd.f32 %v3756, 1.0
  %v3758 = vrcp.pop %v3757
  %v3759 = vmul.f32 1.0, %v3758
  %v3760 = vadd.f32 %v3492, %v3681
  %v3761 = vxor.u32 %v3760, 2147483648
  %v3762 = vmul.f32 %v3761, 1.442695
  %v3763 = vpow.pop %v3762
  %v3764 = vadd.f32 %v3763, 1.0
  %v3765 = vrcp.pop %v3764
  %v3766 = vmul.f32 1.0, %v3765
  %v3767 = vmul.f32 %v3759, %v3750
  %v3768 = vadd.f32 %v3561, %v3767
  %v3769 = vtanh.pop %v3768
  %v3770 = vsub.f32 1.0, %v3766
  %v3771 = vmul.f32 %v3770, %v3769
  %v3772 = vmul.f32 %v3766, %v2759
  %v3773 = vadd.f32 %v3771, %v3772
  %v3774 = vld [vmem:[%s731] sm:$0xff]
  %v3775 = vld [vmem:[%s731 + $0x8] sm:$0xff]
  %v3776 = vld [vmem:[%s731 + $0x10] sm:$0xff]
  %v3777 = vld [vmem:[%s731 + $0x18] sm:$0xff]
  %v3778 = vld [vmem:[%s731 + $0x20] sm:$0xff]
  %v3779 = vld [vmem:[%s731 + $0x28] sm:$0xff]
  %v3780 = vld [vmem:[%s731 + $0x30] sm:$0xff]
  %v3781 = vld [vmem:[%s731 + $0x38] sm:$0xff]
  %v3782 = vld [vmem:[%s731 + $0x40] sm:$0xff]
  %v3783 = vld [vmem:[%s731 + $0x48] sm:$0xff]
  %v3784 = vld [vmem:[%s731 + $0x50] sm:$0xff]
  %v3785 = vld [vmem:[%s731 + $0x58] sm:$0xff]
  %v3786 = vld [vmem:[%s731 + $0x60] sm:$0xff]
  %v3787 = vld [vmem:[%s731 + $0x68] sm:$0xff]
  %v3788 = vld [vmem:[%s731 + $0x70] sm:$0xff]
  %v3789 = vld [vmem:[%s731 + $0x78] sm:$0xff]
  %v3790 = vld [vmem:[%s731 + $0x80] sm:$0xff]
  %v3791 = vld [vmem:[%s731 + $0x88] sm:$0xff]
  %v3792 = vld [vmem:[%s731 + $0x90] sm:$0xff]
  %v3793 = vld [vmem:[%s731 + $0x98] sm:$0xff]
  %v3794 = vld [vmem:[%s731 + $0xa0] sm:$0xff]
  %v3795 = vld [vmem:[%s731 + $0xa8] sm:$0xff]
  %v3796 = vld [vmem:[%s731 + $0xb0] sm:$0xff]
  %v3797 = vld [vmem:[%s731 + $0xb8] sm:$0xff]
  %v3798 = vld [vmem:[%s731 + $0xc0] sm:$0xff]
  %v3799 = vld [vmem:[%s731 + $0xc8] sm:$0xff]
  %v3800 = vld [vmem:[%s731 + $0xd0] sm:$0xff]
  %v3801 = vld [vmem:[%s731 + $0xd8] sm:$0xff]
  %v3802 = vld [vmem:[%s731 + $0xe0] sm:$0xff]
  %v3803 = vld [vmem:[%s731 + $0xe8] sm:$0xff]
  %v3804 = vld [vmem:[%s731 + $0xf0] sm:$0xff]
  %v3805 = vld [vmem:[%s731 + $0xf8] sm:$0xff]
  %v3806 = vld [vmem:[%s731 + $0x100] sm:$0xff]
  %v3807 = vld [vmem:[%s731 + $0x108] sm:$0xff]
  %v3808 = vld [vmem:[%s731 + $0x110] sm:$0xff]
  %v3809 = vld [vmem:[%s731 + $0x118] sm:$0xff]
  %v3810 = vld [vmem:[%s731 + $0x120] sm:$0xff]
  %v3811 = vld [vmem:[%s731 + $0x128] sm:$0xff]
  %v3812 = vld [vmem:[%s731 + $0x130] sm:$0xff]
  %v3813 = vld [vmem:[%s731 + $0x138] sm:$0xff]
  %v3814 = vld [vmem:[%s731 + $0x140] sm:$0xff]
  %v3815 = vld [vmem:[%s731 + $0x148] sm:$0xff]
  %v3816 = vld [vmem:[%s731 + $0x150] sm:$0xff]
  %v3817 = vld [vmem:[%s731 + $0x158] sm:$0xff]
  %v3818 = vld [vmem:[%s731 + $0x160] sm:$0xff]
  %v3819 = vld [vmem:[%s731 + $0x168] sm:$0xff]
  %v3820 = vld [vmem:[%s731 + $0x170] sm:$0xff]
  %v3821 = vld [vmem:[%s731 + $0x178] sm:$0xff]
  %3822 = vmatprep.subr.mxu0 %v3820
  %3823 = vmatpush1.msra.mxu0 %v3819
  %3824 = vmatprep.subr.mxu0 %v3817
  %3825 = vmatpush1.msra.mxu0 %v3816
  %3826 = vmatprep.subr.mxu0 %v3814
  %3827 = vmatpush1.msra.mxu0 %v3813
  %3828 = vmatprep.subr.mxu0 %v3811
  %3829 = vmatpush1.msra.mxu0 %v3810
  %3830 = vmatprep.subr.mxu0 %v3808
  %3831 = vmatpush1.msra.mxu0 %v3807
  %3832 = vmatprep.subr.mxu0 %v3805
  %3833 = vmatpush1.msra.mxu0 %v3804
  %3834 = vmatprep.subr.mxu0 %v3802
  %3835 = vmatpush1.msra.mxu0 %v3801
  %3836 = vmatprep.subr.mxu0 %v3799
  %3837 = vmatpush1.msra.mxu0 %v3798
  %3838 = vmatprep.subr.mxu0 %v3796
  %3839 = vmatpush1.msra.mxu0 %v3795
  %3840 = vmatprep.subr.mxu0 %v3793
  %3841 = vmatpush1.msra.mxu0 %v3792
  %3842 = vmatprep.subr.mxu0 %v3790
  %3843 = vmatpush1.msra.mxu0 %v3789
  %3844 = vmatprep.subr.mxu0 %v3787
  %3845 = vmatpush1.msra.mxu0 %v3786
  %3846 = vmatprep.subr.mxu0 %v3784
  %3847 = vmatpush1.msra.mxu0 %v3783
  %3848 = vmatprep.subr.mxu0 %v3781
  %3849 = vmatpush1.msra.mxu0 %v3780
  %3850 = vmatprep.subr.mxu0 %v3778
  %3851 = vmatpush1.msra.mxu0 %v3777
  %3852 = vmatprep.subr.mxu0 %v3775
  %3853 = vmatpush1.msra.mxu0 %v3774
  %3854 = vmatprep.subr.mxu0 0.0
  %3855 = vmatpush2.msra.mxu0 0.0
  %3856 = vmatprep.subr.mxu0 0.0
  %3857 = vmatpush2.msra.mxu0 0.0
  %3858 = vmatprep.subr.mxu0 0.0
  %3859 = vmatpush2.msra.mxu0 0.0
  %3860 = vmatprep.subr.mxu0 0.0
  %3861 = vmatpush2.msra.mxu0 0.0
  %3862 = vmatprep.subr.mxu0 0.0
  %3863 = vmatpush2.msra.mxu0 0.0
  %3864 = vmatprep.subr.mxu0 0.0
  %3865 = vmatpush2.msra.mxu0 0.0
  %3866 = vmatprep.subr.mxu0 0.0
  %3867 = vmatpush2.msra.mxu0 0.0
  %3868 = vmatprep.subr.mxu0 0.0
  %3869 = vmatpush2.msra.mxu0 0.0
  %3870 = vmatprep.subr.mxu0 0.0
  %3871 = vmatpush2.msra.mxu0 0.0
  %3872 = vmatprep.subr.mxu0 0.0
  %3873 = vmatpush2.msra.mxu0 0.0
  %3874 = vmatprep.subr.mxu0 0.0
  %3875 = vmatpush2.msra.mxu0 0.0
  %3876 = vmatprep.subr.mxu0 0.0
  %3877 = vmatpush2.msra.mxu0 0.0
  %3878 = vmatprep.subr.mxu0 0.0
  %3879 = vmatpush2.msra.mxu0 0.0
  %3880 = vmatprep.subr.mxu0 0.0
  %3881 = vmatpush2.msra.mxu0 0.0
  %3882 = vmatprep.subr.mxu0 0.0
  %3883 = vmatpush2.msra.mxu0 0.0
  %3884 = vmatprep.subr.mxu0 0.0
  %3885 = vmatpush2.msra.mxu0 0.0
  %3886 = vmatprep.mubr.f32.mxu0 0.0
  %3887 = vmatmul.mubr.f32.gmra.mxu0 %v3773
  %v3888 = vpop.f32.mrf.mxu0
  %v3889 = vadd.f32 %v48, %v3888
  %v3890 = vpop.f32.mrf.mxu0
  %v3891 = vadd.f32 %v52, %v3890
  %3892 = vdwg.mxu0
  %3893 = vmatprep.subr.mxu0 0.0
  %3894 = vmatpush1.msra.mxu0 %v3821
  %3895 = vmatprep.subr.mxu0 0.0
  %3896 = vmatpush1.msra.mxu0 %v3818
  %3897 = vmatprep.subr.mxu0 0.0
  %3898 = vmatpush1.msra.mxu0 %v3815
  %3899 = vmatprep.subr.mxu0 0.0
  %3900 = vmatpush1.msra.mxu0 %v3812
  %3901 = vmatprep.subr.mxu0 0.0
  %3902 = vmatpush1.msra.mxu0 %v3809
  %3903 = vmatprep.subr.mxu0 0.0
  %3904 = vmatpush1.msra.mxu0 %v3806
  %3905 = vmatprep.subr.mxu0 0.0
  %3906 = vmatpush1.msra.mxu0 %v3803
  %3907 = vmatprep.subr.mxu0 0.0
  %3908 = vmatpush1.msra.mxu0 %v3800
  %3909 = vmatprep.subr.mxu0 0.0
  %3910 = vmatpush1.msra.mxu0 %v3797
  %3911 = vmatprep.subr.mxu0 0.0
  %3912 = vmatpush1.msra.mxu0 %v3794
  %3913 = vmatprep.subr.mxu0 0.0
  %3914 = vmatpush1.msra.mxu0 %v3791
  %3915 = vmatprep.subr.mxu0 0.0
  %3916 = vmatpush1.msra.mxu0 %v3788
  %3917 = vmatprep.subr.mxu0 0.0
  %3918 = vmatpush1.msra.mxu0 %v3785
  %3919 = vmatprep.subr.mxu0 0.0
  %3920 = vmatpush1.msra.mxu0 %v3782
  %3921 = vmatprep.subr.mxu0 0.0
  %3922 = vmatpush1.msra.mxu0 %v3779
  %3923 = vmatprep.subr.mxu0 0.0
  %3924 = vmatpush1.msra.mxu0 %v3776
  %3925 = vmatprep.subr.mxu0 0.0
  %3926 = vmatpush2.msra.mxu0 0.0
  %3927 = vmatprep.subr.mxu0 0.0
  %3928 = vmatpush2.msra.mxu0 0.0
  %3929 = vmatprep.subr.mxu0 0.0
  %3930 = vmatpush2.msra.mxu0 0.0
  %3931 = vmatprep.subr.mxu0 0.0
  %3932 = vmatpush2.msra.mxu0 0.0
  %3933 = vmatprep.subr.mxu0 0.0
  %3934 = vmatpush2.msra.mxu0 0.0
  %3935 = vmatprep.subr.mxu0 0.0
  %3936 = vmatpush2.msra.mxu0 0.0
  %3937 = vmatprep.subr.mxu0 0.0
  %3938 = vmatpush2.msra.mxu0 0.0
  %3939 = vmatprep.subr.mxu0 0.0
  %3940 = vmatpush2.msra.mxu0 0.0
  %3941 = vmatprep.subr.mxu0 0.0
  %3942 = vmatpush2.msra.mxu0 0.0
  %3943 = vmatprep.subr.mxu0 0.0
  %3944 = vmatpush2.msra.mxu0 0.0
  %3945 = vmatprep.subr.mxu0 0.0
  %3946 = vmatpush2.msra.mxu0 0.0
  %3947 = vmatprep.subr.mxu0 0.0
  %3948 = vmatpush2.msra.mxu0 0.0
  %3949 = vmatprep.subr.mxu0 0.0
  %3950 = vmatpush2.msra.mxu0 0.0
  %3951 = vmatprep.subr.mxu0 0.0
  %3952 = vmatpush2.msra.mxu0 0.0
  %3953 = vmatprep.subr.mxu0 0.0
  %3954 = vmatpush2.msra.mxu0 0.0
  %3955 = vmatprep.subr.mxu0 0.0
  %3956 = vmatpush2.msra.mxu0 0.0
  %3957 = vmatprep.mubr.f32.mxu0 0.0
  %3958 = vmatmul.mubr.f32.gmra.mxu0 %v3773
  %v3959 = vpop.f32.mrf.mxu0
  %v3960 = vadd.f32 %v56, %v3959
  %v3961 = vpop.f32.mrf.mxu0
  %3962 = vdwg.mxu0
  %v3963 = vld [vmem:[%s921] sm:$0xff]
  %v3964 = vld [vmem:[%s921 + $0x8] sm:$0xff]
  %v3965 = vld [vmem:[%s921 + $0x10] sm:$0xff]
  %v3966 = vld [vmem:[%s921 + $0x18] sm:$0xff]
  %v3967 = vld [vmem:[%s921 + $0x20] sm:$0xff]
  %v3968 = vld [vmem:[%s921 + $0x28] sm:$0xff]
  %v3969 = vld [vmem:[%s921 + $0x30] sm:$0xff]
  %v3970 = vld [vmem:[%s921 + $0x38] sm:$0xff]
  %v3971 = vld [vmem:[%s921 + $0x40] sm:$0xff]
  %v3972 = vld [vmem:[%s921 + $0x48] sm:$0xff]
  %v3973 = vld [vmem:[%s921 + $0x50] sm:$0xff]
  %v3974 = vld [vmem:[%s921 + $0x58] sm:$0xff]
  %v3975 = vld [vmem:[%s921 + $0x60] sm:$0xff]
  %v3976 = vld [vmem:[%s921 + $0x68] sm:$0xff]
  %v3977 = vld [vmem:[%s921 + $0x70] sm:$0xff]
  %v3978 = vld [vmem:[%s921 + $0x78] sm:$0xff]
  %v3979 = vld [vmem:[%s921 + $0x80] sm:$0xff]
  %v3980 = vld [vmem:[%s921 + $0x88] sm:$0xff]
  %v3981 = vld [vmem:[%s921 + $0x90] sm:$0xff]
  %v3982 = vld [vmem:[%s921 + $0x98] sm:$0xff]
  %v3983 = vld [vmem:[%s921 + $0xa0] sm:$0xff]
  %v3984 = vld [vmem:[%s921 + $0xa8] sm:$0xff]
  %v3985 = vld [vmem:[%s921 + $0xb0] sm:$0xff]
  %v3986 = vld [vmem:[%s921 + $0xb8] sm:$0xff]
  %v3987 = vld [vmem:[%s921 + $0xc0] sm:$0xff]
  %v3988 = vld [vmem:[%s921 + $0xc8] sm:$0xff]
  %v3989 = vld [vmem:[%s921 + $0xd0] sm:$0xff]
  %v3990 = vld [vmem:[%s921 + $0xd8] sm:$0xff]
  %v3991 = vld [vmem:[%s921 + $0xe0] sm:$0xff]
  %v3992 = vld [vmem:[%s921 + $0xe8] sm:$0xff]
  %v3993 = vld [vmem:[%s921 + $0xf0] sm:$0xff]
  %v3994 = vld [vmem:[%s921 + $0xf8] sm:$0xff]
  %v3995 = vld [vmem:[%s921 + $0x100] sm:$0xff]
  %v3996 = vld [vmem:[%s921 + $0x108] sm:$0xff]
  %v3997 = vld [vmem:[%s921 + $0x110] sm:$0xff]
  %v3998 = vld [vmem:[%s921 + $0x118] sm:$0xff]
  %v3999 = vld [vmem:[%s921 + $0x120] sm:$0xff]
  %v4000 = vld [vmem:[%s921 + $0x128] sm:$0xff]
  %v4001 = vld [vmem:[%s921 + $0x130] sm:$0xff]
  %v4002 = vld [vmem:[%s921 + $0x138] sm:$0xff]
  %v4003 = vld [vmem:[%s921 + $0x140] sm:$0xff]
  %v4004 = vld [vmem:[%s921 + $0x148] sm:$0xff]
  %v4005 = vld [vmem:[%s921 + $0x150] sm:$0xff]
  %v4006 = vld [vmem:[%s921 + $0x158] sm:$0xff]
  %v4007 = vld [vmem:[%s921 + $0x160] sm:$0xff]
  %v4008 = vld [vmem:[%s921 + $0x168] sm:$0xff]
  %v4009 = vld [vmem:[%s921 + $0x170] sm:$0xff]
  %v4010 = vld [vmem:[%s921 + $0x178] sm:$0xff]
  %4011 = vmatprep.subr.mxu0 %v4009
  %4012 = vmatpush1.msra.mxu0 %v4008
  %4013 = vmatprep.subr.mxu0 %v4006
  %4014 = vmatpush1.msra.mxu0 %v4005
  %4015 = vmatprep.subr.mxu0 %v4003
  %4016 = vmatpush1.msra.mxu0 %v4002
  %4017 = vmatprep.subr.mxu0 %v4000
  %4018 = vmatpush1.msra.mxu0 %v3999
  %4019 = vmatprep.subr.mxu0 %v3997
  %4020 = vmatpush1.msra.mxu0 %v3996
  %4021 = vmatprep.subr.mxu0 %v3994
  %4022 = vmatpush1.msra.mxu0 %v3993
  %4023 = vmatprep.subr.mxu0 %v3991
  %4024 = vmatpush1.msra.mxu0 %v3990
  %4025 = vmatprep.subr.mxu0 %v3988
  %4026 = vmatpush1.msra.mxu0 %v3987
  %4027 = vmatprep.subr.mxu0 %v3985
  %4028 = vmatpush1.msra.mxu0 %v3984
  %4029 = vmatprep.subr.mxu0 %v3982
  %4030 = vmatpush1.msra.mxu0 %v3981
  %4031 = vmatprep.subr.mxu0 %v3979
  %4032 = vmatpush1.msra.mxu0 %v3978
  %4033 = vmatprep.subr.mxu0 %v3976
  %4034 = vmatpush1.msra.mxu0 %v3975
  %4035 = vmatprep.subr.mxu0 %v3973
  %4036 = vmatpush1.msra.mxu0 %v3972
  %4037 = vmatprep.subr.mxu0 %v3970
  %4038 = vmatpush1.msra.mxu0 %v3969
  %4039 = vmatprep.subr.mxu0 %v3967
  %4040 = vmatpush1.msra.mxu0 %v3966
  %4041 = vmatprep.subr.mxu0 %v3964
  %4042 = vmatpush1.msra.mxu0 %v3963
  %4043 = vmatprep.subr.mxu0 0.0
  %4044 = vmatpush2.msra.mxu0 0.0
  %4045 = vmatprep.subr.mxu0 0.0
  %4046 = vmatpush2.msra.mxu0 0.0
  %4047 = vmatprep.subr.mxu0 0.0
  %4048 = vmatpush2.msra.mxu0 0.0
  %4049 = vmatprep.subr.mxu0 0.0
  %4050 = vmatpush2.msra.mxu0 0.0
  %4051 = vmatprep.subr.mxu0 0.0
  %4052 = vmatpush2.msra.mxu0 0.0
  %4053 = vmatprep.subr.mxu0 0.0
  %4054 = vmatpush2.msra.mxu0 0.0
  %4055 = vmatprep.subr.mxu0 0.0
  %4056 = vmatpush2.msra.mxu0 0.0
  %4057 = vmatprep.subr.mxu0 0.0
  %4058 = vmatpush2.msra.mxu0 0.0
  %4059 = vmatprep.subr.mxu0 0.0
  %4060 = vmatpush2.msra.mxu0 0.0
  %4061 = vmatprep.subr.mxu0 0.0
  %4062 = vmatpush2.msra.mxu0 0.0
  %4063 = vmatprep.subr.mxu0 0.0
  %4064 = vmatpush2.msra.mxu0 0.0
  %4065 = vmatprep.subr.mxu0 0.0
  %4066 = vmatpush2.msra.mxu0 0.0
  %4067 = vmatprep.subr.mxu0 0.0
  %4068 = vmatpush2.msra.mxu0 0.0
  %4069 = vmatprep.subr.mxu0 0.0
  %4070 = vmatpush2.msra.mxu0 0.0
  %4071 = vmatprep.subr.mxu0 0.0
  %4072 = vmatpush2.msra.mxu0 0.0
  %4073 = vmatprep.subr.mxu0 0.0
  %4074 = vmatpush2.msra.mxu0 0.0
  %4075 = vmatprep.mubr.f32.mxu0 0.0
  %4076 = vmatmul.mubr.f32.gmra.mxu0 %v3158
  %v4077 = vpop.f32.mrf.mxu0
  %v4078 = vadd.f32 %v101, %v4077
  %v4079 = vpop.f32.mrf.mxu0
  %v4080 = vadd.f32 %v105, %v4079
  %4081 = vdwg.mxu0
  %4082 = vmatprep.subr.mxu0 0.0
  %4083 = vmatpush1.msra.mxu0 %v4010
  %4084 = vmatprep.subr.mxu0 0.0
  %4085 = vmatpush1.msra.mxu0 %v4007
  %4086 = vmatprep.subr.mxu0 0.0
  %4087 = vmatpush1.msra.mxu0 %v4004
  %4088 = vmatprep.subr.mxu0 0.0
  %4089 = vmatpush1.msra.mxu0 %v4001
  %4090 = vmatprep.subr.mxu0 0.0
  %4091 = vmatpush1.msra.mxu0 %v3998
  %4092 = vmatprep.subr.mxu0 0.0
  %4093 = vmatpush1.msra.mxu0 %v3995
  %4094 = vmatprep.subr.mxu0 0.0
  %4095 = vmatpush1.msra.mxu0 %v3992
  %4096 = vmatprep.subr.mxu0 0.0
  %4097 = vmatpush1.msra.mxu0 %v3989
  %4098 = vmatprep.subr.mxu0 0.0
  %4099 = vmatpush1.msra.mxu0 %v3986
  %4100 = vmatprep.subr.mxu0 0.0
  %4101 = vmatpush1.msra.mxu0 %v3983
  %4102 = vmatprep.subr.mxu0 0.0
  %4103 = vmatpush1.msra.mxu0 %v3980
  %4104 = vmatprep.subr.mxu0 0.0
  %4105 = vmatpush1.msra.mxu0 %v3977
  %4106 = vmatprep.subr.mxu0 0.0
  %4107 = vmatpush1.msra.mxu0 %v3974
  %4108 = vmatprep.subr.mxu0 0.0
  %4109 = vmatpush1.msra.mxu0 %v3971
  %4110 = vmatprep.subr.mxu0 0.0
  %4111 = vmatpush1.msra.mxu0 %v3968
  %4112 = vmatprep.subr.mxu0 0.0
  %4113 = vmatpush1.msra.mxu0 %v3965
  %4114 = vmatprep.subr.mxu0 0.0
  %4115 = vmatpush2.msra.mxu0 0.0
  %4116 = vmatprep.subr.mxu0 0.0
  %4117 = vmatpush2.msra.mxu0 0.0
  %4118 = vmatprep.subr.mxu0 0.0
  %4119 = vmatpush2.msra.mxu0 0.0
  %4120 = vmatprep.subr.mxu0 0.0
  %4121 = vmatpush2.msra.mxu0 0.0
  %4122 = vmatprep.subr.mxu0 0.0
  %4123 = vmatpush2.msra.mxu0 0.0
  %4124 = vmatprep.subr.mxu0 0.0
  %4125 = vmatpush2.msra.mxu0 0.0
  %4126 = vmatprep.subr.mxu0 0.0
  %4127 = vmatpush2.msra.mxu0 0.0
  %4128 = vmatprep.subr.mxu0 0.0
  %4129 = vmatpush2.msra.mxu0 0.0
  %4130 = vmatprep.subr.mxu0 0.0
  %4131 = vmatpush2.msra.mxu0 0.0
  %4132 = vmatprep.subr.mxu0 0.0
  %4133 = vmatpush2.msra.mxu0 0.0
  %4134 = vmatprep.subr.mxu0 0.0
  %4135 = vmatpush2.msra.mxu0 0.0
  %4136 = vmatprep.subr.mxu0 0.0
  %4137 = vmatpush2.msra.mxu0 0.0
  %4138 = vmatprep.subr.mxu0 0.0
  %4139 = vmatpush2.msra.mxu0 0.0
  %4140 = vmatprep.subr.mxu0 0.0
  %4141 = vmatpush2.msra.mxu0 0.0
  %4142 = vmatprep.subr.mxu0 0.0
  %4143 = vmatpush2.msra.mxu0 0.0
  %4144 = vmatprep.subr.mxu0 0.0
  %4145 = vmatpush2.msra.mxu0 0.0
  %4146 = vmatprep.mubr.f32.mxu0 0.0
  %4147 = vmatmul.mubr.f32.gmra.mxu0 %v3158
  %v4148 = vpop.f32.mrf.mxu0
  %v4149 = vadd.f32 %v109, %v4148
  %v4150 = vpop.f32.mrf.mxu0
  %4151 = vdwg.mxu0
  %v4152 = vadd.f32 %v3889, %v4078
  %v4153 = vxor.u32 %v4152, 2147483648
  %v4154 = vmul.f32 %v4153, 1.442695
  %v4155 = vpow.pop %v4154
  %v4156 = vadd.f32 %v4155, 1.0
  %v4157 = vrcp.pop %v4156
  %v4158 = vmul.f32 1.0, %v4157
  %v4159 = vadd.f32 %v3891, %v4080
  %v4160 = vxor.u32 %v4159, 2147483648
  %v4161 = vmul.f32 %v4160, 1.442695
  %v4162 = vpow.pop %v4161
  %v4163 = vadd.f32 %v4162, 1.0
  %v4164 = vrcp.pop %v4163
  %v4165 = vmul.f32 1.0, %v4164
  %v4166 = vmul.f32 %v4158, %v4149
  %v4167 = vadd.f32 %v3960, %v4166
  %v4168 = vtanh.pop %v4167
  %v4169 = vsub.f32 1.0, %v4165
  %v4170 = vmul.f32 %v4169, %v4168
  %v4171 = vmul.f32 %v4165, %v3158
  %v4172 = vadd.f32 %v4170, %v4171
  %s4173 = scalar_lea.vmem %s6, 24
  %4174 = vst [vmem:[%s4173] sm:$0xff] %v4172
  %s4175 = scalar_lea.vmem %s0, 96
  %v4176 = vld [vmem:[%s4175] sm:$0xff]
  %v4177 = vld [vmem:[%s4175 + $0x8] sm:$0xff]
  %v4178 = vld [vmem:[%s4175 + $0x10] sm:$0xff]
  %v4179 = vld [vmem:[%s2] sm:$0xff]
  %v4180 = vld [vmem:[%s2 + $0x8] sm:$0xff]
  %v4181 = vld [vmem:[%s2 + $0x10] sm:$0xff]
  %v4182 = vld [vmem:[%s2 + $0x18] sm:$0xff]
  %v4183 = vld [vmem:[%s2 + $0x20] sm:$0xff]
  %v4184 = vld [vmem:[%s2 + $0x28] sm:$0xff]
  %v4185 = vld [vmem:[%s2 + $0x30] sm:$0xff]
  %v4186 = vld [vmem:[%s2 + $0x38] sm:$0xff]
  %v4187 = vld [vmem:[%s2 + $0x40] sm:$0xff]
  %v4188 = vld [vmem:[%s2 + $0x48] sm:$0xff]
  %v4189 = vld [vmem:[%s2 + $0x50] sm:$0xff]
  %v4190 = vld [vmem:[%s2 + $0x58] sm:$0xff]
  %v4191 = vld [vmem:[%s2 + $0x60] sm:$0xff]
  %v4192 = vld [vmem:[%s2 + $0x68] sm:$0xff]
  %v4193 = vld [vmem:[%s2 + $0x70] sm:$0xff]
  %v4194 = vld [vmem:[%s2 + $0x78] sm:$0xff]
  %v4195 = vld [vmem:[%s2 + $0x80] sm:$0xff]
  %v4196 = vld [vmem:[%s2 + $0x88] sm:$0xff]
  %v4197 = vld [vmem:[%s2 + $0x90] sm:$0xff]
  %v4198 = vld [vmem:[%s2 + $0x98] sm:$0xff]
  %v4199 = vld [vmem:[%s2 + $0xa0] sm:$0xff]
  %v4200 = vld [vmem:[%s2 + $0xa8] sm:$0xff]
  %v4201 = vld [vmem:[%s2 + $0xb0] sm:$0xff]
  %v4202 = vld [vmem:[%s2 + $0xb8] sm:$0xff]
  %v4203 = vld [vmem:[%s2 + $0xc0] sm:$0xff]
  %v4204 = vld [vmem:[%s2 + $0xc8] sm:$0xff]
  %v4205 = vld [vmem:[%s2 + $0xd0] sm:$0xff]
  %v4206 = vld [vmem:[%s2 + $0xd8] sm:$0xff]
  %v4207 = vld [vmem:[%s2 + $0xe0] sm:$0xff]
  %v4208 = vld [vmem:[%s2 + $0xe8] sm:$0xff]
  %v4209 = vld [vmem:[%s2 + $0xf0] sm:$0xff]
  %v4210 = vld [vmem:[%s2 + $0xf8] sm:$0xff]
  %v4211 = vld [vmem:[%s2 + $0x100] sm:$0xff]
  %v4212 = vld [vmem:[%s2 + $0x108] sm:$0xff]
  %v4213 = vld [vmem:[%s2 + $0x110] sm:$0xff]
  %v4214 = vld [vmem:[%s2 + $0x118] sm:$0xff]
  %v4215 = vld [vmem:[%s2 + $0x120] sm:$0xff]
  %v4216 = vld [vmem:[%s2 + $0x128] sm:$0xff]
  %v4217 = vld [vmem:[%s2 + $0x130] sm:$0xff]
  %v4218 = vld [vmem:[%s2 + $0x138] sm:$0xff]
  %v4219 = vld [vmem:[%s2 + $0x140] sm:$0xff]
  %v4220 = vld [vmem:[%s2 + $0x148] sm:$0xff]
  %v4221 = vld [vmem:[%s2 + $0x150] sm:$0xff]
  %v4222 = vld [vmem:[%s2 + $0x158] sm:$0xff]
  %v4223 = vld [vmem:[%s2 + $0x160] sm:$0xff]
  %v4224 = vld [vmem:[%s2 + $0x168] sm:$0xff]
  %v4225 = vld [vmem:[%s2 + $0x170] sm:$0xff]
  %v4226 = vld [vmem:[%s2 + $0x178] sm:$0xff]
  %4227 = vmatprep.subr.mxu0 %v4225
  %4228 = vmatpush1.msra.mxu0 %v4224
  %4229 = vmatprep.subr.mxu0 %v4222
  %4230 = vmatpush1.msra.mxu0 %v4221
  %4231 = vmatprep.subr.mxu0 %v4219
  %4232 = vmatpush1.msra.mxu0 %v4218
  %4233 = vmatprep.subr.mxu0 %v4216
  %4234 = vmatpush1.msra.mxu0 %v4215
  %4235 = vmatprep.subr.mxu0 %v4213
  %4236 = vmatpush1.msra.mxu0 %v4212
  %4237 = vmatprep.subr.mxu0 %v4210
  %4238 = vmatpush1.msra.mxu0 %v4209
  %4239 = vmatprep.subr.mxu0 %v4207
  %4240 = vmatpush1.msra.mxu0 %v4206
  %4241 = vmatprep.subr.mxu0 %v4204
  %4242 = vmatpush1.msra.mxu0 %v4203
  %4243 = vmatprep.subr.mxu0 %v4201
  %4244 = vmatpush1.msra.mxu0 %v4200
  %4245 = vmatprep.subr.mxu0 %v4198
  %4246 = vmatpush1.msra.mxu0 %v4197
  %4247 = vmatprep.subr.mxu0 %v4195
  %4248 = vmatpush1.msra.mxu0 %v4194
  %4249 = vmatprep.subr.mxu0 %v4192
  %4250 = vmatpush1.msra.mxu0 %v4191
  %4251 = vmatprep.subr.mxu0 %v4189
  %4252 = vmatpush1.msra.mxu0 %v4188
  %4253 = vmatprep.subr.mxu0 %v4186
  %4254 = vmatpush1.msra.mxu0 %v4185
  %4255 = vmatprep.subr.mxu0 %v4183
  %4256 = vmatpush1.msra.mxu0 %v4182
  %4257 = vmatprep.subr.mxu0 %v4180
  %4258 = vmatpush1.msra.mxu0 %v4179
  %4259 = vmatprep.subr.mxu0 0.0
  %4260 = vmatpush2.msra.mxu0 0.0
  %4261 = vmatprep.subr.mxu0 0.0
  %4262 = vmatpush2.msra.mxu0 0.0
  %4263 = vmatprep.subr.mxu0 0.0
  %4264 = vmatpush2.msra.mxu0 0.0
  %4265 = vmatprep.subr.mxu0 0.0
  %4266 = vmatpush2.msra.mxu0 0.0
  %4267 = vmatprep.subr.mxu0 0.0
  %4268 = vmatpush2.msra.mxu0 0.0
  %4269 = vmatprep.subr.mxu0 0.0
  %4270 = vmatpush2.msra.mxu0 0.0
  %4271 = vmatprep.subr.mxu0 0.0
  %4272 = vmatpush2.msra.mxu0 0.0
  %4273 = vmatprep.subr.mxu0 0.0
  %4274 = vmatpush2.msra.mxu0 0.0
  %4275 = vmatprep.subr.mxu0 0.0
  %4276 = vmatpush2.msra.mxu0 0.0
  %4277 = vmatprep.subr.mxu0 0.0
  %4278 = vmatpush2.msra.mxu0 0.0
  %4279 = vmatprep.subr.mxu0 0.0
  %4280 = vmatpush2.msra.mxu0 0.0
  %4281 = vmatprep.subr.mxu0 0.0
  %4282 = vmatpush2.msra.mxu0 0.0
  %4283 = vmatprep.subr.mxu0 0.0
  %4284 = vmatpush2.msra.mxu0 0.0
  %4285 = vmatprep.subr.mxu0 0.0
  %4286 = vmatpush2.msra.mxu0 0.0
  %4287 = vmatprep.subr.mxu0 0.0
  %4288 = vmatpush2.msra.mxu0 0.0
  %4289 = vmatprep.subr.mxu0 0.0
  %4290 = vmatpush2.msra.mxu0 0.0
  %4291 = vmatprep.mubr.f32.mxu0 0.0
  %4292 = vmatmul.mubr.f32.gmra.mxu0 %v3374
  %v4293 = vpop.f32.mrf.mxu0
  %v4294 = vadd.f32 %v65, %v4293
  %v4295 = vpop.f32.mrf.mxu0
  %v4296 = vadd.f32 %v69, %v4295
  %4297 = vdwg.mxu0
  %4298 = vmatprep.subr.mxu0 0.0
  %4299 = vmatpush1.msra.mxu0 %v4226
  %4300 = vmatprep.subr.mxu0 0.0
  %4301 = vmatpush1.msra.mxu0 %v4223
  %4302 = vmatprep.subr.mxu0 0.0
  %4303 = vmatpush1.msra.mxu0 %v4220
  %4304 = vmatprep.subr.mxu0 0.0
  %4305 = vmatpush1.msra.mxu0 %v4217
  %4306 = vmatprep.subr.mxu0 0.0
  %4307 = vmatpush1.msra.mxu0 %v4214
  %4308 = vmatprep.subr.mxu0 0.0
  %4309 = vmatpush1.msra.mxu0 %v4211
  %4310 = vmatprep.subr.mxu0 0.0
  %4311 = vmatpush1.msra.mxu0 %v4208
  %4312 = vmatprep.subr.mxu0 0.0
  %4313 = vmatpush1.msra.mxu0 %v4205
  %4314 = vmatprep.subr.mxu0 0.0
  %4315 = vmatpush1.msra.mxu0 %v4202
  %4316 = vmatprep.subr.mxu0 0.0
  %4317 = vmatpush1.msra.mxu0 %v4199
  %4318 = vmatprep.subr.mxu0 0.0
  %4319 = vmatpush1.msra.mxu0 %v4196
  %4320 = vmatprep.subr.mxu0 0.0
  %4321 = vmatpush1.msra.mxu0 %v4193
  %4322 = vmatprep.subr.mxu0 0.0
  %4323 = vmatpush1.msra.mxu0 %v4190
  %4324 = vmatprep.subr.mxu0 0.0
  %4325 = vmatpush1.msra.mxu0 %v4187
  %4326 = vmatprep.subr.mxu0 0.0
  %4327 = vmatpush1.msra.mxu0 %v4184
  %4328 = vmatprep.subr.mxu0 0.0
  %4329 = vmatpush1.msra.mxu0 %v4181
  %4330 = vmatprep.subr.mxu0 0.0
  %4331 = vmatpush2.msra.mxu0 0.0
  %4332 = vmatprep.subr.mxu0 0.0
  %4333 = vmatpush2.msra.mxu0 0.0
  %4334 = vmatprep.subr.mxu0 0.0
  %4335 = vmatpush2.msra.mxu0 0.0
  %4336 = vmatprep.subr.mxu0 0.0
  %4337 = vmatpush2.msra.mxu0 0.0
  %4338 = vmatprep.subr.mxu0 0.0
  %4339 = vmatpush2.msra.mxu0 0.0
  %4340 = vmatprep.subr.mxu0 0.0
  %4341 = vmatpush2.msra.mxu0 0.0
  %4342 = vmatprep.subr.mxu0 0.0
  %4343 = vmatpush2.msra.mxu0 0.0
  %4344 = vmatprep.subr.mxu0 0.0
  %4345 = vmatpush2.msra.mxu0 0.0
  %4346 = vmatprep.subr.mxu0 0.0
  %4347 = vmatpush2.msra.mxu0 0.0
  %4348 = vmatprep.subr.mxu0 0.0
  %4349 = vmatpush2.msra.mxu0 0.0
  %4350 = vmatprep.subr.mxu0 0.0
  %4351 = vmatpush2.msra.mxu0 0.0
  %4352 = vmatprep.subr.mxu0 0.0
  %4353 = vmatpush2.msra.mxu0 0.0
  %4354 = vmatprep.subr.mxu0 0.0
  %4355 = vmatpush2.msra.mxu0 0.0
  %4356 = vmatprep.subr.mxu0 0.0
  %4357 = vmatpush2.msra.mxu0 0.0
  %4358 = vmatprep.subr.mxu0 0.0
  %4359 = vmatpush2.msra.mxu0 0.0
  %4360 = vmatprep.subr.mxu0 0.0
  %4361 = vmatpush2.msra.mxu0 0.0
  %4362 = vmatprep.mubr.f32.mxu0 0.0
  %4363 = vmatmul.mubr.f32.gmra.mxu0 %v3374
  %v4364 = vpop.f32.mrf.mxu0
  %v4365 = vadd.f32 %v73, %v4364
  %v4366 = vpop.f32.mrf.mxu0
  %4367 = vdwg.mxu0
  %v4368 = vadd.f32 %v4176, %v4294
  %v4369 = vxor.u32 %v4368, 2147483648
  %v4370 = vmul.f32 %v4369, 1.442695
  %v4371 = vpow.pop %v4370
  %v4372 = vadd.f32 %v4371, 1.0
  %v4373 = vrcp.pop %v4372
  %v4374 = vmul.f32 1.0, %v4373
  %v4375 = vadd.f32 %v4177, %v4296
  %v4376 = vxor.u32 %v4375, 2147483648
  %v4377 = vmul.f32 %v4376, 1.442695
  %v4378 = vpow.pop %v4377
  %v4379 = vadd.f32 %v4378, 1.0
  %v4380 = vrcp.pop %v4379
  %v4381 = vmul.f32 1.0, %v4380
  %v4382 = vmul.f32 %v4374, %v4365
  %v4383 = vadd.f32 %v4178, %v4382
  %v4384 = vtanh.pop %v4383
  %v4385 = vsub.f32 1.0, %v4381
  %v4386 = vmul.f32 %v4385, %v4384
  %v4387 = vmul.f32 %v4381, %v3374
  %v4388 = vadd.f32 %v4386, %v4387
  %v4389 = vld [vmem:[%s3] sm:$0xff]
  %v4390 = vld [vmem:[%s3 + $0x8] sm:$0xff]
  %v4391 = vld [vmem:[%s3 + $0x10] sm:$0xff]
  %v4392 = vld [vmem:[%s3 + $0x18] sm:$0xff]
  %v4393 = vld [vmem:[%s3 + $0x20] sm:$0xff]
  %v4394 = vld [vmem:[%s3 + $0x28] sm:$0xff]
  %v4395 = vld [vmem:[%s3 + $0x30] sm:$0xff]
  %v4396 = vld [vmem:[%s3 + $0x38] sm:$0xff]
  %v4397 = vld [vmem:[%s3 + $0x40] sm:$0xff]
  %v4398 = vld [vmem:[%s3 + $0x48] sm:$0xff]
  %v4399 = vld [vmem:[%s3 + $0x50] sm:$0xff]
  %v4400 = vld [vmem:[%s3 + $0x58] sm:$0xff]
  %v4401 = vld [vmem:[%s3 + $0x60] sm:$0xff]
  %v4402 = vld [vmem:[%s3 + $0x68] sm:$0xff]
  %v4403 = vld [vmem:[%s3 + $0x70] sm:$0xff]
  %v4404 = vld [vmem:[%s3 + $0x78] sm:$0xff]
  %v4405 = vld [vmem:[%s3 + $0x80] sm:$0xff]
  %v4406 = vld [vmem:[%s3 + $0x88] sm:$0xff]
  %v4407 = vld [vmem:[%s3 + $0x90] sm:$0xff]
  %v4408 = vld [vmem:[%s3 + $0x98] sm:$0xff]
  %v4409 = vld [vmem:[%s3 + $0xa0] sm:$0xff]
  %v4410 = vld [vmem:[%s3 + $0xa8] sm:$0xff]
  %v4411 = vld [vmem:[%s3 + $0xb0] sm:$0xff]
  %v4412 = vld [vmem:[%s3 + $0xb8] sm:$0xff]
  %v4413 = vld [vmem:[%s3 + $0xc0] sm:$0xff]
  %v4414 = vld [vmem:[%s3 + $0xc8] sm:$0xff]
  %v4415 = vld [vmem:[%s3 + $0xd0] sm:$0xff]
  %v4416 = vld [vmem:[%s3 + $0xd8] sm:$0xff]
  %v4417 = vld [vmem:[%s3 + $0xe0] sm:$0xff]
  %v4418 = vld [vmem:[%s3 + $0xe8] sm:$0xff]
  %v4419 = vld [vmem:[%s3 + $0xf0] sm:$0xff]
  %v4420 = vld [vmem:[%s3 + $0xf8] sm:$0xff]
  %v4421 = vld [vmem:[%s3 + $0x100] sm:$0xff]
  %v4422 = vld [vmem:[%s3 + $0x108] sm:$0xff]
  %v4423 = vld [vmem:[%s3 + $0x110] sm:$0xff]
  %v4424 = vld [vmem:[%s3 + $0x118] sm:$0xff]
  %v4425 = vld [vmem:[%s3 + $0x120] sm:$0xff]
  %v4426 = vld [vmem:[%s3 + $0x128] sm:$0xff]
  %v4427 = vld [vmem:[%s3 + $0x130] sm:$0xff]
  %v4428 = vld [vmem:[%s3 + $0x138] sm:$0xff]
  %v4429 = vld [vmem:[%s3 + $0x140] sm:$0xff]
  %v4430 = vld [vmem:[%s3 + $0x148] sm:$0xff]
  %v4431 = vld [vmem:[%s3 + $0x150] sm:$0xff]
  %v4432 = vld [vmem:[%s3 + $0x158] sm:$0xff]
  %v4433 = vld [vmem:[%s3 + $0x160] sm:$0xff]
  %v4434 = vld [vmem:[%s3 + $0x168] sm:$0xff]
  %v4435 = vld [vmem:[%s3 + $0x170] sm:$0xff]
  %v4436 = vld [vmem:[%s3 + $0x178] sm:$0xff]
  %4437 = vmatprep.subr.mxu0 %v4435
  %4438 = vmatpush1.msra.mxu0 %v4434
  %4439 = vmatprep.subr.mxu0 %v4432
  %4440 = vmatpush1.msra.mxu0 %v4431
  %4441 = vmatprep.subr.mxu0 %v4429
  %4442 = vmatpush1.msra.mxu0 %v4428
  %4443 = vmatprep.subr.mxu0 %v4426
  %4444 = vmatpush1.msra.mxu0 %v4425
  %4445 = vmatprep.subr.mxu0 %v4423
  %4446 = vmatpush1.msra.mxu0 %v4422
  %4447 = vmatprep.subr.mxu0 %v4420
  %4448 = vmatpush1.msra.mxu0 %v4419
  %4449 = vmatprep.subr.mxu0 %v4417
  %4450 = vmatpush1.msra.mxu0 %v4416
  %4451 = vmatprep.subr.mxu0 %v4414
  %4452 = vmatpush1.msra.mxu0 %v4413
  %4453 = vmatprep.subr.mxu0 %v4411
  %4454 = vmatpush1.msra.mxu0 %v4410
  %4455 = vmatprep.subr.mxu0 %v4408
  %4456 = vmatpush1.msra.mxu0 %v4407
  %4457 = vmatprep.subr.mxu0 %v4405
  %4458 = vmatpush1.msra.mxu0 %v4404
  %4459 = vmatprep.subr.mxu0 %v4402
  %4460 = vmatpush1.msra.mxu0 %v4401
  %4461 = vmatprep.subr.mxu0 %v4399
  %4462 = vmatpush1.msra.mxu0 %v4398
  %4463 = vmatprep.subr.mxu0 %v4396
  %4464 = vmatpush1.msra.mxu0 %v4395
  %4465 = vmatprep.subr.mxu0 %v4393
  %4466 = vmatpush1.msra.mxu0 %v4392
  %4467 = vmatprep.subr.mxu0 %v4390
  %4468 = vmatpush1.msra.mxu0 %v4389
  %4469 = vmatprep.subr.mxu0 0.0
  %4470 = vmatpush2.msra.mxu0 0.0
  %4471 = vmatprep.subr.mxu0 0.0
  %4472 = vmatpush2.msra.mxu0 0.0
  %4473 = vmatprep.subr.mxu0 0.0
  %4474 = vmatpush2.msra.mxu0 0.0
  %4475 = vmatprep.subr.mxu0 0.0
  %4476 = vmatpush2.msra.mxu0 0.0
  %4477 = vmatprep.subr.mxu0 0.0
  %4478 = vmatpush2.msra.mxu0 0.0
  %4479 = vmatprep.subr.mxu0 0.0
  %4480 = vmatpush2.msra.mxu0 0.0
  %4481 = vmatprep.subr.mxu0 0.0
  %4482 = vmatpush2.msra.mxu0 0.0
  %4483 = vmatprep.subr.mxu0 0.0
  %4484 = vmatpush2.msra.mxu0 0.0
  %4485 = vmatprep.subr.mxu0 0.0
  %4486 = vmatpush2.msra.mxu0 0.0
  %4487 = vmatprep.subr.mxu0 0.0
  %4488 = vmatpush2.msra.mxu0 0.0
  %4489 = vmatprep.subr.mxu0 0.0
  %4490 = vmatpush2.msra.mxu0 0.0
  %4491 = vmatprep.subr.mxu0 0.0
  %4492 = vmatpush2.msra.mxu0 0.0
  %4493 = vmatprep.subr.mxu0 0.0
  %4494 = vmatpush2.msra.mxu0 0.0
  %4495 = vmatprep.subr.mxu0 0.0
  %4496 = vmatpush2.msra.mxu0 0.0
  %4497 = vmatprep.subr.mxu0 0.0
  %4498 = vmatpush2.msra.mxu0 0.0
  %4499 = vmatprep.subr.mxu0 0.0
  %4500 = vmatpush2.msra.mxu0 0.0
  %4501 = vmatprep.mubr.f32.mxu0 0.0
  %4502 = vmatmul.mubr.f32.gmra.mxu0 %v4388
  %v4503 = vpop.f32.mrf.mxu0
  %v4504 = vadd.f32 %v30, %v4503
  %v4505 = vpop.f32.mrf.mxu0
  %v4506 = vadd.f32 %v34, %v4505
  %4507 = vdwg.mxu0
  %4508 = vmatprep.subr.mxu0 0.0
  %4509 = vmatpush1.msra.mxu0 %v4436
  %4510 = vmatprep.subr.mxu0 0.0
  %4511 = vmatpush1.msra.mxu0 %v4433
  %4512 = vmatprep.subr.mxu0 0.0
  %4513 = vmatpush1.msra.mxu0 %v4430
  %4514 = vmatprep.subr.mxu0 0.0
  %4515 = vmatpush1.msra.mxu0 %v4427
  %4516 = vmatprep.subr.mxu0 0.0
  %4517 = vmatpush1.msra.mxu0 %v4424
  %4518 = vmatprep.subr.mxu0 0.0
  %4519 = vmatpush1.msra.mxu0 %v4421
  %4520 = vmatprep.subr.mxu0 0.0
  %4521 = vmatpush1.msra.mxu0 %v4418
  %4522 = vmatprep.subr.mxu0 0.0
  %4523 = vmatpush1.msra.mxu0 %v4415
  %4524 = vmatprep.subr.mxu0 0.0
  %4525 = vmatpush1.msra.mxu0 %v4412
  %4526 = vmatprep.subr.mxu0 0.0
  %4527 = vmatpush1.msra.mxu0 %v4409
  %4528 = vmatprep.subr.mxu0 0.0
  %4529 = vmatpush1.msra.mxu0 %v4406
  %4530 = vmatprep.subr.mxu0 0.0
  %4531 = vmatpush1.msra.mxu0 %v4403
  %4532 = vmatprep.subr.mxu0 0.0
  %4533 = vmatpush1.msra.mxu0 %v4400
  %4534 = vmatprep.subr.mxu0 0.0
  %4535 = vmatpush1.msra.mxu0 %v4397
  %4536 = vmatprep.subr.mxu0 0.0
  %4537 = vmatpush1.msra.mxu0 %v4394
  %4538 = vmatprep.subr.mxu0 0.0
  %4539 = vmatpush1.msra.mxu0 %v4391
  %4540 = vmatprep.subr.mxu0 0.0
  %4541 = vmatpush2.msra.mxu0 0.0
  %4542 = vmatprep.subr.mxu0 0.0
  %4543 = vmatpush2.msra.mxu0 0.0
  %4544 = vmatprep.subr.mxu0 0.0
  %4545 = vmatpush2.msra.mxu0 0.0
  %4546 = vmatprep.subr.mxu0 0.0
  %4547 = vmatpush2.msra.mxu0 0.0
  %4548 = vmatprep.subr.mxu0 0.0
  %4549 = vmatpush2.msra.mxu0 0.0
  %4550 = vmatprep.subr.mxu0 0.0
  %4551 = vmatpush2.msra.mxu0 0.0
  %4552 = vmatprep.subr.mxu0 0.0
  %4553 = vmatpush2.msra.mxu0 0.0
  %4554 = vmatprep.subr.mxu0 0.0
  %4555 = vmatpush2.msra.mxu0 0.0
  %4556 = vmatprep.subr.mxu0 0.0
  %4557 = vmatpush2.msra.mxu0 0.0
  %4558 = vmatprep.subr.mxu0 0.0
  %4559 = vmatpush2.msra.mxu0 0.0
  %4560 = vmatprep.subr.mxu0 0.0
  %4561 = vmatpush2.msra.mxu0 0.0
  %4562 = vmatprep.subr.mxu0 0.0
  %4563 = vmatpush2.msra.mxu0 0.0
  %4564 = vmatprep.subr.mxu0 0.0
  %4565 = vmatpush2.msra.mxu0 0.0
  %4566 = vmatprep.subr.mxu0 0.0
  %4567 = vmatpush2.msra.mxu0 0.0
  %4568 = vmatprep.subr.mxu0 0.0
  %4569 = vmatpush2.msra.mxu0 0.0
  %4570 = vmatprep.subr.mxu0 0.0
  %4571 = vmatpush2.msra.mxu0 0.0
  %4572 = vmatprep.mubr.f32.mxu0 0.0
  %4573 = vmatmul.mubr.f32.gmra.mxu0 %v4388
  %v4574 = vpop.f32.mrf.mxu0
  %v4575 = vadd.f32 %v38, %v4574
  %v4576 = vpop.f32.mrf.mxu0
  %4577 = vdwg.mxu0
  %v4578 = vld [vmem:[%s520] sm:$0xff]
  %v4579 = vld [vmem:[%s520 + $0x8] sm:$0xff]
  %v4580 = vld [vmem:[%s520 + $0x10] sm:$0xff]
  %v4581 = vld [vmem:[%s520 + $0x18] sm:$0xff]
  %v4582 = vld [vmem:[%s520 + $0x20] sm:$0xff]
  %v4583 = vld [vmem:[%s520 + $0x28] sm:$0xff]
  %v4584 = vld [vmem:[%s520 + $0x30] sm:$0xff]
  %v4585 = vld [vmem:[%s520 + $0x38] sm:$0xff]
  %v4586 = vld [vmem:[%s520 + $0x40] sm:$0xff]
  %v4587 = vld [vmem:[%s520 + $0x48] sm:$0xff]
  %v4588 = vld [vmem:[%s520 + $0x50] sm:$0xff]
  %v4589 = vld [vmem:[%s520 + $0x58] sm:$0xff]
  %v4590 = vld [vmem:[%s520 + $0x60] sm:$0xff]
  %v4591 = vld [vmem:[%s520 + $0x68] sm:$0xff]
  %v4592 = vld [vmem:[%s520 + $0x70] sm:$0xff]
  %v4593 = vld [vmem:[%s520 + $0x78] sm:$0xff]
  %v4594 = vld [vmem:[%s520 + $0x80] sm:$0xff]
  %v4595 = vld [vmem:[%s520 + $0x88] sm:$0xff]
  %v4596 = vld [vmem:[%s520 + $0x90] sm:$0xff]
  %v4597 = vld [vmem:[%s520 + $0x98] sm:$0xff]
  %v4598 = vld [vmem:[%s520 + $0xa0] sm:$0xff]
  %v4599 = vld [vmem:[%s520 + $0xa8] sm:$0xff]
  %v4600 = vld [vmem:[%s520 + $0xb0] sm:$0xff]
  %v4601 = vld [vmem:[%s520 + $0xb8] sm:$0xff]
  %v4602 = vld [vmem:[%s520 + $0xc0] sm:$0xff]
  %v4603 = vld [vmem:[%s520 + $0xc8] sm:$0xff]
  %v4604 = vld [vmem:[%s520 + $0xd0] sm:$0xff]
  %v4605 = vld [vmem:[%s520 + $0xd8] sm:$0xff]
  %v4606 = vld [vmem:[%s520 + $0xe0] sm:$0xff]
  %v4607 = vld [vmem:[%s520 + $0xe8] sm:$0xff]
  %v4608 = vld [vmem:[%s520 + $0xf0] sm:$0xff]
  %v4609 = vld [vmem:[%s520 + $0xf8] sm:$0xff]
  %v4610 = vld [vmem:[%s520 + $0x100] sm:$0xff]
  %v4611 = vld [vmem:[%s520 + $0x108] sm:$0xff]
  %v4612 = vld [vmem:[%s520 + $0x110] sm:$0xff]
  %v4613 = vld [vmem:[%s520 + $0x118] sm:$0xff]
  %v4614 = vld [vmem:[%s520 + $0x120] sm:$0xff]
  %v4615 = vld [vmem:[%s520 + $0x128] sm:$0xff]
  %v4616 = vld [vmem:[%s520 + $0x130] sm:$0xff]
  %v4617 = vld [vmem:[%s520 + $0x138] sm:$0xff]
  %v4618 = vld [vmem:[%s520 + $0x140] sm:$0xff]
  %v4619 = vld [vmem:[%s520 + $0x148] sm:$0xff]
  %v4620 = vld [vmem:[%s520 + $0x150] sm:$0xff]
  %v4621 = vld [vmem:[%s520 + $0x158] sm:$0xff]
  %v4622 = vld [vmem:[%s520 + $0x160] sm:$0xff]
  %v4623 = vld [vmem:[%s520 + $0x168] sm:$0xff]
  %v4624 = vld [vmem:[%s520 + $0x170] sm:$0xff]
  %v4625 = vld [vmem:[%s520 + $0x178] sm:$0xff]
  %4626 = vmatprep.subr.mxu0 %v4624
  %4627 = vmatpush1.msra.mxu0 %v4623
  %4628 = vmatprep.subr.mxu0 %v4621
  %4629 = vmatpush1.msra.mxu0 %v4620
  %4630 = vmatprep.subr.mxu0 %v4618
  %4631 = vmatpush1.msra.mxu0 %v4617
  %4632 = vmatprep.subr.mxu0 %v4615
  %4633 = vmatpush1.msra.mxu0 %v4614
  %4634 = vmatprep.subr.mxu0 %v4612
  %4635 = vmatpush1.msra.mxu0 %v4611
  %4636 = vmatprep.subr.mxu0 %v4609
  %4637 = vmatpush1.msra.mxu0 %v4608
  %4638 = vmatprep.subr.mxu0 %v4606
  %4639 = vmatpush1.msra.mxu0 %v4605
  %4640 = vmatprep.subr.mxu0 %v4603
  %4641 = vmatpush1.msra.mxu0 %v4602
  %4642 = vmatprep.subr.mxu0 %v4600
  %4643 = vmatpush1.msra.mxu0 %v4599
  %4644 = vmatprep.subr.mxu0 %v4597
  %4645 = vmatpush1.msra.mxu0 %v4596
  %4646 = vmatprep.subr.mxu0 %v4594
  %4647 = vmatpush1.msra.mxu0 %v4593
  %4648 = vmatprep.subr.mxu0 %v4591
  %4649 = vmatpush1.msra.mxu0 %v4590
  %4650 = vmatprep.subr.mxu0 %v4588
  %4651 = vmatpush1.msra.mxu0 %v4587
  %4652 = vmatprep.subr.mxu0 %v4585
  %4653 = vmatpush1.msra.mxu0 %v4584
  %4654 = vmatprep.subr.mxu0 %v4582
  %4655 = vmatpush1.msra.mxu0 %v4581
  %4656 = vmatprep.subr.mxu0 %v4579
  %4657 = vmatpush1.msra.mxu0 %v4578
  %4658 = vmatprep.subr.mxu0 0.0
  %4659 = vmatpush2.msra.mxu0 0.0
  %4660 = vmatprep.subr.mxu0 0.0
  %4661 = vmatpush2.msra.mxu0 0.0
  %4662 = vmatprep.subr.mxu0 0.0
  %4663 = vmatpush2.msra.mxu0 0.0
  %4664 = vmatprep.subr.mxu0 0.0
  %4665 = vmatpush2.msra.mxu0 0.0
  %4666 = vmatprep.subr.mxu0 0.0
  %4667 = vmatpush2.msra.mxu0 0.0
  %4668 = vmatprep.subr.mxu0 0.0
  %4669 = vmatpush2.msra.mxu0 0.0
  %4670 = vmatprep.subr.mxu0 0.0
  %4671 = vmatpush2.msra.mxu0 0.0
  %4672 = vmatprep.subr.mxu0 0.0
  %4673 = vmatpush2.msra.mxu0 0.0
  %4674 = vmatprep.subr.mxu0 0.0
  %4675 = vmatpush2.msra.mxu0 0.0
  %4676 = vmatprep.subr.mxu0 0.0
  %4677 = vmatpush2.msra.mxu0 0.0
  %4678 = vmatprep.subr.mxu0 0.0
  %4679 = vmatpush2.msra.mxu0 0.0
  %4680 = vmatprep.subr.mxu0 0.0
  %4681 = vmatpush2.msra.mxu0 0.0
  %4682 = vmatprep.subr.mxu0 0.0
  %4683 = vmatpush2.msra.mxu0 0.0
  %4684 = vmatprep.subr.mxu0 0.0
  %4685 = vmatpush2.msra.mxu0 0.0
  %4686 = vmatprep.subr.mxu0 0.0
  %4687 = vmatpush2.msra.mxu0 0.0
  %4688 = vmatprep.subr.mxu0 0.0
  %4689 = vmatpush2.msra.mxu0 0.0
  %4690 = vmatprep.mubr.f32.mxu0 0.0
  %4691 = vmatmul.mubr.f32.gmra.mxu0 %v3773
  %v4692 = vpop.f32.mrf.mxu0
  %v4693 = vadd.f32 %v83, %v4692
  %v4694 = vpop.f32.mrf.mxu0
  %v4695 = vadd.f32 %v87, %v4694
  %4696 = vdwg.mxu0
  %4697 = vmatprep.subr.mxu0 0.0
  %4698 = vmatpush1.msra.mxu0 %v4625
  %4699 = vmatprep.subr.mxu0 0.0
  %4700 = vmatpush1.msra.mxu0 %v4622
  %4701 = vmatprep.subr.mxu0 0.0
  %4702 = vmatpush1.msra.mxu0 %v4619
  %4703 = vmatprep.subr.mxu0 0.0
  %4704 = vmatpush1.msra.mxu0 %v4616
  %4705 = vmatprep.subr.mxu0 0.0
  %4706 = vmatpush1.msra.mxu0 %v4613
  %4707 = vmatprep.subr.mxu0 0.0
  %4708 = vmatpush1.msra.mxu0 %v4610
  %4709 = vmatprep.subr.mxu0 0.0
  %4710 = vmatpush1.msra.mxu0 %v4607
  %4711 = vmatprep.subr.mxu0 0.0
  %4712 = vmatpush1.msra.mxu0 %v4604
  %4713 = vmatprep.subr.mxu0 0.0
  %4714 = vmatpush1.msra.mxu0 %v4601
  %4715 = vmatprep.subr.mxu0 0.0
  %4716 = vmatpush1.msra.mxu0 %v4598
  %4717 = vmatprep.subr.mxu0 0.0
  %4718 = vmatpush1.msra.mxu0 %v4595
  %4719 = vmatprep.subr.mxu0 0.0
  %4720 = vmatpush1.msra.mxu0 %v4592
  %4721 = vmatprep.subr.mxu0 0.0
  %4722 = vmatpush1.msra.mxu0 %v4589
  %4723 = vmatprep.subr.mxu0 0.0
  %4724 = vmatpush1.msra.mxu0 %v4586
  %4725 = vmatprep.subr.mxu0 0.0
  %4726 = vmatpush1.msra.mxu0 %v4583
  %4727 = vmatprep.subr.mxu0 0.0
  %4728 = vmatpush1.msra.mxu0 %v4580
  %4729 = vmatprep.subr.mxu0 0.0
  %4730 = vmatpush2.msra.mxu0 0.0
  %4731 = vmatprep.subr.mxu0 0.0
  %4732 = vmatpush2.msra.mxu0 0.0
  %4733 = vmatprep.subr.mxu0 0.0
  %4734 = vmatpush2.msra.mxu0 0.0
  %4735 = vmatprep.subr.mxu0 0.0
  %4736 = vmatpush2.msra.mxu0 0.0
  %4737 = vmatprep.subr.mxu0 0.0
  %4738 = vmatpush2.msra.mxu0 0.0
  %4739 = vmatprep.subr.mxu0 0.0
  %4740 = vmatpush2.msra.mxu0 0.0
  %4741 = vmatprep.subr.mxu0 0.0
  %4742 = vmatpush2.msra.mxu0 0.0
  %4743 = vmatprep.subr.mxu0 0.0
  %4744 = vmatpush2.msra.mxu0 0.0
  %4745 = vmatprep.subr.mxu0 0.0
  %4746 = vmatpush2.msra.mxu0 0.0
  %4747 = vmatprep.subr.mxu0 0.0
  %4748 = vmatpush2.msra.mxu0 0.0
  %4749 = vmatprep.subr.mxu0 0.0
  %4750 = vmatpush2.msra.mxu0 0.0
  %4751 = vmatprep.subr.mxu0 0.0
  %4752 = vmatpush2.msra.mxu0 0.0
  %4753 = vmatprep.subr.mxu0 0.0
  %4754 = vmatpush2.msra.mxu0 0.0
  %4755 = vmatprep.subr.mxu0 0.0
  %4756 = vmatpush2.msra.mxu0 0.0
  %4757 = vmatprep.subr.mxu0 0.0
  %4758 = vmatpush2.msra.mxu0 0.0
  %4759 = vmatprep.subr.mxu0 0.0
  %4760 = vmatpush2.msra.mxu0 0.0
  %4761 = vmatprep.mubr.f32.mxu0 0.0
  %4762 = vmatmul.mubr.f32.gmra.mxu0 %v3773
  %v4763 = vpop.f32.mrf.mxu0
  %v4764 = vadd.f32 %v91, %v4763
  %v4765 = vpop.f32.mrf.mxu0
  %4766 = vdwg.mxu0
  %v4767 = vadd.f32 %v4504, %v4693
  %v4768 = vxor.u32 %v4767, 2147483648
  %v4769 = vmul.f32 %v4768, 1.442695
  %v4770 = vpow.pop %v4769
  %v4771 = vadd.f32 %v4770, 1.0
  %v4772 = vrcp.pop %v4771
  %v4773 = vmul.f32 1.0, %v4772
  %v4774 = vadd.f32 %v4506, %v4695
  %v4775 = vxor.u32 %v4774, 2147483648
  %v4776 = vmul.f32 %v4775, 1.442695
  %v4777 = vpow.pop %v4776
  %v4778 = vadd.f32 %v4777, 1.0
  %v4779 = vrcp.pop %v4778
  %v4780 = vmul.f32 1.0, %v4779
  %v4781 = vmul.f32 %v4773, %v4764
  %v4782 = vadd.f32 %v4575, %v4781
  %v4783 = vtanh.pop %v4782
  %v4784 = vsub.f32 1.0, %v4780
  %v4785 = vmul.f32 %v4784, %v4783
  %v4786 = vmul.f32 %v4780, %v3773
  %v4787 = vadd.f32 %v4785, %v4786
  %v4788 = vld [vmem:[%s731] sm:$0xff]
  %v4789 = vld [vmem:[%s731 + $0x8] sm:$0xff]
  %v4790 = vld [vmem:[%s731 + $0x10] sm:$0xff]
  %v4791 = vld [vmem:[%s731 + $0x18] sm:$0xff]
  %v4792 = vld [vmem:[%s731 + $0x20] sm:$0xff]
  %v4793 = vld [vmem:[%s731 + $0x28] sm:$0xff]
  %v4794 = vld [vmem:[%s731 + $0x30] sm:$0xff]
  %v4795 = vld [vmem:[%s731 + $0x38] sm:$0xff]
  %v4796 = vld [vmem:[%s731 + $0x40] sm:$0xff]
  %v4797 = vld [vmem:[%s731 + $0x48] sm:$0xff]
  %v4798 = vld [vmem:[%s731 + $0x50] sm:$0xff]
  %v4799 = vld [vmem:[%s731 + $0x58] sm:$0xff]
  %v4800 = vld [vmem:[%s731 + $0x60] sm:$0xff]
  %v4801 = vld [vmem:[%s731 + $0x68] sm:$0xff]
  %v4802 = vld [vmem:[%s731 + $0x70] sm:$0xff]
  %v4803 = vld [vmem:[%s731 + $0x78] sm:$0xff]
  %v4804 = vld [vmem:[%s731 + $0x80] sm:$0xff]
  %v4805 = vld [vmem:[%s731 + $0x88] sm:$0xff]
  %v4806 = vld [vmem:[%s731 + $0x90] sm:$0xff]
  %v4807 = vld [vmem:[%s731 + $0x98] sm:$0xff]
  %v4808 = vld [vmem:[%s731 + $0xa0] sm:$0xff]
  %v4809 = vld [vmem:[%s731 + $0xa8] sm:$0xff]
  %v4810 = vld [vmem:[%s731 + $0xb0] sm:$0xff]
  %v4811 = vld [vmem:[%s731 + $0xb8] sm:$0xff]
  %v4812 = vld [vmem:[%s731 + $0xc0] sm:$0xff]
  %v4813 = vld [vmem:[%s731 + $0xc8] sm:$0xff]
  %v4814 = vld [vmem:[%s731 + $0xd0] sm:$0xff]
  %v4815 = vld [vmem:[%s731 + $0xd8] sm:$0xff]
  %v4816 = vld [vmem:[%s731 + $0xe0] sm:$0xff]
  %v4817 = vld [vmem:[%s731 + $0xe8] sm:$0xff]
  %v4818 = vld [vmem:[%s731 + $0xf0] sm:$0xff]
  %v4819 = vld [vmem:[%s731 + $0xf8] sm:$0xff]
  %v4820 = vld [vmem:[%s731 + $0x100] sm:$0xff]
  %v4821 = vld [vmem:[%s731 + $0x108] sm:$0xff]
  %v4822 = vld [vmem:[%s731 + $0x110] sm:$0xff]
  %v4823 = vld [vmem:[%s731 + $0x118] sm:$0xff]
  %v4824 = vld [vmem:[%s731 + $0x120] sm:$0xff]
  %v4825 = vld [vmem:[%s731 + $0x128] sm:$0xff]
  %v4826 = vld [vmem:[%s731 + $0x130] sm:$0xff]
  %v4827 = vld [vmem:[%s731 + $0x138] sm:$0xff]
  %v4828 = vld [vmem:[%s731 + $0x140] sm:$0xff]
  %v4829 = vld [vmem:[%s731 + $0x148] sm:$0xff]
  %v4830 = vld [vmem:[%s731 + $0x150] sm:$0xff]
  %v4831 = vld [vmem:[%s731 + $0x158] sm:$0xff]
  %v4832 = vld [vmem:[%s731 + $0x160] sm:$0xff]
  %v4833 = vld [vmem:[%s731 + $0x168] sm:$0xff]
  %v4834 = vld [vmem:[%s731 + $0x170] sm:$0xff]
  %v4835 = vld [vmem:[%s731 + $0x178] sm:$0xff]
  %4836 = vmatprep.subr.mxu0 %v4834
  %4837 = vmatpush1.msra.mxu0 %v4833
  %4838 = vmatprep.subr.mxu0 %v4831
  %4839 = vmatpush1.msra.mxu0 %v4830
  %4840 = vmatprep.subr.mxu0 %v4828
  %4841 = vmatpush1.msra.mxu0 %v4827
  %4842 = vmatprep.subr.mxu0 %v4825
  %4843 = vmatpush1.msra.mxu0 %v4824
  %4844 = vmatprep.subr.mxu0 %v4822
  %4845 = vmatpush1.msra.mxu0 %v4821
  %4846 = vmatprep.subr.mxu0 %v4819
  %4847 = vmatpush1.msra.mxu0 %v4818
  %4848 = vmatprep.subr.mxu0 %v4816
  %4849 = vmatpush1.msra.mxu0 %v4815
  %4850 = vmatprep.subr.mxu0 %v4813
  %4851 = vmatpush1.msra.mxu0 %v4812
  %4852 = vmatprep.subr.mxu0 %v4810
  %4853 = vmatpush1.msra.mxu0 %v4809
  %4854 = vmatprep.subr.mxu0 %v4807
  %4855 = vmatpush1.msra.mxu0 %v4806
  %4856 = vmatprep.subr.mxu0 %v4804
  %4857 = vmatpush1.msra.mxu0 %v4803
  %4858 = vmatprep.subr.mxu0 %v4801
  %4859 = vmatpush1.msra.mxu0 %v4800
  %4860 = vmatprep.subr.mxu0 %v4798
  %4861 = vmatpush1.msra.mxu0 %v4797
  %4862 = vmatprep.subr.mxu0 %v4795
  %4863 = vmatpush1.msra.mxu0 %v4794
  %4864 = vmatprep.subr.mxu0 %v4792
  %4865 = vmatpush1.msra.mxu0 %v4791
  %4866 = vmatprep.subr.mxu0 %v4789
  %4867 = vmatpush1.msra.mxu0 %v4788
  %4868 = vmatprep.subr.mxu0 0.0
  %4869 = vmatpush2.msra.mxu0 0.0
  %4870 = vmatprep.subr.mxu0 0.0
  %4871 = vmatpush2.msra.mxu0 0.0
  %4872 = vmatprep.subr.mxu0 0.0
  %4873 = vmatpush2.msra.mxu0 0.0
  %4874 = vmatprep.subr.mxu0 0.0
  %4875 = vmatpush2.msra.mxu0 0.0
  %4876 = vmatprep.subr.mxu0 0.0
  %4877 = vmatpush2.msra.mxu0 0.0
  %4878 = vmatprep.subr.mxu0 0.0
  %4879 = vmatpush2.msra.mxu0 0.0
  %4880 = vmatprep.subr.mxu0 0.0
  %4881 = vmatpush2.msra.mxu0 0.0
  %4882 = vmatprep.subr.mxu0 0.0
  %4883 = vmatpush2.msra.mxu0 0.0
  %4884 = vmatprep.subr.mxu0 0.0
  %4885 = vmatpush2.msra.mxu0 0.0
  %4886 = vmatprep.subr.mxu0 0.0
  %4887 = vmatpush2.msra.mxu0 0.0
  %4888 = vmatprep.subr.mxu0 0.0
  %4889 = vmatpush2.msra.mxu0 0.0
  %4890 = vmatprep.subr.mxu0 0.0
  %4891 = vmatpush2.msra.mxu0 0.0
  %4892 = vmatprep.subr.mxu0 0.0
  %4893 = vmatpush2.msra.mxu0 0.0
  %4894 = vmatprep.subr.mxu0 0.0
  %4895 = vmatpush2.msra.mxu0 0.0
  %4896 = vmatprep.subr.mxu0 0.0
  %4897 = vmatpush2.msra.mxu0 0.0
  %4898 = vmatprep.subr.mxu0 0.0
  %4899 = vmatpush2.msra.mxu0 0.0
  %4900 = vmatprep.mubr.f32.mxu0 0.0
  %4901 = vmatmul.mubr.f32.gmra.mxu0 %v4787
  %v4902 = vpop.f32.mrf.mxu0
  %v4903 = vadd.f32 %v48, %v4902
  %v4904 = vpop.f32.mrf.mxu0
  %v4905 = vadd.f32 %v52, %v4904
  %4906 = vdwg.mxu0
  %4907 = vmatprep.subr.mxu0 0.0
  %4908 = vmatpush1.msra.mxu0 %v4835
  %4909 = vmatprep.subr.mxu0 0.0
  %4910 = vmatpush1.msra.mxu0 %v4832
  %4911 = vmatprep.subr.mxu0 0.0
  %4912 = vmatpush1.msra.mxu0 %v4829
  %4913 = vmatprep.subr.mxu0 0.0
  %4914 = vmatpush1.msra.mxu0 %v4826
  %4915 = vmatprep.subr.mxu0 0.0
  %4916 = vmatpush1.msra.mxu0 %v4823
  %4917 = vmatprep.subr.mxu0 0.0
  %4918 = vmatpush1.msra.mxu0 %v4820
  %4919 = vmatprep.subr.mxu0 0.0
  %4920 = vmatpush1.msra.mxu0 %v4817
  %4921 = vmatprep.subr.mxu0 0.0
  %4922 = vmatpush1.msra.mxu0 %v4814
  %4923 = vmatprep.subr.mxu0 0.0
  %4924 = vmatpush1.msra.mxu0 %v4811
  %4925 = vmatprep.subr.mxu0 0.0
  %4926 = vmatpush1.msra.mxu0 %v4808
  %4927 = vmatprep.subr.mxu0 0.0
  %4928 = vmatpush1.msra.mxu0 %v4805
  %4929 = vmatprep.subr.mxu0 0.0
  %4930 = vmatpush1.msra.mxu0 %v4802
  %4931 = vmatprep.subr.mxu0 0.0
  %4932 = vmatpush1.msra.mxu0 %v4799
  %4933 = vmatprep.subr.mxu0 0.0
  %4934 = vmatpush1.msra.mxu0 %v4796
  %4935 = vmatprep.subr.mxu0 0.0
  %4936 = vmatpush1.msra.mxu0 %v4793
  %4937 = vmatprep.subr.mxu0 0.0
  %4938 = vmatpush1.msra.mxu0 %v4790
  %4939 = vmatprep.subr.mxu0 0.0
  %4940 = vmatpush2.msra.mxu0 0.0
  %4941 = vmatprep.subr.mxu0 0.0
  %4942 = vmatpush2.msra.mxu0 0.0
  %4943 = vmatprep.subr.mxu0 0.0
  %4944 = vmatpush2.msra.mxu0 0.0
  %4945 = vmatprep.subr.mxu0 0.0
  %4946 = vmatpush2.msra.mxu0 0.0
  %4947 = vmatprep.subr.mxu0 0.0
  %4948 = vmatpush2.msra.mxu0 0.0
  %4949 = vmatprep.subr.mxu0 0.0
  %4950 = vmatpush2.msra.mxu0 0.0
  %4951 = vmatprep.subr.mxu0 0.0
  %4952 = vmatpush2.msra.mxu0 0.0
  %4953 = vmatprep.subr.mxu0 0.0
  %4954 = vmatpush2.msra.mxu0 0.0
  %4955 = vmatprep.subr.mxu0 0.0
  %4956 = vmatpush2.msra.mxu0 0.0
  %4957 = vmatprep.subr.mxu0 0.0
  %4958 = vmatpush2.msra.mxu0 0.0
  %4959 = vmatprep.subr.mxu0 0.0
  %4960 = vmatpush2.msra.mxu0 0.0
  %4961 = vmatprep.subr.mxu0 0.0
  %4962 = vmatpush2.msra.mxu0 0.0
  %4963 = vmatprep.subr.mxu0 0.0
  %4964 = vmatpush2.msra.mxu0 0.0
  %4965 = vmatprep.subr.mxu0 0.0
  %4966 = vmatpush2.msra.mxu0 0.0
  %4967 = vmatprep.subr.mxu0 0.0
  %4968 = vmatpush2.msra.mxu0 0.0
  %4969 = vmatprep.subr.mxu0 0.0
  %4970 = vmatpush2.msra.mxu0 0.0
  %4971 = vmatprep.mubr.f32.mxu0 0.0
  %4972 = vmatmul.mubr.f32.gmra.mxu0 %v4787
  %v4973 = vpop.f32.mrf.mxu0
  %v4974 = vadd.f32 %v56, %v4973
  %v4975 = vpop.f32.mrf.mxu0
  %4976 = vdwg.mxu0
  %v4977 = vld [vmem:[%s921] sm:$0xff]
  %v4978 = vld [vmem:[%s921 + $0x8] sm:$0xff]
  %v4979 = vld [vmem:[%s921 + $0x10] sm:$0xff]
  %v4980 = vld [vmem:[%s921 + $0x18] sm:$0xff]
  %v4981 = vld [vmem:[%s921 + $0x20] sm:$0xff]
  %v4982 = vld [vmem:[%s921 + $0x28] sm:$0xff]
  %v4983 = vld [vmem:[%s921 + $0x30] sm:$0xff]
  %v4984 = vld [vmem:[%s921 + $0x38] sm:$0xff]
  %v4985 = vld [vmem:[%s921 + $0x40] sm:$0xff]
  %v4986 = vld [vmem:[%s921 + $0x48] sm:$0xff]
  %v4987 = vld [vmem:[%s921 + $0x50] sm:$0xff]
  %v4988 = vld [vmem:[%s921 + $0x58] sm:$0xff]
  %v4989 = vld [vmem:[%s921 + $0x60] sm:$0xff]
  %v4990 = vld [vmem:[%s921 + $0x68] sm:$0xff]
  %v4991 = vld [vmem:[%s921 + $0x70] sm:$0xff]
  %v4992 = vld [vmem:[%s921 + $0x78] sm:$0xff]
  %v4993 = vld [vmem:[%s921 + $0x80] sm:$0xff]
  %v4994 = vld [vmem:[%s921 + $0x88] sm:$0xff]
  %v4995 = vld [vmem:[%s921 + $0x90] sm:$0xff]
  %v4996 = vld [vmem:[%s921 + $0x98] sm:$0xff]
  %v4997 = vld [vmem:[%s921 + $0xa0] sm:$0xff]
  %v4998 = vld [vmem:[%s921 + $0xa8] sm:$0xff]
  %v4999 = vld [vmem:[%s921 + $0xb0] sm:$0xff]
  %v5000 = vld [vmem:[%s921 + $0xb8] sm:$0xff]
  %v5001 = vld [vmem:[%s921 + $0xc0] sm:$0xff]
  %v5002 = vld [vmem:[%s921 + $0xc8] sm:$0xff]
  %v5003 = vld [vmem:[%s921 + $0xd0] sm:$0xff]
  %v5004 = vld [vmem:[%s921 + $0xd8] sm:$0xff]
  %v5005 = vld [vmem:[%s921 + $0xe0] sm:$0xff]
  %v5006 = vld [vmem:[%s921 + $0xe8] sm:$0xff]
  %v5007 = vld [vmem:[%s921 + $0xf0] sm:$0xff]
  %v5008 = vld [vmem:[%s921 + $0xf8] sm:$0xff]
  %v5009 = vld [vmem:[%s921 + $0x100] sm:$0xff]
  %v5010 = vld [vmem:[%s921 + $0x108] sm:$0xff]
  %v5011 = vld [vmem:[%s921 + $0x110] sm:$0xff]
  %v5012 = vld [vmem:[%s921 + $0x118] sm:$0xff]
  %v5013 = vld [vmem:[%s921 + $0x120] sm:$0xff]
  %v5014 = vld [vmem:[%s921 + $0x128] sm:$0xff]
  %v5015 = vld [vmem:[%s921 + $0x130] sm:$0xff]
  %v5016 = vld [vmem:[%s921 + $0x138] sm:$0xff]
  %v5017 = vld [vmem:[%s921 + $0x140] sm:$0xff]
  %v5018 = vld [vmem:[%s921 + $0x148] sm:$0xff]
  %v5019 = vld [vmem:[%s921 + $0x150] sm:$0xff]
  %v5020 = vld [vmem:[%s921 + $0x158] sm:$0xff]
  %v5021 = vld [vmem:[%s921 + $0x160] sm:$0xff]
  %v5022 = vld [vmem:[%s921 + $0x168] sm:$0xff]
  %v5023 = vld [vmem:[%s921 + $0x170] sm:$0xff]
  %v5024 = vld [vmem:[%s921 + $0x178] sm:$0xff]
  %5025 = vmatprep.subr.mxu0 %v5023
  %5026 = vmatpush1.msra.mxu0 %v5022
  %5027 = vmatprep.subr.mxu0 %v5020
  %5028 = vmatpush1.msra.mxu0 %v5019
  %5029 = vmatprep.subr.mxu0 %v5017
  %5030 = vmatpush1.msra.mxu0 %v5016
  %5031 = vmatprep.subr.mxu0 %v5014
  %5032 = vmatpush1.msra.mxu0 %v5013
  %5033 = vmatprep.subr.mxu0 %v5011
  %5034 = vmatpush1.msra.mxu0 %v5010
  %5035 = vmatprep.subr.mxu0 %v5008
  %5036 = vmatpush1.msra.mxu0 %v5007
  %5037 = vmatprep.subr.mxu0 %v5005
  %5038 = vmatpush1.msra.mxu0 %v5004
  %5039 = vmatprep.subr.mxu0 %v5002
  %5040 = vmatpush1.msra.mxu0 %v5001
  %5041 = vmatprep.subr.mxu0 %v4999
  %5042 = vmatpush1.msra.mxu0 %v4998
  %5043 = vmatprep.subr.mxu0 %v4996
  %5044 = vmatpush1.msra.mxu0 %v4995
  %5045 = vmatprep.subr.mxu0 %v4993
  %5046 = vmatpush1.msra.mxu0 %v4992
  %5047 = vmatprep.subr.mxu0 %v4990
  %5048 = vmatpush1.msra.mxu0 %v4989
  %5049 = vmatprep.subr.mxu0 %v4987
  %5050 = vmatpush1.msra.mxu0 %v4986
  %5051 = vmatprep.subr.mxu0 %v4984
  %5052 = vmatpush1.msra.mxu0 %v4983
  %5053 = vmatprep.subr.mxu0 %v4981
  %5054 = vmatpush1.msra.mxu0 %v4980
  %5055 = vmatprep.subr.mxu0 %v4978
  %5056 = vmatpush1.msra.mxu0 %v4977
  %5057 = vmatprep.subr.mxu0 0.0
  %5058 = vmatpush2.msra.mxu0 0.0
  %5059 = vmatprep.subr.mxu0 0.0
  %5060 = vmatpush2.msra.mxu0 0.0
  %5061 = vmatprep.subr.mxu0 0.0
  %5062 = vmatpush2.msra.mxu0 0.0
  %5063 = vmatprep.subr.mxu0 0.0
  %5064 = vmatpush2.msra.mxu0 0.0
  %5065 = vmatprep.subr.mxu0 0.0
  %5066 = vmatpush2.msra.mxu0 0.0
  %5067 = vmatprep.subr.mxu0 0.0
  %5068 = vmatpush2.msra.mxu0 0.0
  %5069 = vmatprep.subr.mxu0 0.0
  %5070 = vmatpush2.msra.mxu0 0.0
  %5071 = vmatprep.subr.mxu0 0.0
  %5072 = vmatpush2.msra.mxu0 0.0
  %5073 = vmatprep.subr.mxu0 0.0
  %5074 = vmatpush2.msra.mxu0 0.0
  %5075 = vmatprep.subr.mxu0 0.0
  %5076 = vmatpush2.msra.mxu0 0.0
  %5077 = vmatprep.subr.mxu0 0.0
  %5078 = vmatpush2.msra.mxu0 0.0
  %5079 = vmatprep.subr.mxu0 0.0
  %5080 = vmatpush2.msra.mxu0 0.0
  %5081 = vmatprep.subr.mxu0 0.0
  %5082 = vmatpush2.msra.mxu0 0.0
  %5083 = vmatprep.subr.mxu0 0.0
  %5084 = vmatpush2.msra.mxu0 0.0
  %5085 = vmatprep.subr.mxu0 0.0
  %5086 = vmatpush2.msra.mxu0 0.0
  %5087 = vmatprep.subr.mxu0 0.0
  %5088 = vmatpush2.msra.mxu0 0.0
  %5089 = vmatprep.mubr.f32.mxu0 0.0
  %5090 = vmatmul.mubr.f32.gmra.mxu0 %v4172
  %v5091 = vpop.f32.mrf.mxu0
  %v5092 = vadd.f32 %v101, %v5091
  %v5093 = vpop.f32.mrf.mxu0
  %v5094 = vadd.f32 %v105, %v5093
  %5095 = vdwg.mxu0
  %5096 = vmatprep.subr.mxu0 0.0
  %5097 = vmatpush1.msra.mxu0 %v5024
  %5098 = vmatprep.subr.mxu0 0.0
  %5099 = vmatpush1.msra.mxu0 %v5021
  %5100 = vmatprep.subr.mxu0 0.0
  %5101 = vmatpush1.msra.mxu0 %v5018
  %5102 = vmatprep.subr.mxu0 0.0
  %5103 = vmatpush1.msra.mxu0 %v5015
  %5104 = vmatprep.subr.mxu0 0.0
  %5105 = vmatpush1.msra.mxu0 %v5012
  %5106 = vmatprep.subr.mxu0 0.0
  %5107 = vmatpush1.msra.mxu0 %v5009
  %5108 = vmatprep.subr.mxu0 0.0
  %5109 = vmatpush1.msra.mxu0 %v5006
  %5110 = vmatprep.subr.mxu0 0.0
  %5111 = vmatpush1.msra.mxu0 %v5003
  %5112 = vmatprep.subr.mxu0 0.0
  %5113 = vmatpush1.msra.mxu0 %v5000
  %5114 = vmatprep.subr.mxu0 0.0
  %5115 = vmatpush1.msra.mxu0 %v4997
  %5116 = vmatprep.subr.mxu0 0.0
  %5117 = vmatpush1.msra.mxu0 %v4994
  %5118 = vmatprep.subr.mxu0 0.0
  %5119 = vmatpush1.msra.mxu0 %v4991
  %5120 = vmatprep.subr.mxu0 0.0
  %5121 = vmatpush1.msra.mxu0 %v4988
  %5122 = vmatprep.subr.mxu0 0.0
  %5123 = vmatpush1.msra.mxu0 %v4985
  %5124 = vmatprep.subr.mxu0 0.0
  %5125 = vmatpush1.msra.mxu0 %v4982
  %5126 = vmatprep.subr.mxu0 0.0
  %5127 = vmatpush1.msra.mxu0 %v4979
  %5128 = vmatprep.subr.mxu0 0.0
  %5129 = vmatpush2.msra.mxu0 0.0
  %5130 = vmatprep.subr.mxu0 0.0
  %5131 = vmatpush2.msra.mxu0 0.0
  %5132 = vmatprep.subr.mxu0 0.0
  %5133 = vmatpush2.msra.mxu0 0.0
  %5134 = vmatprep.subr.mxu0 0.0
  %5135 = vmatpush2.msra.mxu0 0.0
  %5136 = vmatprep.subr.mxu0 0.0
  %5137 = vmatpush2.msra.mxu0 0.0
  %5138 = vmatprep.subr.mxu0 0.0
  %5139 = vmatpush2.msra.mxu0 0.0
  %5140 = vmatprep.subr.mxu0 0.0
  %5141 = vmatpush2.msra.mxu0 0.0
  %5142 = vmatprep.subr.mxu0 0.0
  %5143 = vmatpush2.msra.mxu0 0.0
  %5144 = vmatprep.subr.mxu0 0.0
  %5145 = vmatpush2.msra.mxu0 0.0
  %5146 = vmatprep.subr.mxu0 0.0
  %5147 = vmatpush2.msra.mxu0 0.0
  %5148 = vmatprep.subr.mxu0 0.0
  %5149 = vmatpush2.msra.mxu0 0.0
  %5150 = vmatprep.subr.mxu0 0.0
  %5151 = vmatpush2.msra.mxu0 0.0
  %5152 = vmatprep.subr.mxu0 0.0
  %5153 = vmatpush2.msra.mxu0 0.0
  %5154 = vmatprep.subr.mxu0 0.0
  %5155 = vmatpush2.msra.mxu0 0.0
  %5156 = vmatprep.subr.mxu0 0.0
  %5157 = vmatpush2.msra.mxu0 0.0
  %5158 = vmatprep.subr.mxu0 0.0
  %5159 = vmatpush2.msra.mxu0 0.0
  %5160 = vmatprep.mubr.f32.mxu0 0.0
  %5161 = vmatmul.mubr.f32.gmra.mxu0 %v4172
  %v5162 = vpop.f32.mrf.mxu0
  %v5163 = vadd.f32 %v109, %v5162
  %v5164 = vpop.f32.mrf.mxu0
  %5165 = vdwg.mxu0
  %v5166 = vadd.f32 %v4903, %v5092
  %v5167 = vxor.u32 %v5166, 2147483648
  %v5168 = vmul.f32 %v5167, 1.442695
  %v5169 = vpow.pop %v5168
  %v5170 = vadd.f32 %v5169, 1.0
  %v5171 = vrcp.pop %v5170
  %v5172 = vmul.f32 1.0, %v5171
  %v5173 = vadd.f32 %v4905, %v5094
  %v5174 = vxor.u32 %v5173, 2147483648
  %v5175 = vmul.f32 %v5174, 1.442695
  %v5176 = vpow.pop %v5175
  %v5177 = vadd.f32 %v5176, 1.0
  %v5178 = vrcp.pop %v5177
  %v5179 = vmul.f32 1.0, %v5178
  %v5180 = vmul.f32 %v5172, %v5163
  %v5181 = vadd.f32 %v4974, %v5180
  %v5182 = vtanh.pop %v5181
  %v5183 = vsub.f32 1.0, %v5179
  %v5184 = vmul.f32 %v5183, %v5182
  %v5185 = vmul.f32 %v5179, %v4172
  %v5186 = vadd.f32 %v5184, %v5185
  %s5187 = scalar_lea.vmem %s6, 32
  %5188 = vst [vmem:[%s5187] sm:$0xff] %v5186
  %s5189 = scalar_lea.vmem %s0, 120
  %v5190 = vld [vmem:[%s5189] sm:$0xff]
  %v5191 = vld [vmem:[%s5189 + $0x8] sm:$0xff]
  %v5192 = vld [vmem:[%s5189 + $0x10] sm:$0xff]
  %v5193 = vld [vmem:[%s2] sm:$0xff]
  %v5194 = vld [vmem:[%s2 + $0x8] sm:$0xff]
  %v5195 = vld [vmem:[%s2 + $0x10] sm:$0xff]
  %v5196 = vld [vmem:[%s2 + $0x18] sm:$0xff]
  %v5197 = vld [vmem:[%s2 + $0x20] sm:$0xff]
  %v5198 = vld [vmem:[%s2 + $0x28] sm:$0xff]
  %v5199 = vld [vmem:[%s2 + $0x30] sm:$0xff]
  %v5200 = vld [vmem:[%s2 + $0x38] sm:$0xff]
  %v5201 = vld [vmem:[%s2 + $0x40] sm:$0xff]
  %v5202 = vld [vmem:[%s2 + $0x48] sm:$0xff]
  %v5203 = vld [vmem:[%s2 + $0x50] sm:$0xff]
  %v5204 = vld [vmem:[%s2 + $0x58] sm:$0xff]
  %v5205 = vld [vmem:[%s2 + $0x60] sm:$0xff]
  %v5206 = vld [vmem:[%s2 + $0x68] sm:$0xff]
  %v5207 = vld [vmem:[%s2 + $0x70] sm:$0xff]
  %v5208 = vld [vmem:[%s2 + $0x78] sm:$0xff]
  %v5209 = vld [vmem:[%s2 + $0x80] sm:$0xff]
  %v5210 = vld [vmem:[%s2 + $0x88] sm:$0xff]
  %v5211 = vld [vmem:[%s2 + $0x90] sm:$0xff]
  %v5212 = vld [vmem:[%s2 + $0x98] sm:$0xff]
  %v5213 = vld [vmem:[%s2 + $0xa0] sm:$0xff]
  %v5214 = vld [vmem:[%s2 + $0xa8] sm:$0xff]
  %v5215 = vld [vmem:[%s2 + $0xb0] sm:$0xff]
  %v5216 = vld [vmem:[%s2 + $0xb8] sm:$0xff]
  %v5217 = vld [vmem:[%s2 + $0xc0] sm:$0xff]
  %v5218 = vld [vmem:[%s2 + $0xc8] sm:$0xff]
  %v5219 = vld [vmem:[%s2 + $0xd0] sm:$0xff]
  %v5220 = vld [vmem:[%s2 + $0xd8] sm:$0xff]
  %v5221 = vld [vmem:[%s2 + $0xe0] sm:$0xff]
  %v5222 = vld [vmem:[%s2 + $0xe8] sm:$0xff]
  %v5223 = vld [vmem:[%s2 + $0xf0] sm:$0xff]
  %v5224 = vld [vmem:[%s2 + $0xf8] sm:$0xff]
  %v5225 = vld [vmem:[%s2 + $0x100] sm:$0xff]
  %v5226 = vld [vmem:[%s2 + $0x108] sm:$0xff]
  %v5227 = vld [vmem:[%s2 + $0x110] sm:$0xff]
  %v5228 = vld [vmem:[%s2 + $0x118] sm:$0xff]
  %v5229 = vld [vmem:[%s2 + $0x120] sm:$0xff]
  %v5230 = vld [vmem:[%s2 + $0x128] sm:$0xff]
  %v5231 = vld [vmem:[%s2 + $0x130] sm:$0xff]
  %v5232 = vld [vmem:[%s2 + $0x138] sm:$0xff]
  %v5233 = vld [vmem:[%s2 + $0x140] sm:$0xff]
  %v5234 = vld [vmem:[%s2 + $0x148] sm:$0xff]
  %v5235 = vld [vmem:[%s2 + $0x150] sm:$0xff]
  %v5236 = vld [vmem:[%s2 + $0x158] sm:$0xff]
  %v5237 = vld [vmem:[%s2 + $0x160] sm:$0xff]
  %v5238 = vld [vmem:[%s2 + $0x168] sm:$0xff]
  %v5239 = vld [vmem:[%s2 + $0x170] sm:$0xff]
  %v5240 = vld [vmem:[%s2 + $0x178] sm:$0xff]
  %5241 = vmatprep.subr.mxu0 %v5239
  %5242 = vmatpush1.msra.mxu0 %v5238
  %5243 = vmatprep.subr.mxu0 %v5236
  %5244 = vmatpush1.msra.mxu0 %v5235
  %5245 = vmatprep.subr.mxu0 %v5233
  %5246 = vmatpush1.msra.mxu0 %v5232
  %5247 = vmatprep.subr.mxu0 %v5230
  %5248 = vmatpush1.msra.mxu0 %v5229
  %5249 = vmatprep.subr.mxu0 %v5227
  %5250 = vmatpush1.msra.mxu0 %v5226
  %5251 = vmatprep.subr.mxu0 %v5224
  %5252 = vmatpush1.msra.mxu0 %v5223
  %5253 = vmatprep.subr.mxu0 %v5221
  %5254 = vmatpush1.msra.mxu0 %v5220
  %5255 = vmatprep.subr.mxu0 %v5218
  %5256 = vmatpush1.msra.mxu0 %v5217
  %5257 = vmatprep.subr.mxu0 %v5215
  %5258 = vmatpush1.msra.mxu0 %v5214
  %5259 = vmatprep.subr.mxu0 %v5212
  %5260 = vmatpush1.msra.mxu0 %v5211
  %5261 = vmatprep.subr.mxu0 %v5209
  %5262 = vmatpush1.msra.mxu0 %v5208
  %5263 = vmatprep.subr.mxu0 %v5206
  %5264 = vmatpush1.msra.mxu0 %v5205
  %5265 = vmatprep.subr.mxu0 %v5203
  %5266 = vmatpush1.msra.mxu0 %v5202
  %5267 = vmatprep.subr.mxu0 %v5200
  %5268 = vmatpush1.msra.mxu0 %v5199
  %5269 = vmatprep.subr.mxu0 %v5197
  %5270 = vmatpush1.msra.mxu0 %v5196
  %5271 = vmatprep.subr.mxu0 %v5194
  %5272 = vmatpush1.msra.mxu0 %v5193
  %5273 = vmatprep.subr.mxu0 0.0
  %5274 = vmatpush2.msra.mxu0 0.0
  %5275 = vmatprep.subr.mxu0 0.0
  %5276 = vmatpush2.msra.mxu0 0.0
  %5277 = vmatprep.subr.mxu0 0.0
  %5278 = vmatpush2.msra.mxu0 0.0
  %5279 = vmatprep.subr.mxu0 0.0
  %5280 = vmatpush2.msra.mxu0 0.0
  %5281 = vmatprep.subr.mxu0 0.0
  %5282 = vmatpush2.msra.mxu0 0.0
  %5283 = vmatprep.subr.mxu0 0.0
  %5284 = vmatpush2.msra.mxu0 0.0
  %5285 = vmatprep.subr.mxu0 0.0
  %5286 = vmatpush2.msra.mxu0 0.0
  %5287 = vmatprep.subr.mxu0 0.0
  %5288 = vmatpush2.msra.mxu0 0.0
  %5289 = vmatprep.subr.mxu0 0.0
  %5290 = vmatpush2.msra.mxu0 0.0
  %5291 = vmatprep.subr.mxu0 0.0
  %5292 = vmatpush2.msra.mxu0 0.0
  %5293 = vmatprep.subr.mxu0 0.0
  %5294 = vmatpush2.msra.mxu0 0.0
  %5295 = vmatprep.subr.mxu0 0.0
  %5296 = vmatpush2.msra.mxu0 0.0
  %5297 = vmatprep.subr.mxu0 0.0
  %5298 = vmatpush2.msra.mxu0 0.0
  %5299 = vmatprep.subr.mxu0 0.0
  %5300 = vmatpush2.msra.mxu0 0.0
  %5301 = vmatprep.subr.mxu0 0.0
  %5302 = vmatpush2.msra.mxu0 0.0
  %5303 = vmatprep.subr.mxu0 0.0
  %5304 = vmatpush2.msra.mxu0 0.0
  %5305 = vmatprep.mubr.f32.mxu0 0.0
  %5306 = vmatmul.mubr.f32.gmra.mxu0 %v4388
  %v5307 = vpop.f32.mrf.mxu0
  %v5308 = vadd.f32 %v65, %v5307
  %v5309 = vpop.f32.mrf.mxu0
  %v5310 = vadd.f32 %v69, %v5309
  %5311 = vdwg.mxu0
  %5312 = vmatprep.subr.mxu0 0.0
  %5313 = vmatpush1.msra.mxu0 %v5240
  %5314 = vmatprep.subr.mxu0 0.0
  %5315 = vmatpush1.msra.mxu0 %v5237
  %5316 = vmatprep.subr.mxu0 0.0
  %5317 = vmatpush1.msra.mxu0 %v5234
  %5318 = vmatprep.subr.mxu0 0.0
  %5319 = vmatpush1.msra.mxu0 %v5231
  %5320 = vmatprep.subr.mxu0 0.0
  %5321 = vmatpush1.msra.mxu0 %v5228
  %5322 = vmatprep.subr.mxu0 0.0
  %5323 = vmatpush1.msra.mxu0 %v5225
  %5324 = vmatprep.subr.mxu0 0.0
  %5325 = vmatpush1.msra.mxu0 %v5222
  %5326 = vmatprep.subr.mxu0 0.0
  %5327 = vmatpush1.msra.mxu0 %v5219
  %5328 = vmatprep.subr.mxu0 0.0
  %5329 = vmatpush1.msra.mxu0 %v5216
  %5330 = vmatprep.subr.mxu0 0.0
  %5331 = vmatpush1.msra.mxu0 %v5213
  %5332 = vmatprep.subr.mxu0 0.0
  %5333 = vmatpush1.msra.mxu0 %v5210
  %5334 = vmatprep.subr.mxu0 0.0
  %5335 = vmatpush1.msra.mxu0 %v5207
  %5336 = vmatprep.subr.mxu0 0.0
  %5337 = vmatpush1.msra.mxu0 %v5204
  %5338 = vmatprep.subr.mxu0 0.0
  %5339 = vmatpush1.msra.mxu0 %v5201
  %5340 = vmatprep.subr.mxu0 0.0
  %5341 = vmatpush1.msra.mxu0 %v5198
  %5342 = vmatprep.subr.mxu0 0.0
  %5343 = vmatpush1.msra.mxu0 %v5195
  %5344 = vmatprep.subr.mxu0 0.0
  %5345 = vmatpush2.msra.mxu0 0.0
  %5346 = vmatprep.subr.mxu0 0.0
  %5347 = vmatpush2.msra.mxu0 0.0
  %5348 = vmatprep.subr.mxu0 0.0
  %5349 = vmatpush2.msra.mxu0 0.0
  %5350 = vmatprep.subr.mxu0 0.0
  %5351 = vmatpush2.msra.mxu0 0.0
  %5352 = vmatprep.subr.mxu0 0.0
  %5353 = vmatpush2.msra.mxu0 0.0
  %5354 = vmatprep.subr.mxu0 0.0
  %5355 = vmatpush2.msra.mxu0 0.0
  %5356 = vmatprep.subr.mxu0 0.0
  %5357 = vmatpush2.msra.mxu0 0.0
  %5358 = vmatprep.subr.mxu0 0.0
  %5359 = vmatpush2.msra.mxu0 0.0
  %5360 = vmatprep.subr.mxu0 0.0
  %5361 = vmatpush2.msra.mxu0 0.0
  %5362 = vmatprep.subr.mxu0 0.0
  %5363 = vmatpush2.msra.mxu0 0.0
  %5364 = vmatprep.subr.mxu0 0.0
  %5365 = vmatpush2.msra.mxu0 0.0
  %5366 = vmatprep.subr.mxu0 0.0
  %5367 = vmatpush2.msra.mxu0 0.0
  %5368 = vmatprep.subr.mxu0 0.0
  %5369 = vmatpush2.msra.mxu0 0.0
  %5370 = vmatprep.subr.mxu0 0.0
  %5371 = vmatpush2.msra.mxu0 0.0
  %5372 = vmatprep.subr.mxu0 0.0
  %5373 = vmatpush2.msra.mxu0 0.0
  %5374 = vmatprep.subr.mxu0 0.0
  %5375 = vmatpush2.msra.mxu0 0.0
  %5376 = vmatprep.mubr.f32.mxu0 0.0
  %5377 = vmatmul.mubr.f32.gmra.mxu0 %v4388
  %v5378 = vpop.f32.mrf.mxu0
  %v5379 = vadd.f32 %v73, %v5378
  %v5380 = vpop.f32.mrf.mxu0
  %5381 = vdwg.mxu0
  %v5382 = vadd.f32 %v5190, %v5308
  %v5383 = vxor.u32 %v5382, 2147483648
  %v5384 = vmul.f32 %v5383, 1.442695
  %v5385 = vpow.pop %v5384
  %v5386 = vadd.f32 %v5385, 1.0
  %v5387 = vrcp.pop %v5386
  %v5388 = vmul.f32 1.0, %v5387
  %v5389 = vadd.f32 %v5191, %v5310
  %v5390 = vxor.u32 %v5389, 2147483648
  %v5391 = vmul.f32 %v5390, 1.442695
  %v5392 = vpow.pop %v5391
  %v5393 = vadd.f32 %v5392, 1.0
  %v5394 = vrcp.pop %v5393
  %v5395 = vmul.f32 1.0, %v5394
  %v5396 = vmul.f32 %v5388, %v5379
  %v5397 = vadd.f32 %v5192, %v5396
  %v5398 = vtanh.pop %v5397
  %v5399 = vsub.f32 1.0, %v5395
  %v5400 = vmul.f32 %v5399, %v5398
  %v5401 = vmul.f32 %v5395, %v4388
  %v5402 = vadd.f32 %v5400, %v5401
  %v5403 = vld [vmem:[%s3] sm:$0xff]
  %v5404 = vld [vmem:[%s3 + $0x8] sm:$0xff]
  %v5405 = vld [vmem:[%s3 + $0x10] sm:$0xff]
  %v5406 = vld [vmem:[%s3 + $0x18] sm:$0xff]
  %v5407 = vld [vmem:[%s3 + $0x20] sm:$0xff]
  %v5408 = vld [vmem:[%s3 + $0x28] sm:$0xff]
  %v5409 = vld [vmem:[%s3 + $0x30] sm:$0xff]
  %v5410 = vld [vmem:[%s3 + $0x38] sm:$0xff]
  %v5411 = vld [vmem:[%s3 + $0x40] sm:$0xff]
  %v5412 = vld [vmem:[%s3 + $0x48] sm:$0xff]
  %v5413 = vld [vmem:[%s3 + $0x50] sm:$0xff]
  %v5414 = vld [vmem:[%s3 + $0x58] sm:$0xff]
  %v5415 = vld [vmem:[%s3 + $0x60] sm:$0xff]
  %v5416 = vld [vmem:[%s3 + $0x68] sm:$0xff]
  %v5417 = vld [vmem:[%s3 + $0x70] sm:$0xff]
  %v5418 = vld [vmem:[%s3 + $0x78] sm:$0xff]
  %v5419 = vld [vmem:[%s3 + $0x80] sm:$0xff]
  %v5420 = vld [vmem:[%s3 + $0x88] sm:$0xff]
  %v5421 = vld [vmem:[%s3 + $0x90] sm:$0xff]
  %v5422 = vld [vmem:[%s3 + $0x98] sm:$0xff]
  %v5423 = vld [vmem:[%s3 + $0xa0] sm:$0xff]
  %v5424 = vld [vmem:[%s3 + $0xa8] sm:$0xff]
  %v5425 = vld [vmem:[%s3 + $0xb0] sm:$0xff]
  %v5426 = vld [vmem:[%s3 + $0xb8] sm:$0xff]
  %v5427 = vld [vmem:[%s3 + $0xc0] sm:$0xff]
  %v5428 = vld [vmem:[%s3 + $0xc8] sm:$0xff]
  %v5429 = vld [vmem:[%s3 + $0xd0] sm:$0xff]
  %v5430 = vld [vmem:[%s3 + $0xd8] sm:$0xff]
  %v5431 = vld [vmem:[%s3 + $0xe0] sm:$0xff]
  %v5432 = vld [vmem:[%s3 + $0xe8] sm:$0xff]
  %v5433 = vld [vmem:[%s3 + $0xf0] sm:$0xff]
  %v5434 = vld [vmem:[%s3 + $0xf8] sm:$0xff]
  %v5435 = vld [vmem:[%s3 + $0x100] sm:$0xff]
  %v5436 = vld [vmem:[%s3 + $0x108] sm:$0xff]
  %v5437 = vld [vmem:[%s3 + $0x110] sm:$0xff]
  %v5438 = vld [vmem:[%s3 + $0x118] sm:$0xff]
  %v5439 = vld [vmem:[%s3 + $0x120] sm:$0xff]
  %v5440 = vld [vmem:[%s3 + $0x128] sm:$0xff]
  %v5441 = vld [vmem:[%s3 + $0x130] sm:$0xff]
  %v5442 = vld [vmem:[%s3 + $0x138] sm:$0xff]
  %v5443 = vld [vmem:[%s3 + $0x140] sm:$0xff]
  %v5444 = vld [vmem:[%s3 + $0x148] sm:$0xff]
  %v5445 = vld [vmem:[%s3 + $0x150] sm:$0xff]
  %v5446 = vld [vmem:[%s3 + $0x158] sm:$0xff]
  %v5447 = vld [vmem:[%s3 + $0x160] sm:$0xff]
  %v5448 = vld [vmem:[%s3 + $0x168] sm:$0xff]
  %v5449 = vld [vmem:[%s3 + $0x170] sm:$0xff]
  %v5450 = vld [vmem:[%s3 + $0x178] sm:$0xff]
  %5451 = vmatprep.subr.mxu0 %v5449
  %5452 = vmatpush1.msra.mxu0 %v5448
  %5453 = vmatprep.subr.mxu0 %v5446
  %5454 = vmatpush1.msra.mxu0 %v5445
  %5455 = vmatprep.subr.mxu0 %v5443
  %5456 = vmatpush1.msra.mxu0 %v5442
  %5457 = vmatprep.subr.mxu0 %v5440
  %5458 = vmatpush1.msra.mxu0 %v5439
  %5459 = vmatprep.subr.mxu0 %v5437
  %5460 = vmatpush1.msra.mxu0 %v5436
  %5461 = vmatprep.subr.mxu0 %v5434
  %5462 = vmatpush1.msra.mxu0 %v5433
  %5463 = vmatprep.subr.mxu0 %v5431
  %5464 = vmatpush1.msra.mxu0 %v5430
  %5465 = vmatprep.subr.mxu0 %v5428
  %5466 = vmatpush1.msra.mxu0 %v5427
  %5467 = vmatprep.subr.mxu0 %v5425
  %5468 = vmatpush1.msra.mxu0 %v5424
  %5469 = vmatprep.subr.mxu0 %v5422
  %5470 = vmatpush1.msra.mxu0 %v5421
  %5471 = vmatprep.subr.mxu0 %v5419
  %5472 = vmatpush1.msra.mxu0 %v5418
  %5473 = vmatprep.subr.mxu0 %v5416
  %5474 = vmatpush1.msra.mxu0 %v5415
  %5475 = vmatprep.subr.mxu0 %v5413
  %5476 = vmatpush1.msra.mxu0 %v5412
  %5477 = vmatprep.subr.mxu0 %v5410
  %5478 = vmatpush1.msra.mxu0 %v5409
  %5479 = vmatprep.subr.mxu0 %v5407
  %5480 = vmatpush1.msra.mxu0 %v5406
  %5481 = vmatprep.subr.mxu0 %v5404
  %5482 = vmatpush1.msra.mxu0 %v5403
  %5483 = vmatprep.subr.mxu0 0.0
  %5484 = vmatpush2.msra.mxu0 0.0
  %5485 = vmatprep.subr.mxu0 0.0
  %5486 = vmatpush2.msra.mxu0 0.0
  %5487 = vmatprep.subr.mxu0 0.0
  %5488 = vmatpush2.msra.mxu0 0.0
  %5489 = vmatprep.subr.mxu0 0.0
  %5490 = vmatpush2.msra.mxu0 0.0
  %5491 = vmatprep.subr.mxu0 0.0
  %5492 = vmatpush2.msra.mxu0 0.0
  %5493 = vmatprep.subr.mxu0 0.0
  %5494 = vmatpush2.msra.mxu0 0.0
  %5495 = vmatprep.subr.mxu0 0.0
  %5496 = vmatpush2.msra.mxu0 0.0
  %5497 = vmatprep.subr.mxu0 0.0
  %5498 = vmatpush2.msra.mxu0 0.0
  %5499 = vmatprep.subr.mxu0 0.0
  %5500 = vmatpush2.msra.mxu0 0.0
  %5501 = vmatprep.subr.mxu0 0.0
  %5502 = vmatpush2.msra.mxu0 0.0
  %5503 = vmatprep.subr.mxu0 0.0
  %5504 = vmatpush2.msra.mxu0 0.0
  %5505 = vmatprep.subr.mxu0 0.0
  %5506 = vmatpush2.msra.mxu0 0.0
  %5507 = vmatprep.subr.mxu0 0.0
  %5508 = vmatpush2.msra.mxu0 0.0
  %5509 = vmatprep.subr.mxu0 0.0
  %5510 = vmatpush2.msra.mxu0 0.0
  %5511 = vmatprep.subr.mxu0 0.0
  %5512 = vmatpush2.msra.mxu0 0.0
  %5513 = vmatprep.subr.mxu0 0.0
  %5514 = vmatpush2.msra.mxu0 0.0
  %5515 = vmatprep.mubr.f32.mxu0 0.0
  %5516 = vmatmul.mubr.f32.gmra.mxu0 %v5402
  %v5517 = vpop.f32.mrf.mxu0
  %v5518 = vadd.f32 %v30, %v5517
  %v5519 = vpop.f32.mrf.mxu0
  %v5520 = vadd.f32 %v34, %v5519
  %5521 = vdwg.mxu0
  %5522 = vmatprep.subr.mxu0 0.0
  %5523 = vmatpush1.msra.mxu0 %v5450
  %5524 = vmatprep.subr.mxu0 0.0
  %5525 = vmatpush1.msra.mxu0 %v5447
  %5526 = vmatprep.subr.mxu0 0.0
  %5527 = vmatpush1.msra.mxu0 %v5444
  %5528 = vmatprep.subr.mxu0 0.0
  %5529 = vmatpush1.msra.mxu0 %v5441
  %5530 = vmatprep.subr.mxu0 0.0
  %5531 = vmatpush1.msra.mxu0 %v5438
  %5532 = vmatprep.subr.mxu0 0.0
  %5533 = vmatpush1.msra.mxu0 %v5435
  %5534 = vmatprep.subr.mxu0 0.0
  %5535 = vmatpush1.msra.mxu0 %v5432
  %5536 = vmatprep.subr.mxu0 0.0
  %5537 = vmatpush1.msra.mxu0 %v5429
  %5538 = vmatprep.subr.mxu0 0.0
  %5539 = vmatpush1.msra.mxu0 %v5426
  %5540 = vmatprep.subr.mxu0 0.0
  %5541 = vmatpush1.msra.mxu0 %v5423
  %5542 = vmatprep.subr.mxu0 0.0
  %5543 = vmatpush1.msra.mxu0 %v5420
  %5544 = vmatprep.subr.mxu0 0.0
  %5545 = vmatpush1.msra.mxu0 %v5417
  %5546 = vmatprep.subr.mxu0 0.0
  %5547 = vmatpush1.msra.mxu0 %v5414
  %5548 = vmatprep.subr.mxu0 0.0
  %5549 = vmatpush1.msra.mxu0 %v5411
  %5550 = vmatprep.subr.mxu0 0.0
  %5551 = vmatpush1.msra.mxu0 %v5408
  %5552 = vmatprep.subr.mxu0 0.0
  %5553 = vmatpush1.msra.mxu0 %v5405
  %5554 = vmatprep.subr.mxu0 0.0
  %5555 = vmatpush2.msra.mxu0 0.0
  %5556 = vmatprep.subr.mxu0 0.0
  %5557 = vmatpush2.msra.mxu0 0.0
  %5558 = vmatprep.subr.mxu0 0.0
  %5559 = vmatpush2.msra.mxu0 0.0
  %5560 = vmatprep.subr.mxu0 0.0
  %5561 = vmatpush2.msra.mxu0 0.0
  %5562 = vmatprep.subr.mxu0 0.0
  %5563 = vmatpush2.msra.mxu0 0.0
  %5564 = vmatprep.subr.mxu0 0.0
  %5565 = vmatpush2.msra.mxu0 0.0
  %5566 = vmatprep.subr.mxu0 0.0
  %5567 = vmatpush2.msra.mxu0 0.0
  %5568 = vmatprep.subr.mxu0 0.0
  %5569 = vmatpush2.msra.mxu0 0.0
  %5570 = vmatprep.subr.mxu0 0.0
  %5571 = vmatpush2.msra.mxu0 0.0
  %5572 = vmatprep.subr.mxu0 0.0
  %5573 = vmatpush2.msra.mxu0 0.0
  %5574 = vmatprep.subr.mxu0 0.0
  %5575 = vmatpush2.msra.mxu0 0.0
  %5576 = vmatprep.subr.mxu0 0.0
  %5577 = vmatpush2.msra.mxu0 0.0
  %5578 = vmatprep.subr.mxu0 0.0
  %5579 = vmatpush2.msra.mxu0 0.0
  %5580 = vmatprep.subr.mxu0 0.0
  %5581 = vmatpush2.msra.mxu0 0.0
  %5582 = vmatprep.subr.mxu0 0.0
  %5583 = vmatpush2.msra.mxu0 0.0
  %5584 = vmatprep.subr.mxu0 0.0
  %5585 = vmatpush2.msra.mxu0 0.0
  %5586 = vmatprep.mubr.f32.mxu0 0.0
  %5587 = vmatmul.mubr.f32.gmra.mxu0 %v5402
  %v5588 = vpop.f32.mrf.mxu0
  %v5589 = vadd.f32 %v38, %v5588
  %v5590 = vpop.f32.mrf.mxu0
  %5591 = vdwg.mxu0
  %v5592 = vld [vmem:[%s520] sm:$0xff]
  %v5593 = vld [vmem:[%s520 + $0x8] sm:$0xff]
  %v5594 = vld [vmem:[%s520 + $0x10] sm:$0xff]
  %v5595 = vld [vmem:[%s520 + $0x18] sm:$0xff]
  %v5596 = vld [vmem:[%s520 + $0x20] sm:$0xff]
  %v5597 = vld [vmem:[%s520 + $0x28] sm:$0xff]
  %v5598 = vld [vmem:[%s520 + $0x30] sm:$0xff]
  %v5599 = vld [vmem:[%s520 + $0x38] sm:$0xff]
  %v5600 = vld [vmem:[%s520 + $0x40] sm:$0xff]
  %v5601 = vld [vmem:[%s520 + $0x48] sm:$0xff]
  %v5602 = vld [vmem:[%s520 + $0x50] sm:$0xff]
  %v5603 = vld [vmem:[%s520 + $0x58] sm:$0xff]
  %v5604 = vld [vmem:[%s520 + $0x60] sm:$0xff]
  %v5605 = vld [vmem:[%s520 + $0x68] sm:$0xff]
  %v5606 = vld [vmem:[%s520 + $0x70] sm:$0xff]
  %v5607 = vld [vmem:[%s520 + $0x78] sm:$0xff]
  %v5608 = vld [vmem:[%s520 + $0x80] sm:$0xff]
  %v5609 = vld [vmem:[%s520 + $0x88] sm:$0xff]
  %v5610 = vld [vmem:[%s520 + $0x90] sm:$0xff]
  %v5611 = vld [vmem:[%s520 + $0x98] sm:$0xff]
  %v5612 = vld [vmem:[%s520 + $0xa0] sm:$0xff]
  %v5613 = vld [vmem:[%s520 + $0xa8] sm:$0xff]
  %v5614 = vld [vmem:[%s520 + $0xb0] sm:$0xff]
  %v5615 = vld [vmem:[%s520 + $0xb8] sm:$0xff]
  %v5616 = vld [vmem:[%s520 + $0xc0] sm:$0xff]
  %v5617 = vld [vmem:[%s520 + $0xc8] sm:$0xff]
  %v5618 = vld [vmem:[%s520 + $0xd0] sm:$0xff]
  %v5619 = vld [vmem:[%s520 + $0xd8] sm:$0xff]
  %v5620 = vld [vmem:[%s520 + $0xe0] sm:$0xff]
  %v5621 = vld [vmem:[%s520 + $0xe8] sm:$0xff]
  %v5622 = vld [vmem:[%s520 + $0xf0] sm:$0xff]
  %v5623 = vld [vmem:[%s520 + $0xf8] sm:$0xff]
  %v5624 = vld [vmem:[%s520 + $0x100] sm:$0xff]
  %v5625 = vld [vmem:[%s520 + $0x108] sm:$0xff]
  %v5626 = vld [vmem:[%s520 + $0x110] sm:$0xff]
  %v5627 = vld [vmem:[%s520 + $0x118] sm:$0xff]
  %v5628 = vld [vmem:[%s520 + $0x120] sm:$0xff]
  %v5629 = vld [vmem:[%s520 + $0x128] sm:$0xff]
  %v5630 = vld [vmem:[%s520 + $0x130] sm:$0xff]
  %v5631 = vld [vmem:[%s520 + $0x138] sm:$0xff]
  %v5632 = vld [vmem:[%s520 + $0x140] sm:$0xff]
  %v5633 = vld [vmem:[%s520 + $0x148] sm:$0xff]
  %v5634 = vld [vmem:[%s520 + $0x150] sm:$0xff]
  %v5635 = vld [vmem:[%s520 + $0x158] sm:$0xff]
  %v5636 = vld [vmem:[%s520 + $0x160] sm:$0xff]
  %v5637 = vld [vmem:[%s520 + $0x168] sm:$0xff]
  %v5638 = vld [vmem:[%s520 + $0x170] sm:$0xff]
  %v5639 = vld [vmem:[%s520 + $0x178] sm:$0xff]
  %5640 = vmatprep.subr.mxu0 %v5638
  %5641 = vmatpush1.msra.mxu0 %v5637
  %5642 = vmatprep.subr.mxu0 %v5635
  %5643 = vmatpush1.msra.mxu0 %v5634
  %5644 = vmatprep.subr.mxu0 %v5632
  %5645 = vmatpush1.msra.mxu0 %v5631
  %5646 = vmatprep.subr.mxu0 %v5629
  %5647 = vmatpush1.msra.mxu0 %v5628
  %5648 = vmatprep.subr.mxu0 %v5626
  %5649 = vmatpush1.msra.mxu0 %v5625
  %5650 = vmatprep.subr.mxu0 %v5623
  %5651 = vmatpush1.msra.mxu0 %v5622
  %5652 = vmatprep.subr.mxu0 %v5620
  %5653 = vmatpush1.msra.mxu0 %v5619
  %5654 = vmatprep.subr.mxu0 %v5617
  %5655 = vmatpush1.msra.mxu0 %v5616
  %5656 = vmatprep.subr.mxu0 %v5614
  %5657 = vmatpush1.msra.mxu0 %v5613
  %5658 = vmatprep.subr.mxu0 %v5611
  %5659 = vmatpush1.msra.mxu0 %v5610
  %5660 = vmatprep.subr.mxu0 %v5608
  %5661 = vmatpush1.msra.mxu0 %v5607
  %5662 = vmatprep.subr.mxu0 %v5605
  %5663 = vmatpush1.msra.mxu0 %v5604
  %5664 = vmatprep.subr.mxu0 %v5602
  %5665 = vmatpush1.msra.mxu0 %v5601
  %5666 = vmatprep.subr.mxu0 %v5599
  %5667 = vmatpush1.msra.mxu0 %v5598
  %5668 = vmatprep.subr.mxu0 %v5596
  %5669 = vmatpush1.msra.mxu0 %v5595
  %5670 = vmatprep.subr.mxu0 %v5593
  %5671 = vmatpush1.msra.mxu0 %v5592
  %5672 = vmatprep.subr.mxu0 0.0
  %5673 = vmatpush2.msra.mxu0 0.0
  %5674 = vmatprep.subr.mxu0 0.0
  %5675 = vmatpush2.msra.mxu0 0.0
  %5676 = vmatprep.subr.mxu0 0.0
  %5677 = vmatpush2.msra.mxu0 0.0
  %5678 = vmatprep.subr.mxu0 0.0
  %5679 = vmatpush2.msra.mxu0 0.0
  %5680 = vmatprep.subr.mxu0 0.0
  %5681 = vmatpush2.msra.mxu0 0.0
  %5682 = vmatprep.subr.mxu0 0.0
  %5683 = vmatpush2.msra.mxu0 0.0
  %5684 = vmatprep.subr.mxu0 0.0
  %5685 = vmatpush2.msra.mxu0 0.0
  %5686 = vmatprep.subr.mxu0 0.0
  %5687 = vmatpush2.msra.mxu0 0.0
  %5688 = vmatprep.subr.mxu0 0.0
  %5689 = vmatpush2.msra.mxu0 0.0
  %5690 = vmatprep.subr.mxu0 0.0
  %5691 = vmatpush2.msra.mxu0 0.0
  %5692 = vmatprep.subr.mxu0 0.0
  %5693 = vmatpush2.msra.mxu0 0.0
  %5694 = vmatprep.subr.mxu0 0.0
  %5695 = vmatpush2.msra.mxu0 0.0
  %5696 = vmatprep.subr.mxu0 0.0
  %5697 = vmatpush2.msra.mxu0 0.0
  %5698 = vmatprep.subr.mxu0 0.0
  %5699 = vmatpush2.msra.mxu0 0.0
  %5700 = vmatprep.subr.mxu0 0.0
  %5701 = vmatpush2.msra.mxu0 0.0
  %5702 = vmatprep.subr.mxu0 0.0
  %5703 = vmatpush2.msra.mxu0 0.0
  %5704 = vmatprep.mubr.f32.mxu0 0.0
  %5705 = vmatmul.mubr.f32.gmra.mxu0 %v4787
  %v5706 = vpop.f32.mrf.mxu0
  %v5707 = vadd.f32 %v83, %v5706
  %v5708 = vpop.f32.mrf.mxu0
  %v5709 = vadd.f32 %v87, %v5708
  %5710 = vdwg.mxu0
  %5711 = vmatprep.subr.mxu0 0.0
  %5712 = vmatpush1.msra.mxu0 %v5639
  %5713 = vmatprep.subr.mxu0 0.0
  %5714 = vmatpush1.msra.mxu0 %v5636
  %5715 = vmatprep.subr.mxu0 0.0
  %5716 = vmatpush1.msra.mxu0 %v5633
  %5717 = vmatprep.subr.mxu0 0.0
  %5718 = vmatpush1.msra.mxu0 %v5630
  %5719 = vmatprep.subr.mxu0 0.0
  %5720 = vmatpush1.msra.mxu0 %v5627
  %5721 = vmatprep.subr.mxu0 0.0
  %5722 = vmatpush1.msra.mxu0 %v5624
  %5723 = vmatprep.subr.mxu0 0.0
  %5724 = vmatpush1.msra.mxu0 %v5621
  %5725 = vmatprep.subr.mxu0 0.0
  %5726 = vmatpush1.msra.mxu0 %v5618
  %5727 = vmatprep.subr.mxu0 0.0
  %5728 = vmatpush1.msra.mxu0 %v5615
  %5729 = vmatprep.subr.mxu0 0.0
  %5730 = vmatpush1.msra.mxu0 %v5612
  %5731 = vmatprep.subr.mxu0 0.0
  %5732 = vmatpush1.msra.mxu0 %v5609
  %5733 = vmatprep.subr.mxu0 0.0
  %5734 = vmatpush1.msra.mxu0 %v5606
  %5735 = vmatprep.subr.mxu0 0.0
  %5736 = vmatpush1.msra.mxu0 %v5603
  %5737 = vmatprep.subr.mxu0 0.0
  %5738 = vmatpush1.msra.mxu0 %v5600
  %5739 = vmatprep.subr.mxu0 0.0
  %5740 = vmatpush1.msra.mxu0 %v5597
  %5741 = vmatprep.subr.mxu0 0.0
  %5742 = vmatpush1.msra.mxu0 %v5594
  %5743 = vmatprep.subr.mxu0 0.0
  %5744 = vmatpush2.msra.mxu0 0.0
  %5745 = vmatprep.subr.mxu0 0.0
  %5746 = vmatpush2.msra.mxu0 0.0
  %5747 = vmatprep.subr.mxu0 0.0
  %5748 = vmatpush2.msra.mxu0 0.0
  %5749 = vmatprep.subr.mxu0 0.0
  %5750 = vmatpush2.msra.mxu0 0.0
  %5751 = vmatprep.subr.mxu0 0.0
  %5752 = vmatpush2.msra.mxu0 0.0
  %5753 = vmatprep.subr.mxu0 0.0
  %5754 = vmatpush2.msra.mxu0 0.0
  %5755 = vmatprep.subr.mxu0 0.0
  %5756 = vmatpush2.msra.mxu0 0.0
  %5757 = vmatprep.subr.mxu0 0.0
  %5758 = vmatpush2.msra.mxu0 0.0
  %5759 = vmatprep.subr.mxu0 0.0
  %5760 = vmatpush2.msra.mxu0 0.0
  %5761 = vmatprep.subr.mxu0 0.0
  %5762 = vmatpush2.msra.mxu0 0.0
  %5763 = vmatprep.subr.mxu0 0.0
  %5764 = vmatpush2.msra.mxu0 0.0
  %5765 = vmatprep.subr.mxu0 0.0
  %5766 = vmatpush2.msra.mxu0 0.0
  %5767 = vmatprep.subr.mxu0 0.0
  %5768 = vmatpush2.msra.mxu0 0.0
  %5769 = vmatprep.subr.mxu0 0.0
  %5770 = vmatpush2.msra.mxu0 0.0
  %5771 = vmatprep.subr.mxu0 0.0
  %5772 = vmatpush2.msra.mxu0 0.0
  %5773 = vmatprep.subr.mxu0 0.0
  %5774 = vmatpush2.msra.mxu0 0.0
  %5775 = vmatprep.mubr.f32.mxu0 0.0
  %5776 = vmatmul.mubr.f32.gmra.mxu0 %v4787
  %v5777 = vpop.f32.mrf.mxu0
  %v5778 = vadd.f32 %v91, %v5777
  %v5779 = vpop.f32.mrf.mxu0
  %5780 = vdwg.mxu0
  %v5781 = vadd.f32 %v5518, %v5707
  %v5782 = vxor.u32 %v5781, 2147483648
  %v5783 = vmul.f32 %v5782, 1.442695
  %v5784 = vpow.pop %v5783
  %v5785 = vadd.f32 %v5784, 1.0
  %v5786 = vrcp.pop %v5785
  %v5787 = vmul.f32 1.0, %v5786
  %v5788 = vadd.f32 %v5520, %v5709
  %v5789 = vxor.u32 %v5788, 2147483648
  %v5790 = vmul.f32 %v5789, 1.442695
  %v5791 = vpow.pop %v5790
  %v5792 = vadd.f32 %v5791, 1.0
  %v5793 = vrcp.pop %v5792
  %v5794 = vmul.f32 1.0, %v5793
  %v5795 = vmul.f32 %v5787, %v5778
  %v5796 = vadd.f32 %v5589, %v5795
  %v5797 = vtanh.pop %v5796
  %v5798 = vsub.f32 1.0, %v5794
  %v5799 = vmul.f32 %v5798, %v5797
  %v5800 = vmul.f32 %v5794, %v4787
  %v5801 = vadd.f32 %v5799, %v5800
  %v5802 = vld [vmem:[%s731] sm:$0xff]
  %v5803 = vld [vmem:[%s731 + $0x8] sm:$0xff]
  %v5804 = vld [vmem:[%s731 + $0x10] sm:$0xff]
  %v5805 = vld [vmem:[%s731 + $0x18] sm:$0xff]
  %v5806 = vld [vmem:[%s731 + $0x20] sm:$0xff]
  %v5807 = vld [vmem:[%s731 + $0x28] sm:$0xff]
  %v5808 = vld [vmem:[%s731 + $0x30] sm:$0xff]
  %v5809 = vld [vmem:[%s731 + $0x38] sm:$0xff]
  %v5810 = vld [vmem:[%s731 + $0x40] sm:$0xff]
  %v5811 = vld [vmem:[%s731 + $0x48] sm:$0xff]
  %v5812 = vld [vmem:[%s731 + $0x50] sm:$0xff]
  %v5813 = vld [vmem:[%s731 + $0x58] sm:$0xff]
  %v5814 = vld [vmem:[%s731 + $0x60] sm:$0xff]
  %v5815 = vld [vmem:[%s731 + $0x68] sm:$0xff]
  %v5816 = vld [vmem:[%s731 + $0x70] sm:$0xff]
  %v5817 = vld [vmem:[%s731 + $0x78] sm:$0xff]
  %v5818 = vld [vmem:[%s731 + $0x80] sm:$0xff]
  %v5819 = vld [vmem:[%s731 + $0x88] sm:$0xff]
  %v5820 = vld [vmem:[%s731 + $0x90] sm:$0xff]
  %v5821 = vld [vmem:[%s731 + $0x98] sm:$0xff]
  %v5822 = vld [vmem:[%s731 + $0xa0] sm:$0xff]
  %v5823 = vld [vmem:[%s731 + $0xa8] sm:$0xff]
  %v5824 = vld [vmem:[%s731 + $0xb0] sm:$0xff]
  %v5825 = vld [vmem:[%s731 + $0xb8] sm:$0xff]
  %v5826 = vld [vmem:[%s731 + $0xc0] sm:$0xff]
  %v5827 = vld [vmem:[%s731 + $0xc8] sm:$0xff]
  %v5828 = vld [vmem:[%s731 + $0xd0] sm:$0xff]
  %v5829 = vld [vmem:[%s731 + $0xd8] sm:$0xff]
  %v5830 = vld [vmem:[%s731 + $0xe0] sm:$0xff]
  %v5831 = vld [vmem:[%s731 + $0xe8] sm:$0xff]
  %v5832 = vld [vmem:[%s731 + $0xf0] sm:$0xff]
  %v5833 = vld [vmem:[%s731 + $0xf8] sm:$0xff]
  %v5834 = vld [vmem:[%s731 + $0x100] sm:$0xff]
  %v5835 = vld [vmem:[%s731 + $0x108] sm:$0xff]
  %v5836 = vld [vmem:[%s731 + $0x110] sm:$0xff]
  %v5837 = vld [vmem:[%s731 + $0x118] sm:$0xff]
  %v5838 = vld [vmem:[%s731 + $0x120] sm:$0xff]
  %v5839 = vld [vmem:[%s731 + $0x128] sm:$0xff]
  %v5840 = vld [vmem:[%s731 + $0x130] sm:$0xff]
  %v5841 = vld [vmem:[%s731 + $0x138] sm:$0xff]
  %v5842 = vld [vmem:[%s731 + $0x140] sm:$0xff]
  %v5843 = vld [vmem:[%s731 + $0x148] sm:$0xff]
  %v5844 = vld [vmem:[%s731 + $0x150] sm:$0xff]
  %v5845 = vld [vmem:[%s731 + $0x158] sm:$0xff]
  %v5846 = vld [vmem:[%s731 + $0x160] sm:$0xff]
  %v5847 = vld [vmem:[%s731 + $0x168] sm:$0xff]
  %v5848 = vld [vmem:[%s731 + $0x170] sm:$0xff]
  %v5849 = vld [vmem:[%s731 + $0x178] sm:$0xff]
  %5850 = vmatprep.subr.mxu0 %v5848
  %5851 = vmatpush1.msra.mxu0 %v5847
  %5852 = vmatprep.subr.mxu0 %v5845
  %5853 = vmatpush1.msra.mxu0 %v5844
  %5854 = vmatprep.subr.mxu0 %v5842
  %5855 = vmatpush1.msra.mxu0 %v5841
  %5856 = vmatprep.subr.mxu0 %v5839
  %5857 = vmatpush1.msra.mxu0 %v5838
  %5858 = vmatprep.subr.mxu0 %v5836
  %5859 = vmatpush1.msra.mxu0 %v5835
  %5860 = vmatprep.subr.mxu0 %v5833
  %5861 = vmatpush1.msra.mxu0 %v5832
  %5862 = vmatprep.subr.mxu0 %v5830
  %5863 = vmatpush1.msra.mxu0 %v5829
  %5864 = vmatprep.subr.mxu0 %v5827
  %5865 = vmatpush1.msra.mxu0 %v5826
  %5866 = vmatprep.subr.mxu0 %v5824
  %5867 = vmatpush1.msra.mxu0 %v5823
  %5868 = vmatprep.subr.mxu0 %v5821
  %5869 = vmatpush1.msra.mxu0 %v5820
  %5870 = vmatprep.subr.mxu0 %v5818
  %5871 = vmatpush1.msra.mxu0 %v5817
  %5872 = vmatprep.subr.mxu0 %v5815
  %5873 = vmatpush1.msra.mxu0 %v5814
  %5874 = vmatprep.subr.mxu0 %v5812
  %5875 = vmatpush1.msra.mxu0 %v5811
  %5876 = vmatprep.subr.mxu0 %v5809
  %5877 = vmatpush1.msra.mxu0 %v5808
  %5878 = vmatprep.subr.mxu0 %v5806
  %5879 = vmatpush1.msra.mxu0 %v5805
  %5880 = vmatprep.subr.mxu0 %v5803
  %5881 = vmatpush1.msra.mxu0 %v5802
  %5882 = vmatprep.subr.mxu0 0.0
  %5883 = vmatpush2.msra.mxu0 0.0
  %5884 = vmatprep.subr.mxu0 0.0
  %5885 = vmatpush2.msra.mxu0 0.0
  %5886 = vmatprep.subr.mxu0 0.0
  %5887 = vmatpush2.msra.mxu0 0.0
  %5888 = vmatprep.subr.mxu0 0.0
  %5889 = vmatpush2.msra.mxu0 0.0
  %5890 = vmatprep.subr.mxu0 0.0
  %5891 = vmatpush2.msra.mxu0 0.0
  %5892 = vmatprep.subr.mxu0 0.0
  %5893 = vmatpush2.msra.mxu0 0.0
  %5894 = vmatprep.subr.mxu0 0.0
  %5895 = vmatpush2.msra.mxu0 0.0
  %5896 = vmatprep.subr.mxu0 0.0
  %5897 = vmatpush2.msra.mxu0 0.0
  %5898 = vmatprep.subr.mxu0 0.0
  %5899 = vmatpush2.msra.mxu0 0.0
  %5900 = vmatprep.subr.mxu0 0.0
  %5901 = vmatpush2.msra.mxu0 0.0
  %5902 = vmatprep.subr.mxu0 0.0
  %5903 = vmatpush2.msra.mxu0 0.0
  %5904 = vmatprep.subr.mxu0 0.0
  %5905 = vmatpush2.msra.mxu0 0.0
  %5906 = vmatprep.subr.mxu0 0.0
  %5907 = vmatpush2.msra.mxu0 0.0
  %5908 = vmatprep.subr.mxu0 0.0
  %5909 = vmatpush2.msra.mxu0 0.0
  %5910 = vmatprep.subr.mxu0 0.0
  %5911 = vmatpush2.msra.mxu0 0.0
  %5912 = vmatprep.subr.mxu0 0.0
  %5913 = vmatpush2.msra.mxu0 0.0
  %5914 = vmatprep.mubr.f32.mxu0 0.0
  %5915 = vmatmul.mubr.f32.gmra.mxu0 %v5801
  %v5916 = vpop.f32.mrf.mxu0
  %v5917 = vadd.f32 %v48, %v5916
  %v5918 = vpop.f32.mrf.mxu0
  %v5919 = vadd.f32 %v52, %v5918
  %5920 = vdwg.mxu0
  %5921 = vmatprep.subr.mxu0 0.0
  %5922 = vmatpush1.msra.mxu0 %v5849
  %5923 = vmatprep.subr.mxu0 0.0
  %5924 = vmatpush1.msra.mxu0 %v5846
  %5925 = vmatprep.subr.mxu0 0.0
  %5926 = vmatpush1.msra.mxu0 %v5843
  %5927 = vmatprep.subr.mxu0 0.0
  %5928 = vmatpush1.msra.mxu0 %v5840
  %5929 = vmatprep.subr.mxu0 0.0
  %5930 = vmatpush1.msra.mxu0 %v5837
  %5931 = vmatprep.subr.mxu0 0.0
  %5932 = vmatpush1.msra.mxu0 %v5834
  %5933 = vmatprep.subr.mxu0 0.0
  %5934 = vmatpush1.msra.mxu0 %v5831
  %5935 = vmatprep.subr.mxu0 0.0
  %5936 = vmatpush1.msra.mxu0 %v5828
  %5937 = vmatprep.subr.mxu0 0.0
  %5938 = vmatpush1.msra.mxu0 %v5825
  %5939 = vmatprep.subr.mxu0 0.0
  %5940 = vmatpush1.msra.mxu0 %v5822
  %5941 = vmatprep.subr.mxu0 0.0
  %5942 = vmatpush1.msra.mxu0 %v5819
  %5943 = vmatprep.subr.mxu0 0.0
  %5944 = vmatpush1.msra.mxu0 %v5816
  %5945 = vmatprep.subr.mxu0 0.0
  %5946 = vmatpush1.msra.mxu0 %v5813
  %5947 = vmatprep.subr.mxu0 0.0
  %5948 = vmatpush1.msra.mxu0 %v5810
  %5949 = vmatprep.subr.mxu0 0.0
  %5950 = vmatpush1.msra.mxu0 %v5807
  %5951 = vmatprep.subr.mxu0 0.0
  %5952 = vmatpush1.msra.mxu0 %v5804
  %5953 = vmatprep.subr.mxu0 0.0
  %5954 = vmatpush2.msra.mxu0 0.0
  %5955 = vmatprep.subr.mxu0 0.0
  %5956 = vmatpush2.msra.mxu0 0.0
  %5957 = vmatprep.subr.mxu0 0.0
  %5958 = vmatpush2.msra.mxu0 0.0
  %5959 = vmatprep.subr.mxu0 0.0
  %5960 = vmatpush2.msra.mxu0 0.0
  %5961 = vmatprep.subr.mxu0 0.0
  %5962 = vmatpush2.msra.mxu0 0.0
  %5963 = vmatprep.subr.mxu0 0.0
  %5964 = vmatpush2.msra.mxu0 0.0
  %5965 = vmatprep.subr.mxu0 0.0
  %5966 = vmatpush2.msra.mxu0 0.0
  %5967 = vmatprep.subr.mxu0 0.0
  %5968 = vmatpush2.msra.mxu0 0.0
  %5969 = vmatprep.subr.mxu0 0.0
  %5970 = vmatpush2.msra.mxu0 0.0
  %5971 = vmatprep.subr.mxu0 0.0
  %5972 = vmatpush2.msra.mxu0 0.0
  %5973 = vmatprep.subr.mxu0 0.0
  %5974 = vmatpush2.msra.mxu0 0.0
  %5975 = vmatprep.subr.mxu0 0.0
  %5976 = vmatpush2.msra.mxu0 0.0
  %5977 = vmatprep.subr.mxu0 0.0
  %5978 = vmatpush2.msra.mxu0 0.0
  %5979 = vmatprep.subr.mxu0 0.0
  %5980 = vmatpush2.msra.mxu0 0.0
  %5981 = vmatprep.subr.mxu0 0.0
  %5982 = vmatpush2.msra.mxu0 0.0
  %5983 = vmatprep.subr.mxu0 0.0
  %5984 = vmatpush2.msra.mxu0 0.0
  %5985 = vmatprep.mubr.f32.mxu0 0.0
  %5986 = vmatmul.mubr.f32.gmra.mxu0 %v5801
  %v5987 = vpop.f32.mrf.mxu0
  %v5988 = vadd.f32 %v56, %v5987
  %v5989 = vpop.f32.mrf.mxu0
  %5990 = vdwg.mxu0
  %v5991 = vld [vmem:[%s921] sm:$0xff]
  %v5992 = vld [vmem:[%s921 + $0x8] sm:$0xff]
  %v5993 = vld [vmem:[%s921 + $0x10] sm:$0xff]
  %v5994 = vld [vmem:[%s921 + $0x18] sm:$0xff]
  %v5995 = vld [vmem:[%s921 + $0x20] sm:$0xff]
  %v5996 = vld [vmem:[%s921 + $0x28] sm:$0xff]
  %v5997 = vld [vmem:[%s921 + $0x30] sm:$0xff]
  %v5998 = vld [vmem:[%s921 + $0x38] sm:$0xff]
  %v5999 = vld [vmem:[%s921 + $0x40] sm:$0xff]
  %v6000 = vld [vmem:[%s921 + $0x48] sm:$0xff]
  %v6001 = vld [vmem:[%s921 + $0x50] sm:$0xff]
  %v6002 = vld [vmem:[%s921 + $0x58] sm:$0xff]
  %v6003 = vld [vmem:[%s921 + $0x60] sm:$0xff]
  %v6004 = vld [vmem:[%s921 + $0x68] sm:$0xff]
  %v6005 = vld [vmem:[%s921 + $0x70] sm:$0xff]
  %v6006 = vld [vmem:[%s921 + $0x78] sm:$0xff]
  %v6007 = vld [vmem:[%s921 + $0x80] sm:$0xff]
  %v6008 = vld [vmem:[%s921 + $0x88] sm:$0xff]
  %v6009 = vld [vmem:[%s921 + $0x90] sm:$0xff]
  %v6010 = vld [vmem:[%s921 + $0x98] sm:$0xff]
  %v6011 = vld [vmem:[%s921 + $0xa0] sm:$0xff]
  %v6012 = vld [vmem:[%s921 + $0xa8] sm:$0xff]
  %v6013 = vld [vmem:[%s921 + $0xb0] sm:$0xff]
  %v6014 = vld [vmem:[%s921 + $0xb8] sm:$0xff]
  %v6015 = vld [vmem:[%s921 + $0xc0] sm:$0xff]
  %v6016 = vld [vmem:[%s921 + $0xc8] sm:$0xff]
  %v6017 = vld [vmem:[%s921 + $0xd0] sm:$0xff]
  %v6018 = vld [vmem:[%s921 + $0xd8] sm:$0xff]
  %v6019 = vld [vmem:[%s921 + $0xe0] sm:$0xff]
  %v6020 = vld [vmem:[%s921 + $0xe8] sm:$0xff]
  %v6021 = vld [vmem:[%s921 + $0xf0] sm:$0xff]
  %v6022 = vld [vmem:[%s921 + $0xf8] sm:$0xff]
  %v6023 = vld [vmem:[%s921 + $0x100] sm:$0xff]
  %v6024 = vld [vmem:[%s921 + $0x108] sm:$0xff]
  %v6025 = vld [vmem:[%s921 + $0x110] sm:$0xff]
  %v6026 = vld [vmem:[%s921 + $0x118] sm:$0xff]
  %v6027 = vld [vmem:[%s921 + $0x120] sm:$0xff]
  %v6028 = vld [vmem:[%s921 + $0x128] sm:$0xff]
  %v6029 = vld [vmem:[%s921 + $0x130] sm:$0xff]
  %v6030 = vld [vmem:[%s921 + $0x138] sm:$0xff]
  %v6031 = vld [vmem:[%s921 + $0x140] sm:$0xff]
  %v6032 = vld [vmem:[%s921 + $0x148] sm:$0xff]
  %v6033 = vld [vmem:[%s921 + $0x150] sm:$0xff]
  %v6034 = vld [vmem:[%s921 + $0x158] sm:$0xff]
  %v6035 = vld [vmem:[%s921 + $0x160] sm:$0xff]
  %v6036 = vld [vmem:[%s921 + $0x168] sm:$0xff]
  %v6037 = vld [vmem:[%s921 + $0x170] sm:$0xff]
  %v6038 = vld [vmem:[%s921 + $0x178] sm:$0xff]
  %6039 = vmatprep.subr.mxu0 %v6037
  %6040 = vmatpush1.msra.mxu0 %v6036
  %6041 = vmatprep.subr.mxu0 %v6034
  %6042 = vmatpush1.msra.mxu0 %v6033
  %6043 = vmatprep.subr.mxu0 %v6031
  %6044 = vmatpush1.msra.mxu0 %v6030
  %6045 = vmatprep.subr.mxu0 %v6028
  %6046 = vmatpush1.msra.mxu0 %v6027
  %6047 = vmatprep.subr.mxu0 %v6025
  %6048 = vmatpush1.msra.mxu0 %v6024
  %6049 = vmatprep.subr.mxu0 %v6022
  %6050 = vmatpush1.msra.mxu0 %v6021
  %6051 = vmatprep.subr.mxu0 %v6019
  %6052 = vmatpush1.msra.mxu0 %v6018
  %6053 = vmatprep.subr.mxu0 %v6016
  %6054 = vmatpush1.msra.mxu0 %v6015
  %6055 = vmatprep.subr.mxu0 %v6013
  %6056 = vmatpush1.msra.mxu0 %v6012
  %6057 = vmatprep.subr.mxu0 %v6010
  %6058 = vmatpush1.msra.mxu0 %v6009
  %6059 = vmatprep.subr.mxu0 %v6007
  %6060 = vmatpush1.msra.mxu0 %v6006
  %6061 = vmatprep.subr.mxu0 %v6004
  %6062 = vmatpush1.msra.mxu0 %v6003
  %6063 = vmatprep.subr.mxu0 %v6001
  %6064 = vmatpush1.msra.mxu0 %v6000
  %6065 = vmatprep.subr.mxu0 %v5998
  %6066 = vmatpush1.msra.mxu0 %v5997
  %6067 = vmatprep.subr.mxu0 %v5995
  %6068 = vmatpush1.msra.mxu0 %v5994
  %6069 = vmatprep.subr.mxu0 %v5992
  %6070 = vmatpush1.msra.mxu0 %v5991
  %6071 = vmatprep.subr.mxu0 0.0
  %6072 = vmatpush2.msra.mxu0 0.0
  %6073 = vmatprep.subr.mxu0 0.0
  %6074 = vmatpush2.msra.mxu0 0.0
  %6075 = vmatprep.subr.mxu0 0.0
  %6076 = vmatpush2.msra.mxu0 0.0
  %6077 = vmatprep.subr.mxu0 0.0
  %6078 = vmatpush2.msra.mxu0 0.0
  %6079 = vmatprep.subr.mxu0 0.0
  %6080 = vmatpush2.msra.mxu0 0.0
  %6081 = vmatprep.subr.mxu0 0.0
  %6082 = vmatpush2.msra.mxu0 0.0
  %6083 = vmatprep.subr.mxu0 0.0
  %6084 = vmatpush2.msra.mxu0 0.0
  %6085 = vmatprep.subr.mxu0 0.0
  %6086 = vmatpush2.msra.mxu0 0.0
  %6087 = vmatprep.subr.mxu0 0.0
  %6088 = vmatpush2.msra.mxu0 0.0
  %6089 = vmatprep.subr.mxu0 0.0
  %6090 = vmatpush2.msra.mxu0 0.0
  %6091 = vmatprep.subr.mxu0 0.0
  %6092 = vmatpush2.msra.mxu0 0.0
  %6093 = vmatprep.subr.mxu0 0.0
  %6094 = vmatpush2.msra.mxu0 0.0
  %6095 = vmatprep.subr.mxu0 0.0
  %6096 = vmatpush2.msra.mxu0 0.0
  %6097 = vmatprep.subr.mxu0 0.0
  %6098 = vmatpush2.msra.mxu0 0.0
  %6099 = vmatprep.subr.mxu0 0.0
  %6100 = vmatpush2.msra.mxu0 0.0
  %6101 = vmatprep.subr.mxu0 0.0
  %6102 = vmatpush2.msra.mxu0 0.0
  %6103 = vmatprep.mubr.f32.mxu0 0.0
  %6104 = vmatmul.mubr.f32.gmra.mxu0 %v5186
  %v6105 = vpop.f32.mrf.mxu0
  %v6106 = vadd.f32 %v101, %v6105
  %v6107 = vpop.f32.mrf.mxu0
  %v6108 = vadd.f32 %v105, %v6107
  %6109 = vdwg.mxu0
  %6110 = vmatprep.subr.mxu0 0.0
  %6111 = vmatpush1.msra.mxu0 %v6038
  %6112 = vmatprep.subr.mxu0 0.0
  %6113 = vmatpush1.msra.mxu0 %v6035
  %6114 = vmatprep.subr.mxu0 0.0
  %6115 = vmatpush1.msra.mxu0 %v6032
  %6116 = vmatprep.subr.mxu0 0.0
  %6117 = vmatpush1.msra.mxu0 %v6029
  %6118 = vmatprep.subr.mxu0 0.0
  %6119 = vmatpush1.msra.mxu0 %v6026
  %6120 = vmatprep.subr.mxu0 0.0
  %6121 = vmatpush1.msra.mxu0 %v6023
  %6122 = vmatprep.subr.mxu0 0.0
  %6123 = vmatpush1.msra.mxu0 %v6020
  %6124 = vmatprep.subr.mxu0 0.0
  %6125 = vmatpush1.msra.mxu0 %v6017
  %6126 = vmatprep.subr.mxu0 0.0
  %6127 = vmatpush1.msra.mxu0 %v6014
  %6128 = vmatprep.subr.mxu0 0.0
  %6129 = vmatpush1.msra.mxu0 %v6011
  %6130 = vmatprep.subr.mxu0 0.0
  %6131 = vmatpush1.msra.mxu0 %v6008
  %6132 = vmatprep.subr.mxu0 0.0
  %6133 = vmatpush1.msra.mxu0 %v6005
  %6134 = vmatprep.subr.mxu0 0.0
  %6135 = vmatpush1.msra.mxu0 %v6002
  %6136 = vmatprep.subr.mxu0 0.0
  %6137 = vmatpush1.msra.mxu0 %v5999
  %6138 = vmatprep.subr.mxu0 0.0
  %6139 = vmatpush1.msra.mxu0 %v5996
  %6140 = vmatprep.subr.mxu0 0.0
  %6141 = vmatpush1.msra.mxu0 %v5993
  %6142 = vmatprep.subr.mxu0 0.0
  %6143 = vmatpush2.msra.mxu0 0.0
  %6144 = vmatprep.subr.mxu0 0.0
  %6145 = vmatpush2.msra.mxu0 0.0
  %6146 = vmatprep.subr.mxu0 0.0
  %6147 = vmatpush2.msra.mxu0 0.0
  %6148 = vmatprep.subr.mxu0 0.0
  %6149 = vmatpush2.msra.mxu0 0.0
  %6150 = vmatprep.subr.mxu0 0.0
  %6151 = vmatpush2.msra.mxu0 0.0
  %6152 = vmatprep.subr.mxu0 0.0
  %6153 = vmatpush2.msra.mxu0 0.0
  %6154 = vmatprep.subr.mxu0 0.0
  %6155 = vmatpush2.msra.mxu0 0.0
  %6156 = vmatprep.subr.mxu0 0.0
  %6157 = vmatpush2.msra.mxu0 0.0
  %6158 = vmatprep.subr.mxu0 0.0
  %6159 = vmatpush2.msra.mxu0 0.0
  %6160 = vmatprep.subr.mxu0 0.0
  %6161 = vmatpush2.msra.mxu0 0.0
  %6162 = vmatprep.subr.mxu0 0.0
  %6163 = vmatpush2.msra.mxu0 0.0
  %6164 = vmatprep.subr.mxu0 0.0
  %6165 = vmatpush2.msra.mxu0 0.0
  %6166 = vmatprep.subr.mxu0 0.0
  %6167 = vmatpush2.msra.mxu0 0.0
  %6168 = vmatprep.subr.mxu0 0.0
  %6169 = vmatpush2.msra.mxu0 0.0
  %6170 = vmatprep.subr.mxu0 0.0
  %6171 = vmatpush2.msra.mxu0 0.0
  %6172 = vmatprep.subr.mxu0 0.0
  %6173 = vmatpush2.msra.mxu0 0.0
  %6174 = vmatprep.mubr.f32.mxu0 0.0
  %6175 = vmatmul.mubr.f32.gmra.mxu0 %v5186
  %v6176 = vpop.f32.mrf.mxu0
  %v6177 = vadd.f32 %v109, %v6176
  %v6178 = vpop.f32.mrf.mxu0
  %6179 = vdwg.mxu0
  %v6180 = vadd.f32 %v5917, %v6106
  %v6181 = vxor.u32 %v6180, 2147483648
  %v6182 = vmul.f32 %v6181, 1.442695
  %v6183 = vpow.pop %v6182
  %v6184 = vadd.f32 %v6183, 1.0
  %v6185 = vrcp.pop %v6184
  %v6186 = vmul.f32 1.0, %v6185
  %v6187 = vadd.f32 %v5919, %v6108
  %v6188 = vxor.u32 %v6187, 2147483648
  %v6189 = vmul.f32 %v6188, 1.442695
  %v6190 = vpow.pop %v6189
  %v6191 = vadd.f32 %v6190, 1.0
  %v6192 = vrcp.pop %v6191
  %v6193 = vmul.f32 1.0, %v6192
  %v6194 = vmul.f32 %v6186, %v6177
  %v6195 = vadd.f32 %v5988, %v6194
  %v6196 = vtanh.pop %v6195
  %v6197 = vsub.f32 1.0, %v6193
  %v6198 = vmul.f32 %v6197, %v6196
  %v6199 = vmul.f32 %v6193, %v5186
  %v6200 = vadd.f32 %v6198, %v6199
  %s6201 = scalar_lea.vmem %s6, 40
  %6202 = vst [vmem:[%s6201] sm:$0xff] %v6200
  %s6203 = scalar_lea.vmem %s0, 144
  %v6204 = vld [vmem:[%s6203] sm:$0xff]
  %v6205 = vld [vmem:[%s6203 + $0x8] sm:$0xff]
  %v6206 = vld [vmem:[%s6203 + $0x10] sm:$0xff]
  %v6207 = vld [vmem:[%s2] sm:$0xff]
  %v6208 = vld [vmem:[%s2 + $0x8] sm:$0xff]
  %v6209 = vld [vmem:[%s2 + $0x10] sm:$0xff]
  %v6210 = vld [vmem:[%s2 + $0x18] sm:$0xff]
  %v6211 = vld [vmem:[%s2 + $0x20] sm:$0xff]
  %v6212 = vld [vmem:[%s2 + $0x28] sm:$0xff]
  %v6213 = vld [vmem:[%s2 + $0x30] sm:$0xff]
  %v6214 = vld [vmem:[%s2 + $0x38] sm:$0xff]
  %v6215 = vld [vmem:[%s2 + $0x40] sm:$0xff]
  %v6216 = vld [vmem:[%s2 + $0x48] sm:$0xff]
  %v6217 = vld [vmem:[%s2 + $0x50] sm:$0xff]
  %v6218 = vld [vmem:[%s2 + $0x58] sm:$0xff]
  %v6219 = vld [vmem:[%s2 + $0x60] sm:$0xff]
  %v6220 = vld [vmem:[%s2 + $0x68] sm:$0xff]
  %v6221 = vld [vmem:[%s2 + $0x70] sm:$0xff]
  %v6222 = vld [vmem:[%s2 + $0x78] sm:$0xff]
  %v6223 = vld [vmem:[%s2 + $0x80] sm:$0xff]
  %v6224 = vld [vmem:[%s2 + $0x88] sm:$0xff]
  %v6225 = vld [vmem:[%s2 + $0x90] sm:$0xff]
  %v6226 = vld [vmem:[%s2 + $0x98] sm:$0xff]
  %v6227 = vld [vmem:[%s2 + $0xa0] sm:$0xff]
  %v6228 = vld [vmem:[%s2 + $0xa8] sm:$0xff]
  %v6229 = vld [vmem:[%s2 + $0xb0] sm:$0xff]
  %v6230 = vld [vmem:[%s2 + $0xb8] sm:$0xff]
  %v6231 = vld [vmem:[%s2 + $0xc0] sm:$0xff]
  %v6232 = vld [vmem:[%s2 + $0xc8] sm:$0xff]
  %v6233 = vld [vmem:[%s2 + $0xd0] sm:$0xff]
  %v6234 = vld [vmem:[%s2 + $0xd8] sm:$0xff]
  %v6235 = vld [vmem:[%s2 + $0xe0] sm:$0xff]
  %v6236 = vld [vmem:[%s2 + $0xe8] sm:$0xff]
  %v6237 = vld [vmem:[%s2 + $0xf0] sm:$0xff]
  %v6238 = vld [vmem:[%s2 + $0xf8] sm:$0xff]
  %v6239 = vld [vmem:[%s2 + $0x100] sm:$0xff]
  %v6240 = vld [vmem:[%s2 + $0x108] sm:$0xff]
  %v6241 = vld [vmem:[%s2 + $0x110] sm:$0xff]
  %v6242 = vld [vmem:[%s2 + $0x118] sm:$0xff]
  %v6243 = vld [vmem:[%s2 + $0x120] sm:$0xff]
  %v6244 = vld [vmem:[%s2 + $0x128] sm:$0xff]
  %v6245 = vld [vmem:[%s2 + $0x130] sm:$0xff]
  %v6246 = vld [vmem:[%s2 + $0x138] sm:$0xff]
  %v6247 = vld [vmem:[%s2 + $0x140] sm:$0xff]
  %v6248 = vld [vmem:[%s2 + $0x148] sm:$0xff]
  %v6249 = vld [vmem:[%s2 + $0x150] sm:$0xff]
  %v6250 = vld [vmem:[%s2 + $0x158] sm:$0xff]
  %v6251 = vld [vmem:[%s2 + $0x160] sm:$0xff]
  %v6252 = vld [vmem:[%s2 + $0x168] sm:$0xff]
  %v6253 = vld [vmem:[%s2 + $0x170] sm:$0xff]
  %v6254 = vld [vmem:[%s2 + $0x178] sm:$0xff]
  %6255 = vmatprep.subr.mxu0 %v6253
  %6256 = vmatpush1.msra.mxu0 %v6252
  %6257 = vmatprep.subr.mxu0 %v6250
  %6258 = vmatpush1.msra.mxu0 %v6249
  %6259 = vmatprep.subr.mxu0 %v6247
  %6260 = vmatpush1.msra.mxu0 %v6246
  %6261 = vmatprep.subr.mxu0 %v6244
  %6262 = vmatpush1.msra.mxu0 %v6243
  %6263 = vmatprep.subr.mxu0 %v6241
  %6264 = vmatpush1.msra.mxu0 %v6240
  %6265 = vmatprep.subr.mxu0 %v6238
  %6266 = vmatpush1.msra.mxu0 %v6237
  %6267 = vmatprep.subr.mxu0 %v6235
  %6268 = vmatpush1.msra.mxu0 %v6234
  %6269 = vmatprep.subr.mxu0 %v6232
  %6270 = vmatpush1.msra.mxu0 %v6231
  %6271 = vmatprep.subr.mxu0 %v6229
  %6272 = vmatpush1.msra.mxu0 %v6228
  %6273 = vmatprep.subr.mxu0 %v6226
  %6274 = vmatpush1.msra.mxu0 %v6225
  %6275 = vmatprep.subr.mxu0 %v6223
  %6276 = vmatpush1.msra.mxu0 %v6222
  %6277 = vmatprep.subr.mxu0 %v6220
  %6278 = vmatpush1.msra.mxu0 %v6219
  %6279 = vmatprep.subr.mxu0 %v6217
  %6280 = vmatpush1.msra.mxu0 %v6216
  %6281 = vmatprep.subr.mxu0 %v6214
  %6282 = vmatpush1.msra.mxu0 %v6213
  %6283 = vmatprep.subr.mxu0 %v6211
  %6284 = vmatpush1.msra.mxu0 %v6210
  %6285 = vmatprep.subr.mxu0 %v6208
  %6286 = vmatpush1.msra.mxu0 %v6207
  %6287 = vmatprep.subr.mxu0 0.0
  %6288 = vmatpush2.msra.mxu0 0.0
  %6289 = vmatprep.subr.mxu0 0.0
  %6290 = vmatpush2.msra.mxu0 0.0
  %6291 = vmatprep.subr.mxu0 0.0
  %6292 = vmatpush2.msra.mxu0 0.0
  %6293 = vmatprep.subr.mxu0 0.0
  %6294 = vmatpush2.msra.mxu0 0.0
  %6295 = vmatprep.subr.mxu0 0.0
  %6296 = vmatpush2.msra.mxu0 0.0
  %6297 = vmatprep.subr.mxu0 0.0
  %6298 = vmatpush2.msra.mxu0 0.0
  %6299 = vmatprep.subr.mxu0 0.0
  %6300 = vmatpush2.msra.mxu0 0.0
  %6301 = vmatprep.subr.mxu0 0.0
  %6302 = vmatpush2.msra.mxu0 0.0
  %6303 = vmatprep.subr.mxu0 0.0
  %6304 = vmatpush2.msra.mxu0 0.0
  %6305 = vmatprep.subr.mxu0 0.0
  %6306 = vmatpush2.msra.mxu0 0.0
  %6307 = vmatprep.subr.mxu0 0.0
  %6308 = vmatpush2.msra.mxu0 0.0
  %6309 = vmatprep.subr.mxu0 0.0
  %6310 = vmatpush2.msra.mxu0 0.0
  %6311 = vmatprep.subr.mxu0 0.0
  %6312 = vmatpush2.msra.mxu0 0.0
  %6313 = vmatprep.subr.mxu0 0.0
  %6314 = vmatpush2.msra.mxu0 0.0
  %6315 = vmatprep.subr.mxu0 0.0
  %6316 = vmatpush2.msra.mxu0 0.0
  %6317 = vmatprep.subr.mxu0 0.0
  %6318 = vmatpush2.msra.mxu0 0.0
  %6319 = vmatprep.mubr.f32.mxu0 0.0
  %6320 = vmatmul.mubr.f32.gmra.mxu0 %v5402
  %v6321 = vpop.f32.mrf.mxu0
  %v6322 = vadd.f32 %v65, %v6321
  %v6323 = vpop.f32.mrf.mxu0
  %v6324 = vadd.f32 %v69, %v6323
  %6325 = vdwg.mxu0
  %6326 = vmatprep.subr.mxu0 0.0
  %6327 = vmatpush1.msra.mxu0 %v6254
  %6328 = vmatprep.subr.mxu0 0.0
  %6329 = vmatpush1.msra.mxu0 %v6251
  %6330 = vmatprep.subr.mxu0 0.0
  %6331 = vmatpush1.msra.mxu0 %v6248
  %6332 = vmatprep.subr.mxu0 0.0
  %6333 = vmatpush1.msra.mxu0 %v6245
  %6334 = vmatprep.subr.mxu0 0.0
  %6335 = vmatpush1.msra.mxu0 %v6242
  %6336 = vmatprep.subr.mxu0 0.0
  %6337 = vmatpush1.msra.mxu0 %v6239
  %6338 = vmatprep.subr.mxu0 0.0
  %6339 = vmatpush1.msra.mxu0 %v6236
  %6340 = vmatprep.subr.mxu0 0.0
  %6341 = vmatpush1.msra.mxu0 %v6233
  %6342 = vmatprep.subr.mxu0 0.0
  %6343 = vmatpush1.msra.mxu0 %v6230
  %6344 = vmatprep.subr.mxu0 0.0
  %6345 = vmatpush1.msra.mxu0 %v6227
  %6346 = vmatprep.subr.mxu0 0.0
  %6347 = vmatpush1.msra.mxu0 %v6224
  %6348 = vmatprep.subr.mxu0 0.0
  %6349 = vmatpush1.msra.mxu0 %v6221
  %6350 = vmatprep.subr.mxu0 0.0
  %6351 = vmatpush1.msra.mxu0 %v6218
  %6352 = vmatprep.subr.mxu0 0.0
  %6353 = vmatpush1.msra.mxu0 %v6215
  %6354 = vmatprep.subr.mxu0 0.0
  %6355 = vmatpush1.msra.mxu0 %v6212
  %6356 = vmatprep.subr.mxu0 0.0
  %6357 = vmatpush1.msra.mxu0 %v6209
  %6358 = vmatprep.subr.mxu0 0.0
  %6359 = vmatpush2.msra.mxu0 0.0
  %6360 = vmatprep.subr.mxu0 0.0
  %6361 = vmatpush2.msra.mxu0 0.0
  %6362 = vmatprep.subr.mxu0 0.0
  %6363 = vmatpush2.msra.mxu0 0.0
  %6364 = vmatprep.subr.mxu0 0.0
  %6365 = vmatpush2.msra.mxu0 0.0
  %6366 = vmatprep.subr.mxu0 0.0
  %6367 = vmatpush2.msra.mxu0 0.0
  %6368 = vmatprep.subr.mxu0 0.0
  %6369 = vmatpush2.msra.mxu0 0.0
  %6370 = vmatprep.subr.mxu0 0.0
  %6371 = vmatpush2.msra.mxu0 0.0
  %6372 = vmatprep.subr.mxu0 0.0
  %6373 = vmatpush2.msra.mxu0 0.0
  %6374 = vmatprep.subr.mxu0 0.0
  %6375 = vmatpush2.msra.mxu0 0.0
  %6376 = vmatprep.subr.mxu0 0.0
  %6377 = vmatpush2.msra.mxu0 0.0
  %6378 = vmatprep.subr.mxu0 0.0
  %6379 = vmatpush2.msra.mxu0 0.0
  %6380 = vmatprep.subr.mxu0 0.0
  %6381 = vmatpush2.msra.mxu0 0.0
  %6382 = vmatprep.subr.mxu0 0.0
  %6383 = vmatpush2.msra.mxu0 0.0
  %6384 = vmatprep.subr.mxu0 0.0
  %6385 = vmatpush2.msra.mxu0 0.0
  %6386 = vmatprep.subr.mxu0 0.0
  %6387 = vmatpush2.msra.mxu0 0.0
  %6388 = vmatprep.subr.mxu0 0.0
  %6389 = vmatpush2.msra.mxu0 0.0
  %6390 = vmatprep.mubr.f32.mxu0 0.0
  %6391 = vmatmul.mubr.f32.gmra.mxu0 %v5402
  %v6392 = vpop.f32.mrf.mxu0
  %v6393 = vadd.f32 %v73, %v6392
  %v6394 = vpop.f32.mrf.mxu0
  %6395 = vdwg.mxu0
  %v6396 = vadd.f32 %v6204, %v6322
  %v6397 = vxor.u32 %v6396, 2147483648
  %v6398 = vmul.f32 %v6397, 1.442695
  %v6399 = vpow.pop %v6398
  %v6400 = vadd.f32 %v6399, 1.0
  %v6401 = vrcp.pop %v6400
  %v6402 = vmul.f32 1.0, %v6401
  %v6403 = vadd.f32 %v6205, %v6324
  %v6404 = vxor.u32 %v6403, 2147483648
  %v6405 = vmul.f32 %v6404, 1.442695
  %v6406 = vpow.pop %v6405
  %v6407 = vadd.f32 %v6406, 1.0
  %v6408 = vrcp.pop %v6407
  %v6409 = vmul.f32 1.0, %v6408
  %v6410 = vmul.f32 %v6402, %v6393
  %v6411 = vadd.f32 %v6206, %v6410
  %v6412 = vtanh.pop %v6411
  %v6413 = vsub.f32 1.0, %v6409
  %v6414 = vmul.f32 %v6413, %v6412
  %v6415 = vmul.f32 %v6409, %v5402
  %v6416 = vadd.f32 %v6414, %v6415
  %v6417 = vld [vmem:[%s3] sm:$0xff]
  %v6418 = vld [vmem:[%s3 + $0x8] sm:$0xff]
  %v6419 = vld [vmem:[%s3 + $0x10] sm:$0xff]
  %v6420 = vld [vmem:[%s3 + $0x18] sm:$0xff]
  %v6421 = vld [vmem:[%s3 + $0x20] sm:$0xff]
  %v6422 = vld [vmem:[%s3 + $0x28] sm:$0xff]
  %v6423 = vld [vmem:[%s3 + $0x30] sm:$0xff]
  %v6424 = vld [vmem:[%s3 + $0x38] sm:$0xff]
  %v6425 = vld [vmem:[%s3 + $0x40] sm:$0xff]
  %v6426 = vld [vmem:[%s3 + $0x48] sm:$0xff]
  %v6427 = vld [vmem:[%s3 + $0x50] sm:$0xff]
  %v6428 = vld [vmem:[%s3 + $0x58] sm:$0xff]
  %v6429 = vld [vmem:[%s3 + $0x60] sm:$0xff]
  %v6430 = vld [vmem:[%s3 + $0x68] sm:$0xff]
  %v6431 = vld [vmem:[%s3 + $0x70] sm:$0xff]
  %v6432 = vld [vmem:[%s3 + $0x78] sm:$0xff]
  %v6433 = vld [vmem:[%s3 + $0x80] sm:$0xff]
  %v6434 = vld [vmem:[%s3 + $0x88] sm:$0xff]
  %v6435 = vld [vmem:[%s3 + $0x90] sm:$0xff]
  %v6436 = vld [vmem:[%s3 + $0x98] sm:$0xff]
  %v6437 = vld [vmem:[%s3 + $0xa0] sm:$0xff]
  %v6438 = vld [vmem:[%s3 + $0xa8] sm:$0xff]
  %v6439 = vld [vmem:[%s3 + $0xb0] sm:$0xff]
  %v6440 = vld [vmem:[%s3 + $0xb8] sm:$0xff]
  %v6441 = vld [vmem:[%s3 + $0xc0] sm:$0xff]
  %v6442 = vld [vmem:[%s3 + $0xc8] sm:$0xff]
  %v6443 = vld [vmem:[%s3 + $0xd0] sm:$0xff]
  %v6444 = vld [vmem:[%s3 + $0xd8] sm:$0xff]
  %v6445 = vld [vmem:[%s3 + $0xe0] sm:$0xff]
  %v6446 = vld [vmem:[%s3 + $0xe8] sm:$0xff]
  %v6447 = vld [vmem:[%s3 + $0xf0] sm:$0xff]
  %v6448 = vld [vmem:[%s3 + $0xf8] sm:$0xff]
  %v6449 = vld [vmem:[%s3 + $0x100] sm:$0xff]
  %v6450 = vld [vmem:[%s3 + $0x108] sm:$0xff]
  %v6451 = vld [vmem:[%s3 + $0x110] sm:$0xff]
  %v6452 = vld [vmem:[%s3 + $0x118] sm:$0xff]
  %v6453 = vld [vmem:[%s3 + $0x120] sm:$0xff]
  %v6454 = vld [vmem:[%s3 + $0x128] sm:$0xff]
  %v6455 = vld [vmem:[%s3 + $0x130] sm:$0xff]
  %v6456 = vld [vmem:[%s3 + $0x138] sm:$0xff]
  %v6457 = vld [vmem:[%s3 + $0x140] sm:$0xff]
  %v6458 = vld [vmem:[%s3 + $0x148] sm:$0xff]
  %v6459 = vld [vmem:[%s3 + $0x150] sm:$0xff]
  %v6460 = vld [vmem:[%s3 + $0x158] sm:$0xff]
  %v6461 = vld [vmem:[%s3 + $0x160] sm:$0xff]
  %v6462 = vld [vmem:[%s3 + $0x168] sm:$0xff]
  %v6463 = vld [vmem:[%s3 + $0x170] sm:$0xff]
  %v6464 = vld [vmem:[%s3 + $0x178] sm:$0xff]
  %6465 = vmatprep.subr.mxu0 %v6463
  %6466 = vmatpush1.msra.mxu0 %v6462
  %6467 = vmatprep.subr.mxu0 %v6460
  %6468 = vmatpush1.msra.mxu0 %v6459
  %6469 = vmatprep.subr.mxu0 %v6457
  %6470 = vmatpush1.msra.mxu0 %v6456
  %6471 = vmatprep.subr.mxu0 %v6454
  %6472 = vmatpush1.msra.mxu0 %v6453
  %6473 = vmatprep.subr.mxu0 %v6451
  %6474 = vmatpush1.msra.mxu0 %v6450
  %6475 = vmatprep.subr.mxu0 %v6448
  %6476 = vmatpush1.msra.mxu0 %v6447
  %6477 = vmatprep.subr.mxu0 %v6445
  %6478 = vmatpush1.msra.mxu0 %v6444
  %6479 = vmatprep.subr.mxu0 %v6442
  %6480 = vmatpush1.msra.mxu0 %v6441
  %6481 = vmatprep.subr.mxu0 %v6439
  %6482 = vmatpush1.msra.mxu0 %v6438
  %6483 = vmatprep.subr.mxu0 %v6436
  %6484 = vmatpush1.msra.mxu0 %v6435
  %6485 = vmatprep.subr.mxu0 %v6433
  %6486 = vmatpush1.msra.mxu0 %v6432
  %6487 = vmatprep.subr.mxu0 %v6430
  %6488 = vmatpush1.msra.mxu0 %v6429
  %6489 = vmatprep.subr.mxu0 %v6427
  %6490 = vmatpush1.msra.mxu0 %v6426
  %6491 = vmatprep.subr.mxu0 %v6424
  %6492 = vmatpush1.msra.mxu0 %v6423
  %6493 = vmatprep.subr.mxu0 %v6421
  %6494 = vmatpush1.msra.mxu0 %v6420
  %6495 = vmatprep.subr.mxu0 %v6418
  %6496 = vmatpush1.msra.mxu0 %v6417
  %6497 = vmatprep.subr.mxu0 0.0
  %6498 = vmatpush2.msra.mxu0 0.0
  %6499 = vmatprep.subr.mxu0 0.0
  %6500 = vmatpush2.msra.mxu0 0.0
  %6501 = vmatprep.subr.mxu0 0.0
  %6502 = vmatpush2.msra.mxu0 0.0
  %6503 = vmatprep.subr.mxu0 0.0
  %6504 = vmatpush2.msra.mxu0 0.0
  %6505 = vmatprep.subr.mxu0 0.0
  %6506 = vmatpush2.msra.mxu0 0.0
  %6507 = vmatprep.subr.mxu0 0.0
  %6508 = vmatpush2.msra.mxu0 0.0
  %6509 = vmatprep.subr.mxu0 0.0
  %6510 = vmatpush2.msra.mxu0 0.0
  %6511 = vmatprep.subr.mxu0 0.0
  %6512 = vmatpush2.msra.mxu0 0.0
  %6513 = vmatprep.subr.mxu0 0.0
  %6514 = vmatpush2.msra.mxu0 0.0
  %6515 = vmatprep.subr.mxu0 0.0
  %6516 = vmatpush2.msra.mxu0 0.0
  %6517 = vmatprep.subr.mxu0 0.0
  %6518 = vmatpush2.msra.mxu0 0.0
  %6519 = vmatprep.subr.mxu0 0.0
  %6520 = vmatpush2.msra.mxu0 0.0
  %6521 = vmatprep.subr.mxu0 0.0
  %6522 = vmatpush2.msra.mxu0 0.0
  %6523 = vmatprep.subr.mxu0 0.0
  %6524 = vmatpush2.msra.mxu0 0.0
  %6525 = vmatprep.subr.mxu0 0.0
  %6526 = vmatpush2.msra.mxu0 0.0
  %6527 = vmatprep.subr.mxu0 0.0
  %6528 = vmatpush2.msra.mxu0 0.0
  %6529 = vmatprep.mubr.f32.mxu0 0.0
  %6530 = vmatmul.mubr.f32.gmra.mxu0 %v6416
  %v6531 = vpop.f32.mrf.mxu0
  %v6532 = vadd.f32 %v30, %v6531
  %v6533 = vpop.f32.mrf.mxu0
  %v6534 = vadd.f32 %v34, %v6533
  %6535 = vdwg.mxu0
  %6536 = vmatprep.subr.mxu0 0.0
  %6537 = vmatpush1.msra.mxu0 %v6464
  %6538 = vmatprep.subr.mxu0 0.0
  %6539 = vmatpush1.msra.mxu0 %v6461
  %6540 = vmatprep.subr.mxu0 0.0
  %6541 = vmatpush1.msra.mxu0 %v6458
  %6542 = vmatprep.subr.mxu0 0.0
  %6543 = vmatpush1.msra.mxu0 %v6455
  %6544 = vmatprep.subr.mxu0 0.0
  %6545 = vmatpush1.msra.mxu0 %v6452
  %6546 = vmatprep.subr.mxu0 0.0
  %6547 = vmatpush1.msra.mxu0 %v6449
  %6548 = vmatprep.subr.mxu0 0.0
  %6549 = vmatpush1.msra.mxu0 %v6446
  %6550 = vmatprep.subr.mxu0 0.0
  %6551 = vmatpush1.msra.mxu0 %v6443
  %6552 = vmatprep.subr.mxu0 0.0
  %6553 = vmatpush1.msra.mxu0 %v6440
  %6554 = vmatprep.subr.mxu0 0.0
  %6555 = vmatpush1.msra.mxu0 %v6437
  %6556 = vmatprep.subr.mxu0 0.0
  %6557 = vmatpush1.msra.mxu0 %v6434
  %6558 = vmatprep.subr.mxu0 0.0
  %6559 = vmatpush1.msra.mxu0 %v6431
  %6560 = vmatprep.subr.mxu0 0.0
  %6561 = vmatpush1.msra.mxu0 %v6428
  %6562 = vmatprep.subr.mxu0 0.0
  %6563 = vmatpush1.msra.mxu0 %v6425
  %6564 = vmatprep.subr.mxu0 0.0
  %6565 = vmatpush1.msra.mxu0 %v6422
  %6566 = vmatprep.subr.mxu0 0.0
  %6567 = vmatpush1.msra.mxu0 %v6419
  %6568 = vmatprep.subr.mxu0 0.0
  %6569 = vmatpush2.msra.mxu0 0.0
  %6570 = vmatprep.subr.mxu0 0.0
  %6571 = vmatpush2.msra.mxu0 0.0
  %6572 = vmatprep.subr.mxu0 0.0
  %6573 = vmatpush2.msra.mxu0 0.0
  %6574 = vmatprep.subr.mxu0 0.0
  %6575 = vmatpush2.msra.mxu0 0.0
  %6576 = vmatprep.subr.mxu0 0.0
  %6577 = vmatpush2.msra.mxu0 0.0
  %6578 = vmatprep.subr.mxu0 0.0
  %6579 = vmatpush2.msra.mxu0 0.0
  %6580 = vmatprep.subr.mxu0 0.0
  %6581 = vmatpush2.msra.mxu0 0.0
  %6582 = vmatprep.subr.mxu0 0.0
  %6583 = vmatpush2.msra.mxu0 0.0
  %6584 = vmatprep.subr.mxu0 0.0
  %6585 = vmatpush2.msra.mxu0 0.0
  %6586 = vmatprep.subr.mxu0 0.0
  %6587 = vmatpush2.msra.mxu0 0.0
  %6588 = vmatprep.subr.mxu0 0.0
  %6589 = vmatpush2.msra.mxu0 0.0
  %6590 = vmatprep.subr.mxu0 0.0
  %6591 = vmatpush2.msra.mxu0 0.0
  %6592 = vmatprep.subr.mxu0 0.0
  %6593 = vmatpush2.msra.mxu0 0.0
  %6594 = vmatprep.subr.mxu0 0.0
  %6595 = vmatpush2.msra.mxu0 0.0
  %6596 = vmatprep.subr.mxu0 0.0
  %6597 = vmatpush2.msra.mxu0 0.0
  %6598 = vmatprep.subr.mxu0 0.0
  %6599 = vmatpush2.msra.mxu0 0.0
  %6600 = vmatprep.mubr.f32.mxu0 0.0
  %6601 = vmatmul.mubr.f32.gmra.mxu0 %v6416
  %v6602 = vpop.f32.mrf.mxu0
  %v6603 = vadd.f32 %v38, %v6602
  %v6604 = vpop.f32.mrf.mxu0
  %6605 = vdwg.mxu0
  %v6606 = vld [vmem:[%s520] sm:$0xff]
  %v6607 = vld [vmem:[%s520 + $0x8] sm:$0xff]
  %v6608 = vld [vmem:[%s520 + $0x10] sm:$0xff]
  %v6609 = vld [vmem:[%s520 + $0x18] sm:$0xff]
  %v6610 = vld [vmem:[%s520 + $0x20] sm:$0xff]
  %v6611 = vld [vmem:[%s520 + $0x28] sm:$0xff]
  %v6612 = vld [vmem:[%s520 + $0x30] sm:$0xff]
  %v6613 = vld [vmem:[%s520 + $0x38] sm:$0xff]
  %v6614 = vld [vmem:[%s520 + $0x40] sm:$0xff]
  %v6615 = vld [vmem:[%s520 + $0x48] sm:$0xff]
  %v6616 = vld [vmem:[%s520 + $0x50] sm:$0xff]
  %v6617 = vld [vmem:[%s520 + $0x58] sm:$0xff]
  %v6618 = vld [vmem:[%s520 + $0x60] sm:$0xff]
  %v6619 = vld [vmem:[%s520 + $0x68] sm:$0xff]
  %v6620 = vld [vmem:[%s520 + $0x70] sm:$0xff]
  %v6621 = vld [vmem:[%s520 + $0x78] sm:$0xff]
  %v6622 = vld [vmem:[%s520 + $0x80] sm:$0xff]
  %v6623 = vld [vmem:[%s520 + $0x88] sm:$0xff]
  %v6624 = vld [vmem:[%s520 + $0x90] sm:$0xff]
  %v6625 = vld [vmem:[%s520 + $0x98] sm:$0xff]
  %v6626 = vld [vmem:[%s520 + $0xa0] sm:$0xff]
  %v6627 = vld [vmem:[%s520 + $0xa8] sm:$0xff]
  %v6628 = vld [vmem:[%s520 + $0xb0] sm:$0xff]
  %v6629 = vld [vmem:[%s520 + $0xb8] sm:$0xff]
  %v6630 = vld [vmem:[%s520 + $0xc0] sm:$0xff]
  %v6631 = vld [vmem:[%s520 + $0xc8] sm:$0xff]
  %v6632 = vld [vmem:[%s520 + $0xd0] sm:$0xff]
  %v6633 = vld [vmem:[%s520 + $0xd8] sm:$0xff]
  %v6634 = vld [vmem:[%s520 + $0xe0] sm:$0xff]
  %v6635 = vld [vmem:[%s520 + $0xe8] sm:$0xff]
  %v6636 = vld [vmem:[%s520 + $0xf0] sm:$0xff]
  %v6637 = vld [vmem:[%s520 + $0xf8] sm:$0xff]
  %v6638 = vld [vmem:[%s520 + $0x100] sm:$0xff]
  %v6639 = vld [vmem:[%s520 + $0x108] sm:$0xff]
  %v6640 = vld [vmem:[%s520 + $0x110] sm:$0xff]
  %v6641 = vld [vmem:[%s520 + $0x118] sm:$0xff]
  %v6642 = vld [vmem:[%s520 + $0x120] sm:$0xff]
  %v6643 = vld [vmem:[%s520 + $0x128] sm:$0xff]
  %v6644 = vld [vmem:[%s520 + $0x130] sm:$0xff]
  %v6645 = vld [vmem:[%s520 + $0x138] sm:$0xff]
  %v6646 = vld [vmem:[%s520 + $0x140] sm:$0xff]
  %v6647 = vld [vmem:[%s520 + $0x148] sm:$0xff]
  %v6648 = vld [vmem:[%s520 + $0x150] sm:$0xff]
  %v6649 = vld [vmem:[%s520 + $0x158] sm:$0xff]
  %v6650 = vld [vmem:[%s520 + $0x160] sm:$0xff]
  %v6651 = vld [vmem:[%s520 + $0x168] sm:$0xff]
  %v6652 = vld [vmem:[%s520 + $0x170] sm:$0xff]
  %v6653 = vld [vmem:[%s520 + $0x178] sm:$0xff]
  %6654 = vmatprep.subr.mxu0 %v6652
  %6655 = vmatpush1.msra.mxu0 %v6651
  %6656 = vmatprep.subr.mxu0 %v6649
  %6657 = vmatpush1.msra.mxu0 %v6648
  %6658 = vmatprep.subr.mxu0 %v6646
  %6659 = vmatpush1.msra.mxu0 %v6645
  %6660 = vmatprep.subr.mxu0 %v6643
  %6661 = vmatpush1.msra.mxu0 %v6642
  %6662 = vmatprep.subr.mxu0 %v6640
  %6663 = vmatpush1.msra.mxu0 %v6639
  %6664 = vmatprep.subr.mxu0 %v6637
  %6665 = vmatpush1.msra.mxu0 %v6636
  %6666 = vmatprep.subr.mxu0 %v6634
  %6667 = vmatpush1.msra.mxu0 %v6633
  %6668 = vmatprep.subr.mxu0 %v6631
  %6669 = vmatpush1.msra.mxu0 %v6630
  %6670 = vmatprep.subr.mxu0 %v6628
  %6671 = vmatpush1.msra.mxu0 %v6627
  %6672 = vmatprep.subr.mxu0 %v6625
  %6673 = vmatpush1.msra.mxu0 %v6624
  %6674 = vmatprep.subr.mxu0 %v6622
  %6675 = vmatpush1.msra.mxu0 %v6621
  %6676 = vmatprep.subr.mxu0 %v6619
  %6677 = vmatpush1.msra.mxu0 %v6618
  %6678 = vmatprep.subr.mxu0 %v6616
  %6679 = vmatpush1.msra.mxu0 %v6615
  %6680 = vmatprep.subr.mxu0 %v6613
  %6681 = vmatpush1.msra.mxu0 %v6612
  %6682 = vmatprep.subr.mxu0 %v6610
  %6683 = vmatpush1.msra.mxu0 %v6609
  %6684 = vmatprep.subr.mxu0 %v6607
  %6685 = vmatpush1.msra.mxu0 %v6606
  %6686 = vmatprep.subr.mxu0 0.0
  %6687 = vmatpush2.msra.mxu0 0.0
  %6688 = vmatprep.subr.mxu0 0.0
  %6689 = vmatpush2.msra.mxu0 0.0
  %6690 = vmatprep.subr.mxu0 0.0
  %6691 = vmatpush2.msra.mxu0 0.0
  %6692 = vmatprep.subr.mxu0 0.0
  %6693 = vmatpush2.msra.mxu0 0.0
  %6694 = vmatprep.subr.mxu0 0.0
  %6695 = vmatpush2.msra.mxu0 0.0
  %6696 = vmatprep.subr.mxu0 0.0
  %6697 = vmatpush2.msra.mxu0 0.0
  %6698 = vmatprep.subr.mxu0 0.0
  %6699 = vmatpush2.msra.mxu0 0.0
  %6700 = vmatprep.subr.mxu0 0.0
  %6701 = vmatpush2.msra.mxu0 0.0
  %6702 = vmatprep.subr.mxu0 0.0
  %6703 = vmatpush2.msra.mxu0 0.0
  %6704 = vmatprep.subr.mxu0 0.0
  %6705 = vmatpush2.msra.mxu0 0.0
  %6706 = vmatprep.subr.mxu0 0.0
  %6707 = vmatpush2.msra.mxu0 0.0
  %6708 = vmatprep.subr.mxu0 0.0
  %6709 = vmatpush2.msra.mxu0 0.0
  %6710 = vmatprep.subr.mxu0 0.0
  %6711 = vmatpush2.msra.mxu0 0.0
  %6712 = vmatprep.subr.mxu0 0.0
  %6713 = vmatpush2.msra.mxu0 0.0
  %6714 = vmatprep.subr.mxu0 0.0
  %6715 = vmatpush2.msra.mxu0 0.0
  %6716 = vmatprep.subr.mxu0 0.0
  %6717 = vmatpush2.msra.mxu0 0.0
  %6718 = vmatprep.mubr.f32.mxu0 0.0
  %6719 = vmatmul.mubr.f32.gmra.mxu0 %v5801
  %v6720 = vpop.f32.mrf.mxu0
  %v6721 = vadd.f32 %v83, %v6720
  %v6722 = vpop.f32.mrf.mxu0
  %v6723 = vadd.f32 %v87, %v6722
  %6724 = vdwg.mxu0
  %6725 = vmatprep.subr.mxu0 0.0
  %6726 = vmatpush1.msra.mxu0 %v6653
  %6727 = vmatprep.subr.mxu0 0.0
  %6728 = vmatpush1.msra.mxu0 %v6650
  %6729 = vmatprep.subr.mxu0 0.0
  %6730 = vmatpush1.msra.mxu0 %v6647
  %6731 = vmatprep.subr.mxu0 0.0
  %6732 = vmatpush1.msra.mxu0 %v6644
  %6733 = vmatprep.subr.mxu0 0.0
  %6734 = vmatpush1.msra.mxu0 %v6641
  %6735 = vmatprep.subr.mxu0 0.0
  %6736 = vmatpush1.msra.mxu0 %v6638
  %6737 = vmatprep.subr.mxu0 0.0
  %6738 = vmatpush1.msra.mxu0 %v6635
  %6739 = vmatprep.subr.mxu0 0.0
  %6740 = vmatpush1.msra.mxu0 %v6632
  %6741 = vmatprep.subr.mxu0 0.0
  %6742 = vmatpush1.msra.mxu0 %v6629
  %6743 = vmatprep.subr.mxu0 0.0
  %6744 = vmatpush1.msra.mxu0 %v6626
  %6745 = vmatprep.subr.mxu0 0.0
  %6746 = vmatpush1.msra.mxu0 %v6623
  %6747 = vmatprep.subr.mxu0 0.0
  %6748 = vmatpush1.msra.mxu0 %v6620
  %6749 = vmatprep.subr.mxu0 0.0
  %6750 = vmatpush1.msra.mxu0 %v6617
  %6751 = vmatprep.subr.mxu0 0.0
  %6752 = vmatpush1.msra.mxu0 %v6614
  %6753 = vmatprep.subr.mxu0 0.0
  %6754 = vmatpush1.msra.mxu0 %v6611
  %6755 = vmatprep.subr.mxu0 0.0
  %6756 = vmatpush1.msra.mxu0 %v6608
  %6757 = vmatprep.subr.mxu0 0.0
  %6758 = vmatpush2.msra.mxu0 0.0
  %6759 = vmatprep.subr.mxu0 0.0
  %6760 = vmatpush2.msra.mxu0 0.0
  %6761 = vmatprep.subr.mxu0 0.0
  %6762 = vmatpush2.msra.mxu0 0.0
  %6763 = vmatprep.subr.mxu0 0.0
  %6764 = vmatpush2.msra.mxu0 0.0
  %6765 = vmatprep.subr.mxu0 0.0
  %6766 = vmatpush2.msra.mxu0 0.0
  %6767 = vmatprep.subr.mxu0 0.0
  %6768 = vmatpush2.msra.mxu0 0.0
  %6769 = vmatprep.subr.mxu0 0.0
  %6770 = vmatpush2.msra.mxu0 0.0
  %6771 = vmatprep.subr.mxu0 0.0
  %6772 = vmatpush2.msra.mxu0 0.0
  %6773 = vmatprep.subr.mxu0 0.0
  %6774 = vmatpush2.msra.mxu0 0.0
  %6775 = vmatprep.subr.mxu0 0.0
  %6776 = vmatpush2.msra.mxu0 0.0
  %6777 = vmatprep.subr.mxu0 0.0
  %6778 = vmatpush2.msra.mxu0 0.0
  %6779 = vmatprep.subr.mxu0 0.0
  %6780 = vmatpush2.msra.mxu0 0.0
  %6781 = vmatprep.subr.mxu0 0.0
  %6782 = vmatpush2.msra.mxu0 0.0
  %6783 = vmatprep.subr.mxu0 0.0
  %6784 = vmatpush2.msra.mxu0 0.0
  %6785 = vmatprep.subr.mxu0 0.0
  %6786 = vmatpush2.msra.mxu0 0.0
  %6787 = vmatprep.subr.mxu0 0.0
  %6788 = vmatpush2.msra.mxu0 0.0
  %6789 = vmatprep.mubr.f32.mxu0 0.0
  %6790 = vmatmul.mubr.f32.gmra.mxu0 %v5801
  %v6791 = vpop.f32.mrf.mxu0
  %v6792 = vadd.f32 %v91, %v6791
  %v6793 = vpop.f32.mrf.mxu0
  %6794 = vdwg.mxu0
  %v6795 = vadd.f32 %v6532, %v6721
  %v6796 = vxor.u32 %v6795, 2147483648
  %v6797 = vmul.f32 %v6796, 1.442695
  %v6798 = vpow.pop %v6797
  %v6799 = vadd.f32 %v6798, 1.0
  %v6800 = vrcp.pop %v6799
  %v6801 = vmul.f32 1.0, %v6800
  %v6802 = vadd.f32 %v6534, %v6723
  %v6803 = vxor.u32 %v6802, 2147483648
  %v6804 = vmul.f32 %v6803, 1.442695
  %v6805 = vpow.pop %v6804
  %v6806 = vadd.f32 %v6805, 1.0
  %v6807 = vrcp.pop %v6806
  %v6808 = vmul.f32 1.0, %v6807
  %v6809 = vmul.f32 %v6801, %v6792
  %v6810 = vadd.f32 %v6603, %v6809
  %v6811 = vtanh.pop %v6810
  %v6812 = vsub.f32 1.0, %v6808
  %v6813 = vmul.f32 %v6812, %v6811
  %v6814 = vmul.f32 %v6808, %v5801
  %v6815 = vadd.f32 %v6813, %v6814
  %v6816 = vld [vmem:[%s731] sm:$0xff]
  %v6817 = vld [vmem:[%s731 + $0x8] sm:$0xff]
  %v6818 = vld [vmem:[%s731 + $0x10] sm:$0xff]
  %v6819 = vld [vmem:[%s731 + $0x18] sm:$0xff]
  %v6820 = vld [vmem:[%s731 + $0x20] sm:$0xff]
  %v6821 = vld [vmem:[%s731 + $0x28] sm:$0xff]
  %v6822 = vld [vmem:[%s731 + $0x30] sm:$0xff]
  %v6823 = vld [vmem:[%s731 + $0x38] sm:$0xff]
  %v6824 = vld [vmem:[%s731 + $0x40] sm:$0xff]
  %v6825 = vld [vmem:[%s731 + $0x48] sm:$0xff]
  %v6826 = vld [vmem:[%s731 + $0x50] sm:$0xff]
  %v6827 = vld [vmem:[%s731 + $0x58] sm:$0xff]
  %v6828 = vld [vmem:[%s731 + $0x60] sm:$0xff]
  %v6829 = vld [vmem:[%s731 + $0x68] sm:$0xff]
  %v6830 = vld [vmem:[%s731 + $0x70] sm:$0xff]
  %v6831 = vld [vmem:[%s731 + $0x78] sm:$0xff]
  %v6832 = vld [vmem:[%s731 + $0x80] sm:$0xff]
  %v6833 = vld [vmem:[%s731 + $0x88] sm:$0xff]
  %v6834 = vld [vmem:[%s731 + $0x90] sm:$0xff]
  %v6835 = vld [vmem:[%s731 + $0x98] sm:$0xff]
  %v6836 = vld [vmem:[%s731 + $0xa0] sm:$0xff]
  %v6837 = vld [vmem:[%s731 + $0xa8] sm:$0xff]
  %v6838 = vld [vmem:[%s731 + $0xb0] sm:$0xff]
  %v6839 = vld [vmem:[%s731 + $0xb8] sm:$0xff]
  %v6840 = vld [vmem:[%s731 + $0xc0] sm:$0xff]
  %v6841 = vld [vmem:[%s731 + $0xc8] sm:$0xff]
  %v6842 = vld [vmem:[%s731 + $0xd0] sm:$0xff]
  %v6843 = vld [vmem:[%s731 + $0xd8] sm:$0xff]
  %v6844 = vld [vmem:[%s731 + $0xe0] sm:$0xff]
  %v6845 = vld [vmem:[%s731 + $0xe8] sm:$0xff]
  %v6846 = vld [vmem:[%s731 + $0xf0] sm:$0xff]
  %v6847 = vld [vmem:[%s731 + $0xf8] sm:$0xff]
  %v6848 = vld [vmem:[%s731 + $0x100] sm:$0xff]
  %v6849 = vld [vmem:[%s731 + $0x108] sm:$0xff]
  %v6850 = vld [vmem:[%s731 + $0x110] sm:$0xff]
  %v6851 = vld [vmem:[%s731 + $0x118] sm:$0xff]
  %v6852 = vld [vmem:[%s731 + $0x120] sm:$0xff]
  %v6853 = vld [vmem:[%s731 + $0x128] sm:$0xff]
  %v6854 = vld [vmem:[%s731 + $0x130] sm:$0xff]
  %v6855 = vld [vmem:[%s731 + $0x138] sm:$0xff]
  %v6856 = vld [vmem:[%s731 + $0x140] sm:$0xff]
  %v6857 = vld [vmem:[%s731 + $0x148] sm:$0xff]
  %v6858 = vld [vmem:[%s731 + $0x150] sm:$0xff]
  %v6859 = vld [vmem:[%s731 + $0x158] sm:$0xff]
  %v6860 = vld [vmem:[%s731 + $0x160] sm:$0xff]
  %v6861 = vld [vmem:[%s731 + $0x168] sm:$0xff]
  %v6862 = vld [vmem:[%s731 + $0x170] sm:$0xff]
  %v6863 = vld [vmem:[%s731 + $0x178] sm:$0xff]
  %6864 = vmatprep.subr.mxu0 %v6862
  %6865 = vmatpush1.msra.mxu0 %v6861
  %6866 = vmatprep.subr.mxu0 %v6859
  %6867 = vmatpush1.msra.mxu0 %v6858
  %6868 = vmatprep.subr.mxu0 %v6856
  %6869 = vmatpush1.msra.mxu0 %v6855
  %6870 = vmatprep.subr.mxu0 %v6853
  %6871 = vmatpush1.msra.mxu0 %v6852
  %6872 = vmatprep.subr.mxu0 %v6850
  %6873 = vmatpush1.msra.mxu0 %v6849
  %6874 = vmatprep.subr.mxu0 %v6847
  %6875 = vmatpush1.msra.mxu0 %v6846
  %6876 = vmatprep.subr.mxu0 %v6844
  %6877 = vmatpush1.msra.mxu0 %v6843
  %6878 = vmatprep.subr.mxu0 %v6841
  %6879 = vmatpush1.msra.mxu0 %v6840
  %6880 = vmatprep.subr.mxu0 %v6838
  %6881 = vmatpush1.msra.mxu0 %v6837
  %6882 = vmatprep.subr.mxu0 %v6835
  %6883 = vmatpush1.msra.mxu0 %v6834
  %6884 = vmatprep.subr.mxu0 %v6832
  %6885 = vmatpush1.msra.mxu0 %v6831
  %6886 = vmatprep.subr.mxu0 %v6829
  %6887 = vmatpush1.msra.mxu0 %v6828
  %6888 = vmatprep.subr.mxu0 %v6826
  %6889 = vmatpush1.msra.mxu0 %v6825
  %6890 = vmatprep.subr.mxu0 %v6823
  %6891 = vmatpush1.msra.mxu0 %v6822
  %6892 = vmatprep.subr.mxu0 %v6820
  %6893 = vmatpush1.msra.mxu0 %v6819
  %6894 = vmatprep.subr.mxu0 %v6817
  %6895 = vmatpush1.msra.mxu0 %v6816
  %6896 = vmatprep.subr.mxu0 0.0
  %6897 = vmatpush2.msra.mxu0 0.0
  %6898 = vmatprep.subr.mxu0 0.0
  %6899 = vmatpush2.msra.mxu0 0.0
  %6900 = vmatprep.subr.mxu0 0.0
  %6901 = vmatpush2.msra.mxu0 0.0
  %6902 = vmatprep.subr.mxu0 0.0
  %6903 = vmatpush2.msra.mxu0 0.0
  %6904 = vmatprep.subr.mxu0 0.0
  %6905 = vmatpush2.msra.mxu0 0.0
  %6906 = vmatprep.subr.mxu0 0.0
  %6907 = vmatpush2.msra.mxu0 0.0
  %6908 = vmatprep.subr.mxu0 0.0
  %6909 = vmatpush2.msra.mxu0 0.0
  %6910 = vmatprep.subr.mxu0 0.0
  %6911 = vmatpush2.msra.mxu0 0.0
  %6912 = vmatprep.subr.mxu0 0.0
  %6913 = vmatpush2.msra.mxu0 0.0
  %6914 = vmatprep.subr.mxu0 0.0
  %6915 = vmatpush2.msra.mxu0 0.0
  %6916 = vmatprep.subr.mxu0 0.0
  %6917 = vmatpush2.msra.mxu0 0.0
  %6918 = vmatprep.subr.mxu0 0.0
  %6919 = vmatpush2.msra.mxu0 0.0
  %6920 = vmatprep.subr.mxu0 0.0
  %6921 = vmatpush2.msra.mxu0 0.0
  %6922 = vmatprep.subr.mxu0 0.0
  %6923 = vmatpush2.msra.mxu0 0.0
  %6924 = vmatprep.subr.mxu0 0.0
  %6925 = vmatpush2.msra.mxu0 0.0
  %6926 = vmatprep.subr.mxu0 0.0
  %6927 = vmatpush2.msra.mxu0 0.0
  %6928 = vmatprep.mubr.f32.mxu0 0.0
  %6929 = vmatmul.mubr.f32.gmra.mxu0 %v6815
  %v6930 = vpop.f32.mrf.mxu0
  %v6931 = vadd.f32 %v48, %v6930
  %v6932 = vpop.f32.mrf.mxu0
  %v6933 = vadd.f32 %v52, %v6932
  %6934 = vdwg.mxu0
  %6935 = vmatprep.subr.mxu0 0.0
  %6936 = vmatpush1.msra.mxu0 %v6863
  %6937 = vmatprep.subr.mxu0 0.0
  %6938 = vmatpush1.msra.mxu0 %v6860
  %6939 = vmatprep.subr.mxu0 0.0
  %6940 = vmatpush1.msra.mxu0 %v6857
  %6941 = vmatprep.subr.mxu0 0.0
  %6942 = vmatpush1.msra.mxu0 %v6854
  %6943 = vmatprep.subr.mxu0 0.0
  %6944 = vmatpush1.msra.mxu0 %v6851
  %6945 = vmatprep.subr.mxu0 0.0
  %6946 = vmatpush1.msra.mxu0 %v6848
  %6947 = vmatprep.subr.mxu0 0.0
  %6948 = vmatpush1.msra.mxu0 %v6845
  %6949 = vmatprep.subr.mxu0 0.0
  %6950 = vmatpush1.msra.mxu0 %v6842
  %6951 = vmatprep.subr.mxu0 0.0
  %6952 = vmatpush1.msra.mxu0 %v6839
  %6953 = vmatprep.subr.mxu0 0.0
  %6954 = vmatpush1.msra.mxu0 %v6836
  %6955 = vmatprep.subr.mxu0 0.0
  %6956 = vmatpush1.msra.mxu0 %v6833
  %6957 = vmatprep.subr.mxu0 0.0
  %6958 = vmatpush1.msra.mxu0 %v6830
  %6959 = vmatprep.subr.mxu0 0.0
  %6960 = vmatpush1.msra.mxu0 %v6827
  %6961 = vmatprep.subr.mxu0 0.0
  %6962 = vmatpush1.msra.mxu0 %v6824
  %6963 = vmatprep.subr.mxu0 0.0
  %6964 = vmatpush1.msra.mxu0 %v6821
  %6965 = vmatprep.subr.mxu0 0.0
  %6966 = vmatpush1.msra.mxu0 %v6818
  %6967 = vmatprep.subr.mxu0 0.0
  %6968 = vmatpush2.msra.mxu0 0.0
  %6969 = vmatprep.subr.mxu0 0.0
  %6970 = vmatpush2.msra.mxu0 0.0
  %6971 = vmatprep.subr.mxu0 0.0
  %6972 = vmatpush2.msra.mxu0 0.0
  %6973 = vmatprep.subr.mxu0 0.0
  %6974 = vmatpush2.msra.mxu0 0.0
  %6975 = vmatprep.subr.mxu0 0.0
  %6976 = vmatpush2.msra.mxu0 0.0
  %6977 = vmatprep.subr.mxu0 0.0
  %6978 = vmatpush2.msra.mxu0 0.0
  %6979 = vmatprep.subr.mxu0 0.0
  %6980 = vmatpush2.msra.mxu0 0.0
  %6981 = vmatprep.subr.mxu0 0.0
  %6982 = vmatpush2.msra.mxu0 0.0
  %6983 = vmatprep.subr.mxu0 0.0
  %6984 = vmatpush2.msra.mxu0 0.0
  %6985 = vmatprep.subr.mxu0 0.0
  %6986 = vmatpush2.msra.mxu0 0.0
  %6987 = vmatprep.subr.mxu0 0.0
  %6988 = vmatpush2.msra.mxu0 0.0
  %6989 = vmatprep.subr.mxu0 0.0
  %6990 = vmatpush2.msra.mxu0 0.0
  %6991 = vmatprep.subr.mxu0 0.0
  %6992 = vmatpush2.msra.mxu0 0.0
  %6993 = vmatprep.subr.mxu0 0.0
  %6994 = vmatpush2.msra.mxu0 0.0
  %6995 = vmatprep.subr.mxu0 0.0
  %6996 = vmatpush2.msra.mxu0 0.0
  %6997 = vmatprep.subr.mxu0 0.0
  %6998 = vmatpush2.msra.mxu0 0.0
  %6999 = vmatprep.mubr.f32.mxu0 0.0
  %7000 = vmatmul.mubr.f32.gmra.mxu0 %v6815
  %v7001 = vpop.f32.mrf.mxu0
  %v7002 = vadd.f32 %v56, %v7001
  %v7003 = vpop.f32.mrf.mxu0
  %7004 = vdwg.mxu0
  %v7005 = vld [vmem:[%s921] sm:$0xff]
  %v7006 = vld [vmem:[%s921 + $0x8] sm:$0xff]
  %v7007 = vld [vmem:[%s921 + $0x10] sm:$0xff]
  %v7008 = vld [vmem:[%s921 + $0x18] sm:$0xff]
  %v7009 = vld [vmem:[%s921 + $0x20] sm:$0xff]
  %v7010 = vld [vmem:[%s921 + $0x28] sm:$0xff]
  %v7011 = vld [vmem:[%s921 + $0x30] sm:$0xff]
  %v7012 = vld [vmem:[%s921 + $0x38] sm:$0xff]
  %v7013 = vld [vmem:[%s921 + $0x40] sm:$0xff]
  %v7014 = vld [vmem:[%s921 + $0x48] sm:$0xff]
  %v7015 = vld [vmem:[%s921 + $0x50] sm:$0xff]
  %v7016 = vld [vmem:[%s921 + $0x58] sm:$0xff]
  %v7017 = vld [vmem:[%s921 + $0x60] sm:$0xff]
  %v7018 = vld [vmem:[%s921 + $0x68] sm:$0xff]
  %v7019 = vld [vmem:[%s921 + $0x70] sm:$0xff]
  %v7020 = vld [vmem:[%s921 + $0x78] sm:$0xff]
  %v7021 = vld [vmem:[%s921 + $0x80] sm:$0xff]
  %v7022 = vld [vmem:[%s921 + $0x88] sm:$0xff]
  %v7023 = vld [vmem:[%s921 + $0x90] sm:$0xff]
  %v7024 = vld [vmem:[%s921 + $0x98] sm:$0xff]
  %v7025 = vld [vmem:[%s921 + $0xa0] sm:$0xff]
  %v7026 = vld [vmem:[%s921 + $0xa8] sm:$0xff]
  %v7027 = vld [vmem:[%s921 + $0xb0] sm:$0xff]
  %v7028 = vld [vmem:[%s921 + $0xb8] sm:$0xff]
  %v7029 = vld [vmem:[%s921 + $0xc0] sm:$0xff]
  %v7030 = vld [vmem:[%s921 + $0xc8] sm:$0xff]
  %v7031 = vld [vmem:[%s921 + $0xd0] sm:$0xff]
  %v7032 = vld [vmem:[%s921 + $0xd8] sm:$0xff]
  %v7033 = vld [vmem:[%s921 + $0xe0] sm:$0xff]
  %v7034 = vld [vmem:[%s921 + $0xe8] sm:$0xff]
  %v7035 = vld [vmem:[%s921 + $0xf0] sm:$0xff]
  %v7036 = vld [vmem:[%s921 + $0xf8] sm:$0xff]
  %v7037 = vld [vmem:[%s921 + $0x100] sm:$0xff]
  %v7038 = vld [vmem:[%s921 + $0x108] sm:$0xff]
  %v7039 = vld [vmem:[%s921 + $0x110] sm:$0xff]
  %v7040 = vld [vmem:[%s921 + $0x118] sm:$0xff]
  %v7041 = vld [vmem:[%s921 + $0x120] sm:$0xff]
  %v7042 = vld [vmem:[%s921 + $0x128] sm:$0xff]
  %v7043 = vld [vmem:[%s921 + $0x130] sm:$0xff]
  %v7044 = vld [vmem:[%s921 + $0x138] sm:$0xff]
  %v7045 = vld [vmem:[%s921 + $0x140] sm:$0xff]
  %v7046 = vld [vmem:[%s921 + $0x148] sm:$0xff]
  %v7047 = vld [vmem:[%s921 + $0x150] sm:$0xff]
  %v7048 = vld [vmem:[%s921 + $0x158] sm:$0xff]
  %v7049 = vld [vmem:[%s921 + $0x160] sm:$0xff]
  %v7050 = vld [vmem:[%s921 + $0x168] sm:$0xff]
  %v7051 = vld [vmem:[%s921 + $0x170] sm:$0xff]
  %v7052 = vld [vmem:[%s921 + $0x178] sm:$0xff]
  %7053 = vmatprep.subr.mxu0 %v7051
  %7054 = vmatpush1.msra.mxu0 %v7050
  %7055 = vmatprep.subr.mxu0 %v7048
  %7056 = vmatpush1.msra.mxu0 %v7047
  %7057 = vmatprep.subr.mxu0 %v7045
  %7058 = vmatpush1.msra.mxu0 %v7044
  %7059 = vmatprep.subr.mxu0 %v7042
  %7060 = vmatpush1.msra.mxu0 %v7041
  %7061 = vmatprep.subr.mxu0 %v7039
  %7062 = vmatpush1.msra.mxu0 %v7038
  %7063 = vmatprep.subr.mxu0 %v7036
  %7064 = vmatpush1.msra.mxu0 %v7035
  %7065 = vmatprep.subr.mxu0 %v7033
  %7066 = vmatpush1.msra.mxu0 %v7032
  %7067 = vmatprep.subr.mxu0 %v7030
  %7068 = vmatpush1.msra.mxu0 %v7029
  %7069 = vmatprep.subr.mxu0 %v7027
  %7070 = vmatpush1.msra.mxu0 %v7026
  %7071 = vmatprep.subr.mxu0 %v7024
  %7072 = vmatpush1.msra.mxu0 %v7023
  %7073 = vmatprep.subr.mxu0 %v7021
  %7074 = vmatpush1.msra.mxu0 %v7020
  %7075 = vmatprep.subr.mxu0 %v7018
  %7076 = vmatpush1.msra.mxu0 %v7017
  %7077 = vmatprep.subr.mxu0 %v7015
  %7078 = vmatpush1.msra.mxu0 %v7014
  %7079 = vmatprep.subr.mxu0 %v7012
  %7080 = vmatpush1.msra.mxu0 %v7011
  %7081 = vmatprep.subr.mxu0 %v7009
  %7082 = vmatpush1.msra.mxu0 %v7008
  %7083 = vmatprep.subr.mxu0 %v7006
  %7084 = vmatpush1.msra.mxu0 %v7005
  %7085 = vmatprep.subr.mxu0 0.0
  %7086 = vmatpush2.msra.mxu0 0.0
  %7087 = vmatprep.subr.mxu0 0.0
  %7088 = vmatpush2.msra.mxu0 0.0
  %7089 = vmatprep.subr.mxu0 0.0
  %7090 = vmatpush2.msra.mxu0 0.0
  %7091 = vmatprep.subr.mxu0 0.0
  %7092 = vmatpush2.msra.mxu0 0.0
  %7093 = vmatprep.subr.mxu0 0.0
  %7094 = vmatpush2.msra.mxu0 0.0
  %7095 = vmatprep.subr.mxu0 0.0
  %7096 = vmatpush2.msra.mxu0 0.0
  %7097 = vmatprep.subr.mxu0 0.0
  %7098 = vmatpush2.msra.mxu0 0.0
  %7099 = vmatprep.subr.mxu0 0.0
  %7100 = vmatpush2.msra.mxu0 0.0
  %7101 = vmatprep.subr.mxu0 0.0
  %7102 = vmatpush2.msra.mxu0 0.0
  %7103 = vmatprep.subr.mxu0 0.0
  %7104 = vmatpush2.msra.mxu0 0.0
  %7105 = vmatprep.subr.mxu0 0.0
  %7106 = vmatpush2.msra.mxu0 0.0
  %7107 = vmatprep.subr.mxu0 0.0
  %7108 = vmatpush2.msra.mxu0 0.0
  %7109 = vmatprep.subr.mxu0 0.0
  %7110 = vmatpush2.msra.mxu0 0.0
  %7111 = vmatprep.subr.mxu0 0.0
  %7112 = vmatpush2.msra.mxu0 0.0
  %7113 = vmatprep.subr.mxu0 0.0
  %7114 = vmatpush2.msra.mxu0 0.0
  %7115 = vmatprep.subr.mxu0 0.0
  %7116 = vmatpush2.msra.mxu0 0.0
  %7117 = vmatprep.mubr.f32.mxu0 0.0
  %7118 = vmatmul.mubr.f32.gmra.mxu0 %v6200
  %v7119 = vpop.f32.mrf.mxu0
  %v7120 = vadd.f32 %v101, %v7119
  %v7121 = vpop.f32.mrf.mxu0
  %v7122 = vadd.f32 %v105, %v7121
  %7123 = vdwg.mxu0
  %7124 = vmatprep.subr.mxu0 0.0
  %7125 = vmatpush1.msra.mxu0 %v7052
  %7126 = vmatprep.subr.mxu0 0.0
  %7127 = vmatpush1.msra.mxu0 %v7049
  %7128 = vmatprep.subr.mxu0 0.0
  %7129 = vmatpush1.msra.mxu0 %v7046
  %7130 = vmatprep.subr.mxu0 0.0
  %7131 = vmatpush1.msra.mxu0 %v7043
  %7132 = vmatprep.subr.mxu0 0.0
  %7133 = vmatpush1.msra.mxu0 %v7040
  %7134 = vmatprep.subr.mxu0 0.0
  %7135 = vmatpush1.msra.mxu0 %v7037
  %7136 = vmatprep.subr.mxu0 0.0
  %7137 = vmatpush1.msra.mxu0 %v7034
  %7138 = vmatprep.subr.mxu0 0.0
  %7139 = vmatpush1.msra.mxu0 %v7031
  %7140 = vmatprep.subr.mxu0 0.0
  %7141 = vmatpush1.msra.mxu0 %v7028
  %7142 = vmatprep.subr.mxu0 0.0
  %7143 = vmatpush1.msra.mxu0 %v7025
  %7144 = vmatprep.subr.mxu0 0.0
  %7145 = vmatpush1.msra.mxu0 %v7022
  %7146 = vmatprep.subr.mxu0 0.0
  %7147 = vmatpush1.msra.mxu0 %v7019
  %7148 = vmatprep.subr.mxu0 0.0
  %7149 = vmatpush1.msra.mxu0 %v7016
  %7150 = vmatprep.subr.mxu0 0.0
  %7151 = vmatpush1.msra.mxu0 %v7013
  %7152 = vmatprep.subr.mxu0 0.0
  %7153 = vmatpush1.msra.mxu0 %v7010
  %7154 = vmatprep.subr.mxu0 0.0
  %7155 = vmatpush1.msra.mxu0 %v7007
  %7156 = vmatprep.subr.mxu0 0.0
  %7157 = vmatpush2.msra.mxu0 0.0
  %7158 = vmatprep.subr.mxu0 0.0
  %7159 = vmatpush2.msra.mxu0 0.0
  %7160 = vmatprep.subr.mxu0 0.0
  %7161 = vmatpush2.msra.mxu0 0.0
  %7162 = vmatprep.subr.mxu0 0.0
  %7163 = vmatpush2.msra.mxu0 0.0
  %7164 = vmatprep.subr.mxu0 0.0
  %7165 = vmatpush2.msra.mxu0 0.0
  %7166 = vmatprep.subr.mxu0 0.0
  %7167 = vmatpush2.msra.mxu0 0.0
  %7168 = vmatprep.subr.mxu0 0.0
  %7169 = vmatpush2.msra.mxu0 0.0
  %7170 = vmatprep.subr.mxu0 0.0
  %7171 = vmatpush2.msra.mxu0 0.0
  %7172 = vmatprep.subr.mxu0 0.0
  %7173 = vmatpush2.msra.mxu0 0.0
  %7174 = vmatprep.subr.mxu0 0.0
  %7175 = vmatpush2.msra.mxu0 0.0
  %7176 = vmatprep.subr.mxu0 0.0
  %7177 = vmatpush2.msra.mxu0 0.0
  %7178 = vmatprep.subr.mxu0 0.0
  %7179 = vmatpush2.msra.mxu0 0.0
  %7180 = vmatprep.subr.mxu0 0.0
  %7181 = vmatpush2.msra.mxu0 0.0
  %7182 = vmatprep.subr.mxu0 0.0
  %7183 = vmatpush2.msra.mxu0 0.0
  %7184 = vmatprep.subr.mxu0 0.0
  %7185 = vmatpush2.msra.mxu0 0.0
  %7186 = vmatprep.subr.mxu0 0.0
  %7187 = vmatpush2.msra.mxu0 0.0
  %7188 = vmatprep.mubr.f32.mxu0 0.0
  %7189 = vmatmul.mubr.f32.gmra.mxu0 %v6200
  %v7190 = vpop.f32.mrf.mxu0
  %v7191 = vadd.f32 %v109, %v7190
  %v7192 = vpop.f32.mrf.mxu0
  %7193 = vdwg.mxu0
  %v7194 = vadd.f32 %v6931, %v7120
  %v7195 = vxor.u32 %v7194, 2147483648
  %v7196 = vmul.f32 %v7195, 1.442695
  %v7197 = vpow.pop %v7196
  %v7198 = vadd.f32 %v7197, 1.0
  %v7199 = vrcp.pop %v7198
  %v7200 = vmul.f32 1.0, %v7199
  %v7201 = vadd.f32 %v6933, %v7122
  %v7202 = vxor.u32 %v7201, 2147483648
  %v7203 = vmul.f32 %v7202, 1.442695
  %v7204 = vpow.pop %v7203
  %v7205 = vadd.f32 %v7204, 1.0
  %v7206 = vrcp.pop %v7205
  %v7207 = vmul.f32 1.0, %v7206
  %v7208 = vmul.f32 %v7200, %v7191
  %v7209 = vadd.f32 %v7002, %v7208
  %v7210 = vtanh.pop %v7209
  %v7211 = vsub.f32 1.0, %v7207
  %v7212 = vmul.f32 %v7211, %v7210
  %v7213 = vmul.f32 %v7207, %v6200
  %v7214 = vadd.f32 %v7212, %v7213
  %s7215 = scalar_lea.vmem %s6, 48
  %7216 = vst [vmem:[%s7215] sm:$0xff] %v7214
  %s7217 = scalar_lea.vmem %s0, 168
  %v7218 = vld [vmem:[%s7217] sm:$0xff]
  %v7219 = vld [vmem:[%s7217 + $0x8] sm:$0xff]
  %v7220 = vld [vmem:[%s7217 + $0x10] sm:$0xff]
  %v7221 = vld [vmem:[%s2] sm:$0xff]
  %v7222 = vld [vmem:[%s2 + $0x8] sm:$0xff]
  %v7223 = vld [vmem:[%s2 + $0x10] sm:$0xff]
  %v7224 = vld [vmem:[%s2 + $0x18] sm:$0xff]
  %v7225 = vld [vmem:[%s2 + $0x20] sm:$0xff]
  %v7226 = vld [vmem:[%s2 + $0x28] sm:$0xff]
  %v7227 = vld [vmem:[%s2 + $0x30] sm:$0xff]
  %v7228 = vld [vmem:[%s2 + $0x38] sm:$0xff]
  %v7229 = vld [vmem:[%s2 + $0x40] sm:$0xff]
  %v7230 = vld [vmem:[%s2 + $0x48] sm:$0xff]
  %v7231 = vld [vmem:[%s2 + $0x50] sm:$0xff]
  %v7232 = vld [vmem:[%s2 + $0x58] sm:$0xff]
  %v7233 = vld [vmem:[%s2 + $0x60] sm:$0xff]
  %v7234 = vld [vmem:[%s2 + $0x68] sm:$0xff]
  %v7235 = vld [vmem:[%s2 + $0x70] sm:$0xff]
  %v7236 = vld [vmem:[%s2 + $0x78] sm:$0xff]
  %v7237 = vld [vmem:[%s2 + $0x80] sm:$0xff]
  %v7238 = vld [vmem:[%s2 + $0x88] sm:$0xff]
  %v7239 = vld [vmem:[%s2 + $0x90] sm:$0xff]
  %v7240 = vld [vmem:[%s2 + $0x98] sm:$0xff]
  %v7241 = vld [vmem:[%s2 + $0xa0] sm:$0xff]
  %v7242 = vld [vmem:[%s2 + $0xa8] sm:$0xff]
  %v7243 = vld [vmem:[%s2 + $0xb0] sm:$0xff]
  %v7244 = vld [vmem:[%s2 + $0xb8] sm:$0xff]
  %v7245 = vld [vmem:[%s2 + $0xc0] sm:$0xff]
  %v7246 = vld [vmem:[%s2 + $0xc8] sm:$0xff]
  %v7247 = vld [vmem:[%s2 + $0xd0] sm:$0xff]
  %v7248 = vld [vmem:[%s2 + $0xd8] sm:$0xff]
  %v7249 = vld [vmem:[%s2 + $0xe0] sm:$0xff]
  %v7250 = vld [vmem:[%s2 + $0xe8] sm:$0xff]
  %v7251 = vld [vmem:[%s2 + $0xf0] sm:$0xff]
  %v7252 = vld [vmem:[%s2 + $0xf8] sm:$0xff]
  %v7253 = vld [vmem:[%s2 + $0x100] sm:$0xff]
  %v7254 = vld [vmem:[%s2 + $0x108] sm:$0xff]
  %v7255 = vld [vmem:[%s2 + $0x110] sm:$0xff]
  %v7256 = vld [vmem:[%s2 + $0x118] sm:$0xff]
  %v7257 = vld [vmem:[%s2 + $0x120] sm:$0xff]
  %v7258 = vld [vmem:[%s2 + $0x128] sm:$0xff]
  %v7259 = vld [vmem:[%s2 + $0x130] sm:$0xff]
  %v7260 = vld [vmem:[%s2 + $0x138] sm:$0xff]
  %v7261 = vld [vmem:[%s2 + $0x140] sm:$0xff]
  %v7262 = vld [vmem:[%s2 + $0x148] sm:$0xff]
  %v7263 = vld [vmem:[%s2 + $0x150] sm:$0xff]
  %v7264 = vld [vmem:[%s2 + $0x158] sm:$0xff]
  %v7265 = vld [vmem:[%s2 + $0x160] sm:$0xff]
  %v7266 = vld [vmem:[%s2 + $0x168] sm:$0xff]
  %v7267 = vld [vmem:[%s2 + $0x170] sm:$0xff]
  %v7268 = vld [vmem:[%s2 + $0x178] sm:$0xff]
  %7269 = vmatprep.subr.mxu0 %v7267
  %7270 = vmatpush1.msra.mxu0 %v7266
  %7271 = vmatprep.subr.mxu0 %v7264
  %7272 = vmatpush1.msra.mxu0 %v7263
  %7273 = vmatprep.subr.mxu0 %v7261
  %7274 = vmatpush1.msra.mxu0 %v7260
  %7275 = vmatprep.subr.mxu0 %v7258
  %7276 = vmatpush1.msra.mxu0 %v7257
  %7277 = vmatprep.subr.mxu0 %v7255
  %7278 = vmatpush1.msra.mxu0 %v7254
  %7279 = vmatprep.subr.mxu0 %v7252
  %7280 = vmatpush1.msra.mxu0 %v7251
  %7281 = vmatprep.subr.mxu0 %v7249
  %7282 = vmatpush1.msra.mxu0 %v7248
  %7283 = vmatprep.subr.mxu0 %v7246
  %7284 = vmatpush1.msra.mxu0 %v7245
  %7285 = vmatprep.subr.mxu0 %v7243
  %7286 = vmatpush1.msra.mxu0 %v7242
  %7287 = vmatprep.subr.mxu0 %v7240
  %7288 = vmatpush1.msra.mxu0 %v7239
  %7289 = vmatprep.subr.mxu0 %v7237
  %7290 = vmatpush1.msra.mxu0 %v7236
  %7291 = vmatprep.subr.mxu0 %v7234
  %7292 = vmatpush1.msra.mxu0 %v7233
  %7293 = vmatprep.subr.mxu0 %v7231
  %7294 = vmatpush1.msra.mxu0 %v7230
  %7295 = vmatprep.subr.mxu0 %v7228
  %7296 = vmatpush1.msra.mxu0 %v7227
  %7297 = vmatprep.subr.mxu0 %v7225
  %7298 = vmatpush1.msra.mxu0 %v7224
  %7299 = vmatprep.subr.mxu0 %v7222
  %7300 = vmatpush1.msra.mxu0 %v7221
  %7301 = vmatprep.subr.mxu0 0.0
  %7302 = vmatpush2.msra.mxu0 0.0
  %7303 = vmatprep.subr.mxu0 0.0
  %7304 = vmatpush2.msra.mxu0 0.0
  %7305 = vmatprep.subr.mxu0 0.0
  %7306 = vmatpush2.msra.mxu0 0.0
  %7307 = vmatprep.subr.mxu0 0.0
  %7308 = vmatpush2.msra.mxu0 0.0
  %7309 = vmatprep.subr.mxu0 0.0
  %7310 = vmatpush2.msra.mxu0 0.0
  %7311 = vmatprep.subr.mxu0 0.0
  %7312 = vmatpush2.msra.mxu0 0.0
  %7313 = vmatprep.subr.mxu0 0.0
  %7314 = vmatpush2.msra.mxu0 0.0
  %7315 = vmatprep.subr.mxu0 0.0
  %7316 = vmatpush2.msra.mxu0 0.0
  %7317 = vmatprep.subr.mxu0 0.0
  %7318 = vmatpush2.msra.mxu0 0.0
  %7319 = vmatprep.subr.mxu0 0.0
  %7320 = vmatpush2.msra.mxu0 0.0
  %7321 = vmatprep.subr.mxu0 0.0
  %7322 = vmatpush2.msra.mxu0 0.0
  %7323 = vmatprep.subr.mxu0 0.0
  %7324 = vmatpush2.msra.mxu0 0.0
  %7325 = vmatprep.subr.mxu0 0.0
  %7326 = vmatpush2.msra.mxu0 0.0
  %7327 = vmatprep.subr.mxu0 0.0
  %7328 = vmatpush2.msra.mxu0 0.0
  %7329 = vmatprep.subr.mxu0 0.0
  %7330 = vmatpush2.msra.mxu0 0.0
  %7331 = vmatprep.subr.mxu0 0.0
  %7332 = vmatpush2.msra.mxu0 0.0
  %7333 = vmatprep.mubr.f32.mxu0 0.0
  %7334 = vmatmul.mubr.f32.gmra.mxu0 %v6416
  %v7335 = vpop.f32.mrf.mxu0
  %v7336 = vadd.f32 %v65, %v7335
  %v7337 = vpop.f32.mrf.mxu0
  %v7338 = vadd.f32 %v69, %v7337
  %7339 = vdwg.mxu0
  %7340 = vmatprep.subr.mxu0 0.0
  %7341 = vmatpush1.msra.mxu0 %v7268
  %7342 = vmatprep.subr.mxu0 0.0
  %7343 = vmatpush1.msra.mxu0 %v7265
  %7344 = vmatprep.subr.mxu0 0.0
  %7345 = vmatpush1.msra.mxu0 %v7262
  %7346 = vmatprep.subr.mxu0 0.0
  %7347 = vmatpush1.msra.mxu0 %v7259
  %7348 = vmatprep.subr.mxu0 0.0
  %7349 = vmatpush1.msra.mxu0 %v7256
  %7350 = vmatprep.subr.mxu0 0.0
  %7351 = vmatpush1.msra.mxu0 %v7253
  %7352 = vmatprep.subr.mxu0 0.0
  %7353 = vmatpush1.msra.mxu0 %v7250
  %7354 = vmatprep.subr.mxu0 0.0
  %7355 = vmatpush1.msra.mxu0 %v7247
  %7356 = vmatprep.subr.mxu0 0.0
  %7357 = vmatpush1.msra.mxu0 %v7244
  %7358 = vmatprep.subr.mxu0 0.0
  %7359 = vmatpush1.msra.mxu0 %v7241
  %7360 = vmatprep.subr.mxu0 0.0
  %7361 = vmatpush1.msra.mxu0 %v7238
  %7362 = vmatprep.subr.mxu0 0.0
  %7363 = vmatpush1.msra.mxu0 %v7235
  %7364 = vmatprep.subr.mxu0 0.0
  %7365 = vmatpush1.msra.mxu0 %v7232
  %7366 = vmatprep.subr.mxu0 0.0
  %7367 = vmatpush1.msra.mxu0 %v7229
  %7368 = vmatprep.subr.mxu0 0.0
  %7369 = vmatpush1.msra.mxu0 %v7226
  %7370 = vmatprep.subr.mxu0 0.0
  %7371 = vmatpush1.msra.mxu0 %v7223
  %7372 = vmatprep.subr.mxu0 0.0
  %7373 = vmatpush2.msra.mxu0 0.0
  %7374 = vmatprep.subr.mxu0 0.0
  %7375 = vmatpush2.msra.mxu0 0.0
  %7376 = vmatprep.subr.mxu0 0.0
  %7377 = vmatpush2.msra.mxu0 0.0
  %7378 = vmatprep.subr.mxu0 0.0
  %7379 = vmatpush2.msra.mxu0 0.0
  %7380 = vmatprep.subr.mxu0 0.0
  %7381 = vmatpush2.msra.mxu0 0.0
  %7382 = vmatprep.subr.mxu0 0.0
  %7383 = vmatpush2.msra.mxu0 0.0
  %7384 = vmatprep.subr.mxu0 0.0
  %7385 = vmatpush2.msra.mxu0 0.0
  %7386 = vmatprep.subr.mxu0 0.0
  %7387 = vmatpush2.msra.mxu0 0.0
  %7388 = vmatprep.subr.mxu0 0.0
  %7389 = vmatpush2.msra.mxu0 0.0
  %7390 = vmatprep.subr.mxu0 0.0
  %7391 = vmatpush2.msra.mxu0 0.0
  %7392 = vmatprep.subr.mxu0 0.0
  %7393 = vmatpush2.msra.mxu0 0.0
  %7394 = vmatprep.subr.mxu0 0.0
  %7395 = vmatpush2.msra.mxu0 0.0
  %7396 = vmatprep.subr.mxu0 0.0
  %7397 = vmatpush2.msra.mxu0 0.0
  %7398 = vmatprep.subr.mxu0 0.0
  %7399 = vmatpush2.msra.mxu0 0.0
  %7400 = vmatprep.subr.mxu0 0.0
  %7401 = vmatpush2.msra.mxu0 0.0
  %7402 = vmatprep.subr.mxu0 0.0
  %7403 = vmatpush2.msra.mxu0 0.0
  %7404 = vmatprep.mubr.f32.mxu0 0.0
  %7405 = vmatmul.mubr.f32.gmra.mxu0 %v6416
  %v7406 = vpop.f32.mrf.mxu0
  %v7407 = vadd.f32 %v73, %v7406
  %v7408 = vpop.f32.mrf.mxu0
  %7409 = vdwg.mxu0
  %v7410 = vadd.f32 %v7218, %v7336
  %v7411 = vxor.u32 %v7410, 2147483648
  %v7412 = vmul.f32 %v7411, 1.442695
  %v7413 = vpow.pop %v7412
  %v7414 = vadd.f32 %v7413, 1.0
  %v7415 = vrcp.pop %v7414
  %v7416 = vmul.f32 1.0, %v7415
  %v7417 = vadd.f32 %v7219, %v7338
  %v7418 = vxor.u32 %v7417, 2147483648
  %v7419 = vmul.f32 %v7418, 1.442695
  %v7420 = vpow.pop %v7419
  %v7421 = vadd.f32 %v7420, 1.0
  %v7422 = vrcp.pop %v7421
  %v7423 = vmul.f32 1.0, %v7422
  %v7424 = vmul.f32 %v7416, %v7407
  %v7425 = vadd.f32 %v7220, %v7424
  %v7426 = vtanh.pop %v7425
  %v7427 = vsub.f32 1.0, %v7423
  %v7428 = vmul.f32 %v7427, %v7426
  %v7429 = vmul.f32 %v7423, %v6416
  %v7430 = vadd.f32 %v7428, %v7429
  %v7431 = vld [vmem:[%s3] sm:$0xff]
  %v7432 = vld [vmem:[%s3 + $0x8] sm:$0xff]
  %v7433 = vld [vmem:[%s3 + $0x10] sm:$0xff]
  %v7434 = vld [vmem:[%s3 + $0x18] sm:$0xff]
  %v7435 = vld [vmem:[%s3 + $0x20] sm:$0xff]
  %v7436 = vld [vmem:[%s3 + $0x28] sm:$0xff]
  %v7437 = vld [vmem:[%s3 + $0x30] sm:$0xff]
  %v7438 = vld [vmem:[%s3 + $0x38] sm:$0xff]
  %v7439 = vld [vmem:[%s3 + $0x40] sm:$0xff]
  %v7440 = vld [vmem:[%s3 + $0x48] sm:$0xff]
  %v7441 = vld [vmem:[%s3 + $0x50] sm:$0xff]
  %v7442 = vld [vmem:[%s3 + $0x58] sm:$0xff]
  %v7443 = vld [vmem:[%s3 + $0x60] sm:$0xff]
  %v7444 = vld [vmem:[%s3 + $0x68] sm:$0xff]
  %v7445 = vld [vmem:[%s3 + $0x70] sm:$0xff]
  %v7446 = vld [vmem:[%s3 + $0x78] sm:$0xff]
  %v7447 = vld [vmem:[%s3 + $0x80] sm:$0xff]
  %v7448 = vld [vmem:[%s3 + $0x88] sm:$0xff]
  %v7449 = vld [vmem:[%s3 + $0x90] sm:$0xff]
  %v7450 = vld [vmem:[%s3 + $0x98] sm:$0xff]
  %v7451 = vld [vmem:[%s3 + $0xa0] sm:$0xff]
  %v7452 = vld [vmem:[%s3 + $0xa8] sm:$0xff]
  %v7453 = vld [vmem:[%s3 + $0xb0] sm:$0xff]
  %v7454 = vld [vmem:[%s3 + $0xb8] sm:$0xff]
  %v7455 = vld [vmem:[%s3 + $0xc0] sm:$0xff]
  %v7456 = vld [vmem:[%s3 + $0xc8] sm:$0xff]
  %v7457 = vld [vmem:[%s3 + $0xd0] sm:$0xff]
  %v7458 = vld [vmem:[%s3 + $0xd8] sm:$0xff]
  %v7459 = vld [vmem:[%s3 + $0xe0] sm:$0xff]
  %v7460 = vld [vmem:[%s3 + $0xe8] sm:$0xff]
  %v7461 = vld [vmem:[%s3 + $0xf0] sm:$0xff]
  %v7462 = vld [vmem:[%s3 + $0xf8] sm:$0xff]
  %v7463 = vld [vmem:[%s3 + $0x100] sm:$0xff]
  %v7464 = vld [vmem:[%s3 + $0x108] sm:$0xff]
  %v7465 = vld [vmem:[%s3 + $0x110] sm:$0xff]
  %v7466 = vld [vmem:[%s3 + $0x118] sm:$0xff]
  %v7467 = vld [vmem:[%s3 + $0x120] sm:$0xff]
  %v7468 = vld [vmem:[%s3 + $0x128] sm:$0xff]
  %v7469 = vld [vmem:[%s3 + $0x130] sm:$0xff]
  %v7470 = vld [vmem:[%s3 + $0x138] sm:$0xff]
  %v7471 = vld [vmem:[%s3 + $0x140] sm:$0xff]
  %v7472 = vld [vmem:[%s3 + $0x148] sm:$0xff]
  %v7473 = vld [vmem:[%s3 + $0x150] sm:$0xff]
  %v7474 = vld [vmem:[%s3 + $0x158] sm:$0xff]
  %v7475 = vld [vmem:[%s3 + $0x160] sm:$0xff]
  %v7476 = vld [vmem:[%s3 + $0x168] sm:$0xff]
  %v7477 = vld [vmem:[%s3 + $0x170] sm:$0xff]
  %v7478 = vld [vmem:[%s3 + $0x178] sm:$0xff]
  %7479 = vmatprep.subr.mxu0 %v7477
  %7480 = vmatpush1.msra.mxu0 %v7476
  %7481 = vmatprep.subr.mxu0 %v7474
  %7482 = vmatpush1.msra.mxu0 %v7473
  %7483 = vmatprep.subr.mxu0 %v7471
  %7484 = vmatpush1.msra.mxu0 %v7470
  %7485 = vmatprep.subr.mxu0 %v7468
  %7486 = vmatpush1.msra.mxu0 %v7467
  %7487 = vmatprep.subr.mxu0 %v7465
  %7488 = vmatpush1.msra.mxu0 %v7464
  %7489 = vmatprep.subr.mxu0 %v7462
  %7490 = vmatpush1.msra.mxu0 %v7461
  %7491 = vmatprep.subr.mxu0 %v7459
  %7492 = vmatpush1.msra.mxu0 %v7458
  %7493 = vmatprep.subr.mxu0 %v7456
  %7494 = vmatpush1.msra.mxu0 %v7455
  %7495 = vmatprep.subr.mxu0 %v7453
  %7496 = vmatpush1.msra.mxu0 %v7452
  %7497 = vmatprep.subr.mxu0 %v7450
  %7498 = vmatpush1.msra.mxu0 %v7449
  %7499 = vmatprep.subr.mxu0 %v7447
  %7500 = vmatpush1.msra.mxu0 %v7446
  %7501 = vmatprep.subr.mxu0 %v7444
  %7502 = vmatpush1.msra.mxu0 %v7443
  %7503 = vmatprep.subr.mxu0 %v7441
  %7504 = vmatpush1.msra.mxu0 %v7440
  %7505 = vmatprep.subr.mxu0 %v7438
  %7506 = vmatpush1.msra.mxu0 %v7437
  %7507 = vmatprep.subr.mxu0 %v7435
  %7508 = vmatpush1.msra.mxu0 %v7434
  %7509 = vmatprep.subr.mxu0 %v7432
  %7510 = vmatpush1.msra.mxu0 %v7431
  %7511 = vmatprep.subr.mxu0 0.0
  %7512 = vmatpush2.msra.mxu0 0.0
  %7513 = vmatprep.subr.mxu0 0.0
  %7514 = vmatpush2.msra.mxu0 0.0
  %7515 = vmatprep.subr.mxu0 0.0
  %7516 = vmatpush2.msra.mxu0 0.0
  %7517 = vmatprep.subr.mxu0 0.0
  %7518 = vmatpush2.msra.mxu0 0.0
  %7519 = vmatprep.subr.mxu0 0.0
  %7520 = vmatpush2.msra.mxu0 0.0
  %7521 = vmatprep.subr.mxu0 0.0
  %7522 = vmatpush2.msra.mxu0 0.0
  %7523 = vmatprep.subr.mxu0 0.0
  %7524 = vmatpush2.msra.mxu0 0.0
  %7525 = vmatprep.subr.mxu0 0.0
  %7526 = vmatpush2.msra.mxu0 0.0
  %7527 = vmatprep.subr.mxu0 0.0
  %7528 = vmatpush2.msra.mxu0 0.0
  %7529 = vmatprep.subr.mxu0 0.0
  %7530 = vmatpush2.msra.mxu0 0.0
  %7531 = vmatprep.subr.mxu0 0.0
  %7532 = vmatpush2.msra.mxu0 0.0
  %7533 = vmatprep.subr.mxu0 0.0
  %7534 = vmatpush2.msra.mxu0 0.0
  %7535 = vmatprep.subr.mxu0 0.0
  %7536 = vmatpush2.msra.mxu0 0.0
  %7537 = vmatprep.subr.mxu0 0.0
  %7538 = vmatpush2.msra.mxu0 0.0
  %7539 = vmatprep.subr.mxu0 0.0
  %7540 = vmatpush2.msra.mxu0 0.0
  %7541 = vmatprep.subr.mxu0 0.0
  %7542 = vmatpush2.msra.mxu0 0.0
  %7543 = vmatprep.mubr.f32.mxu0 0.0
  %7544 = vmatmul.mubr.f32.gmra.mxu0 %v7430
  %v7545 = vpop.f32.mrf.mxu0
  %v7546 = vadd.f32 %v30, %v7545
  %v7547 = vpop.f32.mrf.mxu0
  %v7548 = vadd.f32 %v34, %v7547
  %7549 = vdwg.mxu0
  %7550 = vmatprep.subr.mxu0 0.0
  %7551 = vmatpush1.msra.mxu0 %v7478
  %7552 = vmatprep.subr.mxu0 0.0
  %7553 = vmatpush1.msra.mxu0 %v7475
  %7554 = vmatprep.subr.mxu0 0.0
  %7555 = vmatpush1.msra.mxu0 %v7472
  %7556 = vmatprep.subr.mxu0 0.0
  %7557 = vmatpush1.msra.mxu0 %v7469
  %7558 = vmatprep.subr.mxu0 0.0
  %7559 = vmatpush1.msra.mxu0 %v7466
  %7560 = vmatprep.subr.mxu0 0.0
  %7561 = vmatpush1.msra.mxu0 %v7463
  %7562 = vmatprep.subr.mxu0 0.0
  %7563 = vmatpush1.msra.mxu0 %v7460
  %7564 = vmatprep.subr.mxu0 0.0
  %7565 = vmatpush1.msra.mxu0 %v7457
  %7566 = vmatprep.subr.mxu0 0.0
  %7567 = vmatpush1.msra.mxu0 %v7454
  %7568 = vmatprep.subr.mxu0 0.0
  %7569 = vmatpush1.msra.mxu0 %v7451
  %7570 = vmatprep.subr.mxu0 0.0
  %7571 = vmatpush1.msra.mxu0 %v7448
  %7572 = vmatprep.subr.mxu0 0.0
  %7573 = vmatpush1.msra.mxu0 %v7445
  %7574 = vmatprep.subr.mxu0 0.0
  %7575 = vmatpush1.msra.mxu0 %v7442
  %7576 = vmatprep.subr.mxu0 0.0
  %7577 = vmatpush1.msra.mxu0 %v7439
  %7578 = vmatprep.subr.mxu0 0.0
  %7579 = vmatpush1.msra.mxu0 %v7436
  %7580 = vmatprep.subr.mxu0 0.0
  %7581 = vmatpush1.msra.mxu0 %v7433
  %7582 = vmatprep.subr.mxu0 0.0
  %7583 = vmatpush2.msra.mxu0 0.0
  %7584 = vmatprep.subr.mxu0 0.0
  %7585 = vmatpush2.msra.mxu0 0.0
  %7586 = vmatprep.subr.mxu0 0.0
  %7587 = vmatpush2.msra.mxu0 0.0
  %7588 = vmatprep.subr.mxu0 0.0
  %7589 = vmatpush2.msra.mxu0 0.0
  %7590 = vmatprep.subr.mxu0 0.0
  %7591 = vmatpush2.msra.mxu0 0.0
  %7592 = vmatprep.subr.mxu0 0.0
  %7593 = vmatpush2.msra.mxu0 0.0
  %7594 = vmatprep.subr.mxu0 0.0
  %7595 = vmatpush2.msra.mxu0 0.0
  %7596 = vmatprep.subr.mxu0 0.0
  %7597 = vmatpush2.msra.mxu0 0.0
  %7598 = vmatprep.subr.mxu0 0.0
  %7599 = vmatpush2.msra.mxu0 0.0
  %7600 = vmatprep.subr.mxu0 0.0
  %7601 = vmatpush2.msra.mxu0 0.0
  %7602 = vmatprep.subr.mxu0 0.0
  %7603 = vmatpush2.msra.mxu0 0.0
  %7604 = vmatprep.subr.mxu0 0.0
  %7605 = vmatpush2.msra.mxu0 0.0
  %7606 = vmatprep.subr.mxu0 0.0
  %7607 = vmatpush2.msra.mxu0 0.0
  %7608 = vmatprep.subr.mxu0 0.0
  %7609 = vmatpush2.msra.mxu0 0.0
  %7610 = vmatprep.subr.mxu0 0.0
  %7611 = vmatpush2.msra.mxu0 0.0
  %7612 = vmatprep.subr.mxu0 0.0
  %7613 = vmatpush2.msra.mxu0 0.0
  %7614 = vmatprep.mubr.f32.mxu0 0.0
  %7615 = vmatmul.mubr.f32.gmra.mxu0 %v7430
  %v7616 = vpop.f32.mrf.mxu0
  %v7617 = vadd.f32 %v38, %v7616
  %v7618 = vpop.f32.mrf.mxu0
  %7619 = vdwg.mxu0
  %v7620 = vld [vmem:[%s520] sm:$0xff]
  %v7621 = vld [vmem:[%s520 + $0x8] sm:$0xff]
  %v7622 = vld [vmem:[%s520 + $0x10] sm:$0xff]
  %v7623 = vld [vmem:[%s520 + $0x18] sm:$0xff]
  %v7624 = vld [vmem:[%s520 + $0x20] sm:$0xff]
  %v7625 = vld [vmem:[%s520 + $0x28] sm:$0xff]
  %v7626 = vld [vmem:[%s520 + $0x30] sm:$0xff]
  %v7627 = vld [vmem:[%s520 + $0x38] sm:$0xff]
  %v7628 = vld [vmem:[%s520 + $0x40] sm:$0xff]
  %v7629 = vld [vmem:[%s520 + $0x48] sm:$0xff]
  %v7630 = vld [vmem:[%s520 + $0x50] sm:$0xff]
  %v7631 = vld [vmem:[%s520 + $0x58] sm:$0xff]
  %v7632 = vld [vmem:[%s520 + $0x60] sm:$0xff]
  %v7633 = vld [vmem:[%s520 + $0x68] sm:$0xff]
  %v7634 = vld [vmem:[%s520 + $0x70] sm:$0xff]
  %v7635 = vld [vmem:[%s520 + $0x78] sm:$0xff]
  %v7636 = vld [vmem:[%s520 + $0x80] sm:$0xff]
  %v7637 = vld [vmem:[%s520 + $0x88] sm:$0xff]
  %v7638 = vld [vmem:[%s520 + $0x90] sm:$0xff]
  %v7639 = vld [vmem:[%s520 + $0x98] sm:$0xff]
  %v7640 = vld [vmem:[%s520 + $0xa0] sm:$0xff]
  %v7641 = vld [vmem:[%s520 + $0xa8] sm:$0xff]
  %v7642 = vld [vmem:[%s520 + $0xb0] sm:$0xff]
  %v7643 = vld [vmem:[%s520 + $0xb8] sm:$0xff]
  %v7644 = vld [vmem:[%s520 + $0xc0] sm:$0xff]
  %v7645 = vld [vmem:[%s520 + $0xc8] sm:$0xff]
  %v7646 = vld [vmem:[%s520 + $0xd0] sm:$0xff]
  %v7647 = vld [vmem:[%s520 + $0xd8] sm:$0xff]
  %v7648 = vld [vmem:[%s520 + $0xe0] sm:$0xff]
  %v7649 = vld [vmem:[%s520 + $0xe8] sm:$0xff]
  %v7650 = vld [vmem:[%s520 + $0xf0] sm:$0xff]
  %v7651 = vld [vmem:[%s520 + $0xf8] sm:$0xff]
  %v7652 = vld [vmem:[%s520 + $0x100] sm:$0xff]
  %v7653 = vld [vmem:[%s520 + $0x108] sm:$0xff]
  %v7654 = vld [vmem:[%s520 + $0x110] sm:$0xff]
  %v7655 = vld [vmem:[%s520 + $0x118] sm:$0xff]
  %v7656 = vld [vmem:[%s520 + $0x120] sm:$0xff]
  %v7657 = vld [vmem:[%s520 + $0x128] sm:$0xff]
  %v7658 = vld [vmem:[%s520 + $0x130] sm:$0xff]
  %v7659 = vld [vmem:[%s520 + $0x138] sm:$0xff]
  %v7660 = vld [vmem:[%s520 + $0x140] sm:$0xff]
  %v7661 = vld [vmem:[%s520 + $0x148] sm:$0xff]
  %v7662 = vld [vmem:[%s520 + $0x150] sm:$0xff]
  %v7663 = vld [vmem:[%s520 + $0x158] sm:$0xff]
  %v7664 = vld [vmem:[%s520 + $0x160] sm:$0xff]
  %v7665 = vld [vmem:[%s520 + $0x168] sm:$0xff]
  %v7666 = vld [vmem:[%s520 + $0x170] sm:$0xff]
  %v7667 = vld [vmem:[%s520 + $0x178] sm:$0xff]
  %7668 = vmatprep.subr.mxu0 %v7666
  %7669 = vmatpush1.msra.mxu0 %v7665
  %7670 = vmatprep.subr.mxu0 %v7663
  %7671 = vmatpush1.msra.mxu0 %v7662
  %7672 = vmatprep.subr.mxu0 %v7660
  %7673 = vmatpush1.msra.mxu0 %v7659
  %7674 = vmatprep.subr.mxu0 %v7657
  %7675 = vmatpush1.msra.mxu0 %v7656
  %7676 = vmatprep.subr.mxu0 %v7654
  %7677 = vmatpush1.msra.mxu0 %v7653
  %7678 = vmatprep.subr.mxu0 %v7651
  %7679 = vmatpush1.msra.mxu0 %v7650
  %7680 = vmatprep.subr.mxu0 %v7648
  %7681 = vmatpush1.msra.mxu0 %v7647
  %7682 = vmatprep.subr.mxu0 %v7645
  %7683 = vmatpush1.msra.mxu0 %v7644
  %7684 = vmatprep.subr.mxu0 %v7642
  %7685 = vmatpush1.msra.mxu0 %v7641
  %7686 = vmatprep.subr.mxu0 %v7639
  %7687 = vmatpush1.msra.mxu0 %v7638
  %7688 = vmatprep.subr.mxu0 %v7636
  %7689 = vmatpush1.msra.mxu0 %v7635
  %7690 = vmatprep.subr.mxu0 %v7633
  %7691 = vmatpush1.msra.mxu0 %v7632
  %7692 = vmatprep.subr.mxu0 %v7630
  %7693 = vmatpush1.msra.mxu0 %v7629
  %7694 = vmatprep.subr.mxu0 %v7627
  %7695 = vmatpush1.msra.mxu0 %v7626
  %7696 = vmatprep.subr.mxu0 %v7624
  %7697 = vmatpush1.msra.mxu0 %v7623
  %7698 = vmatprep.subr.mxu0 %v7621
  %7699 = vmatpush1.msra.mxu0 %v7620
  %7700 = vmatprep.subr.mxu0 0.0
  %7701 = vmatpush2.msra.mxu0 0.0
  %7702 = vmatprep.subr.mxu0 0.0
  %7703 = vmatpush2.msra.mxu0 0.0
  %7704 = vmatprep.subr.mxu0 0.0
  %7705 = vmatpush2.msra.mxu0 0.0
  %7706 = vmatprep.subr.mxu0 0.0
  %7707 = vmatpush2.msra.mxu0 0.0
  %7708 = vmatprep.subr.mxu0 0.0
  %7709 = vmatpush2.msra.mxu0 0.0
  %7710 = vmatprep.subr.mxu0 0.0
  %7711 = vmatpush2.msra.mxu0 0.0
  %7712 = vmatprep.subr.mxu0 0.0
  %7713 = vmatpush2.msra.mxu0 0.0
  %7714 = vmatprep.subr.mxu0 0.0
  %7715 = vmatpush2.msra.mxu0 0.0
  %7716 = vmatprep.subr.mxu0 0.0
  %7717 = vmatpush2.msra.mxu0 0.0
  %7718 = vmatprep.subr.mxu0 0.0
  %7719 = vmatpush2.msra.mxu0 0.0
  %7720 = vmatprep.subr.mxu0 0.0
  %7721 = vmatpush2.msra.mxu0 0.0
  %7722 = vmatprep.subr.mxu0 0.0
  %7723 = vmatpush2.msra.mxu0 0.0
  %7724 = vmatprep.subr.mxu0 0.0
  %7725 = vmatpush2.msra.mxu0 0.0
  %7726 = vmatprep.subr.mxu0 0.0
  %7727 = vmatpush2.msra.mxu0 0.0
  %7728 = vmatprep.subr.mxu0 0.0
  %7729 = vmatpush2.msra.mxu0 0.0
  %7730 = vmatprep.subr.mxu0 0.0
  %7731 = vmatpush2.msra.mxu0 0.0
  %7732 = vmatprep.mubr.f32.mxu0 0.0
  %7733 = vmatmul.mubr.f32.gmra.mxu0 %v6815
  %v7734 = vpop.f32.mrf.mxu0
  %v7735 = vadd.f32 %v83, %v7734
  %v7736 = vpop.f32.mrf.mxu0
  %v7737 = vadd.f32 %v87, %v7736
  %7738 = vdwg.mxu0
  %7739 = vmatprep.subr.mxu0 0.0
  %7740 = vmatpush1.msra.mxu0 %v7667
  %7741 = vmatprep.subr.mxu0 0.0
  %7742 = vmatpush1.msra.mxu0 %v7664
  %7743 = vmatprep.subr.mxu0 0.0
  %7744 = vmatpush1.msra.mxu0 %v7661
  %7745 = vmatprep.subr.mxu0 0.0
  %7746 = vmatpush1.msra.mxu0 %v7658
  %7747 = vmatprep.subr.mxu0 0.0
  %7748 = vmatpush1.msra.mxu0 %v7655
  %7749 = vmatprep.subr.mxu0 0.0
  %7750 = vmatpush1.msra.mxu0 %v7652
  %7751 = vmatprep.subr.mxu0 0.0
  %7752 = vmatpush1.msra.mxu0 %v7649
  %7753 = vmatprep.subr.mxu0 0.0
  %7754 = vmatpush1.msra.mxu0 %v7646
  %7755 = vmatprep.subr.mxu0 0.0
  %7756 = vmatpush1.msra.mxu0 %v7643
  %7757 = vmatprep.subr.mxu0 0.0
  %7758 = vmatpush1.msra.mxu0 %v7640
  %7759 = vmatprep.subr.mxu0 0.0
  %7760 = vmatpush1.msra.mxu0 %v7637
  %7761 = vmatprep.subr.mxu0 0.0
  %7762 = vmatpush1.msra.mxu0 %v7634
  %7763 = vmatprep.subr.mxu0 0.0
  %7764 = vmatpush1.msra.mxu0 %v7631
  %7765 = vmatprep.subr.mxu0 0.0
  %7766 = vmatpush1.msra.mxu0 %v7628
  %7767 = vmatprep.subr.mxu0 0.0
  %7768 = vmatpush1.msra.mxu0 %v7625
  %7769 = vmatprep.subr.mxu0 0.0
  %7770 = vmatpush1.msra.mxu0 %v7622
  %7771 = vmatprep.subr.mxu0 0.0
  %7772 = vmatpush2.msra.mxu0 0.0
  %7773 = vmatprep.subr.mxu0 0.0
  %7774 = vmatpush2.msra.mxu0 0.0
  %7775 = vmatprep.subr.mxu0 0.0
  %7776 = vmatpush2.msra.mxu0 0.0
  %7777 = vmatprep.subr.mxu0 0.0
  %7778 = vmatpush2.msra.mxu0 0.0
  %7779 = vmatprep.subr.mxu0 0.0
  %7780 = vmatpush2.msra.mxu0 0.0
  %7781 = vmatprep.subr.mxu0 0.0
  %7782 = vmatpush2.msra.mxu0 0.0
  %7783 = vmatprep.subr.mxu0 0.0
  %7784 = vmatpush2.msra.mxu0 0.0
  %7785 = vmatprep.subr.mxu0 0.0
  %7786 = vmatpush2.msra.mxu0 0.0
  %7787 = vmatprep.subr.mxu0 0.0
  %7788 = vmatpush2.msra.mxu0 0.0
  %7789 = vmatprep.subr.mxu0 0.0
  %7790 = vmatpush2.msra.mxu0 0.0
  %7791 = vmatprep.subr.mxu0 0.0
  %7792 = vmatpush2.msra.mxu0 0.0
  %7793 = vmatprep.subr.mxu0 0.0
  %7794 = vmatpush2.msra.mxu0 0.0
  %7795 = vmatprep.subr.mxu0 0.0
  %7796 = vmatpush2.msra.mxu0 0.0
  %7797 = vmatprep.subr.mxu0 0.0
  %7798 = vmatpush2.msra.mxu0 0.0
  %7799 = vmatprep.subr.mxu0 0.0
  %7800 = vmatpush2.msra.mxu0 0.0
  %7801 = vmatprep.subr.mxu0 0.0
  %7802 = vmatpush2.msra.mxu0 0.0
  %7803 = vmatprep.mubr.f32.mxu0 0.0
  %7804 = vmatmul.mubr.f32.gmra.mxu0 %v6815
  %v7805 = vpop.f32.mrf.mxu0
  %v7806 = vadd.f32 %v91, %v7805
  %v7807 = vpop.f32.mrf.mxu0
  %7808 = vdwg.mxu0
  %v7809 = vadd.f32 %v7546, %v7735
  %v7810 = vxor.u32 %v7809, 2147483648
  %v7811 = vmul.f32 %v7810, 1.442695
  %v7812 = vpow.pop %v7811
  %v7813 = vadd.f32 %v7812, 1.0
  %v7814 = vrcp.pop %v7813
  %v7815 = vmul.f32 1.0, %v7814
  %v7816 = vadd.f32 %v7548, %v7737
  %v7817 = vxor.u32 %v7816, 2147483648
  %v7818 = vmul.f32 %v7817, 1.442695
  %v7819 = vpow.pop %v7818
  %v7820 = vadd.f32 %v7819, 1.0
  %v7821 = vrcp.pop %v7820
  %v7822 = vmul.f32 1.0, %v7821
  %v7823 = vmul.f32 %v7815, %v7806
  %v7824 = vadd.f32 %v7617, %v7823
  %v7825 = vtanh.pop %v7824
  %v7826 = vsub.f32 1.0, %v7822
  %v7827 = vmul.f32 %v7826, %v7825
  %v7828 = vmul.f32 %v7822, %v6815
  %v7829 = vadd.f32 %v7827, %v7828
  %v7830 = vld [vmem:[%s731] sm:$0xff]
  %v7831 = vld [vmem:[%s731 + $0x8] sm:$0xff]
  %v7832 = vld [vmem:[%s731 + $0x10] sm:$0xff]
  %v7833 = vld [vmem:[%s731 + $0x18] sm:$0xff]
  %v7834 = vld [vmem:[%s731 + $0x20] sm:$0xff]
  %v7835 = vld [vmem:[%s731 + $0x28] sm:$0xff]
  %v7836 = vld [vmem:[%s731 + $0x30] sm:$0xff]
  %v7837 = vld [vmem:[%s731 + $0x38] sm:$0xff]
  %v7838 = vld [vmem:[%s731 + $0x40] sm:$0xff]
  %v7839 = vld [vmem:[%s731 + $0x48] sm:$0xff]
  %v7840 = vld [vmem:[%s731 + $0x50] sm:$0xff]
  %v7841 = vld [vmem:[%s731 + $0x58] sm:$0xff]
  %v7842 = vld [vmem:[%s731 + $0x60] sm:$0xff]
  %v7843 = vld [vmem:[%s731 + $0x68] sm:$0xff]
  %v7844 = vld [vmem:[%s731 + $0x70] sm:$0xff]
  %v7845 = vld [vmem:[%s731 + $0x78] sm:$0xff]
  %v7846 = vld [vmem:[%s731 + $0x80] sm:$0xff]
  %v7847 = vld [vmem:[%s731 + $0x88] sm:$0xff]
  %v7848 = vld [vmem:[%s731 + $0x90] sm:$0xff]
  %v7849 = vld [vmem:[%s731 + $0x98] sm:$0xff]
  %v7850 = vld [vmem:[%s731 + $0xa0] sm:$0xff]
  %v7851 = vld [vmem:[%s731 + $0xa8] sm:$0xff]
  %v7852 = vld [vmem:[%s731 + $0xb0] sm:$0xff]
  %v7853 = vld [vmem:[%s731 + $0xb8] sm:$0xff]
  %v7854 = vld [vmem:[%s731 + $0xc0] sm:$0xff]
  %v7855 = vld [vmem:[%s731 + $0xc8] sm:$0xff]
  %v7856 = vld [vmem:[%s731 + $0xd0] sm:$0xff]
  %v7857 = vld [vmem:[%s731 + $0xd8] sm:$0xff]
  %v7858 = vld [vmem:[%s731 + $0xe0] sm:$0xff]
  %v7859 = vld [vmem:[%s731 + $0xe8] sm:$0xff]
  %v7860 = vld [vmem:[%s731 + $0xf0] sm:$0xff]
  %v7861 = vld [vmem:[%s731 + $0xf8] sm:$0xff]
  %v7862 = vld [vmem:[%s731 + $0x100] sm:$0xff]
  %v7863 = vld [vmem:[%s731 + $0x108] sm:$0xff]
  %v7864 = vld [vmem:[%s731 + $0x110] sm:$0xff]
  %v7865 = vld [vmem:[%s731 + $0x118] sm:$0xff]
  %v7866 = vld [vmem:[%s731 + $0x120] sm:$0xff]
  %v7867 = vld [vmem:[%s731 + $0x128] sm:$0xff]
  %v7868 = vld [vmem:[%s731 + $0x130] sm:$0xff]
  %v7869 = vld [vmem:[%s731 + $0x138] sm:$0xff]
  %v7870 = vld [vmem:[%s731 + $0x140] sm:$0xff]
  %v7871 = vld [vmem:[%s731 + $0x148] sm:$0xff]
  %v7872 = vld [vmem:[%s731 + $0x150] sm:$0xff]
  %v7873 = vld [vmem:[%s731 + $0x158] sm:$0xff]
  %v7874 = vld [vmem:[%s731 + $0x160] sm:$0xff]
  %v7875 = vld [vmem:[%s731 + $0x168] sm:$0xff]
  %v7876 = vld [vmem:[%s731 + $0x170] sm:$0xff]
  %v7877 = vld [vmem:[%s731 + $0x178] sm:$0xff]
  %7878 = vmatprep.subr.mxu0 %v7876
  %7879 = vmatpush1.msra.mxu0 %v7875
  %7880 = vmatprep.subr.mxu0 %v7873
  %7881 = vmatpush1.msra.mxu0 %v7872
  %7882 = vmatprep.subr.mxu0 %v7870
  %7883 = vmatpush1.msra.mxu0 %v7869
  %7884 = vmatprep.subr.mxu0 %v7867
  %7885 = vmatpush1.msra.mxu0 %v7866
  %7886 = vmatprep.subr.mxu0 %v7864
  %7887 = vmatpush1.msra.mxu0 %v7863
  %7888 = vmatprep.subr.mxu0 %v7861
  %7889 = vmatpush1.msra.mxu0 %v7860
  %7890 = vmatprep.subr.mxu0 %v7858
  %7891 = vmatpush1.msra.mxu0 %v7857
  %7892 = vmatprep.subr.mxu0 %v7855
  %7893 = vmatpush1.msra.mxu0 %v7854
  %7894 = vmatprep.subr.mxu0 %v7852
  %7895 = vmatpush1.msra.mxu0 %v7851
  %7896 = vmatprep.subr.mxu0 %v7849
  %7897 = vmatpush1.msra.mxu0 %v7848
  %7898 = vmatprep.subr.mxu0 %v7846
  %7899 = vmatpush1.msra.mxu0 %v7845
  %7900 = vmatprep.subr.mxu0 %v7843
  %7901 = vmatpush1.msra.mxu0 %v7842
  %7902 = vmatprep.subr.mxu0 %v7840
  %7903 = vmatpush1.msra.mxu0 %v7839
  %7904 = vmatprep.subr.mxu0 %v7837
  %7905 = vmatpush1.msra.mxu0 %v7836
  %7906 = vmatprep.subr.mxu0 %v7834
  %7907 = vmatpush1.msra.mxu0 %v7833
  %7908 = vmatprep.subr.mxu0 %v7831
  %7909 = vmatpush1.msra.mxu0 %v7830
  %7910 = vmatprep.subr.mxu0 0.0
  %7911 = vmatpush2.msra.mxu0 0.0
  %7912 = vmatprep.subr.mxu0 0.0
  %7913 = vmatpush2.msra.mxu0 0.0
  %7914 = vmatprep.subr.mxu0 0.0
  %7915 = vmatpush2.msra.mxu0 0.0
  %7916 = vmatprep.subr.mxu0 0.0
  %7917 = vmatpush2.msra.mxu0 0.0
  %7918 = vmatprep.subr.mxu0 0.0
  %7919 = vmatpush2.msra.mxu0 0.0
  %7920 = vmatprep.subr.mxu0 0.0
  %7921 = vmatpush2.msra.mxu0 0.0
  %7922 = vmatprep.subr.mxu0 0.0
  %7923 = vmatpush2.msra.mxu0 0.0
  %7924 = vmatprep.subr.mxu0 0.0
  %7925 = vmatpush2.msra.mxu0 0.0
  %7926 = vmatprep.subr.mxu0 0.0
  %7927 = vmatpush2.msra.mxu0 0.0
  %7928 = vmatprep.subr.mxu0 0.0
  %7929 = vmatpush2.msra.mxu0 0.0
  %7930 = vmatprep.subr.mxu0 0.0
  %7931 = vmatpush2.msra.mxu0 0.0
  %7932 = vmatprep.subr.mxu0 0.0
  %7933 = vmatpush2.msra.mxu0 0.0
  %7934 = vmatprep.subr.mxu0 0.0
  %7935 = vmatpush2.msra.mxu0 0.0
  %7936 = vmatprep.subr.mxu0 0.0
  %7937 = vmatpush2.msra.mxu0 0.0
  %7938 = vmatprep.subr.mxu0 0.0
  %7939 = vmatpush2.msra.mxu0 0.0
  %7940 = vmatprep.subr.mxu0 0.0
  %7941 = vmatpush2.msra.mxu0 0.0
  %7942 = vmatprep.mubr.f32.mxu0 0.0
  %7943 = vmatmul.mubr.f32.gmra.mxu0 %v7829
  %v7944 = vpop.f32.mrf.mxu0
  %v7945 = vadd.f32 %v48, %v7944
  %v7946 = vpop.f32.mrf.mxu0
  %v7947 = vadd.f32 %v52, %v7946
  %7948 = vdwg.mxu0
  %7949 = vmatprep.subr.mxu0 0.0
  %7950 = vmatpush1.msra.mxu0 %v7877
  %7951 = vmatprep.subr.mxu0 0.0
  %7952 = vmatpush1.msra.mxu0 %v7874
  %7953 = vmatprep.subr.mxu0 0.0
  %7954 = vmatpush1.msra.mxu0 %v7871
  %7955 = vmatprep.subr.mxu0 0.0
  %7956 = vmatpush1.msra.mxu0 %v7868
  %7957 = vmatprep.subr.mxu0 0.0
  %7958 = vmatpush1.msra.mxu0 %v7865
  %7959 = vmatprep.subr.mxu0 0.0
  %7960 = vmatpush1.msra.mxu0 %v7862
  %7961 = vmatprep.subr.mxu0 0.0
  %7962 = vmatpush1.msra.mxu0 %v7859
  %7963 = vmatprep.subr.mxu0 0.0
  %7964 = vmatpush1.msra.mxu0 %v7856
  %7965 = vmatprep.subr.mxu0 0.0
  %7966 = vmatpush1.msra.mxu0 %v7853
  %7967 = vmatprep.subr.mxu0 0.0
  %7968 = vmatpush1.msra.mxu0 %v7850
  %7969 = vmatprep.subr.mxu0 0.0
  %7970 = vmatpush1.msra.mxu0 %v7847
  %7971 = vmatprep.subr.mxu0 0.0
  %7972 = vmatpush1.msra.mxu0 %v7844
  %7973 = vmatprep.subr.mxu0 0.0
  %7974 = vmatpush1.msra.mxu0 %v7841
  %7975 = vmatprep.subr.mxu0 0.0
  %7976 = vmatpush1.msra.mxu0 %v7838
  %7977 = vmatprep.subr.mxu0 0.0
  %7978 = vmatpush1.msra.mxu0 %v7835
  %7979 = vmatprep.subr.mxu0 0.0
  %7980 = vmatpush1.msra.mxu0 %v7832
  %7981 = vmatprep.subr.mxu0 0.0
  %7982 = vmatpush2.msra.mxu0 0.0
  %7983 = vmatprep.subr.mxu0 0.0
  %7984 = vmatpush2.msra.mxu0 0.0
  %7985 = vmatprep.subr.mxu0 0.0
  %7986 = vmatpush2.msra.mxu0 0.0
  %7987 = vmatprep.subr.mxu0 0.0
  %7988 = vmatpush2.msra.mxu0 0.0
  %7989 = vmatprep.subr.mxu0 0.0
  %7990 = vmatpush2.msra.mxu0 0.0
  %7991 = vmatprep.subr.mxu0 0.0
  %7992 = vmatpush2.msra.mxu0 0.0
  %7993 = vmatprep.subr.mxu0 0.0
  %7994 = vmatpush2.msra.mxu0 0.0
  %7995 = vmatprep.subr.mxu0 0.0
  %7996 = vmatpush2.msra.mxu0 0.0
  %7997 = vmatprep.subr.mxu0 0.0
  %7998 = vmatpush2.msra.mxu0 0.0
  %7999 = vmatprep.subr.mxu0 0.0
  %8000 = vmatpush2.msra.mxu0 0.0
  %8001 = vmatprep.subr.mxu0 0.0
  %8002 = vmatpush2.msra.mxu0 0.0
  %8003 = vmatprep.subr.mxu0 0.0
  %8004 = vmatpush2.msra.mxu0 0.0
  %8005 = vmatprep.subr.mxu0 0.0
  %8006 = vmatpush2.msra.mxu0 0.0
  %8007 = vmatprep.subr.mxu0 0.0
  %8008 = vmatpush2.msra.mxu0 0.0
  %8009 = vmatprep.subr.mxu0 0.0
  %8010 = vmatpush2.msra.mxu0 0.0
  %8011 = vmatprep.subr.mxu0 0.0
  %8012 = vmatpush2.msra.mxu0 0.0
  %8013 = vmatprep.mubr.f32.mxu0 0.0
  %8014 = vmatmul.mubr.f32.gmra.mxu0 %v7829
  %v8015 = vpop.f32.mrf.mxu0
  %v8016 = vadd.f32 %v56, %v8015
  %v8017 = vpop.f32.mrf.mxu0
  %8018 = vdwg.mxu0
  %v8019 = vld [vmem:[%s921] sm:$0xff]
  %v8020 = vld [vmem:[%s921 + $0x8] sm:$0xff]
  %v8021 = vld [vmem:[%s921 + $0x10] sm:$0xff]
  %v8022 = vld [vmem:[%s921 + $0x18] sm:$0xff]
  %v8023 = vld [vmem:[%s921 + $0x20] sm:$0xff]
  %v8024 = vld [vmem:[%s921 + $0x28] sm:$0xff]
  %v8025 = vld [vmem:[%s921 + $0x30] sm:$0xff]
  %v8026 = vld [vmem:[%s921 + $0x38] sm:$0xff]
  %v8027 = vld [vmem:[%s921 + $0x40] sm:$0xff]
  %v8028 = vld [vmem:[%s921 + $0x48] sm:$0xff]
  %v8029 = vld [vmem:[%s921 + $0x50] sm:$0xff]
  %v8030 = vld [vmem:[%s921 + $0x58] sm:$0xff]
  %v8031 = vld [vmem:[%s921 + $0x60] sm:$0xff]
  %v8032 = vld [vmem:[%s921 + $0x68] sm:$0xff]
  %v8033 = vld [vmem:[%s921 + $0x70] sm:$0xff]
  %v8034 = vld [vmem:[%s921 + $0x78] sm:$0xff]
  %v8035 = vld [vmem:[%s921 + $0x80] sm:$0xff]
  %v8036 = vld [vmem:[%s921 + $0x88] sm:$0xff]
  %v8037 = vld [vmem:[%s921 + $0x90] sm:$0xff]
  %v8038 = vld [vmem:[%s921 + $0x98] sm:$0xff]
  %v8039 = vld [vmem:[%s921 + $0xa0] sm:$0xff]
  %v8040 = vld [vmem:[%s921 + $0xa8] sm:$0xff]
  %v8041 = vld [vmem:[%s921 + $0xb0] sm:$0xff]
  %v8042 = vld [vmem:[%s921 + $0xb8] sm:$0xff]
  %v8043 = vld [vmem:[%s921 + $0xc0] sm:$0xff]
  %v8044 = vld [vmem:[%s921 + $0xc8] sm:$0xff]
  %v8045 = vld [vmem:[%s921 + $0xd0] sm:$0xff]
  %v8046 = vld [vmem:[%s921 + $0xd8] sm:$0xff]
  %v8047 = vld [vmem:[%s921 + $0xe0] sm:$0xff]
  %v8048 = vld [vmem:[%s921 + $0xe8] sm:$0xff]
  %v8049 = vld [vmem:[%s921 + $0xf0] sm:$0xff]
  %v8050 = vld [vmem:[%s921 + $0xf8] sm:$0xff]
  %v8051 = vld [vmem:[%s921 + $0x100] sm:$0xff]
  %v8052 = vld [vmem:[%s921 + $0x108] sm:$0xff]
  %v8053 = vld [vmem:[%s921 + $0x110] sm:$0xff]
  %v8054 = vld [vmem:[%s921 + $0x118] sm:$0xff]
  %v8055 = vld [vmem:[%s921 + $0x120] sm:$0xff]
  %v8056 = vld [vmem:[%s921 + $0x128] sm:$0xff]
  %v8057 = vld [vmem:[%s921 + $0x130] sm:$0xff]
  %v8058 = vld [vmem:[%s921 + $0x138] sm:$0xff]
  %v8059 = vld [vmem:[%s921 + $0x140] sm:$0xff]
  %v8060 = vld [vmem:[%s921 + $0x148] sm:$0xff]
  %v8061 = vld [vmem:[%s921 + $0x150] sm:$0xff]
  %v8062 = vld [vmem:[%s921 + $0x158] sm:$0xff]
  %v8063 = vld [vmem:[%s921 + $0x160] sm:$0xff]
  %v8064 = vld [vmem:[%s921 + $0x168] sm:$0xff]
  %v8065 = vld [vmem:[%s921 + $0x170] sm:$0xff]
  %v8066 = vld [vmem:[%s921 + $0x178] sm:$0xff]
  %8067 = vmatprep.subr.mxu0 %v8065
  %8068 = vmatpush1.msra.mxu0 %v8064
  %8069 = vmatprep.subr.mxu0 %v8062
  %8070 = vmatpush1.msra.mxu0 %v8061
  %8071 = vmatprep.subr.mxu0 %v8059
  %8072 = vmatpush1.msra.mxu0 %v8058
  %8073 = vmatprep.subr.mxu0 %v8056
  %8074 = vmatpush1.msra.mxu0 %v8055
  %8075 = vmatprep.subr.mxu0 %v8053
  %8076 = vmatpush1.msra.mxu0 %v8052
  %8077 = vmatprep.subr.mxu0 %v8050
  %8078 = vmatpush1.msra.mxu0 %v8049
  %8079 = vmatprep.subr.mxu0 %v8047
  %8080 = vmatpush1.msra.mxu0 %v8046
  %8081 = vmatprep.subr.mxu0 %v8044
  %8082 = vmatpush1.msra.mxu0 %v8043
  %8083 = vmatprep.subr.mxu0 %v8041
  %8084 = vmatpush1.msra.mxu0 %v8040
  %8085 = vmatprep.subr.mxu0 %v8038
  %8086 = vmatpush1.msra.mxu0 %v8037
  %8087 = vmatprep.subr.mxu0 %v8035
  %8088 = vmatpush1.msra.mxu0 %v8034
  %8089 = vmatprep.subr.mxu0 %v8032
  %8090 = vmatpush1.msra.mxu0 %v8031
  %8091 = vmatprep.subr.mxu0 %v8029
  %8092 = vmatpush1.msra.mxu0 %v8028
  %8093 = vmatprep.subr.mxu0 %v8026
  %8094 = vmatpush1.msra.mxu0 %v8025
  %8095 = vmatprep.subr.mxu0 %v8023
  %8096 = vmatpush1.msra.mxu0 %v8022
  %8097 = vmatprep.subr.mxu0 %v8020
  %8098 = vmatpush1.msra.mxu0 %v8019
  %8099 = vmatprep.subr.mxu0 0.0
  %8100 = vmatpush2.msra.mxu0 0.0
  %8101 = vmatprep.subr.mxu0 0.0
  %8102 = vmatpush2.msra.mxu0 0.0
  %8103 = vmatprep.subr.mxu0 0.0
  %8104 = vmatpush2.msra.mxu0 0.0
  %8105 = vmatprep.subr.mxu0 0.0
  %8106 = vmatpush2.msra.mxu0 0.0
  %8107 = vmatprep.subr.mxu0 0.0
  %8108 = vmatpush2.msra.mxu0 0.0
  %8109 = vmatprep.subr.mxu0 0.0
  %8110 = vmatpush2.msra.mxu0 0.0
  %8111 = vmatprep.subr.mxu0 0.0
  %8112 = vmatpush2.msra.mxu0 0.0
  %8113 = vmatprep.subr.mxu0 0.0
  %8114 = vmatpush2.msra.mxu0 0.0
  %8115 = vmatprep.subr.mxu0 0.0
  %8116 = vmatpush2.msra.mxu0 0.0
  %8117 = vmatprep.subr.mxu0 0.0
  %8118 = vmatpush2.msra.mxu0 0.0
  %8119 = vmatprep.subr.mxu0 0.0
  %8120 = vmatpush2.msra.mxu0 0.0
  %8121 = vmatprep.subr.mxu0 0.0
  %8122 = vmatpush2.msra.mxu0 0.0
  %8123 = vmatprep.subr.mxu0 0.0
  %8124 = vmatpush2.msra.mxu0 0.0
  %8125 = vmatprep.subr.mxu0 0.0
  %8126 = vmatpush2.msra.mxu0 0.0
  %8127 = vmatprep.subr.mxu0 0.0
  %8128 = vmatpush2.msra.mxu0 0.0
  %8129 = vmatprep.subr.mxu0 0.0
  %8130 = vmatpush2.msra.mxu0 0.0
  %8131 = vmatprep.mubr.f32.mxu0 0.0
  %8132 = vmatmul.mubr.f32.gmra.mxu0 %v7214
  %v8133 = vpop.f32.mrf.mxu0
  %v8134 = vadd.f32 %v101, %v8133
  %v8135 = vpop.f32.mrf.mxu0
  %v8136 = vadd.f32 %v105, %v8135
  %8137 = vdwg.mxu0
  %8138 = vmatprep.subr.mxu0 0.0
  %8139 = vmatpush1.msra.mxu0 %v8066
  %8140 = vmatprep.subr.mxu0 0.0
  %8141 = vmatpush1.msra.mxu0 %v8063
  %8142 = vmatprep.subr.mxu0 0.0
  %8143 = vmatpush1.msra.mxu0 %v8060
  %8144 = vmatprep.subr.mxu0 0.0
  %8145 = vmatpush1.msra.mxu0 %v8057
  %8146 = vmatprep.subr.mxu0 0.0
  %8147 = vmatpush1.msra.mxu0 %v8054
  %8148 = vmatprep.subr.mxu0 0.0
  %8149 = vmatpush1.msra.mxu0 %v8051
  %8150 = vmatprep.subr.mxu0 0.0
  %8151 = vmatpush1.msra.mxu0 %v8048
  %8152 = vmatprep.subr.mxu0 0.0
  %8153 = vmatpush1.msra.mxu0 %v8045
  %8154 = vmatprep.subr.mxu0 0.0
  %8155 = vmatpush1.msra.mxu0 %v8042
  %8156 = vmatprep.subr.mxu0 0.0
  %8157 = vmatpush1.msra.mxu0 %v8039
  %8158 = vmatprep.subr.mxu0 0.0
  %8159 = vmatpush1.msra.mxu0 %v8036
  %8160 = vmatprep.subr.mxu0 0.0
  %8161 = vmatpush1.msra.mxu0 %v8033
  %8162 = vmatprep.subr.mxu0 0.0
  %8163 = vmatpush1.msra.mxu0 %v8030
  %8164 = vmatprep.subr.mxu0 0.0
  %8165 = vmatpush1.msra.mxu0 %v8027
  %8166 = vmatprep.subr.mxu0 0.0
  %8167 = vmatpush1.msra.mxu0 %v8024
  %8168 = vmatprep.subr.mxu0 0.0
  %8169 = vmatpush1.msra.mxu0 %v8021
  %8170 = vmatprep.subr.mxu0 0.0
  %8171 = vmatpush2.msra.mxu0 0.0
  %8172 = vmatprep.subr.mxu0 0.0
  %8173 = vmatpush2.msra.mxu0 0.0
  %8174 = vmatprep.subr.mxu0 0.0
  %8175 = vmatpush2.msra.mxu0 0.0
  %8176 = vmatprep.subr.mxu0 0.0
  %8177 = vmatpush2.msra.mxu0 0.0
  %8178 = vmatprep.subr.mxu0 0.0
  %8179 = vmatpush2.msra.mxu0 0.0
  %8180 = vmatprep.subr.mxu0 0.0
  %8181 = vmatpush2.msra.mxu0 0.0
  %8182 = vmatprep.subr.mxu0 0.0
  %8183 = vmatpush2.msra.mxu0 0.0
  %8184 = vmatprep.subr.mxu0 0.0
  %8185 = vmatpush2.msra.mxu0 0.0
  %8186 = vmatprep.subr.mxu0 0.0
  %8187 = vmatpush2.msra.mxu0 0.0
  %8188 = vmatprep.subr.mxu0 0.0
  %8189 = vmatpush2.msra.mxu0 0.0
  %8190 = vmatprep.subr.mxu0 0.0
  %8191 = vmatpush2.msra.mxu0 0.0
  %8192 = vmatprep.subr.mxu0 0.0
  %8193 = vmatpush2.msra.mxu0 0.0
  %8194 = vmatprep.subr.mxu0 0.0
  %8195 = vmatpush2.msra.mxu0 0.0
  %8196 = vmatprep.subr.mxu0 0.0
  %8197 = vmatpush2.msra.mxu0 0.0
  %8198 = vmatprep.subr.mxu0 0.0
  %8199 = vmatpush2.msra.mxu0 0.0
  %8200 = vmatprep.subr.mxu0 0.0
  %8201 = vmatpush2.msra.mxu0 0.0
  %8202 = vmatprep.mubr.f32.mxu0 0.0
  %8203 = vmatmul.mubr.f32.gmra.mxu0 %v7214
  %v8204 = vpop.f32.mrf.mxu0
  %v8205 = vadd.f32 %v109, %v8204
  %v8206 = vpop.f32.mrf.mxu0
  %8207 = vdwg.mxu0
  %v8208 = vadd.f32 %v7945, %v8134
  %v8209 = vxor.u32 %v8208, 2147483648
  %v8210 = vmul.f32 %v8209, 1.442695
  %v8211 = vpow.pop %v8210
  %v8212 = vadd.f32 %v8211, 1.0
  %v8213 = vrcp.pop %v8212
  %v8214 = vmul.f32 1.0, %v8213
  %v8215 = vadd.f32 %v7947, %v8136
  %v8216 = vxor.u32 %v8215, 2147483648
  %v8217 = vmul.f32 %v8216, 1.442695
  %v8218 = vpow.pop %v8217
  %v8219 = vadd.f32 %v8218, 1.0
  %v8220 = vrcp.pop %v8219
  %v8221 = vmul.f32 1.0, %v8220
  %v8222 = vmul.f32 %v8214, %v8205
  %v8223 = vadd.f32 %v8016, %v8222
  %v8224 = vtanh.pop %v8223
  %v8225 = vsub.f32 1.0, %v8221
  %v8226 = vmul.f32 %v8225, %v8224
  %v8227 = vmul.f32 %v8221, %v7214
  %v8228 = vadd.f32 %v8226, %v8227
  %s8229 = scalar_lea.vmem %s6, 56
  %8230 = vst [vmem:[%s8229] sm:$0xff] %v8228
  %8231 = vst [vmem:[%s7] sm:$0xff] %v7430
  %s8232 = scalar_lea.vmem %s7, 8
  %8233 = vst [vmem:[%s8232] sm:$0xff] %v7829
  %s8234 = scalar_lea.vmem %s7, 16
  %8235 = vst [vmem:[%s8234] sm:$0xff] %v8228
  // Predicated region
  $region26: #{decoder_forward.4} parent=0 // pred_check
    _
  $region27: #{decoder_forward.4} parent=0 // pred_check_branch
    %8237 = sbr.rel (0) target = $region29
  $region28: #{decoder_forward.4} parent=0 // pred_region
    _
  $region29: #{decoder_forward.4} parent=0 // pred_fallthru
    _
  // Predicated region
  $region30: #{decoder_forward.4} parent=0 // pred_check
    _
  $region31: #{decoder_forward.4} parent=0 // pred_check_branch
    %8239 = sbr.rel (0) target = $region33
  $region32: #{decoder_forward.4} parent=0 // pred_region
    _
  $region33: #{decoder_forward.4} parent=0 // pred_fallthru
    _
  // Predicated region
  $region34: #{decoder_forward.4} parent=0 // pred_check
    _
  $region35: #{decoder_forward.4} parent=0 // pred_check_branch
    %8241 = sbr.rel (0) target = $region37
  $region36: #{decoder_forward.4} parent=0 // pred_region
    _
  $region37: #{decoder_forward.4} parent=0 // pred_fallthru
    _
  // Predicated region
  $region38: #{decoder_forward.4} parent=0 // pred_check
    _
  $region39: #{decoder_forward.4} parent=0 // pred_check_branch
    %8243 = sbr.rel (0) target = $region41
  $region40: #{decoder_forward.4} parent=0 // pred_region
    _
  $region41: #{decoder_forward.4} parent=0 // pred_fallthru
    _

</llo_original>
